<compile_context>
chip_gen: v7x
topology: tpu7x:2x2x1
jax: 0.10.0
libtpu: 0.0.40
codegen_flags: <defaults>
</compile_context>

<pallas_src>
import math

import numpy as np
import jax
import jax.numpy as jnp
from jax import lax
from jax.experimental import pallas as pl
from jax.experimental.pallas import tpu as pltpu

# -------------------- configuration (cfg.MODEL.* analogue) --------------------
IN_CHANNELS = 64            # must be divisible by 32 (GroupNorm(32, C))
NUM_CLASSES = 8             # cfg.MODEL.YOOO.NUM_CLASSES
NUM_CONVS = 2               # cfg.MODEL.YOOO.NUM_CONVS
NUM_GROUPS = 32
PRIOR_PROB = 0.01           # cfg.MODEL.FCOS.PRIOR_PROB
CENTERNESS_ON_REG = True    # cfg.MODEL.YOOO.CENTERNESS_ON_REG
GN_EPS = 1e-5
BATCH = 2
LEVEL_HW = [(16, 16), (8, 8), (8, 8), (8, 8), (8, 8)]
USED_LEVEL = [0, 1, 2, 3, 4]
OUT_PAD = 128               # lane-dense output slab; first NUM_CLASSES+3 lanes are real


# ------------------------------ Pallas kernel ---------------------------------
def _make_group_kernel(rows, H, W, C, C2, L, Cg):
    """Kernel for one grid step of folded same-sized levels.  rows = levels*N."""
    HW = H * W
    inv_cnt = 1.0 / float(HW * Cg)

    def kernel(feat_ref,      # VMEM (rows, H, W, C) bf16   folded level features
               scale_ref,     # VMEM (rows, 1) f32          per-row Scale (per level)
               w0_ref,        # VMEM (9*C, C2) bf16         dense layer-0 im2col weight
               wr_ref,        # VMEM (L-1, 9*C2, C2) bf16   block-diag im2col weights
               cb_ref,        # VMEM (L, 1, C2) f32         fused conv bias
               gg_ref,        # VMEM (L, 1, C2) f32         fused GN gamma
               gb_ref,        # VMEM (L, 1, C2) f32         fused GN beta
               A_ref,         # VMEM (C2, 2G) f32           channel->group membership
               AT_ref,        # VMEM (2G, C2) f32           group->channel broadcast
               wh_ref,        # VMEM (C2, OUT_PAD) bf16     fused + lane-padded heads
               bh_ref,        # VMEM (1, OUT_PAD) f32       fused head bias
               mask_ref,      # VMEM (1, OUT_PAD) f32       1.0 on bbox (exp'd) columns
               out_ref):      # VMEM (rows, OUT_PAD) f32
        A = A_ref[...]
        AT = AT_ref[...]
        x = feat_ref[...]                                   # (rows, H, W, Cin) bf16
        y3 = None
        for l in range(L):
            cin = x.shape[-1]                               # C for l==0, C2 after
            # ---- zero-pad H and W by 1 (bf16 values; two concats) ----
            zh = jnp.zeros((rows, 1, W, cin), jnp.bfloat16)
            xp = jnp.concatenate([zh, x, zh], axis=1)       # (rows, H+2, W, cin)
            zw = jnp.zeros((rows, H + 2, 1, cin), jnp.bfloat16)
            xp = jnp.concatenate([zw, xp, zw], axis=2)      # (rows, H+2, W+2, cin)
            # ---- im2col: 9 shifted windows -> one wide bf16 matmul ----
            cols = [xp[:, ky:ky + H, kx:kx + W, :]
                    for ky in range(3) for kx in range(3)]
            x9 = jnp.concatenate(cols, axis=-1).reshape(rows * HW, 9 * cin)
            w = w0_ref[...] if l == 0 else wr_ref[l - 1]
            y = jnp.dot(x9, w, preferred_element_type=jnp.float32) + cb_ref[l]

            # ---- fused GroupNorm(32) over both towers (2G groups of Cg channels), f32 ----
            y3 = y.reshape(rows, HW, C2)
            sum_c = jnp.sum(y3, axis=1)                     # (rows, C2)
            sumsq_c = jnp.sum(y3 * y3, axis=1)              # (rows, C2)
            stats = jnp.concatenate([sum_c, sumsq_c], axis=0)             # (2*rows, C2)
            sg = jnp.dot(stats, A, preferred_element_type=jnp.float32)    # (2*rows, 2G)
            mean_g = sg[:rows] * inv_cnt
            # TODO(synk): single-pass E[x^2]-E[x]^2 variance (fine in f32 at this tolerance)
            var_g = sg[rows:] * inv_cnt - mean_g * mean_g
            inv_g = lax.rsqrt(var_g + GN_EPS)
            mi_c = jnp.dot(jnp.concatenate([mean_g, inv_g], axis=0), AT,
                           preferred_element_type=jnp.float32)            # (2*rows, C2)
            mul_c = mi_c[rows:] * gg_ref[l]                 # inv * gamma
            add_c = gb_ref[l] - mi_c[:rows] * mul_c         # beta - mean*inv*gamma
            y3 = jnp.maximum(y3 * mul_c[:, None, :] + add_c[:, None, :], 0.0)
            if l < L - 1:
                # carry inter-layer activation in bf16 (storage / im2col / matmul operand)
                x = y3.reshape(rows, H, W, C2).astype(jnp.bfloat16)

        # ---- AdaptiveAvgPool2d((1,1)) on both towers at once (f32) ----
        pooled = jnp.mean(y3, axis=1)                       # (rows, C2)

        # ---- fused heads: [cls_logits | bbox_pred | centerness | zero pad] ----
        raw = jnp.dot(pooled.astype(jnp.bfloat16), wh_ref[...],
                      preferred_element_type=jnp.float32) + bh_ref[...]   # (rows, OUT_PAD)
        m = mask_ref[...]                                   # (1, OUT_PAD)
        sc = scale_ref[...]                                 # (rows, 1)
        # scale is masked to the bbox columns BEFORE exp -> exp(0)=1 elsewhere, no inf
        e = jnp.exp(raw * (m * sc))
        out_ref[...] = m * e + (1.0 - m) * raw

    return kernel


def _run_group(feats5, scale_rows, packed):
    """feats5: (nsteps, rows, H, W, C) bf16.  Returns (nsteps, rows, OUT_PAD) f32."""
    nsteps, rows, H, W, C = feats5.shape
    C2 = 2 * IN_CHANNELS
    Cg = IN_CHANNELS // NUM_GROUPS
    kernel = _make_group_kernel(rows, H, W, C, C2, NUM_CONVS, Cg)
    vmem = pl.BlockSpec(memory_space=pltpu.MemorySpace.VMEM)  # resident across the grid
    feat_spec = pl.BlockSpec((None, rows, H, W, C), lambda i: (i, 0, 0, 0, 0))
    scale_spec = pl.BlockSpec((None, rows, 1), lambda i: (i, 0, 0))
    out_spec = pl.BlockSpec((None, rows, OUT_PAD), lambda i: (i, 0, 0))
    return pl.pallas_call(
        kernel,
        grid=(nsteps,),
        out_shape=jax.ShapeDtypeStruct((nsteps, rows, OUT_PAD), jnp.float32),
        in_specs=[feat_spec, scale_spec] + [vmem] * 10,
        out_specs=out_spec,
        compiler_params=pltpu.CompilerParams(
            dimension_semantics=("parallel",)),
    )(feats5, scale_rows,
      packed["w0"], packed["wr"], packed["cb"], packed["gg"], packed["gb"],
      packed["A"], packed["AT"], packed["wh"], packed["bh"], packed["mask"])


# --------------------------- parameter packing (once) --------------------------
def pack_params(p):
    L, C, NC, G = NUM_CONVS, IN_CHANNELS, NUM_CLASSES, NUM_GROUPS
    C2, G2, Cg = 2 * C, 2 * G, C // G
    # layer 0: dense (9*C, C2) — cls|box output blocks read the same C input channels
    w0 = jnp.concatenate([p["cls_w"][0].reshape(9 * C, C),
                          p["box_w"][0].reshape(9 * C, C)],
                         axis=1).astype(jnp.bfloat16)
    # layers >= 1: block-diagonal (9*C2, C2) on the fused channel axis, im2col row order
    n_rest = max(L - 1, 1)
    wf = jnp.zeros((n_rest, 3, 3, C2, C2), jnp.float32)
    if L > 1:
        wf = wf.at[:, :, :, :C, :C].set(p["cls_w"][1:])
        wf = wf.at[:, :, :, C:, C:].set(p["box_w"][1:])
    wr = wf.reshape(n_rest, 9 * C2, C2).astype(jnp.bfloat16)
    cb = jnp.concatenate([p["cls_b"], p["box_b"]], axis=1).reshape(L, 1, C2)
    gg = jnp.concatenate([p["cls_g"], p["box_g"]], axis=1).reshape(L, 1, C2)
    gb = jnp.concatenate([p["cls_be"], p["box_be"]], axis=1).reshape(L, 1, C2)
    # fused, lane-padded 1x1 heads: [cls_logits | bbox_pred | centerness | zeros]
    wh = jnp.zeros((C2, OUT_PAD), jnp.float32)
    wh = wh.at[:C, :NC].set(p["wl"])
    wh = wh.at[C:, NC:NC + 2].set(p["wbb"])
    if CENTERNESS_ON_REG:
        wh = wh.at[C:, NC + 2:NC + 3].set(p["wc"])
    else:
        wh = wh.at[:C, NC + 2:NC + 3].set(p["wc"])
    wh = wh.astype(jnp.bfloat16)
    bh = jnp.zeros((1, OUT_PAD), jnp.float32)
    bh = bh.at[:, :NC].set(p["bl"])
    bh = bh.at[:, NC:NC + 2].set(p["bbb"])
    bh = bh.at[:, NC + 2:NC + 3].set(p["bc"])
    # bbox-column mask (columns that get Scale + exp)
    mask = np.zeros((1, OUT_PAD), np.float32)
    mask[0, NC:NC + 2] = 1.0
    # group-membership matrices for the fused GroupNorm (2G groups of Cg channels)
    ch = np.arange(C2)[:, None] // Cg
    gr = np.arange(G2)[None, :]
    A = (ch == gr).astype(np.float32)
    return dict(w0=w0, wr=wr, cb=cb, gg=gg, gb=gb, wh=wh, bh=bh,
                mask=jnp.asarray(mask),
                A=jnp.asarray(A), AT=jnp.asarray(np.ascontiguousarray(A.T)))


# --------------------------------- forward -------------------------------------
def _yooo_head_forward(features_nchw, packed, scales):
    """Mirrors YOOOHead.forward: returns (logits, bbox_reg, centerness) lists."""
    NC = NUM_CLASSES
    scales_flat = scales.reshape(-1)
    used = [l for l in range(len(features_nchw)) if l in USED_LEVEL]
    scale_of = {l: scales_flat[k] for k, l in enumerate(used)}

    # fold same-sized levels into matmul rows; >=2 levels -> 2 parallel grid steps (v7x)
    groups = {}
    for l in used:
        f = features_nchw[l]
        groups.setdefault((f.shape[2], f.shape[3]), []).append(l)

    per_level = {}
    for (H, W), idxs in groups.items():
        nlev = len(idxs)
        N = features_nchw[idxs[0]].shape[0]
        nsteps = 2 if nlev % 2 == 0 else 1
        rows = (nlev // nsteps) * N
        feats = jnp.stack([jnp.transpose(features_nchw[l], (0, 2, 3, 1))
                           for l in idxs], axis=0).astype(jnp.bfloat16)
        feats5 = feats.reshape(nsteps, rows, H, W, IN_CHANNELS)
        sc = jnp.stack([scale_of[l] for l in idxs])                    # (nlev,)
        scale_rows = jnp.repeat(sc, N).reshape(nsteps, rows, 1)
        out = _run_group(feats5, scale_rows, packed)                   # (nsteps, rows, 128)
        out = out.reshape(nlev, N, OUT_PAD)
        for j, l in enumerate(idxs):
            per_level[l] = out[j]

    logits, bbox_reg, centerness = [], [], []
    for l in used:
        o = per_level[l]
        N = o.shape[0]
        logits.append(o[:, :NC].reshape(N, NC, 1, 1))
        bbox_reg.append(o[:, NC:NC + 2].reshape(N, 2, 1, 1))
        centerness.append(o[:, NC + 2:NC + 3].reshape(N, 1, 1, 1))
    return logits, bbox_reg, centerness


yooo_head_forward = jax.jit(_yooo_head_forward)


# ------------------------- deterministic parameter init ------------------------
def init_params(key):
    L, C, NC = NUM_CONVS, IN_CHANNELS, NUM_CLASSES
    k = jax.random.split(key, 5)
    std = 0.01
    bias_value = -math.log((1.0 - PRIOR_PROB) / PRIOR_PROB)
    return dict(
        cls_w=jax.random.normal(k[0], (L, 3, 3, C, C), jnp.float32) * std,  # HWIO per layer
        box_w=jax.random.normal(k[1], (L, 3, 3, C, C), jnp.float32) * std,
        cls_b=jnp.zeros((L, C), jnp.float32),
        box_b=jnp.zeros((L, C), jnp.float32),
        cls_g=jnp.ones((L, C), jnp.float32),
        cls_be=jnp.zeros((L, C), jnp.float32),
        box_g=jnp.ones((L, C), jnp.float32),
        box_be=jnp.zeros((L, C), jnp.float32),
        wl=jax.random.normal(k[2], (C, NC), jnp.float32) * std,
        bl=jnp.full((1, NC), bias_value, jnp.float32),
        wbb=jax.random.normal(k[3], (C, 2), jnp.float32) * std,
        bbb=jnp.zeros((1, 2), jnp.float32),
        wc=jax.random.normal(k[4], (C, 1), jnp.float32) * std,
        bc=jnp.zeros((1, 1), jnp.float32),
        scales=jnp.ones((len(USED_LEVEL), 1, 1), jnp.float32),
    )


# ----------------------------- pure-JAX reference ------------------------------
def _ref_tower(x, w, b, g, be):
    L = w.shape[0]
    for l in range(L):
        x = lax.conv_general_dilated(
            x, w[l], (1, 1), "SAME",
            dimension_numbers=("NHWC", "HWIO", "NHWC")) + b[l]
        N_, H_, W_, C_ = x.shape
        xg = x.reshape(N_, H_ * W_, NUM_GROUPS, C_ // NUM_GROUPS)
        mean = xg.mean(axis=(1, 3), keepdims=True)
        var = ((xg - mean) ** 2).mean(axis=(1, 3), keepdims=True)
        xg = (xg - mean) / jnp.sqrt(var + GN_EPS)
        x = xg.reshape(N_, H_, W_, C_) * g[l] + be[l]
        x = jnp.maximum(x, 0.0)
    return x.mean(axis=(1, 2))                                # (N, C)


def ref_level(feat_nhwc, p, scale):
    cls_feat = _ref_tower(feat_nhwc, p["cls_w"], p["cls_b"], p["cls_g"], p["cls_be"])
    box_feat = _ref_tower(feat_nhwc, p["box_w"], p["box_b"], p["box_g"], p["box_be"])
    logits = cls_feat @ p["wl"] + p["bl"]
    ctr_src = box_feat if CENTERNESS_ON_REG else cls_feat
    ctr = ctr_src @ p["wc"] + p["bc"]
    bbox = jnp.exp((box_feat @ p["wbb"] + p["bbb"]) * scale[0, 0])
    return logits, bbox, ctr


# ------------------------------------ main -------------------------------------
if __name__ == "__main__":
    key = jax.random.PRNGKey(0)
    pkey, fkey = jax.random.split(key)
    params = init_params(pkey)
    packed = pack_params(params)        # hoisted out of the per-forward path

    feats = []
    fkeys = jax.random.split(fkey, len(LEVEL_HW))
    for (H, W), kk in zip(LEVEL_HW, fkeys):
        # PyTorch-style NCHW inputs
        feats.append(jax.random.normal(kk, (BATCH, IN_CHANNELS, H, W), jnp.float32))

    logits, bbox_reg, centerness = yooo_head_forward(feats, packed, params["scales"])
    jax.block_until_ready((logits, bbox_reg, centerness))

    # validate against a pure-JAX f32 reference (bf16 MXU operands -> loose tolerance)
    for k, lvl in enumerate(USED_LEVEL):
        fh = jnp.transpose(feats[lvl], (0, 2, 3, 1))
        rl, rb, rc = ref_level(fh, params, params["scales"][k])
        np.testing.assert_allclose(np.asarray(logits[k]).reshape(BATCH, -1),
                                   np.asarray(rl), rtol=5e-2, atol=1e-2)
        np.testing.assert_allclose(np.asarray(bbox_reg[k]).reshape(BATCH, -1),
                                   np.asarray(rb), rtol=5e-2, atol=1e-2)
        np.testing.assert_allclose(np.asarray(centerness[k]).reshape(BATCH, -1),
                                   np.asarray(rc), rtol=5e-2, atol=1e-2)

    print("KERNEL_OK")
</pallas_src>

<mosaic_0001>
module attributes {stable_mosaic.version = 11 : i64} {
  func.func @kernel(%arg0: i32, %arg1: memref<1x4x8x8x64xbf16, #tpu.memory_space<vmem>>, %arg2: memref<1x4x1xf32, #tpu.memory_space<vmem>>, %arg3: memref<576x128xbf16, #tpu.memory_space<vmem>>, %arg4: memref<1x1152x128xbf16, #tpu.memory_space<vmem>>, %arg5: memref<2x1x128xf32, #tpu.memory_space<vmem>>, %arg6: memref<2x1x128xf32, #tpu.memory_space<vmem>>, %arg7: memref<2x1x128xf32, #tpu.memory_space<vmem>>, %arg8: memref<128x64xf32, #tpu.memory_space<vmem>>, %arg9: memref<64x128xf32, #tpu.memory_space<vmem>>, %arg10: memref<128x128xbf16, #tpu.memory_space<vmem>>, %arg11: memref<1x128xf32, #tpu.memory_space<vmem>>, %arg12: memref<1x128xf32, #tpu.memory_space<vmem>>, %arg13: memref<1x4x128xf32, #tpu.memory_space<vmem>>) attributes {dimension_semantics = [#tpu.dimension_semantics<parallel>], iteration_bounds = array<i64: 2>, scalar_prefetch = 0 : i64, scratch_operands = 0 : i64, tpu.core_type = #tpu.core_type<tc>, window_params = [{transform_indices = @transform_0, window_bounds = array<i64: 1, 4, 8, 8, 64>}, {transform_indices = @transform_1, window_bounds = array<i64: 1, 4, 1>}, {pipeline_mode = #tpu.pipeline_mode<synchronous>, transform_indices = @transform_2, window_bounds = array<i64: 576, 128>}, {pipeline_mode = #tpu.pipeline_mode<synchronous>, transform_indices = @transform_3, window_bounds = array<i64: 1, 1152, 128>}, {pipeline_mode = #tpu.pipeline_mode<synchronous>, transform_indices = @transform_4, window_bounds = array<i64: 2, 1, 128>}, {pipeline_mode = #tpu.pipeline_mode<synchronous>, transform_indices = @transform_5, window_bounds = array<i64: 2, 1, 128>}, {pipeline_mode = #tpu.pipeline_mode<synchronous>, transform_indices = @transform_6, window_bounds = array<i64: 2, 1, 128>}, {pipeline_mode = #tpu.pipeline_mode<synchronous>, transform_indices = @transform_7, window_bounds = array<i64: 128, 64>}, {pipeline_mode = #tpu.pipeline_mode<synchronous>, transform_indices = @transform_8, window_bounds = array<i64: 64, 128>}, {pipeline_mode = #tpu.pipeline_mode<synchronous>, transform_indices = @transform_9, window_bounds = array<i64: 128, 128>}, {pipeline_mode = #tpu.pipeline_mode<synchronous>, transform_indices = @transform_10, window_bounds = array<i64: 1, 128>}, {pipeline_mode = #tpu.pipeline_mode<synchronous>, transform_indices = @transform_11, window_bounds = array<i64: 1, 128>}, {transform_indices = @transform_12, window_bounds = array<i64: 1, 4, 128>}]} {
    %c0 = arith.constant 0 : index
    %c0_0 = arith.constant 0 : index
    %0 = vector.load %arg8[%c0, %c0_0] : memref<128x64xf32, #tpu.memory_space<vmem>>, vector<128x64xf32>
    %c0_1 = arith.constant 0 : index
    %c0_2 = arith.constant 0 : index
    %1 = vector.load %arg9[%c0_1, %c0_2] : memref<64x128xf32, #tpu.memory_space<vmem>>, vector<64x128xf32>
    %c0_3 = arith.constant 0 : index
    %c0_4 = arith.constant 0 : index
    %c0_5 = arith.constant 0 : index
    %c0_6 = arith.constant 0 : index
    %c0_7 = arith.constant 0 : index
    %2 = vector.load %arg1[%c0_3, %c0_4, %c0_5, %c0_6, %c0_7] : memref<1x4x8x8x64xbf16, #tpu.memory_space<vmem>>, vector<1x4x8x8x64xbf16>
    %3 = vector.shape_cast %2 : vector<1x4x8x8x64xbf16> to vector<4x8x8x64xbf16>
    %cst = arith.constant 0.000000e+00 : bf16
    %4 = vector.broadcast %cst : bf16 to vector<4x1x8x64xbf16>
    %5 = tpu.concatenate %4, %3, %4 in 1 : vector<4x1x8x64xbf16>, vector<4x8x8x64xbf16>, vector<4x1x8x64xbf16> -> vector<4x10x8x64xbf16>
    %cst_8 = arith.constant 0.000000e+00 : bf16
    %6 = vector.broadcast %cst_8 : bf16 to vector<4x10x1x64xbf16>
    %7 = tpu.concatenate %6, %5, %6 in 2 : vector<4x10x1x64xbf16>, vector<4x10x8x64xbf16>, vector<4x10x1x64xbf16> -> vector<4x10x10x64xbf16>
    %8 = vector.extract_strided_slice %7 {offsets = [0, 0, 0, 0], sizes = [4, 8, 8, 64], strides = [1, 1, 1, 1]} : vector<4x10x10x64xbf16> to vector<4x8x8x64xbf16>
    %9 = vector.extract_strided_slice %7 {offsets = [0, 0, 1, 0], sizes = [4, 8, 8, 64], strides = [1, 1, 1, 1]} : vector<4x10x10x64xbf16> to vector<4x8x8x64xbf16>
    %10 = vector.extract_strided_slice %7 {offsets = [0, 0, 2, 0], sizes = [4, 8, 8, 64], strides = [1, 1, 1, 1]} : vector<4x10x10x64xbf16> to vector<4x8x8x64xbf16>
    %11 = vector.extract_strided_slice %7 {offsets = [0, 1, 0, 0], sizes = [4, 8, 8, 64], strides = [1, 1, 1, 1]} : vector<4x10x10x64xbf16> to vector<4x8x8x64xbf16>
    %12 = vector.extract_strided_slice %7 {offsets = [0, 1, 1, 0], sizes = [4, 8, 8, 64], strides = [1, 1, 1, 1]} : vector<4x10x10x64xbf16> to vector<4x8x8x64xbf16>
    %13 = vector.extract_strided_slice %7 {offsets = [0, 1, 2, 0], sizes = [4, 8, 8, 64], strides = [1, 1, 1, 1]} : vector<4x10x10x64xbf16> to vector<4x8x8x64xbf16>
    %14 = vector.extract_strided_slice %7 {offsets = [0, 2, 0, 0], sizes = [4, 8, 8, 64], strides = [1, 1, 1, 1]} : vector<4x10x10x64xbf16> to vector<4x8x8x64xbf16>
    %15 = vector.extract_strided_slice %7 {offsets = [0, 2, 1, 0], sizes = [4, 8, 8, 64], strides = [1, 1, 1, 1]} : vector<4x10x10x64xbf16> to vector<4x8x8x64xbf16>
    %16 = vector.extract_strided_slice %7 {offsets = [0, 2, 2, 0], sizes = [4, 8, 8, 64], strides = [1, 1, 1, 1]} : vector<4x10x10x64xbf16> to vector<4x8x8x64xbf16>
    %17 = tpu.concatenate %8, %9, %10, %11, %12, %13, %14, %15, %16 in 3 : vector<4x8x8x64xbf16>, vector<4x8x8x64xbf16>, vector<4x8x8x64xbf16>, vector<4x8x8x64xbf16>, vector<4x8x8x64xbf16>, vector<4x8x8x64xbf16>, vector<4x8x8x64xbf16>, vector<4x8x8x64xbf16>, vector<4x8x8x64xbf16> -> vector<4x8x8x576xbf16>
    %18 = vector.shape_cast %17 : vector<4x8x8x576xbf16> to vector<256x576xbf16>
    %c0_9 = arith.constant 0 : index
    %c0_10 = arith.constant 0 : index
    %19 = vector.load %arg3[%c0_9, %c0_10] : memref<576x128xbf16, #tpu.memory_space<vmem>>, vector<576x128xbf16>
    %cst_11 = arith.constant dense<0.000000e+00> : vector<256x128xf32>
    %20 = tpu.matmul %18, %19, %cst_11 {dimension_numbers = #tpu.dot_dimension_numbers<[1], [0], [0], [1], [0, 0, 1, 1], [], []>} : vector<256x576xbf16>, vector<576x128xbf16>, vector<256x128xf32> -> vector<256x128xf32>
    %c0_12 = arith.constant 0 : index
    %c0_13 = arith.constant 0 : index
    %c0_14 = arith.constant 0 : index
    %21 = vector.load %arg5[%c0_12, %c0_13, %c0_14] : memref<2x1x128xf32, #tpu.memory_space<vmem>>, vector<1x1x128xf32>
    %22 = vector.shape_cast %21 : vector<1x1x128xf32> to vector<1x128xf32>
    %23 = vector.broadcast %22 : vector<1x128xf32> to vector<256x128xf32>
    %24 = arith.addf %20, %23 : vector<256x128xf32>
    %25 = vector.shape_cast %24 : vector<256x128xf32> to vector<4x64x128xf32>
    %cst_15 = arith.constant dense<0.000000e+00> : vector<4x128xf32>
    %26 = vector.multi_reduction <add>, %25, %cst_15 [1] : vector<4x64x128xf32> to vector<4x128xf32>
    %27 = arith.mulf %25, %25 : vector<4x64x128xf32>
    %cst_16 = arith.constant dense<0.000000e+00> : vector<4x128xf32>
    %28 = vector.multi_reduction <add>, %27, %cst_16 [1] : vector<4x64x128xf32> to vector<4x128xf32>
    %29 = tpu.concatenate %26, %28 in 0 : vector<4x128xf32>, vector<4x128xf32> -> vector<8x128xf32>
    %cst_17 = arith.constant dense<0.000000e+00> : vector<8x64xf32>
    %30 = tpu.matmul %29, %0, %cst_17 {dimension_numbers = #tpu.dot_dimension_numbers<[1], [0], [0], [1], [0, 0, 1, 1], [], []>} : vector<8x128xf32>, vector<128x64xf32>, vector<8x64xf32> -> vector<8x64xf32>
    %31 = vector.extract_strided_slice %30 {offsets = [0, 0], sizes = [4, 64], strides = [1, 1]} : vector<8x64xf32> to vector<4x64xf32>
    %cst_18 = arith.constant 7.812500e-03 : f32
    %32 = vector.broadcast %cst_18 : f32 to vector<4x64xf32>
    %33 = arith.mulf %31, %32 : vector<4x64xf32>
    %34 = vector.extract_strided_slice %30 {offsets = [4, 0], sizes = [4, 64], strides = [1, 1]} : vector<8x64xf32> to vector<4x64xf32>
    %cst_19 = arith.constant 7.812500e-03 : f32
    %35 = vector.broadcast %cst_19 : f32 to vector<4x64xf32>
    %36 = arith.mulf %34, %35 : vector<4x64xf32>
    %37 = arith.mulf %33, %33 : vector<4x64xf32>
    %38 = arith.subf %36, %37 : vector<4x64xf32>
    %cst_20 = arith.constant 9.99999974E-6 : f32
    %39 = vector.broadcast %cst_20 : f32 to vector<4x64xf32>
    %40 = arith.addf %38, %39 : vector<4x64xf32>
    %41 = math.rsqrt %40 : vector<4x64xf32>
    %42 = tpu.concatenate %33, %41 in 0 : vector<4x64xf32>, vector<4x64xf32> -> vector<8x64xf32>
    %cst_21 = arith.constant dense<0.000000e+00> : vector<8x128xf32>
    %43 = tpu.matmul %42, %1, %cst_21 {dimension_numbers = #tpu.dot_dimension_numbers<[1], [0], [0], [1], [0, 0, 1, 1], [], []>} : vector<8x64xf32>, vector<64x128xf32>, vector<8x128xf32> -> vector<8x128xf32>
    %44 = vector.extract_strided_slice %43 {offsets = [4, 0], sizes = [4, 128], strides = [1, 1]} : vector<8x128xf32> to vector<4x128xf32>
    %c0_22 = arith.constant 0 : index
    %c0_23 = arith.constant 0 : index
    %c0_24 = arith.constant 0 : index
    %45 = vector.load %arg6[%c0_22, %c0_23, %c0_24] : memref<2x1x128xf32, #tpu.memory_space<vmem>>, vector<1x1x128xf32>
    %46 = vector.shape_cast %45 : vector<1x1x128xf32> to vector<1x128xf32>
    %47 = vector.broadcast %46 : vector<1x128xf32> to vector<4x128xf32>
    %48 = arith.mulf %44, %47 : vector<4x128xf32>
    %c0_25 = arith.constant 0 : index
    %c0_26 = arith.constant 0 : index
    %c0_27 = arith.constant 0 : index
    %49 = vector.load %arg7[%c0_25, %c0_26, %c0_27] : memref<2x1x128xf32, #tpu.memory_space<vmem>>, vector<1x1x128xf32>
    %50 = vector.shape_cast %49 : vector<1x1x128xf32> to vector<1x128xf32>
    %51 = vector.extract_strided_slice %43 {offsets = [0, 0], sizes = [4, 128], strides = [1, 1]} : vector<8x128xf32> to vector<4x128xf32>
    %52 = arith.mulf %51, %48 : vector<4x128xf32>
    %53 = vector.broadcast %50 : vector<1x128xf32> to vector<4x128xf32>
    %54 = arith.subf %53, %52 : vector<4x128xf32>
    %55 = vector.shape_cast %48 : vector<4x128xf32> to vector<4x1x128xf32>
    %56 = vector.broadcast %55 : vector<4x1x128xf32> to vector<4x64x128xf32>
    %57 = arith.mulf %25, %56 : vector<4x64x128xf32>
    %58 = vector.shape_cast %54 : vector<4x128xf32> to vector<4x1x128xf32>
    %59 = vector.broadcast %58 : vector<4x1x128xf32> to vector<4x64x128xf32>
    %60 = arith.addf %57, %59 : vector<4x64x128xf32>
    %cst_28 = arith.constant 0.000000e+00 : f32
    %61 = vector.broadcast %cst_28 : f32 to vector<4x64x128xf32>
    %62 = arith.maximumf %60, %61 : vector<4x64x128xf32>
    %63 = vector.shape_cast %62 : vector<4x64x128xf32> to vector<4x8x8x128xf32>
    %64 = arith.truncf %63 : vector<4x8x8x128xf32> to vector<4x8x8x128xbf16>
    %cst_29 = arith.constant 0.000000e+00 : bf16
    %65 = vector.broadcast %cst_29 : bf16 to vector<4x1x8x128xbf16>
    %66 = tpu.concatenate %65, %64, %65 in 1 : vector<4x1x8x128xbf16>, vector<4x8x8x128xbf16>, vector<4x1x8x128xbf16> -> vector<4x10x8x128xbf16>
    %cst_30 = arith.constant 0.000000e+00 : bf16
    %67 = vector.broadcast %cst_30 : bf16 to vector<4x10x1x128xbf16>
    %68 = tpu.concatenate %67, %66, %67 in 2 : vector<4x10x1x128xbf16>, vector<4x10x8x128xbf16>, vector<4x10x1x128xbf16> -> vector<4x10x10x128xbf16>
    %69 = vector.extract_strided_slice %68 {offsets = [0, 0, 0, 0], sizes = [4, 8, 8, 128], strides = [1, 1, 1, 1]} : vector<4x10x10x128xbf16> to vector<4x8x8x128xbf16>
    %70 = vector.extract_strided_slice %68 {offsets = [0, 0, 1, 0], sizes = [4, 8, 8, 128], strides = [1, 1, 1, 1]} : vector<4x10x10x128xbf16> to vector<4x8x8x128xbf16>
    %71 = vector.extract_strided_slice %68 {offsets = [0, 0, 2, 0], sizes = [4, 8, 8, 128], strides = [1, 1, 1, 1]} : vector<4x10x10x128xbf16> to vector<4x8x8x128xbf16>
    %72 = vector.extract_strided_slice %68 {offsets = [0, 1, 0, 0], sizes = [4, 8, 8, 128], strides = [1, 1, 1, 1]} : vector<4x10x10x128xbf16> to vector<4x8x8x128xbf16>
    %73 = vector.extract_strided_slice %68 {offsets = [0, 1, 1, 0], sizes = [4, 8, 8, 128], strides = [1, 1, 1, 1]} : vector<4x10x10x128xbf16> to vector<4x8x8x128xbf16>
    %74 = vector.extract_strided_slice %68 {offsets = [0, 1, 2, 0], sizes = [4, 8, 8, 128], strides = [1, 1, 1, 1]} : vector<4x10x10x128xbf16> to vector<4x8x8x128xbf16>
    %75 = vector.extract_strided_slice %68 {offsets = [0, 2, 0, 0], sizes = [4, 8, 8, 128], strides = [1, 1, 1, 1]} : vector<4x10x10x128xbf16> to vector<4x8x8x128xbf16>
    %76 = vector.extract_strided_slice %68 {offsets = [0, 2, 1, 0], sizes = [4, 8, 8, 128], strides = [1, 1, 1, 1]} : vector<4x10x10x128xbf16> to vector<4x8x8x128xbf16>
    %77 = vector.extract_strided_slice %68 {offsets = [0, 2, 2, 0], sizes = [4, 8, 8, 128], strides = [1, 1, 1, 1]} : vector<4x10x10x128xbf16> to vector<4x8x8x128xbf16>
    %78 = tpu.concatenate %69, %70, %71, %72, %73, %74, %75, %76, %77 in 3 : vector<4x8x8x128xbf16>, vector<4x8x8x128xbf16>, vector<4x8x8x128xbf16>, vector<4x8x8x128xbf16>, vector<4x8x8x128xbf16>, vector<4x8x8x128xbf16>, vector<4x8x8x128xbf16>, vector<4x8x8x128xbf16>, vector<4x8x8x128xbf16> -> vector<4x8x8x1152xbf16>
    %79 = vector.shape_cast %78 : vector<4x8x8x1152xbf16> to vector<256x1152xbf16>
    %c0_31 = arith.constant 0 : index
    %c0_32 = arith.constant 0 : index
    %c0_33 = arith.constant 0 : index
    %80 = vector.load %arg4[%c0_31, %c0_32, %c0_33] : memref<1x1152x128xbf16, #tpu.memory_space<vmem>>, vector<1x1152x128xbf16>
    %81 = vector.shape_cast %80 : vector<1x1152x128xbf16> to vector<1152x128xbf16>
    %cst_34 = arith.constant dense<0.000000e+00> : vector<256x128xf32>
    %82 = tpu.matmul %79, %81, %cst_34 {dimension_numbers = #tpu.dot_dimension_numbers<[1], [0], [0], [1], [0, 0, 1, 1], [], []>} : vector<256x1152xbf16>, vector<1152x128xbf16>, vector<256x128xf32> -> vector<256x128xf32>
    %c1 = arith.constant 1 : index
    %c0_35 = arith.constant 0 : index
    %c0_36 = arith.constant 0 : index
    %83 = vector.load %arg5[%c1, %c0_35, %c0_36] : memref<2x1x128xf32, #tpu.memory_space<vmem>>, vector<1x1x128xf32>
    %84 = vector.shape_cast %83 : vector<1x1x128xf32> to vector<1x128xf32>
    %85 = vector.broadcast %84 : vector<1x128xf32> to vector<256x128xf32>
    %86 = arith.addf %82, %85 : vector<256x128xf32>
    %87 = vector.shape_cast %86 : vector<256x128xf32> to vector<4x64x128xf32>
    %cst_37 = arith.constant dense<0.000000e+00> : vector<4x128xf32>
    %88 = vector.multi_reduction <add>, %87, %cst_37 [1] : vector<4x64x128xf32> to vector<4x128xf32>
    %89 = arith.mulf %87, %87 : vector<4x64x128xf32>
    %cst_38 = arith.constant dense<0.000000e+00> : vector<4x128xf32>
    %90 = vector.multi_reduction <add>, %89, %cst_38 [1] : vector<4x64x128xf32> to vector<4x128xf32>
    %91 = tpu.concatenate %88, %90 in 0 : vector<4x128xf32>, vector<4x128xf32> -> vector<8x128xf32>
    %cst_39 = arith.constant dense<0.000000e+00> : vector<8x64xf32>
    %92 = tpu.matmul %91, %0, %cst_39 {dimension_numbers = #tpu.dot_dimension_numbers<[1], [0], [0], [1], [0, 0, 1, 1], [], []>} : vector<8x128xf32>, vector<128x64xf32>, vector<8x64xf32> -> vector<8x64xf32>
    %93 = vector.extract_strided_slice %92 {offsets = [0, 0], sizes = [4, 64], strides = [1, 1]} : vector<8x64xf32> to vector<4x64xf32>
    %cst_40 = arith.constant 7.812500e-03 : f32
    %94 = vector.broadcast %cst_40 : f32 to vector<4x64xf32>
    %95 = arith.mulf %93, %94 : vector<4x64xf32>
    %96 = vector.extract_strided_slice %92 {offsets = [4, 0], sizes = [4, 64], strides = [1, 1]} : vector<8x64xf32> to vector<4x64xf32>
    %cst_41 = arith.constant 7.812500e-03 : f32
    %97 = vector.broadcast %cst_41 : f32 to vector<4x64xf32>
    %98 = arith.mulf %96, %97 : vector<4x64xf32>
    %99 = arith.mulf %95, %95 : vector<4x64xf32>
    %100 = arith.subf %98, %99 : vector<4x64xf32>
    %cst_42 = arith.constant 9.99999974E-6 : f32
    %101 = vector.broadcast %cst_42 : f32 to vector<4x64xf32>
    %102 = arith.addf %100, %101 : vector<4x64xf32>
    %103 = math.rsqrt %102 : vector<4x64xf32>
    %104 = tpu.concatenate %95, %103 in 0 : vector<4x64xf32>, vector<4x64xf32> -> vector<8x64xf32>
    %cst_43 = arith.constant dense<0.000000e+00> : vector<8x128xf32>
    %105 = tpu.matmul %104, %1, %cst_43 {dimension_numbers = #tpu.dot_dimension_numbers<[1], [0], [0], [1], [0, 0, 1, 1], [], []>} : vector<8x64xf32>, vector<64x128xf32>, vector<8x128xf32> -> vector<8x128xf32>
    %106 = vector.extract_strided_slice %105 {offsets = [4, 0], sizes = [4, 128], strides = [1, 1]} : vector<8x128xf32> to vector<4x128xf32>
    %c1_44 = arith.constant 1 : index
    %c0_45 = arith.constant 0 : index
    %c0_46 = arith.constant 0 : index
    %107 = vector.load %arg6[%c1_44, %c0_45, %c0_46] : memref<2x1x128xf32, #tpu.memory_space<vmem>>, vector<1x1x128xf32>
    %108 = vector.shape_cast %107 : vector<1x1x128xf32> to vector<1x128xf32>
    %109 = vector.broadcast %108 : vector<1x128xf32> to vector<4x128xf32>
    %110 = arith.mulf %106, %109 : vector<4x128xf32>
    %c1_47 = arith.constant 1 : index
    %c0_48 = arith.constant 0 : index
    %c0_49 = arith.constant 0 : index
    %111 = vector.load %arg7[%c1_47, %c0_48, %c0_49] : memref<2x1x128xf32, #tpu.memory_space<vmem>>, vector<1x1x128xf32>
    %112 = vector.shape_cast %111 : vector<1x1x128xf32> to vector<1x128xf32>
    %113 = vector.extract_strided_slice %105 {offsets = [0, 0], sizes = [4, 128], strides = [1, 1]} : vector<8x128xf32> to vector<4x128xf32>
    %114 = arith.mulf %113, %110 : vector<4x128xf32>
    %115 = vector.broadcast %112 : vector<1x128xf32> to vector<4x128xf32>
    %116 = arith.subf %115, %114 : vector<4x128xf32>
    %117 = vector.shape_cast %110 : vector<4x128xf32> to vector<4x1x128xf32>
    %118 = vector.broadcast %117 : vector<4x1x128xf32> to vector<4x64x128xf32>
    %119 = arith.mulf %87, %118 : vector<4x64x128xf32>
    %120 = vector.shape_cast %116 : vector<4x128xf32> to vector<4x1x128xf32>
    %121 = vector.broadcast %120 : vector<4x1x128xf32> to vector<4x64x128xf32>
    %122 = arith.addf %119, %121 : vector<4x64x128xf32>
    %cst_50 = arith.constant 0.000000e+00 : f32
    %123 = vector.broadcast %cst_50 : f32 to vector<4x64x128xf32>
    %124 = arith.maximumf %122, %123 : vector<4x64x128xf32>
    %cst_51 = arith.constant dense<0.000000e+00> : vector<4x128xf32>
    %125 = vector.multi_reduction <add>, %124, %cst_51 [1] : vector<4x64x128xf32> to vector<4x128xf32>
    %cst_52 = arith.constant 6.400000e+01 : f32
    %126 = vector.broadcast %cst_52 : f32 to vector<4x128xf32>
    %127 = arith.divf %125, %126 : vector<4x128xf32>
    %128 = arith.truncf %127 : vector<4x128xf32> to vector<4x128xbf16>
    %c0_53 = arith.constant 0 : index
    %c0_54 = arith.constant 0 : index
    %129 = vector.load %arg10[%c0_53, %c0_54] : memref<128x128xbf16, #tpu.memory_space<vmem>>, vector<128x128xbf16>
    %cst_55 = arith.constant dense<0.000000e+00> : vector<4x128xf32>
    %130 = tpu.matmul %128, %129, %cst_55 {dimension_numbers = #tpu.dot_dimension_numbers<[1], [0], [0], [1], [0, 0, 1, 1], [], []>} : vector<4x128xbf16>, vector<128x128xbf16>, vector<4x128xf32> -> vector<4x128xf32>
    %c0_56 = arith.constant 0 : index
    %c0_57 = arith.constant 0 : index
    %131 = vector.load %arg11[%c0_56, %c0_57] : memref<1x128xf32, #tpu.memory_space<vmem>>, vector<1x128xf32>
    %132 = vector.broadcast %131 : vector<1x128xf32> to vector<4x128xf32>
    %133 = arith.addf %130, %132 : vector<4x128xf32>
    %c0_58 = arith.constant 0 : index
    %c0_59 = arith.constant 0 : index
    %134 = vector.load %arg12[%c0_58, %c0_59] : memref<1x128xf32, #tpu.memory_space<vmem>>, vector<1x128xf32>
    %c0_60 = arith.constant 0 : index
    %c0_61 = arith.constant 0 : index
    %c0_62 = arith.constant 0 : index
    %135 = vector.load %arg2[%c0_60, %c0_61, %c0_62] : memref<1x4x1xf32, #tpu.memory_space<vmem>>, vector<1x4x1xf32>
    %136 = vector.shape_cast %135 : vector<1x4x1xf32> to vector<4x1xf32>
    %137 = vector.broadcast %134 : vector<1x128xf32> to vector<4x128xf32>
    %138 = vector.broadcast %136 : vector<4x1xf32> to vector<4x128xf32>
    %139 = arith.mulf %137, %138 : vector<4x128xf32>
    %140 = arith.mulf %133, %139 : vector<4x128xf32>
    %141 = math.exp %140 : vector<4x128xf32>
    %142 = vector.broadcast %134 : vector<1x128xf32> to vector<4x128xf32>
    %143 = arith.mulf %142, %141 : vector<4x128xf32>
    %cst_63 = arith.constant 1.000000e+00 : f32
    %144 = vector.broadcast %cst_63 : f32 to vector<1x128xf32>
    %145 = arith.subf %144, %134 : vector<1x128xf32>
    %146 = vector.broadcast %145 : vector<1x128xf32> to vector<4x128xf32>
    %147 = arith.mulf %146, %133 : vector<4x128xf32>
    %148 = arith.addf %143, %147 : vector<4x128xf32>
    %c0_64 = arith.constant 0 : index
    %c0_65 = arith.constant 0 : index
    %c0_66 = arith.constant 0 : index
    %149 = vector.load %arg13[%c0_64, %c0_65, %c0_66] : memref<1x4x128xf32, #tpu.memory_space<vmem>>, vector<1x4x128xf32>
    %150 = vector.shape_cast %149 : vector<1x4x128xf32> to vector<4x128xf32>
    %151 = vector.shape_cast %148 : vector<4x128xf32> to vector<1x4x128xf32>
    tpu.vector_store %arg13[%c0_64, %c0_65, %c0_66], %151 {strides = array<i32>} : memref<1x4x128xf32, #tpu.memory_space<vmem>>, vector<1x4x128xf32>,
    return
  }
  func.func @transform_0(%arg0: i32) -> (i32, i32, i32, i32, i32) {
    %c0_i32 = arith.constant 0 : i32
    %c0_i32_0 = arith.constant 0 : i32
    %c0_i32_1 = arith.constant 0 : i32
    %c0_i32_2 = arith.constant 0 : i32
    %c0_i32_3 = arith.constant 0 : i32
    return %arg0, %c0_i32, %c0_i32_0, %c0_i32_1, %c0_i32_2 : i32, i32, i32, i32, i32
  }
  func.func @transform_1(%arg0: i32) -> (i32, i32, i32) {
    %c0_i32 = arith.constant 0 : i32
    %c0_i32_0 = arith.constant 0 : i32
    %c0_i32_1 = arith.constant 0 : i32
    return %arg0, %c0_i32, %c0_i32_0 : i32, i32, i32
  }
  func.func @transform_2(%arg0: i32) -> (i32, i32) {
    %c0_i32 = arith.constant 0 : i32
    %c0_i32_0 = arith.constant 0 : i32
    %c0_i32_1 = arith.constant 0 : i32
    return %c0_i32, %c0_i32_0 : i32, i32
  }
  func.func @transform_3(%arg0: i32) -> (i32, i32, i32) {
    %c0_i32 = arith.constant 0 : i32
    %c0_i32_0 = arith.constant 0 : i32
    %c0_i32_1 = arith.constant 0 : i32
    %c0_i32_2 = arith.constant 0 : i32
    return %c0_i32, %c0_i32_0, %c0_i32_1 : i32, i32, i32
  }
  func.func @transform_4(%arg0: i32) -> (i32, i32, i32) {
    %c0_i32 = arith.constant 0 : i32
    %c0_i32_0 = arith.constant 0 : i32
    %c0_i32_1 = arith.constant 0 : i32
    %c0_i32_2 = arith.constant 0 : i32
    return %c0_i32, %c0_i32_0, %c0_i32_1 : i32, i32, i32
  }
  func.func @transform_5(%arg0: i32) -> (i32, i32, i32) {
    %c0_i32 = arith.constant 0 : i32
    %c0_i32_0 = arith.constant 0 : i32
    %c0_i32_1 = arith.constant 0 : i32
    %c0_i32_2 = arith.constant 0 : i32
    return %c0_i32, %c0_i32_0, %c0_i32_1 : i32, i32, i32
  }
  func.func @transform_6(%arg0: i32) -> (i32, i32, i32) {
    %c0_i32 = arith.constant 0 : i32
    %c0_i32_0 = arith.constant 0 : i32
    %c0_i32_1 = arith.constant 0 : i32
    %c0_i32_2 = arith.constant 0 : i32
    return %c0_i32, %c0_i32_0, %c0_i32_1 : i32, i32, i32
  }
  func.func @transform_7(%arg0: i32) -> (i32, i32) {
    %c0_i32 = arith.constant 0 : i32
    %c0_i32_0 = arith.constant 0 : i32
    %c0_i32_1 = arith.constant 0 : i32
    return %c0_i32, %c0_i32_0 : i32, i32
  }
  func.func @transform_8(%arg0: i32) -> (i32, i32) {
    %c0_i32 = arith.constant 0 : i32
    %c0_i32_0 = arith.constant 0 : i32
    %c0_i32_1 = arith.constant 0 : i32
    return %c0_i32, %c0_i32_0 : i32, i32
  }
  func.func @transform_9(%arg0: i32) -> (i32, i32) {
    %c0_i32 = arith.constant 0 : i32
    %c0_i32_0 = arith.constant 0 : i32
    %c0_i32_1 = arith.constant 0 : i32
    return %c0_i32, %c0_i32_0 : i32, i32
  }
  func.func @transform_10(%arg0: i32) -> (i32, i32) {
    %c0_i32 = arith.constant 0 : i32
    %c0_i32_0 = arith.constant 0 : i32
    %c0_i32_1 = arith.constant 0 : i32
    return %c0_i32, %c0_i32_0 : i32, i32
  }
  func.func @transform_11(%arg0: i32) -> (i32, i32) {
    %c0_i32 = arith.constant 0 : i32
    %c0_i32_0 = arith.constant 0 : i32
    %c0_i32_1 = arith.constant 0 : i32
    return %c0_i32, %c0_i32_0 : i32, i32
  }
  func.func @transform_12(%arg0: i32) -> (i32, i32, i32) {
    %c0_i32 = arith.constant 0 : i32
    %c0_i32_0 = arith.constant 0 : i32
    %c0_i32_1 = arith.constant 0 : i32
    return %arg0, %c0_i32, %c0_i32_0 : i32, i32, i32
  }
}

module attributes {stable_mosaic.version = 11 : i64} {
  func.func @kernel(%arg0: i32, %arg1: memref<1x2x16x16x64xbf16, #tpu.memory_space<vmem>>, %arg2: memref<1x2x1xf32, #tpu.memory_space<vmem>>, %arg3: memref<576x128xbf16, #tpu.memory_space<vmem>>, %arg4: memref<1x1152x128xbf16, #tpu.memory_space<vmem>>, %arg5: memref<2x1x128xf32, #tpu.memory_space<vmem>>, %arg6: memref<2x1x128xf32, #tpu.memory_space<vmem>>, %arg7: memref<2x1x128xf32, #tpu.memory_space<vmem>>, %arg8: memref<128x64xf32, #tpu.memory_space<vmem>>, %arg9: memref<64x128xf32, #tpu.memory_space<vmem>>, %arg10: memref<128x128xbf16, #tpu.memory_space<vmem>>, %arg11: memref<1x128xf32, #tpu.memory_space<vmem>>, %arg12: memref<1x128xf32, #tpu.memory_space<vmem>>, %arg13: memref<1x2x128xf32, #tpu.memory_space<vmem>>) attributes {dimension_semantics = [#tpu.dimension_semantics<parallel>], iteration_bounds = array<i64: 1>, scalar_prefetch = 0 : i64, scratch_operands = 0 : i64, tpu.core_type = #tpu.core_type<tc>, window_params = [{transform_indices = @transform_0, window_bounds = array<i64: 1, 2, 16, 16, 64>}, {transform_indices = @transform_1, window_bounds = array<i64: 1, 2, 1>}, {pipeline_mode = #tpu.pipeline_mode<synchronous>, transform_indices = @transform_2, window_bounds = array<i64: 576, 128>}, {pipeline_mode = #tpu.pipeline_mode<synchronous>, transform_indices = @transform_3, window_bounds = array<i64: 1, 1152, 128>}, {pipeline_mode = #tpu.pipeline_mode<synchronous>, transform_indices = @transform_4, window_bounds = array<i64: 2, 1, 128>}, {pipeline_mode = #tpu.pipeline_mode<synchronous>, transform_indices = @transform_5, window_bounds = array<i64: 2, 1, 128>}, {pipeline_mode = #tpu.pipeline_mode<synchronous>, transform_indices = @transform_6, window_bounds = array<i64: 2, 1, 128>}, {pipeline_mode = #tpu.pipeline_mode<synchronous>, transform_indices = @transform_7, window_bounds = array<i64: 128, 64>}, {pipeline_mode = #tpu.pipeline_mode<synchronous>, transform_indices = @transform_8, window_bounds = array<i64: 64, 128>}, {pipeline_mode = #tpu.pipeline_mode<synchronous>, transform_indices = @transform_9, window_bounds = array<i64: 128, 128>}, {pipeline_mode = #tpu.pipeline_mode<synchronous>, transform_indices = @transform_10, window_bounds = array<i64: 1, 128>}, {pipeline_mode = #tpu.pipeline_mode<synchronous>, transform_indices = @transform_11, window_bounds = array<i64: 1, 128>}, {transform_indices = @transform_12, window_bounds = array<i64: 1, 2, 128>}]} {
    %c0 = arith.constant 0 : index
    %c0_0 = arith.constant 0 : index
    %0 = vector.load %arg8[%c0, %c0_0] : memref<128x64xf32, #tpu.memory_space<vmem>>, vector<128x64xf32>
    %c0_1 = arith.constant 0 : index
    %c0_2 = arith.constant 0 : index
    %1 = vector.load %arg9[%c0_1, %c0_2] : memref<64x128xf32, #tpu.memory_space<vmem>>, vector<64x128xf32>
    %c0_3 = arith.constant 0 : index
    %c0_4 = arith.constant 0 : index
    %c0_5 = arith.constant 0 : index
    %c0_6 = arith.constant 0 : index
    %c0_7 = arith.constant 0 : index
    %2 = vector.load %arg1[%c0_3, %c0_4, %c0_5, %c0_6, %c0_7] : memref<1x2x16x16x64xbf16, #tpu.memory_space<vmem>>, vector<1x2x16x16x64xbf16>
    %3 = vector.shape_cast %2 : vector<1x2x16x16x64xbf16> to vector<2x16x16x64xbf16>
    %cst = arith.constant 0.000000e+00 : bf16
    %4 = vector.broadcast %cst : bf16 to vector<2x1x16x64xbf16>
    %5 = tpu.concatenate %4, %3, %4 in 1 : vector<2x1x16x64xbf16>, vector<2x16x16x64xbf16>, vector<2x1x16x64xbf16> -> vector<2x18x16x64xbf16>
    %cst_8 = arith.constant 0.000000e+00 : bf16
    %6 = vector.broadcast %cst_8 : bf16 to vector<2x18x1x64xbf16>
    %7 = tpu.concatenate %6, %5, %6 in 2 : vector<2x18x1x64xbf16>, vector<2x18x16x64xbf16>, vector<2x18x1x64xbf16> -> vector<2x18x18x64xbf16>
    %8 = vector.extract_strided_slice %7 {offsets = [0, 0, 0, 0], sizes = [2, 16, 16, 64], strides = [1, 1, 1, 1]} : vector<2x18x18x64xbf16> to vector<2x16x16x64xbf16>
    %9 = vector.extract_strided_slice %7 {offsets = [0, 0, 1, 0], sizes = [2, 16, 16, 64], strides = [1, 1, 1, 1]} : vector<2x18x18x64xbf16> to vector<2x16x16x64xbf16>
    %10 = vector.extract_strided_slice %7 {offsets = [0, 0, 2, 0], sizes = [2, 16, 16, 64], strides = [1, 1, 1, 1]} : vector<2x18x18x64xbf16> to vector<2x16x16x64xbf16>
    %11 = vector.extract_strided_slice %7 {offsets = [0, 1, 0, 0], sizes = [2, 16, 16, 64], strides = [1, 1, 1, 1]} : vector<2x18x18x64xbf16> to vector<2x16x16x64xbf16>
    %12 = vector.extract_strided_slice %7 {offsets = [0, 1, 1, 0], sizes = [2, 16, 16, 64], strides = [1, 1, 1, 1]} : vector<2x18x18x64xbf16> to vector<2x16x16x64xbf16>
    %13 = vector.extract_strided_slice %7 {offsets = [0, 1, 2, 0], sizes = [2, 16, 16, 64], strides = [1, 1, 1, 1]} : vector<2x18x18x64xbf16> to vector<2x16x16x64xbf16>
    %14 = vector.extract_strided_slice %7 {offsets = [0, 2, 0, 0], sizes = [2, 16, 16, 64], strides = [1, 1, 1, 1]} : vector<2x18x18x64xbf16> to vector<2x16x16x64xbf16>
    %15 = vector.extract_strided_slice %7 {offsets = [0, 2, 1, 0], sizes = [2, 16, 16, 64], strides = [1, 1, 1, 1]} : vector<2x18x18x64xbf16> to vector<2x16x16x64xbf16>
    %16 = vector.extract_strided_slice %7 {offsets = [0, 2, 2, 0], sizes = [2, 16, 16, 64], strides = [1, 1, 1, 1]} : vector<2x18x18x64xbf16> to vector<2x16x16x64xbf16>
    %17 = tpu.concatenate %8, %9, %10, %11, %12, %13, %14, %15, %16 in 3 : vector<2x16x16x64xbf16>, vector<2x16x16x64xbf16>, vector<2x16x16x64xbf16>, vector<2x16x16x64xbf16>, vector<2x16x16x64xbf16>, vector<2x16x16x64xbf16>, vector<2x16x16x64xbf16>, vector<2x16x16x64xbf16>, vector<2x16x16x64xbf16> -> vector<2x16x16x576xbf16>
    %18 = vector.shape_cast %17 : vector<2x16x16x576xbf16> to vector<512x576xbf16>
    %c0_9 = arith.constant 0 : index
    %c0_10 = arith.constant 0 : index
    %19 = vector.load %arg3[%c0_9, %c0_10] : memref<576x128xbf16, #tpu.memory_space<vmem>>, vector<576x128xbf16>
    %cst_11 = arith.constant dense<0.000000e+00> : vector<512x128xf32>
    %20 = tpu.matmul %18, %19, %cst_11 {dimension_numbers = #tpu.dot_dimension_numbers<[1], [0], [0], [1], [0, 0, 1, 1], [], []>} : vector<512x576xbf16>, vector<576x128xbf16>, vector<512x128xf32> -> vector<512x128xf32>
    %c0_12 = arith.constant 0 : index
    %c0_13 = arith.constant 0 : index
    %c0_14 = arith.constant 0 : index
    %21 = vector.load %arg5[%c0_12, %c0_13, %c0_14] : memref<2x1x128xf32, #tpu.memory_space<vmem>>, vector<1x1x128xf32>
    %22 = vector.shape_cast %21 : vector<1x1x128xf32> to vector<1x128xf32>
    %23 = vector.broadcast %22 : vector<1x128xf32> to vector<512x128xf32>
    %24 = arith.addf %20, %23 : vector<512x128xf32>
    %25 = vector.shape_cast %24 : vector<512x128xf32> to vector<2x256x128xf32>
    %cst_15 = arith.constant dense<0.000000e+00> : vector<2x128xf32>
    %26 = vector.multi_reduction <add>, %25, %cst_15 [1] : vector<2x256x128xf32> to vector<2x128xf32>
    %27 = arith.mulf %25, %25 : vector<2x256x128xf32>
    %cst_16 = arith.constant dense<0.000000e+00> : vector<2x128xf32>
    %28 = vector.multi_reduction <add>, %27, %cst_16 [1] : vector<2x256x128xf32> to vector<2x128xf32>
    %29 = tpu.concatenate %26, %28 in 0 : vector<2x128xf32>, vector<2x128xf32> -> vector<4x128xf32>
    %cst_17 = arith.constant dense<0.000000e+00> : vector<4x64xf32>
    %30 = tpu.matmul %29, %0, %cst_17 {dimension_numbers = #tpu.dot_dimension_numbers<[1], [0], [0], [1], [0, 0, 1, 1], [], []>} : vector<4x128xf32>, vector<128x64xf32>, vector<4x64xf32> -> vector<4x64xf32>
    %31 = vector.extract_strided_slice %30 {offsets = [0, 0], sizes = [2, 64], strides = [1, 1]} : vector<4x64xf32> to vector<2x64xf32>
    %cst_18 = arith.constant 0.001953125 : f32
    %32 = vector.broadcast %cst_18 : f32 to vector<2x64xf32>
    %33 = arith.mulf %31, %32 : vector<2x64xf32>
    %34 = vector.extract_strided_slice %30 {offsets = [2, 0], sizes = [2, 64], strides = [1, 1]} : vector<4x64xf32> to vector<2x64xf32>
    %cst_19 = arith.constant 0.001953125 : f32
    %35 = vector.broadcast %cst_19 : f32 to vector<2x64xf32>
    %36 = arith.mulf %34, %35 : vector<2x64xf32>
    %37 = arith.mulf %33, %33 : vector<2x64xf32>
    %38 = arith.subf %36, %37 : vector<2x64xf32>
    %cst_20 = arith.constant 9.99999974E-6 : f32
    %39 = vector.broadcast %cst_20 : f32 to vector<2x64xf32>
    %40 = arith.addf %38, %39 : vector<2x64xf32>
    %41 = math.rsqrt %40 : vector<2x64xf32>
    %42 = tpu.concatenate %33, %41 in 0 : vector<2x64xf32>, vector<2x64xf32> -> vector<4x64xf32>
    %cst_21 = arith.constant dense<0.000000e+00> : vector<4x128xf32>
    %43 = tpu.matmul %42, %1, %cst_21 {dimension_numbers = #tpu.dot_dimension_numbers<[1], [0], [0], [1], [0, 0, 1, 1], [], []>} : vector<4x64xf32>, vector<64x128xf32>, vector<4x128xf32> -> vector<4x128xf32>
    %44 = vector.extract_strided_slice %43 {offsets = [2, 0], sizes = [2, 128], strides = [1, 1]} : vector<4x128xf32> to vector<2x128xf32>
    %c0_22 = arith.constant 0 : index
    %c0_23 = arith.constant 0 : index
    %c0_24 = arith.constant 0 : index
    %45 = vector.load %arg6[%c0_22, %c0_23, %c0_24] : memref<2x1x128xf32, #tpu.memory_space<vmem>>, vector<1x1x128xf32>
    %46 = vector.shape_cast %45 : vector<1x1x128xf32> to vector<1x128xf32>
    %47 = vector.broadcast %46 : vector<1x128xf32> to vector<2x128xf32>
    %48 = arith.mulf %44, %47 : vector<2x128xf32>
    %c0_25 = arith.constant 0 : index
    %c0_26 = arith.constant 0 : index
    %c0_27 = arith.constant 0 : index
    %49 = vector.load %arg7[%c0_25, %c0_26, %c0_27] : memref<2x1x128xf32, #tpu.memory_space<vmem>>, vector<1x1x128xf32>
    %50 = vector.shape_cast %49 : vector<1x1x128xf32> to vector<1x128xf32>
    %51 = vector.extract_strided_slice %43 {offsets = [0, 0], sizes = [2, 128], strides = [1, 1]} : vector<4x128xf32> to vector<2x128xf32>
    %52 = arith.mulf %51, %48 : vector<2x128xf32>
    %53 = vector.broadcast %50 : vector<1x128xf32> to vector<2x128xf32>
    %54 = arith.subf %53, %52 : vector<2x128xf32>
    %55 = vector.shape_cast %48 : vector<2x128xf32> to vector<2x1x128xf32>
    %56 = vector.broadcast %55 : vector<2x1x128xf32> to vector<2x256x128xf32>
    %57 = arith.mulf %25, %56 : vector<2x256x128xf32>
    %58 = vector.shape_cast %54 : vector<2x128xf32> to vector<2x1x128xf32>
    %59 = vector.broadcast %58 : vector<2x1x128xf32> to vector<2x256x128xf32>
    %60 = arith.addf %57, %59 : vector<2x256x128xf32>
    %cst_28 = arith.constant 0.000000e+00 : f32
    %61 = vector.broadcast %cst_28 : f32 to vector<2x256x128xf32>
    %62 = arith.maximumf %60, %61 : vector<2x256x128xf32>
    %63 = vector.shape_cast %62 : vector<2x256x128xf32> to vector<2x16x16x128xf32>
    %64 = arith.truncf %63 : vector<2x16x16x128xf32> to vector<2x16x16x128xbf16>
    %cst_29 = arith.constant 0.000000e+00 : bf16
    %65 = vector.broadcast %cst_29 : bf16 to vector<2x1x16x128xbf16>
    %66 = tpu.concatenate %65, %64, %65 in 1 : vector<2x1x16x128xbf16>, vector<2x16x16x128xbf16>, vector<2x1x16x128xbf16> -> vector<2x18x16x128xbf16>
    %cst_30 = arith.constant 0.000000e+00 : bf16
    %67 = vector.broadcast %cst_30 : bf16 to vector<2x18x1x128xbf16>
    %68 = tpu.concatenate %67, %66, %67 in 2 : vector<2x18x1x128xbf16>, vector<2x18x16x128xbf16>, vector<2x18x1x128xbf16> -> vector<2x18x18x128xbf16>
    %69 = vector.extract_strided_slice %68 {offsets = [0, 0, 0, 0], sizes = [2, 16, 16, 128], strides = [1, 1, 1, 1]} : vector<2x18x18x128xbf16> to vector<2x16x16x128xbf16>
    %70 = vector.extract_strided_slice %68 {offsets = [0, 0, 1, 0], sizes = [2, 16, 16, 128], strides = [1, 1, 1, 1]} : vector<2x18x18x128xbf16> to vector<2x16x16x128xbf16>
    %71 = vector.extract_strided_slice %68 {offsets = [0, 0, 2, 0], sizes = [2, 16, 16, 128], strides = [1, 1, 1, 1]} : vector<2x18x18x128xbf16> to vector<2x16x16x128xbf16>
    %72 = vector.extract_strided_slice %68 {offsets = [0, 1, 0, 0], sizes = [2, 16, 16, 128], strides = [1, 1, 1, 1]} : vector<2x18x18x128xbf16> to vector<2x16x16x128xbf16>
    %73 = vector.extract_strided_slice %68 {offsets = [0, 1, 1, 0], sizes = [2, 16, 16, 128], strides = [1, 1, 1, 1]} : vector<2x18x18x128xbf16> to vector<2x16x16x128xbf16>
    %74 = vector.extract_strided_slice %68 {offsets = [0, 1, 2, 0], sizes = [2, 16, 16, 128], strides = [1, 1, 1, 1]} : vector<2x18x18x128xbf16> to vector<2x16x16x128xbf16>
    %75 = vector.extract_strided_slice %68 {offsets = [0, 2, 0, 0], sizes = [2, 16, 16, 128], strides = [1, 1, 1, 1]} : vector<2x18x18x128xbf16> to vector<2x16x16x128xbf16>
    %76 = vector.extract_strided_slice %68 {offsets = [0, 2, 1, 0], sizes = [2, 16, 16, 128], strides = [1, 1, 1, 1]} : vector<2x18x18x128xbf16> to vector<2x16x16x128xbf16>
    %77 = vector.extract_strided_slice %68 {offsets = [0, 2, 2, 0], sizes = [2, 16, 16, 128], strides = [1, 1, 1, 1]} : vector<2x18x18x128xbf16> to vector<2x16x16x128xbf16>
    %78 = tpu.concatenate %69, %70, %71, %72, %73, %74, %75, %76, %77 in 3 : vector<2x16x16x128xbf16>, vector<2x16x16x128xbf16>, vector<2x16x16x128xbf16>, vector<2x16x16x128xbf16>, vector<2x16x16x128xbf16>, vector<2x16x16x128xbf16>, vector<2x16x16x128xbf16>, vector<2x16x16x128xbf16>, vector<2x16x16x128xbf16> -> vector<2x16x16x1152xbf16>
    %79 = vector.shape_cast %78 : vector<2x16x16x1152xbf16> to vector<512x1152xbf16>
    %c0_31 = arith.constant 0 : index
    %c0_32 = arith.constant 0 : index
    %c0_33 = arith.constant 0 : index
    %80 = vector.load %arg4[%c0_31, %c0_32, %c0_33] : memref<1x1152x128xbf16, #tpu.memory_space<vmem>>, vector<1x1152x128xbf16>
    %81 = vector.shape_cast %80 : vector<1x1152x128xbf16> to vector<1152x128xbf16>
    %cst_34 = arith.constant dense<0.000000e+00> : vector<512x128xf32>
    %82 = tpu.matmul %79, %81, %cst_34 {dimension_numbers = #tpu.dot_dimension_numbers<[1], [0], [0], [1], [0, 0, 1, 1], [], []>} : vector<512x1152xbf16>, vector<1152x128xbf16>, vector<512x128xf32> -> vector<512x128xf32>
    %c1 = arith.constant 1 : index
    %c0_35 = arith.constant 0 : index
    %c0_36 = arith.constant 0 : index
    %83 = vector.load %arg5[%c1, %c0_35, %c0_36] : memref<2x1x128xf32, #tpu.memory_space<vmem>>, vector<1x1x128xf32>
    %84 = vector.shape_cast %83 : vector<1x1x128xf32> to vector<1x128xf32>
    %85 = vector.broadcast %84 : vector<1x128xf32> to vector<512x128xf32>
    %86 = arith.addf %82, %85 : vector<512x128xf32>
    %87 = vector.shape_cast %86 : vector<512x128xf32> to vector<2x256x128xf32>
    %cst_37 = arith.constant dense<0.000000e+00> : vector<2x128xf32>
    %88 = vector.multi_reduction <add>, %87, %cst_37 [1] : vector<2x256x128xf32> to vector<2x128xf32>
    %89 = arith.mulf %87, %87 : vector<2x256x128xf32>
    %cst_38 = arith.constant dense<0.000000e+00> : vector<2x128xf32>
    %90 = vector.multi_reduction <add>, %89, %cst_38 [1] : vector<2x256x128xf32> to vector<2x128xf32>
    %91 = tpu.concatenate %88, %90 in 0 : vector<2x128xf32>, vector<2x128xf32> -> vector<4x128xf32>
    %cst_39 = arith.constant dense<0.000000e+00> : vector<4x64xf32>
    %92 = tpu.matmul %91, %0, %cst_39 {dimension_numbers = #tpu.dot_dimension_numbers<[1], [0], [0], [1], [0, 0, 1, 1], [], []>} : vector<4x128xf32>, vector<128x64xf32>, vector<4x64xf32> -> vector<4x64xf32>
    %93 = vector.extract_strided_slice %92 {offsets = [0, 0], sizes = [2, 64], strides = [1, 1]} : vector<4x64xf32> to vector<2x64xf32>
    %cst_40 = arith.constant 0.001953125 : f32
    %94 = vector.broadcast %cst_40 : f32 to vector<2x64xf32>
    %95 = arith.mulf %93, %94 : vector<2x64xf32>
    %96 = vector.extract_strided_slice %92 {offsets = [2, 0], sizes = [2, 64], strides = [1, 1]} : vector<4x64xf32> to vector<2x64xf32>
    %cst_41 = arith.constant 0.001953125 : f32
    %97 = vector.broadcast %cst_41 : f32 to vector<2x64xf32>
    %98 = arith.mulf %96, %97 : vector<2x64xf32>
    %99 = arith.mulf %95, %95 : vector<2x64xf32>
    %100 = arith.subf %98, %99 : vector<2x64xf32>
    %cst_42 = arith.constant 9.99999974E-6 : f32
    %101 = vector.broadcast %cst_42 : f32 to vector<2x64xf32>
    %102 = arith.addf %100, %101 : vector<2x64xf32>
    %103 = math.rsqrt %102 : vector<2x64xf32>
    %104 = tpu.concatenate %95, %103 in 0 : vector<2x64xf32>, vector<2x64xf32> -> vector<4x64xf32>
    %cst_43 = arith.constant dense<0.000000e+00> : vector<4x128xf32>
    %105 = tpu.matmul %104, %1, %cst_43 {dimension_numbers = #tpu.dot_dimension_numbers<[1], [0], [0], [1], [0, 0, 1, 1], [], []>} : vector<4x64xf32>, vector<64x128xf32>, vector<4x128xf32> -> vector<4x128xf32>
    %106 = vector.extract_strided_slice %105 {offsets = [2, 0], sizes = [2, 128], strides = [1, 1]} : vector<4x128xf32> to vector<2x128xf32>
    %c1_44 = arith.constant 1 : index
    %c0_45 = arith.constant 0 : index
    %c0_46 = arith.constant 0 : index
    %107 = vector.load %arg6[%c1_44, %c0_45, %c0_46] : memref<2x1x128xf32, #tpu.memory_space<vmem>>, vector<1x1x128xf32>
    %108 = vector.shape_cast %107 : vector<1x1x128xf32> to vector<1x128xf32>
    %109 = vector.broadcast %108 : vector<1x128xf32> to vector<2x128xf32>
    %110 = arith.mulf %106, %109 : vector<2x128xf32>
    %c1_47 = arith.constant 1 : index
    %c0_48 = arith.constant 0 : index
    %c0_49 = arith.constant 0 : index
    %111 = vector.load %arg7[%c1_47, %c0_48, %c0_49] : memref<2x1x128xf32, #tpu.memory_space<vmem>>, vector<1x1x128xf32>
    %112 = vector.shape_cast %111 : vector<1x1x128xf32> to vector<1x128xf32>
    %113 = vector.extract_strided_slice %105 {offsets = [0, 0], sizes = [2, 128], strides = [1, 1]} : vector<4x128xf32> to vector<2x128xf32>
    %114 = arith.mulf %113, %110 : vector<2x128xf32>
    %115 = vector.broadcast %112 : vector<1x128xf32> to vector<2x128xf32>
    %116 = arith.subf %115, %114 : vector<2x128xf32>
    %117 = vector.shape_cast %110 : vector<2x128xf32> to vector<2x1x128xf32>
    %118 = vector.broadcast %117 : vector<2x1x128xf32> to vector<2x256x128xf32>
    %119 = arith.mulf %87, %118 : vector<2x256x128xf32>
    %120 = vector.shape_cast %116 : vector<2x128xf32> to vector<2x1x128xf32>
    %121 = vector.broadcast %120 : vector<2x1x128xf32> to vector<2x256x128xf32>
    %122 = arith.addf %119, %121 : vector<2x256x128xf32>
    %cst_50 = arith.constant 0.000000e+00 : f32
    %123 = vector.broadcast %cst_50 : f32 to vector<2x256x128xf32>
    %124 = arith.maximumf %122, %123 : vector<2x256x128xf32>
    %cst_51 = arith.constant dense<0.000000e+00> : vector<2x128xf32>
    %125 = vector.multi_reduction <add>, %124, %cst_51 [1] : vector<2x256x128xf32> to vector<2x128xf32>
    %cst_52 = arith.constant 2.560000e+02 : f32
    %126 = vector.broadcast %cst_52 : f32 to vector<2x128xf32>
    %127 = arith.divf %125, %126 : vector<2x128xf32>
    %128 = arith.truncf %127 : vector<2x128xf32> to vector<2x128xbf16>
    %c0_53 = arith.constant 0 : index
    %c0_54 = arith.constant 0 : index
    %129 = vector.load %arg10[%c0_53, %c0_54] : memref<128x128xbf16, #tpu.memory_space<vmem>>, vector<128x128xbf16>
    %cst_55 = arith.constant dense<0.000000e+00> : vector<2x128xf32>
    %130 = tpu.matmul %128, %129, %cst_55 {dimension_numbers = #tpu.dot_dimension_numbers<[1], [0], [0], [1], [0, 0, 1, 1], [], []>} : vector<2x128xbf16>, vector<128x128xbf16>, vector<2x128xf32> -> vector<2x128xf32>
    %c0_56 = arith.constant 0 : index
    %c0_57 = arith.constant 0 : index
    %131 = vector.load %arg11[%c0_56, %c0_57] : memref<1x128xf32, #tpu.memory_space<vmem>>, vector<1x128xf32>
    %132 = vector.broadcast %131 : vector<1x128xf32> to vector<2x128xf32>
    %133 = arith.addf %130, %132 : vector<2x128xf32>
    %c0_58 = arith.constant 0 : index
    %c0_59 = arith.constant 0 : index
    %134 = vector.load %arg12[%c0_58, %c0_59] : memref<1x128xf32, #tpu.memory_space<vmem>>, vector<1x128xf32>
    %c0_60 = arith.constant 0 : index
    %c0_61 = arith.constant 0 : index
    %c0_62 = arith.constant 0 : index
    %135 = vector.load %arg2[%c0_60, %c0_61, %c0_62] : memref<1x2x1xf32, #tpu.memory_space<vmem>>, vector<1x2x1xf32>
    %136 = vector.shape_cast %135 : vector<1x2x1xf32> to vector<2x1xf32>
    %137 = vector.broadcast %134 : vector<1x128xf32> to vector<2x128xf32>
    %138 = vector.broadcast %136 : vector<2x1xf32> to vector<2x128xf32>
    %139 = arith.mulf %137, %138 : vector<2x128xf32>
    %140 = arith.mulf %133, %139 : vector<2x128xf32>
    %141 = math.exp %140 : vector<2x128xf32>
    %142 = vector.broadcast %134 : vector<1x128xf32> to vector<2x128xf32>
    %143 = arith.mulf %142, %141 : vector<2x128xf32>
    %cst_63 = arith.constant 1.000000e+00 : f32
    %144 = vector.broadcast %cst_63 : f32 to vector<1x128xf32>
    %145 = arith.subf %144, %134 : vector<1x128xf32>
    %146 = vector.broadcast %145 : vector<1x128xf32> to vector<2x128xf32>
    %147 = arith.mulf %146, %133 : vector<2x128xf32>
    %148 = arith.addf %143, %147 : vector<2x128xf32>
    %c0_64 = arith.constant 0 : index
    %c0_65 = arith.constant 0 : index
    %c0_66 = arith.constant 0 : index
    %149 = vector.load %arg13[%c0_64, %c0_65, %c0_66] : memref<1x2x128xf32, #tpu.memory_space<vmem>>, vector<1x2x128xf32>
    %150 = vector.shape_cast %149 : vector<1x2x128xf32> to vector<2x128xf32>
    %151 = vector.shape_cast %148 : vector<2x128xf32> to vector<1x2x128xf32>
    tpu.vector_store %arg13[%c0_64, %c0_65, %c0_66], %151 {strides = array<i32>} : memref<1x2x128xf32, #tpu.memory_space<vmem>>, vector<1x2x128xf32>,
    return
  }
  func.func @transform_0(%arg0: i32) -> (i32, i32, i32, i32, i32) {
    %c0_i32 = arith.constant 0 : i32
    %c0_i32_0 = arith.constant 0 : i32
    %c0_i32_1 = arith.constant 0 : i32
    %c0_i32_2 = arith.constant 0 : i32
    %c0_i32_3 = arith.constant 0 : i32
    return %arg0, %c0_i32, %c0_i32_0, %c0_i32_1, %c0_i32_2 : i32, i32, i32, i32, i32
  }
  func.func @transform_1(%arg0: i32) -> (i32, i32, i32) {
    %c0_i32 = arith.constant 0 : i32
    %c0_i32_0 = arith.constant 0 : i32
    %c0_i32_1 = arith.constant 0 : i32
    return %arg0, %c0_i32, %c0_i32_0 : i32, i32, i32
  }
  func.func @transform_2(%arg0: i32) -> (i32, i32) {
    %c0_i32 = arith.constant 0 : i32
    %c0_i32_0 = arith.constant 0 : i32
    %c0_i32_1 = arith.constant 0 : i32
    return %c0_i32, %c0_i32_0 : i32, i32
  }
  func.func @transform_3(%arg0: i32) -> (i32, i32, i32) {
    %c0_i32 = arith.constant 0 : i32
    %c0_i32_0 = arith.constant 0 : i32
    %c0_i32_1 = arith.constant 0 : i32
    %c0_i32_2 = arith.constant 0 : i32
    return %c0_i32, %c0_i32_0, %c0_i32_1 : i32, i32, i32
  }
  func.func @transform_4(%arg0: i32) -> (i32, i32, i32) {
    %c0_i32 = arith.constant 0 : i32
    %c0_i32_0 = arith.constant 0 : i32
    %c0_i32_1 = arith.constant 0 : i32
    %c0_i32_2 = arith.constant 0 : i32
    return %c0_i32, %c0_i32_0, %c0_i32_1 : i32, i32, i32
  }
  func.func @transform_5(%arg0: i32) -> (i32, i32, i32) {
    %c0_i32 = arith.constant 0 : i32
    %c0_i32_0 = arith.constant 0 : i32
    %c0_i32_1 = arith.constant 0 : i32
    %c0_i32_2 = arith.constant 0 : i32
    return %c0_i32, %c0_i32_0, %c0_i32_1 : i32, i32, i32
  }
  func.func @transform_6(%arg0: i32) -> (i32, i32, i32) {
    %c0_i32 = arith.constant 0 : i32
    %c0_i32_0 = arith.constant 0 : i32
    %c0_i32_1 = arith.constant 0 : i32
    %c0_i32_2 = arith.constant 0 : i32
    return %c0_i32, %c0_i32_0, %c0_i32_1 : i32, i32, i32
  }
  func.func @transform_7(%arg0: i32) -> (i32, i32) {
    %c0_i32 = arith.constant 0 : i32
    %c0_i32_0 = arith.constant 0 : i32
    %c0_i32_1 = arith.constant 0 : i32
    return %c0_i32, %c0_i32_0 : i32, i32
  }
  func.func @transform_8(%arg0: i32) -> (i32, i32) {
    %c0_i32 = arith.constant 0 : i32
    %c0_i32_0 = arith.constant 0 : i32
    %c0_i32_1 = arith.constant 0 : i32
    return %c0_i32, %c0_i32_0 : i32, i32
  }
  func.func @transform_9(%arg0: i32) -> (i32, i32) {
    %c0_i32 = arith.constant 0 : i32
    %c0_i32_0 = arith.constant 0 : i32
    %c0_i32_1 = arith.constant 0 : i32
    return %c0_i32, %c0_i32_0 : i32, i32
  }
  func.func @transform_10(%arg0: i32) -> (i32, i32) {
    %c0_i32 = arith.constant 0 : i32
    %c0_i32_0 = arith.constant 0 : i32
    %c0_i32_1 = arith.constant 0 : i32
    return %c0_i32, %c0_i32_0 : i32, i32
  }
  func.func @transform_11(%arg0: i32) -> (i32, i32) {
    %c0_i32 = arith.constant 0 : i32
    %c0_i32_0 = arith.constant 0 : i32
    %c0_i32_1 = arith.constant 0 : i32
    return %c0_i32, %c0_i32_0 : i32, i32
  }
  func.func @transform_12(%arg0: i32) -> (i32, i32, i32) {
    %c0_i32 = arith.constant 0 : i32
    %c0_i32_0 = arith.constant 0 : i32
    %c0_i32_1 = arith.constant 0 : i32
    return %arg0, %c0_i32, %c0_i32_0 : i32, i32, i32
  }
}

</mosaic_0001>

<llo_original>
// kernel: _yooo_head_forward.3
$region0: #{_yooo_head_forward.3}
  #allocation0 [shape = 'u32[]', space=smem, size = 0x4, offset = 0x4, fixed_abs, tag = 'smem constant byte address 0x4 - core index']
  #allocation1 [shape = 'u32[144,128]{1,0:T(1,128)}', space=vmem, size = 0x12000, scoped, tag = 'internal scratch']
  %s0 = inlined_call_operand.vmem [shape: bf16[2,4,8,8,64], index: 0, kind: input, shape index: {}]
  %s1 = inlined_call_operand.vmem [shape: f32[2,4,1], index: 1, kind: input, shape index: {}]
  %s2 = inlined_call_operand.vmem [shape: bf16[576,128], index: 2, kind: input, shape index: {}]
  %s3 = inlined_call_operand.vmem [shape: bf16[1,1152,128], index: 3, kind: input, shape index: {}]
  %s4 = inlined_call_operand.vmem [shape: f32[2,1,128], index: 4, kind: input, shape index: {}]
  %s5 = inlined_call_operand.vmem [shape: f32[2,1,128], index: 5, kind: input, shape index: {}]
  %s6 = inlined_call_operand.vmem [shape: f32[2,1,128], index: 6, kind: input, shape index: {}]
  %s7 = inlined_call_operand.vmem [shape: f32[128,64], index: 7, kind: input, shape index: {}]
  %s8 = inlined_call_operand.vmem [shape: f32[64,128], index: 8, kind: input, shape index: {}]
  %s9 = inlined_call_operand.vmem [shape: bf16[128,128], index: 9, kind: input, shape index: {}]
  %s10 = inlined_call_operand.vmem [shape: f32[1,128], index: 10, kind: input, shape index: {}]
  %s11 = inlined_call_operand.vmem [shape: f32[1,128], index: 11, kind: input, shape index: {}]
  %s12 = inlined_call_operand.vmem [shape: f32[2,4,128], index: 12, kind: output, shape index: {}]
  %s13 = sld [smem:[#allocation0]]
  $region81: #{_yooo_head_forward.3} parent=0
    _
  %s15 = ssub.s32 1, %s13
  %s16 = scalar_select 0, %s15, %s13
  loop: start=0, step=1, limit=4
  $region2: #{_yooo_head_forward.3} parent=0 // loop_pre_header
    _
  $region3: #{_yooo_head_forward.3} parent=0 // loop_header
    %s18 = sphi 0, %s22
    %p19 = scmp.ge.s32.totalorder %s18, 4
    %s28 = sphi 0, %s30
    %s31 = sphi 0, %s28
    %s32 = sphi 0, %s31
    %s48 = sphi 0, %s32
    %s54 = sphi 0, %s56
    %s57 = sphi 0, %s54
    %s58 = sphi 0, %s57
    %s74 = sphi 0, %s58
    %s78 = sphi 0, %s78
    %s80 = sphi 0, %s78
    %s81 = sphi 0, %s80
    %s95 = sphi 0, %s81
    %s99 = sphi 0, %s99
    %s101 = sphi 0, %s99
    %s102 = sphi 0, %s101
    %s116 = sphi 0, %s102
    %s120 = sphi 0, %s120
    %s122 = sphi 0, %s120
    %s123 = sphi 0, %s122
    %s137 = sphi 0, %s123
    %s141 = sphi 0, %s141
    %s143 = sphi 0, %s141
    %s144 = sphi 0, %s143
    %s158 = sphi 0, %s144
    %s162 = sphi 0, %s162
    %s164 = sphi 0, %s162
    %s165 = sphi 0, %s164
    %s179 = sphi 0, %s165
    %s183 = sphi 0, %s183
    %s185 = sphi 0, %s183
    %s186 = sphi 0, %s185
    %s200 = sphi 0, %s186
    %s204 = sphi 0, %s204
    %s206 = sphi 0, %s204
    %s207 = sphi 0, %s206
    %s221 = sphi 0, %s207
    %s225 = sphi 0, %s225
    %s227 = sphi 0, %s225
    %s228 = sphi 0, %s227
    %s242 = sphi 0, %s228
    %s246 = sphi 0, %s246
    %s248 = sphi 0, %s246
    %s249 = sphi 0, %s248
    %s263 = sphi 0, %s249
    %s267 = sphi 0, %s267
    %s269 = sphi 0, %s267
    %s270 = sphi 0, %s269
    %s284 = sphi 0, %s270
    %s290 = sphi 0, %s292
    %s293 = sphi 0, %s290
    %s294 = sphi 0, %s293
    %s310 = sphi 0, %s294
  $region4: #{_yooo_head_forward.3} parent=0 // loop_header_branch
    %21 = sbr.rel (%p19) target = $region8
  $region5: #{_yooo_head_forward.3} parent=0 // loop_body
    %s23 = ssub.s32 %s18, 1
    %s24 = ssub.s32 %s18, 2
    %s25 = sadd.s32 %s18, 1
    %s26 = ssub.s32 %s18, %s25
    %p27 = scmp.eq.s32.totalorder %s26, 0
    %s29 = sadd.s32 %s28, 1
    %s30 = scalar_select %p27, %s28, %s29
    %p33 = pneg %p27
    %p34 = scmp.eq.s32.totalorder %s18, 1
    %p35 = por %p33, %p34
    %p36 = scmp.ne.s32.totalorder %s28, %s31
    %p37 = scmp.eq.s32.totalorder %s18, 0
    %p38 = por %p36, %p37
    %p39 = scmp.ne.s32.totalorder %s28, %s31
    %p40 = scmp.eq.s32.totalorder %s23, 1
    %p41 = por %p39, %p40
    %p42 = scmp.ne.s32.totalorder %s31, %s32
    %p43 = scmp.eq.s32.totalorder %s23, 0
    %p44 = por %p42, %p43
    %p45 = scmp.ne.s32.totalorder %s31, %s32
    %p46 = scmp.eq.s32.totalorder %s24, 1
    %p47 = por %p45, %p46
    %p49 = scmp.ne.s32.totalorder %s32, %s48
    %p50 = scmp.eq.s32.totalorder %s24, 0
    %p51 = por %p49, %p50
    %s52 = ssub.s32 %s18, %s25
    %p53 = scmp.eq.s32.totalorder %s52, 0
    %s55 = sadd.s32 %s54, 1
    %s56 = scalar_select %p53, %s54, %s55
    %p59 = pneg %p53
    %p60 = scmp.eq.s32.totalorder %s18, 1
    %p61 = por %p59, %p60
    %p62 = scmp.ne.s32.totalorder %s54, %s57
    %p63 = scmp.eq.s32.totalorder %s18, 0
    %p64 = por %p62, %p63
    %p65 = scmp.ne.s32.totalorder %s54, %s57
    %p66 = scmp.eq.s32.totalorder %s23, 1
    %p67 = por %p65, %p66
    %p68 = scmp.ne.s32.totalorder %s57, %s58
    %p69 = scmp.eq.s32.totalorder %s23, 0
    %p70 = por %p68, %p69
    %p71 = scmp.ne.s32.totalorder %s57, %s58
    %p72 = scmp.eq.s32.totalorder %s24, 1
    %p73 = por %p71, %p72
    %p75 = scmp.ne.s32.totalorder %s58, %s74
    %p76 = scmp.eq.s32.totalorder %s24, 0
    %p77 = por %p75, %p76
    %s79 = sadd.s32 %s78, 1
    %p82 = scmp.eq.s32.totalorder %s18, 1
    %p83 = scmp.ne.s32.totalorder %s78, %s80
    %p84 = scmp.eq.s32.totalorder %s18, 0
    %p85 = por %p83, %p84
    %p86 = scmp.ne.s32.totalorder %s78, %s80
    %p87 = scmp.eq.s32.totalorder %s23, 1
    %p88 = por %p86, %p87
    %p89 = scmp.ne.s32.totalorder %s80, %s81
    %p90 = scmp.eq.s32.totalorder %s23, 0
    %p91 = por %p89, %p90
    %p92 = scmp.ne.s32.totalorder %s80, %s81
    %p93 = scmp.eq.s32.totalorder %s24, 1
    %p94 = por %p92, %p93
    %p96 = scmp.ne.s32.totalorder %s81, %s95
    %p97 = scmp.eq.s32.totalorder %s24, 0
    %p98 = por %p96, %p97
    %s100 = sadd.s32 %s99, 1
    %p103 = scmp.eq.s32.totalorder %s18, 1
    %p104 = scmp.ne.s32.totalorder %s99, %s101
    %p105 = scmp.eq.s32.totalorder %s18, 0
    %p106 = por %p104, %p105
    %p107 = scmp.ne.s32.totalorder %s99, %s101
    %p108 = scmp.eq.s32.totalorder %s23, 1
    %p109 = por %p107, %p108
    %p110 = scmp.ne.s32.totalorder %s101, %s102
    %p111 = scmp.eq.s32.totalorder %s23, 0
    %p112 = por %p110, %p111
    %p113 = scmp.ne.s32.totalorder %s101, %s102
    %p114 = scmp.eq.s32.totalorder %s24, 1
    %p115 = por %p113, %p114
    %p117 = scmp.ne.s32.totalorder %s102, %s116
    %p118 = scmp.eq.s32.totalorder %s24, 0
    %p119 = por %p117, %p118
    %s121 = sadd.s32 %s120, 1
    %p124 = scmp.eq.s32.totalorder %s18, 1
    %p125 = scmp.ne.s32.totalorder %s120, %s122
    %p126 = scmp.eq.s32.totalorder %s18, 0
    %p127 = por %p125, %p126
    %p128 = scmp.ne.s32.totalorder %s120, %s122
    %p129 = scmp.eq.s32.totalorder %s23, 1
    %p130 = por %p128, %p129
    %p131 = scmp.ne.s32.totalorder %s122, %s123
    %p132 = scmp.eq.s32.totalorder %s23, 0
    %p133 = por %p131, %p132
    %p134 = scmp.ne.s32.totalorder %s122, %s123
    %p135 = scmp.eq.s32.totalorder %s24, 1
    %p136 = por %p134, %p135
    %p138 = scmp.ne.s32.totalorder %s123, %s137
    %p139 = scmp.eq.s32.totalorder %s24, 0
    %p140 = por %p138, %p139
    %s142 = sadd.s32 %s141, 1
    %p145 = scmp.eq.s32.totalorder %s18, 1
    %p146 = scmp.ne.s32.totalorder %s141, %s143
    %p147 = scmp.eq.s32.totalorder %s18, 0
    %p148 = por %p146, %p147
    %p149 = scmp.ne.s32.totalorder %s141, %s143
    %p150 = scmp.eq.s32.totalorder %s23, 1
    %p151 = por %p149, %p150
    %p152 = scmp.ne.s32.totalorder %s143, %s144
    %p153 = scmp.eq.s32.totalorder %s23, 0
    %p154 = por %p152, %p153
    %p155 = scmp.ne.s32.totalorder %s143, %s144
    %p156 = scmp.eq.s32.totalorder %s24, 1
    %p157 = por %p155, %p156
    %p159 = scmp.ne.s32.totalorder %s144, %s158
    %p160 = scmp.eq.s32.totalorder %s24, 0
    %p161 = por %p159, %p160
    %s163 = sadd.s32 %s162, 1
    %p166 = scmp.eq.s32.totalorder %s18, 1
    %p167 = scmp.ne.s32.totalorder %s162, %s164
    %p168 = scmp.eq.s32.totalorder %s18, 0
    %p169 = por %p167, %p168
    %p170 = scmp.ne.s32.totalorder %s162, %s164
    %p171 = scmp.eq.s32.totalorder %s23, 1
    %p172 = por %p170, %p171
    %p173 = scmp.ne.s32.totalorder %s164, %s165
    %p174 = scmp.eq.s32.totalorder %s23, 0
    %p175 = por %p173, %p174
    %p176 = scmp.ne.s32.totalorder %s164, %s165
    %p177 = scmp.eq.s32.totalorder %s24, 1
    %p178 = por %p176, %p177
    %p180 = scmp.ne.s32.totalorder %s165, %s179
    %p181 = scmp.eq.s32.totalorder %s24, 0
    %p182 = por %p180, %p181
    %s184 = sadd.s32 %s183, 1
    %p187 = scmp.eq.s32.totalorder %s18, 1
    %p188 = scmp.ne.s32.totalorder %s183, %s185
    %p189 = scmp.eq.s32.totalorder %s18, 0
    %p190 = por %p188, %p189
    %p191 = scmp.ne.s32.totalorder %s183, %s185
    %p192 = scmp.eq.s32.totalorder %s23, 1
    %p193 = por %p191, %p192
    %p194 = scmp.ne.s32.totalorder %s185, %s186
    %p195 = scmp.eq.s32.totalorder %s23, 0
    %p196 = por %p194, %p195
    %p197 = scmp.ne.s32.totalorder %s185, %s186
    %p198 = scmp.eq.s32.totalorder %s24, 1
    %p199 = por %p197, %p198
    %p201 = scmp.ne.s32.totalorder %s186, %s200
    %p202 = scmp.eq.s32.totalorder %s24, 0
    %p203 = por %p201, %p202
    %s205 = sadd.s32 %s204, 1
    %p208 = scmp.eq.s32.totalorder %s18, 1
    %p209 = scmp.ne.s32.totalorder %s204, %s206
    %p210 = scmp.eq.s32.totalorder %s18, 0
    %p211 = por %p209, %p210
    %p212 = scmp.ne.s32.totalorder %s204, %s206
    %p213 = scmp.eq.s32.totalorder %s23, 1
    %p214 = por %p212, %p213
    %p215 = scmp.ne.s32.totalorder %s206, %s207
    %p216 = scmp.eq.s32.totalorder %s23, 0
    %p217 = por %p215, %p216
    %p218 = scmp.ne.s32.totalorder %s206, %s207
    %p219 = scmp.eq.s32.totalorder %s24, 1
    %p220 = por %p218, %p219
    %p222 = scmp.ne.s32.totalorder %s207, %s221
    %p223 = scmp.eq.s32.totalorder %s24, 0
    %p224 = por %p222, %p223
    %s226 = sadd.s32 %s225, 1
    %p229 = scmp.eq.s32.totalorder %s18, 1
    %p230 = scmp.ne.s32.totalorder %s225, %s227
    %p231 = scmp.eq.s32.totalorder %s18, 0
    %p232 = por %p230, %p231
    %p233 = scmp.ne.s32.totalorder %s225, %s227
    %p234 = scmp.eq.s32.totalorder %s23, 1
    %p235 = por %p233, %p234
    %p236 = scmp.ne.s32.totalorder %s227, %s228
    %p237 = scmp.eq.s32.totalorder %s23, 0
    %p238 = por %p236, %p237
    %p239 = scmp.ne.s32.totalorder %s227, %s228
    %p240 = scmp.eq.s32.totalorder %s24, 1
    %p241 = por %p239, %p240
    %p243 = scmp.ne.s32.totalorder %s228, %s242
    %p244 = scmp.eq.s32.totalorder %s24, 0
    %p245 = por %p243, %p244
    %s247 = sadd.s32 %s246, 1
    %p250 = scmp.eq.s32.totalorder %s18, 1
    %p251 = scmp.ne.s32.totalorder %s246, %s248
    %p252 = scmp.eq.s32.totalorder %s18, 0
    %p253 = por %p251, %p252
    %p254 = scmp.ne.s32.totalorder %s246, %s248
    %p255 = scmp.eq.s32.totalorder %s23, 1
    %p256 = por %p254, %p255
    %p257 = scmp.ne.s32.totalorder %s248, %s249
    %p258 = scmp.eq.s32.totalorder %s23, 0
    %p259 = por %p257, %p258
    %p260 = scmp.ne.s32.totalorder %s248, %s249
    %p261 = scmp.eq.s32.totalorder %s24, 1
    %p262 = por %p260, %p261
    %p264 = scmp.ne.s32.totalorder %s249, %s263
    %p265 = scmp.eq.s32.totalorder %s24, 0
    %p266 = por %p264, %p265
    %s268 = sadd.s32 %s267, 1
    %p271 = scmp.eq.s32.totalorder %s18, 1
    %p272 = scmp.ne.s32.totalorder %s267, %s269
    %p273 = scmp.eq.s32.totalorder %s18, 0
    %p274 = por %p272, %p273
    %p275 = scmp.ne.s32.totalorder %s267, %s269
    %p276 = scmp.eq.s32.totalorder %s23, 1
    %p277 = por %p275, %p276
    %p278 = scmp.ne.s32.totalorder %s269, %s270
    %p279 = scmp.eq.s32.totalorder %s23, 0
    %p280 = por %p278, %p279
    %p281 = scmp.ne.s32.totalorder %s269, %s270
    %p282 = scmp.eq.s32.totalorder %s24, 1
    %p283 = por %p281, %p282
    %p285 = scmp.ne.s32.totalorder %s270, %s284
    %p286 = scmp.eq.s32.totalorder %s24, 0
    %p287 = por %p285, %p286
    %s288 = ssub.s32 %s18, %s25
    %p289 = scmp.eq.s32.totalorder %s288, 0
    %s291 = sadd.s32 %s290, 1
    %s292 = scalar_select %p289, %s290, %s291
    %p295 = pneg %p289
    %p296 = scmp.eq.s32.totalorder %s18, 1
    %p297 = por %p295, %p296
    %p298 = scmp.ne.s32.totalorder %s290, %s293
    %p299 = scmp.eq.s32.totalorder %s18, 0
    %p300 = por %p298, %p299
    %p301 = scmp.ne.s32.totalorder %s290, %s293
    %p302 = scmp.eq.s32.totalorder %s23, 1
    %p303 = por %p301, %p302
    %p304 = scmp.ne.s32.totalorder %s293, %s294
    %p305 = scmp.eq.s32.totalorder %s23, 0
    %p306 = por %p304, %p305
    %p307 = scmp.ne.s32.totalorder %s293, %s294
    %p308 = scmp.eq.s32.totalorder %s24, 1
    %p309 = por %p307, %p308
    %p311 = scmp.ne.s32.totalorder %s294, %s310
    %p312 = scmp.eq.s32.totalorder %s24, 0
    %p313 = por %p311, %p312
    %p314 = scmp.le.s32.totalorder 1, %s18
    %p315 = scmp.lt.s32.totalorder %s18, 3
    %p316 = pnand %p314, %p315
    %p317 = pneg %p316
    // Predicated region
    $region9: #{_yooo_head_forward.3} parent=5 // pred_check
      _
    $region10: #{_yooo_head_forward.3} parent=5 // pred_check_branch
      %319 = sbr.rel (%p316) target = $region12
    $region11: #{_yooo_head_forward.3} parent=5 // pred_region
      %s320 = ssub.s32 %s18, 1
      // Predicated region
      $region13: #{_yooo_head_forward.3} parent=11 // pred_check
        %p321 = pneg %p91
      $region14: #{_yooo_head_forward.3} parent=11 // pred_check_branch
        %323 = sbr.rel (%p321) target = $region16
      $region15: #{_yooo_head_forward.3} parent=11 // pred_region
        _
      $region16: #{_yooo_head_forward.3} parent=11 // pred_fallthru
        _
      // Predicated region
      $region17: #{_yooo_head_forward.3} parent=11 // pred_check
        %p324 = pneg %p112
      $region18: #{_yooo_head_forward.3} parent=11 // pred_check_branch
        %326 = sbr.rel (%p324) target = $region20
      $region19: #{_yooo_head_forward.3} parent=11 // pred_region
        _
      $region20: #{_yooo_head_forward.3} parent=11 // pred_fallthru
        _
      // Predicated region
      $region21: #{_yooo_head_forward.3} parent=11 // pred_check
        %p327 = pneg %p133
      $region22: #{_yooo_head_forward.3} parent=11 // pred_check_branch
        %329 = sbr.rel (%p327) target = $region24
      $region23: #{_yooo_head_forward.3} parent=11 // pred_region
        _
      $region24: #{_yooo_head_forward.3} parent=11 // pred_fallthru
        _
      // Predicated region
      $region25: #{_yooo_head_forward.3} parent=11 // pred_check
        %p330 = pneg %p154
      $region26: #{_yooo_head_forward.3} parent=11 // pred_check_branch
        %332 = sbr.rel (%p330) target = $region28
      $region27: #{_yooo_head_forward.3} parent=11 // pred_region
        _
      $region28: #{_yooo_head_forward.3} parent=11 // pred_fallthru
        _
      // Predicated region
      $region29: #{_yooo_head_forward.3} parent=11 // pred_check
        %p333 = pneg %p175
      $region30: #{_yooo_head_forward.3} parent=11 // pred_check_branch
        %335 = sbr.rel (%p333) target = $region32
      $region31: #{_yooo_head_forward.3} parent=11 // pred_region
        _
      $region32: #{_yooo_head_forward.3} parent=11 // pred_fallthru
        _
      // Predicated region
      $region33: #{_yooo_head_forward.3} parent=11 // pred_check
        %p336 = pneg %p196
      $region34: #{_yooo_head_forward.3} parent=11 // pred_check_branch
        %338 = sbr.rel (%p336) target = $region36
      $region35: #{_yooo_head_forward.3} parent=11 // pred_region
        _
      $region36: #{_yooo_head_forward.3} parent=11 // pred_fallthru
        _
      // Predicated region
      $region37: #{_yooo_head_forward.3} parent=11 // pred_check
        %p339 = pneg %p217
      $region38: #{_yooo_head_forward.3} parent=11 // pred_check_branch
        %341 = sbr.rel (%p339) target = $region40
      $region39: #{_yooo_head_forward.3} parent=11 // pred_region
        _
      $region40: #{_yooo_head_forward.3} parent=11 // pred_fallthru
        _
      // Predicated region
      $region41: #{_yooo_head_forward.3} parent=11 // pred_check
        %p342 = pneg %p238
      $region42: #{_yooo_head_forward.3} parent=11 // pred_check_branch
        %344 = sbr.rel (%p342) target = $region44
      $region43: #{_yooo_head_forward.3} parent=11 // pred_region
        _
      $region44: #{_yooo_head_forward.3} parent=11 // pred_fallthru
        _
      // Predicated region
      $region45: #{_yooo_head_forward.3} parent=11 // pred_check
        %p345 = pneg %p259
      $region46: #{_yooo_head_forward.3} parent=11 // pred_check_branch
        %347 = sbr.rel (%p345) target = $region48
      $region47: #{_yooo_head_forward.3} parent=11 // pred_region
        _
      $region48: #{_yooo_head_forward.3} parent=11 // pred_fallthru
        _
      // Predicated region
      $region49: #{_yooo_head_forward.3} parent=11 // pred_check
        %p348 = pneg %p280
      $region50: #{_yooo_head_forward.3} parent=11 // pred_check_branch
        %350 = sbr.rel (%p348) target = $region52
      $region51: #{_yooo_head_forward.3} parent=11 // pred_region
        _
      $region52: #{_yooo_head_forward.3} parent=11 // pred_fallthru
        _
    $region12: #{_yooo_head_forward.3} parent=5 // pred_fallthru
      _
    %p351 = scmp.lt.s32.totalorder %s18, 2
    // Predicated region
    $region53: #{_yooo_head_forward.3} parent=5 // pred_check
      %p352 = pneg %p351
    $region54: #{_yooo_head_forward.3} parent=5 // pred_check_branch
      %354 = sbr.rel (%p352) target = $region56
    $region55: #{_yooo_head_forward.3} parent=5 // pred_region
      // Predicated region
      $region57: #{_yooo_head_forward.3} parent=55 // pred_check
        %p355 = pneg %p38
      $region58: #{_yooo_head_forward.3} parent=55 // pred_check_branch
        %357 = sbr.rel (%p355) target = $region60
      $region59: #{_yooo_head_forward.3} parent=55 // pred_region
        %p358 = scmp.lt.s32.totalorder %s18, 1
        %s359 = scalar_select %p358, %s18, 1
        %s360 = smul.addr %s359, 32
        %s361 = smul.addr %s360, 4
        %s362 = scalar_lea.vmem %s0, %s361
      $region60: #{_yooo_head_forward.3} parent=55 // pred_fallthru
        _
      // Predicated region
      $region61: #{_yooo_head_forward.3} parent=55 // pred_check
        %p363 = pneg %p64
      $region62: #{_yooo_head_forward.3} parent=55 // pred_check_branch
        %365 = sbr.rel (%p363) target = $region64
      $region63: #{_yooo_head_forward.3} parent=55 // pred_region
        %p366 = scmp.lt.s32.totalorder %s18, 1
        %s367 = scalar_select %p366, %s18, 1
        %s368 = smul.addr %s367, 4
        %s369 = scalar_lea.vmem %s1, %s368
      $region64: #{_yooo_head_forward.3} parent=55 // pred_fallthru
        _
    $region56: #{_yooo_head_forward.3} parent=5 // pred_fallthru
      _
    %p370 = scmp.le.s32.totalorder 1, %s18
    %p371 = scmp.lt.s32.totalorder %s18, 3
    %p372 = pnand %p370, %p371
    %p373 = pneg %p372
    // Predicated region
    $region65: #{_yooo_head_forward.3} parent=5 // pred_check
      _
    $region66: #{_yooo_head_forward.3} parent=5 // pred_check_branch
      %375 = sbr.rel (%p372) target = $region68
    $region67: #{_yooo_head_forward.3} parent=5 // pred_region
      %s376 = ssub.s32 %s18, 1
      %p377 = scmp.lt.s32.totalorder %s23, 1
      %s378 = scalar_select %p377, %s23, 1
      %s379 = smul.addr %s378, 32
      %s380 = smul.addr %s379, 4
      %s381 = scalar_lea.vmem %s0, %s380
      %p382 = pneg %p44
      %p383 = pneg %p41
      %p384 = scmp.lt.s32.totalorder %s23, 1
      %s385 = scalar_select %p384, %s23, 1
      %s386 = smul.addr %s385, 4
      %s387 = scalar_lea.vmem %s1, %s386
      %p388 = pneg %p70
      %p389 = pneg %p67
      %p390 = pneg %p91
      %p391 = pneg %p88
      %p392 = pneg %p112
      %p393 = pneg %p109
      %p394 = pneg %p133
      %p395 = pneg %p130
      %p396 = pneg %p154
      %p397 = pneg %p151
      %p398 = pneg %p175
      %p399 = pneg %p172
      %p400 = pneg %p196
      %p401 = pneg %p193
      %p402 = pneg %p217
      %p403 = pneg %p214
      %p404 = pneg %p238
      %p405 = pneg %p235
      %p406 = pneg %p259
      %p407 = pneg %p256
      %p408 = pneg %p280
      %p409 = pneg %p277
      %p410 = pneg %p306
      %p411 = pneg %p303
      %p412 = scmp.lt.s32.totalorder %s23, 1
      %s413 = scalar_select %p412, %s23, 1
      %s414 = smul.addr %s413, 4
      %s415 = scalar_lea.vmem %s12, %s414
      %p416 = scmp.lt.s32.totalorder %s23, 1
      %s417 = scalar_select %p416, %s23, 1
      %s418 = smul.addr %s417, 32
      %s419 = smul.addr %s418, 4
      %s420 = scalar_lea.vmem %s0, %s419
      %p421 = scmp.lt.s32.totalorder %s23, 1
      %s422 = scalar_select %p421, %s23, 1
      %s423 = smul.addr %s422, 4
      %s424 = scalar_lea.vmem %s1, %s423
      %p425 = scmp.lt.s32.totalorder %s23, 1
      %s426 = scalar_select %p425, %s23, 1
      %s427 = smul.addr %s426, 4
      %s428 = scalar_lea.vmem %s12, %s427
      %v430 = vld [vmem:[%s7] sm:$0xff]
      %v431 = vld [vmem:[%s7 + $0x8] sm:$0xff]
      %v432 = vld [vmem:[%s7 + $0x10] sm:$0xff]
      %v433 = vld [vmem:[%s7 + $0x18] sm:$0xff]
      %v434 = vld [vmem:[%s7 + $0x20] sm:$0xff]
      %v435 = vld [vmem:[%s7 + $0x28] sm:$0xff]
      %v436 = vld [vmem:[%s7 + $0x30] sm:$0xff]
      %v437 = vld [vmem:[%s7 + $0x38] sm:$0xff]
      %v438 = vld [vmem:[%s7 + $0x40] sm:$0xff]
      %v439 = vld [vmem:[%s7 + $0x48] sm:$0xff]
      %v440 = vld [vmem:[%s7 + $0x50] sm:$0xff]
      %v441 = vld [vmem:[%s7 + $0x58] sm:$0xff]
      %v442 = vld [vmem:[%s7 + $0x60] sm:$0xff]
      %v443 = vld [vmem:[%s7 + $0x68] sm:$0xff]
      %v444 = vld [vmem:[%s7 + $0x70] sm:$0xff]
      %v445 = vld [vmem:[%s7 + $0x78] sm:$0xff]
      %v446 = vld [vmem:[%s8] sm:$0xff]
      %v447 = vld [vmem:[%s8 + $0x8] sm:$0xff]
      %v448 = vld [vmem:[%s8 + $0x10] sm:$0xff]
      %v449 = vld [vmem:[%s8 + $0x18] sm:$0xff]
      %v450 = vld [vmem:[%s8 + $0x20] sm:$0xff]
      %v451 = vld [vmem:[%s8 + $0x28] sm:$0xff]
      %v452 = vld [vmem:[%s8 + $0x30] sm:$0xff]
      %v453 = vld [vmem:[%s8 + $0x38] sm:$0xff]
      %v454 = vld [vmem:[%s420] sm:$0xf]
      %v455 = vld [vmem:[%s420 + $0x4] sm:$0xf]
      %v456 = vld [vmem:[%s420 + $0x8] sm:$0xf]
      %v457 = vld [vmem:[%s420 + $0xc] sm:$0xf]
      %v458 = vld [vmem:[%s420 + $0x10] sm:$0xf]
      %v459 = vld [vmem:[%s420 + $0x14] sm:$0xf]
      %v460 = vld [vmem:[%s420 + $0x18] sm:$0xf]
      %v461 = vld [vmem:[%s420 + $0x1c] sm:$0xf]
      %v462 = vld [vmem:[%s420 + $0x20] sm:$0xf]
      %v463 = vld [vmem:[%s420 + $0x24] sm:$0xf]
      %v464 = vld [vmem:[%s420 + $0x28] sm:$0xf]
      %v465 = vld [vmem:[%s420 + $0x2c] sm:$0xf]
      %v466 = vld [vmem:[%s420 + $0x30] sm:$0xf]
      %v467 = vld [vmem:[%s420 + $0x34] sm:$0xf]
      %v468 = vld [vmem:[%s420 + $0x38] sm:$0xf]
      %v469 = vld [vmem:[%s420 + $0x3c] sm:$0xf]
      %v470 = vld [vmem:[%s420 + $0x40] sm:$0xf]
      %v471 = vld [vmem:[%s420 + $0x44] sm:$0xf]
      %v472 = vld [vmem:[%s420 + $0x48] sm:$0xf]
      %v473 = vld [vmem:[%s420 + $0x4c] sm:$0xf]
      %v474 = vld [vmem:[%s420 + $0x50] sm:$0xf]
      %v475 = vld [vmem:[%s420 + $0x54] sm:$0xf]
      %v476 = vld [vmem:[%s420 + $0x58] sm:$0xf]
      %v477 = vld [vmem:[%s420 + $0x5c] sm:$0xf]
      %v478 = vld [vmem:[%s420 + $0x60] sm:$0xf]
      %v479 = vld [vmem:[%s420 + $0x64] sm:$0xf]
      %v480 = vld [vmem:[%s420 + $0x68] sm:$0xf]
      %v481 = vld [vmem:[%s420 + $0x6c] sm:$0xf]
      %v482 = vld [vmem:[%s420 + $0x70] sm:$0xf]
      %v483 = vld [vmem:[%s420 + $0x74] sm:$0xf]
      %v484 = vld [vmem:[%s420 + $0x78] sm:$0xf]
      %v485 = vld [vmem:[%s420 + $0x7c] sm:$0xf]
      %v487 = vshrl.u32 0, 16
      %v489 = vrot.slane %v487, 7
      %v490 = vshll.u32 0, 16
      %v492 = vor.u32 %v489, %v490
      %v494 = vshrl.u32 %v454, 16
      %v496 = vrot.slane %v494, 7
      %v497 = vshll.u32 %v454, 16
      %v499 = vor.u32 %v496, %v497
      %v501 = vshrl.u32 %v455, 16
      %v503 = vrot.slane %v501, 7
      %v504 = vshll.u32 %v455, 16
      %v506 = vor.u32 %v503, %v504
      %v508 = vshrl.u32 %v456, 16
      %v510 = vrot.slane %v508, 7
      %v511 = vshll.u32 %v456, 16
      %v513 = vor.u32 %v510, %v511
      %v515 = vshrl.u32 %v457, 16
      %v517 = vrot.slane %v515, 7
      %v518 = vshll.u32 %v457, 16
      %v520 = vor.u32 %v517, %v518
      %v522 = vshrl.u32 %v458, 16
      %v524 = vrot.slane %v522, 7
      %v525 = vshll.u32 %v458, 16
      %v527 = vor.u32 %v524, %v525
      %v529 = vshrl.u32 %v459, 16
      %v531 = vrot.slane %v529, 7
      %v532 = vshll.u32 %v459, 16
      %v534 = vor.u32 %v531, %v532
      %v536 = vshrl.u32 %v460, 16
      %v538 = vrot.slane %v536, 7
      %v539 = vshll.u32 %v460, 16
      %v541 = vor.u32 %v538, %v539
      %v543 = vshrl.u32 %v461, 16
      %v545 = vrot.slane %v543, 7
      %v546 = vshll.u32 %v461, 16
      %v548 = vor.u32 %v545, %v546
      %v550 = vshrl.u32 %v462, 16
      %v552 = vrot.slane %v550, 7
      %v553 = vshll.u32 %v462, 16
      %v555 = vor.u32 %v552, %v553
      %v557 = vshrl.u32 %v463, 16
      %v559 = vrot.slane %v557, 7
      %v560 = vshll.u32 %v463, 16
      %v562 = vor.u32 %v559, %v560
      %v564 = vshrl.u32 %v464, 16
      %v566 = vrot.slane %v564, 7
      %v567 = vshll.u32 %v464, 16
      %v569 = vor.u32 %v566, %v567
      %v571 = vshrl.u32 %v465, 16
      %v573 = vrot.slane %v571, 7
      %v574 = vshll.u32 %v465, 16
      %v576 = vor.u32 %v573, %v574
      %v578 = vshrl.u32 %v466, 16
      %v580 = vrot.slane %v578, 7
      %v581 = vshll.u32 %v466, 16
      %v583 = vor.u32 %v580, %v581
      %v585 = vshrl.u32 %v467, 16
      %v587 = vrot.slane %v585, 7
      %v588 = vshll.u32 %v467, 16
      %v590 = vor.u32 %v587, %v588
      %v592 = vshrl.u32 %v468, 16
      %v594 = vrot.slane %v592, 7
      %v595 = vshll.u32 %v468, 16
      %v597 = vor.u32 %v594, %v595
      %v599 = vshrl.u32 %v469, 16
      %v601 = vrot.slane %v599, 7
      %v602 = vshll.u32 %v469, 16
      %v604 = vor.u32 %v601, %v602
      %v606 = vshrl.u32 %v470, 16
      %v608 = vrot.slane %v606, 7
      %v609 = vshll.u32 %v470, 16
      %v611 = vor.u32 %v608, %v609
      %v613 = vshrl.u32 %v471, 16
      %v615 = vrot.slane %v613, 7
      %v616 = vshll.u32 %v471, 16
      %v618 = vor.u32 %v615, %v616
      %v620 = vshrl.u32 %v472, 16
      %v622 = vrot.slane %v620, 7
      %v623 = vshll.u32 %v472, 16
      %v625 = vor.u32 %v622, %v623
      %v627 = vshrl.u32 %v473, 16
      %v629 = vrot.slane %v627, 7
      %v630 = vshll.u32 %v473, 16
      %v632 = vor.u32 %v629, %v630
      %v634 = vshrl.u32 %v474, 16
      %v636 = vrot.slane %v634, 7
      %v637 = vshll.u32 %v474, 16
      %v639 = vor.u32 %v636, %v637
      %v641 = vshrl.u32 %v475, 16
      %v643 = vrot.slane %v641, 7
      %v644 = vshll.u32 %v475, 16
      %v646 = vor.u32 %v643, %v644
      %v648 = vshrl.u32 %v476, 16
      %v650 = vrot.slane %v648, 7
      %v651 = vshll.u32 %v476, 16
      %v653 = vor.u32 %v650, %v651
      %v655 = vshrl.u32 %v477, 16
      %v657 = vrot.slane %v655, 7
      %v658 = vshll.u32 %v477, 16
      %v660 = vor.u32 %v657, %v658
      %v662 = vshrl.u32 %v478, 16
      %v664 = vrot.slane %v662, 7
      %v665 = vshll.u32 %v478, 16
      %v667 = vor.u32 %v664, %v665
      %v669 = vshrl.u32 %v479, 16
      %v671 = vrot.slane %v669, 7
      %v672 = vshll.u32 %v479, 16
      %v674 = vor.u32 %v671, %v672
      %v676 = vshrl.u32 %v480, 16
      %v678 = vrot.slane %v676, 7
      %v679 = vshll.u32 %v480, 16
      %v681 = vor.u32 %v678, %v679
      %v683 = vshrl.u32 %v481, 16
      %v685 = vrot.slane %v683, 7
      %v686 = vshll.u32 %v481, 16
      %v688 = vor.u32 %v685, %v686
      %v690 = vshrl.u32 %v482, 16
      %v692 = vrot.slane %v690, 7
      %v693 = vshll.u32 %v482, 16
      %v695 = vor.u32 %v692, %v693
      %v697 = vshrl.u32 %v483, 16
      %v699 = vrot.slane %v697, 7
      %v700 = vshll.u32 %v483, 16
      %v702 = vor.u32 %v699, %v700
      %v704 = vshrl.u32 %v484, 16
      %v706 = vrot.slane %v704, 7
      %v707 = vshll.u32 %v484, 16
      %v709 = vor.u32 %v706, %v707
      %v711 = vshrl.u32 %v485, 16
      %v713 = vrot.slane %v711, 7
      %v714 = vshll.u32 %v485, 16
      %v716 = vor.u32 %v713, %v714
      %vm750 = vcmask 1040384
      %vm751 = vsmask.f32 256
      %vm752 = vmand %vm750, %vm751
      %v753 = vsel %vm752, 0, %v492
      %v754 = vsel %vm752, 0, %v499
      %v755 = vsel %vm752, 0, %v506
      %v756 = vsel %vm752, 0, %v513
      %v757 = vsel %vm752, 0, %v520
      %v758 = vsel %vm752, 0, %v527
      %v759 = vsel %vm752, 0, %v534
      %v760 = vsel %vm752, 0, %v541
      %v761 = vsel %vm752, 0, %v548
      %v762 = vsel %vm752, 0, %v555
      %v763 = vsel %vm752, 0, %v562
      %v764 = vsel %vm752, 0, %v569
      %v765 = vsel %vm752, 0, %v576
      %v766 = vsel %vm752, 0, %v583
      %v767 = vsel %vm752, 0, %v590
      %v768 = vsel %vm752, 0, %v597
      %v769 = vsel %vm752, 0, %v604
      %v770 = vsel %vm752, 0, %v611
      %v771 = vsel %vm752, 0, %v618
      %v772 = vsel %vm752, 0, %v625
      %v773 = vsel %vm752, 0, %v632
      %v774 = vsel %vm752, 0, %v639
      %v775 = vsel %vm752, 0, %v646
      %v776 = vsel %vm752, 0, %v653
      %v777 = vsel %vm752, 0, %v660
      %v778 = vsel %vm752, 0, %v667
      %v779 = vsel %vm752, 0, %v674
      %v780 = vsel %vm752, 0, %v681
      %v781 = vsel %vm752, 0, %v688
      %v782 = vsel %vm752, 0, %v695
      %v783 = vsel %vm752, 0, %v702
      %v784 = vsel %vm752, 0, %v709
      %v785 = vsel %vm752, 0, %v716
      %vm786 = vcmask 1044480
      %vm787 = vsmask.f32 4352
      %vm788 = vmand %vm786, %vm787
      %v789 = vsel %vm788, %v753, 0
      %v790 = vsel %vm788, %v754, 0
      %v791 = vsel %vm788, %v755, 0
      %v792 = vsel %vm788, %v756, 0
      %v793 = vsel %vm788, %v757, 0
      %v794 = vsel %vm788, %v758, 0
      %v795 = vsel %vm788, %v759, 0
      %v796 = vsel %vm788, %v760, 0
      %v797 = vsel %vm788, %v761, 0
      %v798 = vsel %vm788, %v762, 0
      %v799 = vsel %vm788, %v763, 0
      %v800 = vsel %vm788, %v764, 0
      %v801 = vsel %vm788, %v765, 0
      %v802 = vsel %vm788, %v766, 0
      %v803 = vsel %vm788, %v767, 0
      %v804 = vsel %vm788, %v768, 0
      %v805 = vsel %vm788, %v769, 0
      %v806 = vsel %vm788, %v770, 0
      %v807 = vsel %vm788, %v771, 0
      %v808 = vsel %vm788, %v772, 0
      %v809 = vsel %vm788, %v773, 0
      %v810 = vsel %vm788, %v774, 0
      %v811 = vsel %vm788, %v775, 0
      %v812 = vsel %vm788, %v776, 0
      %v813 = vsel %vm788, %v777, 0
      %v814 = vsel %vm788, %v778, 0
      %v815 = vsel %vm788, %v779, 0
      %v816 = vsel %vm788, %v780, 0
      %v817 = vsel %vm788, %v781, 0
      %v818 = vsel %vm788, %v782, 0
      %v819 = vsel %vm788, %v783, 0
      %v820 = vsel %vm788, %v784, 0
      %v821 = vsel %vm788, %v785, 0
      %v823 = vshrl.u32 %v789, 16
      %v825 = vshll.u32 %v789, 16
      %v827 = vrot.slane %v825, 1
      %v828 = vor.u32 %v823, %v827
      %v830 = vshrl.u32 %v790, 16
      %v832 = vshll.u32 %v790, 16
      %v834 = vrot.slane %v832, 1
      %v835 = vor.u32 %v830, %v834
      %v837 = vshrl.u32 %v791, 16
      %v839 = vshll.u32 %v791, 16
      %v841 = vrot.slane %v839, 1
      %v842 = vor.u32 %v837, %v841
      %v844 = vshrl.u32 %v792, 16
      %v846 = vshll.u32 %v792, 16
      %v848 = vrot.slane %v846, 1
      %v849 = vor.u32 %v844, %v848
      %v851 = vshrl.u32 %v793, 16
      %v853 = vshll.u32 %v793, 16
      %v855 = vrot.slane %v853, 1
      %v856 = vor.u32 %v851, %v855
      %v858 = vshrl.u32 %v794, 16
      %v860 = vshll.u32 %v794, 16
      %v862 = vrot.slane %v860, 1
      %v863 = vor.u32 %v858, %v862
      %v865 = vshrl.u32 %v795, 16
      %v867 = vshll.u32 %v795, 16
      %v869 = vrot.slane %v867, 1
      %v870 = vor.u32 %v865, %v869
      %v872 = vshrl.u32 %v796, 16
      %v874 = vshll.u32 %v796, 16
      %v876 = vrot.slane %v874, 1
      %v877 = vor.u32 %v872, %v876
      %v879 = vshrl.u32 %v798, 16
      %v881 = vshll.u32 %v798, 16
      %v883 = vrot.slane %v881, 1
      %v884 = vor.u32 %v879, %v883
      %v886 = vshrl.u32 %v799, 16
      %v888 = vshll.u32 %v799, 16
      %v890 = vrot.slane %v888, 1
      %v891 = vor.u32 %v886, %v890
      %v893 = vshrl.u32 %v800, 16
      %v895 = vshll.u32 %v800, 16
      %v897 = vrot.slane %v895, 1
      %v898 = vor.u32 %v893, %v897
      %v900 = vshrl.u32 %v801, 16
      %v902 = vshll.u32 %v801, 16
      %v904 = vrot.slane %v902, 1
      %v905 = vor.u32 %v900, %v904
      %v907 = vshrl.u32 %v802, 16
      %v909 = vshll.u32 %v802, 16
      %v911 = vrot.slane %v909, 1
      %v912 = vor.u32 %v907, %v911
      %v914 = vshrl.u32 %v803, 16
      %v916 = vshll.u32 %v803, 16
      %v918 = vrot.slane %v916, 1
      %v919 = vor.u32 %v914, %v918
      %v921 = vshrl.u32 %v804, 16
      %v923 = vshll.u32 %v804, 16
      %v925 = vrot.slane %v923, 1
      %v926 = vor.u32 %v921, %v925
      %v928 = vshrl.u32 %v806, 16
      %v930 = vshll.u32 %v806, 16
      %v932 = vrot.slane %v930, 1
      %v933 = vor.u32 %v928, %v932
      %v935 = vshrl.u32 %v807, 16
      %v937 = vshll.u32 %v807, 16
      %v939 = vrot.slane %v937, 1
      %v940 = vor.u32 %v935, %v939
      %v942 = vshrl.u32 %v808, 16
      %v944 = vshll.u32 %v808, 16
      %v946 = vrot.slane %v944, 1
      %v947 = vor.u32 %v942, %v946
      %v949 = vshrl.u32 %v809, 16
      %v951 = vshll.u32 %v809, 16
      %v953 = vrot.slane %v951, 1
      %v954 = vor.u32 %v949, %v953
      %v956 = vshrl.u32 %v810, 16
      %v958 = vshll.u32 %v810, 16
      %v960 = vrot.slane %v958, 1
      %v961 = vor.u32 %v956, %v960
      %v963 = vshrl.u32 %v811, 16
      %v965 = vshll.u32 %v811, 16
      %v967 = vrot.slane %v965, 1
      %v968 = vor.u32 %v963, %v967
      %v970 = vshrl.u32 %v812, 16
      %v972 = vshll.u32 %v812, 16
      %v974 = vrot.slane %v972, 1
      %v975 = vor.u32 %v970, %v974
      %v977 = vshrl.u32 %v814, 16
      %v979 = vshll.u32 %v814, 16
      %v981 = vrot.slane %v979, 1
      %v982 = vor.u32 %v977, %v981
      %v984 = vshrl.u32 %v815, 16
      %v986 = vshll.u32 %v815, 16
      %v988 = vrot.slane %v986, 1
      %v989 = vor.u32 %v984, %v988
      %v991 = vshrl.u32 %v816, 16
      %v993 = vshll.u32 %v816, 16
      %v995 = vrot.slane %v993, 1
      %v996 = vor.u32 %v991, %v995
      %v998 = vshrl.u32 %v817, 16
      %v1000 = vshll.u32 %v817, 16
      %v1002 = vrot.slane %v1000, 1
      %v1003 = vor.u32 %v998, %v1002
      %v1005 = vshrl.u32 %v818, 16
      %v1007 = vshll.u32 %v818, 16
      %v1009 = vrot.slane %v1007, 1
      %v1010 = vor.u32 %v1005, %v1009
      %v1012 = vshrl.u32 %v819, 16
      %v1014 = vshll.u32 %v819, 16
      %v1016 = vrot.slane %v1014, 1
      %v1017 = vor.u32 %v1012, %v1016
      %v1019 = vshrl.u32 %v820, 16
      %v1021 = vshll.u32 %v820, 16
      %v1023 = vrot.slane %v1021, 1
      %v1024 = vor.u32 %v1019, %v1023
      %1025 = vrot.lane.b32.xlu0 %v828, 64
      %v1026 = vpop.permute.xlu0 %1025
      %1027 = vrot.lane.b32.xlu0 %v835, 64
      %v1028 = vpop.permute.xlu0 %1027
      %1029 = vrot.lane.b32.xlu0 %v842, 64
      %v1030 = vpop.permute.xlu0 %1029
      %1031 = vrot.lane.b32.xlu0 %v849, 64
      %v1032 = vpop.permute.xlu0 %1031
      %1033 = vrot.lane.b32.xlu0 %v856, 64
      %v1034 = vpop.permute.xlu0 %1033
      %1035 = vrot.lane.b32.xlu0 %v863, 64
      %v1036 = vpop.permute.xlu0 %1035
      %1037 = vrot.lane.b32.xlu0 %v870, 64
      %v1038 = vpop.permute.xlu0 %1037
      %1039 = vrot.lane.b32.xlu0 %v877, 64
      %v1040 = vpop.permute.xlu0 %1039
      %1041 = vrot.lane.b32.xlu0 %v884, 64
      %v1042 = vpop.permute.xlu0 %1041
      %1043 = vrot.lane.b32.xlu0 %v891, 64
      %v1044 = vpop.permute.xlu0 %1043
      %1045 = vrot.lane.b32.xlu0 %v898, 64
      %v1046 = vpop.permute.xlu0 %1045
      %1047 = vrot.lane.b32.xlu0 %v905, 64
      %v1048 = vpop.permute.xlu0 %1047
      %1049 = vrot.lane.b32.xlu0 %v912, 64
      %v1050 = vpop.permute.xlu0 %1049
      %1051 = vrot.lane.b32.xlu0 %v919, 64
      %v1052 = vpop.permute.xlu0 %1051
      %1053 = vrot.lane.b32.xlu0 %v926, 64
      %v1054 = vpop.permute.xlu0 %1053
      %1055 = vrot.lane.b32.xlu0 %v933, 64
      %v1056 = vpop.permute.xlu0 %1055
      %1057 = vrot.lane.b32.xlu0 %v940, 64
      %v1058 = vpop.permute.xlu0 %1057
      %1059 = vrot.lane.b32.xlu0 %v947, 64
      %v1060 = vpop.permute.xlu0 %1059
      %1061 = vrot.lane.b32.xlu0 %v954, 64
      %v1062 = vpop.permute.xlu0 %1061
      %1063 = vrot.lane.b32.xlu0 %v961, 64
      %v1064 = vpop.permute.xlu0 %1063
      %1065 = vrot.lane.b32.xlu0 %v968, 64
      %v1066 = vpop.permute.xlu0 %1065
      %1067 = vrot.lane.b32.xlu0 %v975, 64
      %v1068 = vpop.permute.xlu0 %1067
      %1069 = vrot.lane.b32.xlu0 %v982, 64
      %v1070 = vpop.permute.xlu0 %1069
      %1071 = vrot.lane.b32.xlu0 %v989, 64
      %v1072 = vpop.permute.xlu0 %1071
      %1073 = vrot.lane.b32.xlu0 %v996, 64
      %v1074 = vpop.permute.xlu0 %1073
      %1075 = vrot.lane.b32.xlu0 %v1003, 64
      %v1076 = vpop.permute.xlu0 %1075
      %1077 = vrot.lane.b32.xlu0 %v1010, 64
      %v1078 = vpop.permute.xlu0 %1077
      %1079 = vrot.lane.b32.xlu0 %v1017, 64
      %v1080 = vpop.permute.xlu0 %1079
      %1081 = vrot.lane.b32.xlu0 %v1024, 64
      %v1082 = vpop.permute.xlu0 %1081
      %v1112 = vrot.slane %v789, 1
      %v1113 = vrot.slane %v790, 1
      %v1114 = vrot.slane %v791, 1
      %v1115 = vrot.slane %v792, 1
      %v1116 = vrot.slane %v793, 1
      %v1117 = vrot.slane %v794, 1
      %v1118 = vrot.slane %v795, 1
      %v1119 = vrot.slane %v796, 1
      %v1120 = vrot.slane %v798, 1
      %v1121 = vrot.slane %v799, 1
      %v1122 = vrot.slane %v800, 1
      %v1123 = vrot.slane %v801, 1
      %v1124 = vrot.slane %v802, 1
      %v1125 = vrot.slane %v803, 1
      %v1126 = vrot.slane %v804, 1
      %v1127 = vrot.slane %v806, 1
      %v1128 = vrot.slane %v807, 1
      %v1129 = vrot.slane %v808, 1
      %v1130 = vrot.slane %v809, 1
      %v1131 = vrot.slane %v810, 1
      %v1132 = vrot.slane %v811, 1
      %v1133 = vrot.slane %v812, 1
      %v1134 = vrot.slane %v814, 1
      %v1135 = vrot.slane %v815, 1
      %v1136 = vrot.slane %v816, 1
      %v1137 = vrot.slane %v817, 1
      %v1138 = vrot.slane %v818, 1
      %v1139 = vrot.slane %v819, 1
      %v1140 = vrot.slane %v820, 1
      %1145 = vrot.lane.b32.xlu0 %v790, 64
      %v1146 = vpop.permute.xlu0 %1145
      %1147 = vrot.lane.b32.xlu0 %v791, 64
      %v1148 = vpop.permute.xlu0 %1147
      %1149 = vrot.lane.b32.xlu0 %v792, 64
      %v1150 = vpop.permute.xlu0 %1149
      %1151 = vrot.lane.b32.xlu0 %v793, 64
      %v1152 = vpop.permute.xlu0 %1151
      %1153 = vrot.lane.b32.xlu0 %v794, 64
      %v1154 = vpop.permute.xlu0 %1153
      %1155 = vrot.lane.b32.xlu0 %v795, 64
      %v1156 = vpop.permute.xlu0 %1155
      %1157 = vrot.lane.b32.xlu0 %v796, 64
      %v1158 = vpop.permute.xlu0 %1157
      %1159 = vrot.lane.b32.xlu0 %v797, 64
      %v1160 = vpop.permute.xlu0 %1159
      %1161 = vrot.lane.b32.xlu0 %v798, 64
      %v1162 = vpop.permute.xlu0 %1161
      %1163 = vrot.lane.b32.xlu0 %v799, 64
      %v1164 = vpop.permute.xlu0 %1163
      %1165 = vrot.lane.b32.xlu0 %v800, 64
      %v1166 = vpop.permute.xlu0 %1165
      %1167 = vrot.lane.b32.xlu0 %v801, 64
      %v1168 = vpop.permute.xlu0 %1167
      %1169 = vrot.lane.b32.xlu0 %v802, 64
      %v1170 = vpop.permute.xlu0 %1169
      %1171 = vrot.lane.b32.xlu0 %v803, 64
      %v1172 = vpop.permute.xlu0 %1171
      %1173 = vrot.lane.b32.xlu0 %v804, 64
      %v1174 = vpop.permute.xlu0 %1173
      %1175 = vrot.lane.b32.xlu0 %v805, 64
      %v1176 = vpop.permute.xlu0 %1175
      %1177 = vrot.lane.b32.xlu0 %v806, 64
      %v1178 = vpop.permute.xlu0 %1177
      %1179 = vrot.lane.b32.xlu0 %v807, 64
      %v1180 = vpop.permute.xlu0 %1179
      %1181 = vrot.lane.b32.xlu0 %v808, 64
      %v1182 = vpop.permute.xlu0 %1181
      %1183 = vrot.lane.b32.xlu0 %v809, 64
      %v1184 = vpop.permute.xlu0 %1183
      %1185 = vrot.lane.b32.xlu0 %v810, 64
      %v1186 = vpop.permute.xlu0 %1185
      %1187 = vrot.lane.b32.xlu0 %v811, 64
      %v1188 = vpop.permute.xlu0 %1187
      %1189 = vrot.lane.b32.xlu0 %v812, 64
      %v1190 = vpop.permute.xlu0 %1189
      %1191 = vrot.lane.b32.xlu0 %v813, 64
      %v1192 = vpop.permute.xlu0 %1191
      %1193 = vrot.lane.b32.xlu0 %v814, 64
      %v1194 = vpop.permute.xlu0 %1193
      %1195 = vrot.lane.b32.xlu0 %v815, 64
      %v1196 = vpop.permute.xlu0 %1195
      %1197 = vrot.lane.b32.xlu0 %v816, 64
      %v1198 = vpop.permute.xlu0 %1197
      %1199 = vrot.lane.b32.xlu0 %v817, 64
      %v1200 = vpop.permute.xlu0 %1199
      %1201 = vrot.lane.b32.xlu0 %v818, 64
      %v1202 = vpop.permute.xlu0 %1201
      %1203 = vrot.lane.b32.xlu0 %v819, 64
      %v1204 = vpop.permute.xlu0 %1203
      %1205 = vrot.lane.b32.xlu0 %v820, 64
      %v1206 = vpop.permute.xlu0 %1205
      %1207 = vrot.lane.b32.xlu0 %v821, 64
      %v1208 = vpop.permute.xlu0 %1207
      %v1210 = vshrl.u32 %v797, 16
      %v1212 = vshll.u32 %v797, 16
      %v1214 = vrot.slane %v1212, 1
      %v1215 = vor.u32 %v1210, %v1214
      %v1217 = vshrl.u32 %v805, 16
      %v1219 = vshll.u32 %v805, 16
      %v1221 = vrot.slane %v1219, 1
      %v1222 = vor.u32 %v1217, %v1221
      %v1224 = vshrl.u32 %v813, 16
      %v1226 = vshll.u32 %v813, 16
      %v1228 = vrot.slane %v1226, 1
      %v1229 = vor.u32 %v1224, %v1228
      %v1231 = vshrl.u32 %v821, 16
      %v1233 = vshll.u32 %v821, 16
      %v1235 = vrot.slane %v1233, 1
      %v1236 = vor.u32 %v1231, %v1235
      %v1237 = vrot.slane %v797, 1
      %v1238 = vrot.slane %v805, 1
      %v1239 = vrot.slane %v813, 1
      %v1240 = vrot.slane %v821, 1
      %1241 = vrot.lane.b32.xlu0 %v1113, 64
      %v1242 = vpop.permute.xlu0 %1241
      %1243 = vrot.lane.b32.xlu0 %v1114, 64
      %v1244 = vpop.permute.xlu0 %1243
      %1245 = vrot.lane.b32.xlu0 %v1115, 64
      %v1246 = vpop.permute.xlu0 %1245
      %1247 = vrot.lane.b32.xlu0 %v1116, 64
      %v1248 = vpop.permute.xlu0 %1247
      %1249 = vrot.lane.b32.xlu0 %v1117, 64
      %v1250 = vpop.permute.xlu0 %1249
      %1251 = vrot.lane.b32.xlu0 %v1118, 64
      %v1252 = vpop.permute.xlu0 %1251
      %1253 = vrot.lane.b32.xlu0 %v1119, 64
      %v1254 = vpop.permute.xlu0 %1253
      %1255 = vrot.lane.b32.xlu0 %v1237, 64
      %v1256 = vpop.permute.xlu0 %1255
      %1257 = vrot.lane.b32.xlu0 %v1120, 64
      %v1258 = vpop.permute.xlu0 %1257
      %1259 = vrot.lane.b32.xlu0 %v1121, 64
      %v1260 = vpop.permute.xlu0 %1259
      %1261 = vrot.lane.b32.xlu0 %v1122, 64
      %v1262 = vpop.permute.xlu0 %1261
      %1263 = vrot.lane.b32.xlu0 %v1123, 64
      %v1264 = vpop.permute.xlu0 %1263
      %1265 = vrot.lane.b32.xlu0 %v1124, 64
      %v1266 = vpop.permute.xlu0 %1265
      %1267 = vrot.lane.b32.xlu0 %v1125, 64
      %v1268 = vpop.permute.xlu0 %1267
      %1269 = vrot.lane.b32.xlu0 %v1126, 64
      %v1270 = vpop.permute.xlu0 %1269
      %1271 = vrot.lane.b32.xlu0 %v1238, 64
      %v1272 = vpop.permute.xlu0 %1271
      %1273 = vrot.lane.b32.xlu0 %v1127, 64
      %v1274 = vpop.permute.xlu0 %1273
      %1275 = vrot.lane.b32.xlu0 %v1128, 64
      %v1276 = vpop.permute.xlu0 %1275
      %1277 = vrot.lane.b32.xlu0 %v1129, 64
      %v1278 = vpop.permute.xlu0 %1277
      %1279 = vrot.lane.b32.xlu0 %v1130, 64
      %v1280 = vpop.permute.xlu0 %1279
      %1281 = vrot.lane.b32.xlu0 %v1131, 64
      %v1282 = vpop.permute.xlu0 %1281
      %1283 = vrot.lane.b32.xlu0 %v1132, 64
      %v1284 = vpop.permute.xlu0 %1283
      %1285 = vrot.lane.b32.xlu0 %v1133, 64
      %v1286 = vpop.permute.xlu0 %1285
      %1287 = vrot.lane.b32.xlu0 %v1239, 64
      %v1288 = vpop.permute.xlu0 %1287
      %1289 = vrot.lane.b32.xlu0 %v1134, 64
      %v1290 = vpop.permute.xlu0 %1289
      %1291 = vrot.lane.b32.xlu0 %v1135, 64
      %v1292 = vpop.permute.xlu0 %1291
      %1293 = vrot.lane.b32.xlu0 %v1136, 64
      %v1294 = vpop.permute.xlu0 %1293
      %1295 = vrot.lane.b32.xlu0 %v1137, 64
      %v1296 = vpop.permute.xlu0 %1295
      %1297 = vrot.lane.b32.xlu0 %v1138, 64
      %v1298 = vpop.permute.xlu0 %1297
      %1299 = vrot.lane.b32.xlu0 %v1139, 64
      %v1300 = vpop.permute.xlu0 %1299
      %1301 = vrot.lane.b32.xlu0 %v1140, 64
      %v1302 = vpop.permute.xlu0 %1301
      %1303 = vrot.lane.b32.xlu0 %v1240, 64
      %v1304 = vpop.permute.xlu0 %1303
      %1305 = vrot.lane.b32.xlu0 %v1215, 64
      %v1306 = vpop.permute.xlu0 %1305
      %1307 = vrot.lane.b32.xlu0 %v1222, 64
      %v1308 = vpop.permute.xlu0 %1307
      %1309 = vrot.lane.b32.xlu0 %v1229, 64
      %v1310 = vpop.permute.xlu0 %1309
      %1311 = vrot.lane.b32.xlu0 %v1236, 64
      %v1312 = vpop.permute.xlu0 %1311
      %vm1313 = vcmask 523264
      %v1315 = vsel %vm1313, %v789, %v1026
      %v1317 = vsel %vm1313, %v790, %v1028
      %v1319 = vsel %vm1313, %v791, %v1030
      %v1321 = vsel %vm1313, %v792, %v1032
      %v1323 = vsel %vm1313, %v793, %v1034
      %v1325 = vsel %vm1313, %v794, %v1036
      %v1327 = vsel %vm1313, %v795, %v1038
      %v1329 = vsel %vm1313, %v796, %v1040
      %v1331 = vsel %vm1313, %v798, %v1042
      %v1333 = vsel %vm1313, %v799, %v1044
      %v1335 = vsel %vm1313, %v800, %v1046
      %v1337 = vsel %vm1313, %v801, %v1048
      %v1339 = vsel %vm1313, %v802, %v1050
      %v1341 = vsel %vm1313, %v803, %v1052
      %v1343 = vsel %vm1313, %v804, %v1054
      %v1345 = vsel %vm1313, %v806, %v1056
      %v1347 = vsel %vm1313, %v807, %v1058
      %v1349 = vsel %vm1313, %v808, %v1060
      %v1351 = vsel %vm1313, %v809, %v1062
      %v1353 = vsel %vm1313, %v810, %v1064
      %v1355 = vsel %vm1313, %v811, %v1066
      %v1357 = vsel %vm1313, %v812, %v1068
      %v1359 = vsel %vm1313, %v814, %v1070
      %v1361 = vsel %vm1313, %v815, %v1072
      %v1363 = vsel %vm1313, %v816, %v1074
      %v1365 = vsel %vm1313, %v817, %v1076
      %v1367 = vsel %vm1313, %v818, %v1078
      %v1369 = vsel %vm1313, %v819, %v1080
      %v1371 = vsel %vm1313, %v820, %v1082
      %v1374 = vsel %vm1313, %v1112, %v1146
      %v1377 = vsel %vm1313, %v1113, %v1148
      %v1380 = vsel %vm1313, %v1114, %v1150
      %v1383 = vsel %vm1313, %v1115, %v1152
      %v1386 = vsel %vm1313, %v1116, %v1154
      %v1389 = vsel %vm1313, %v1117, %v1156
      %v1392 = vsel %vm1313, %v1118, %v1158
      %v1395 = vsel %vm1313, %v1119, %v1160
      %v1397 = vsel %vm1313, %v1112, %v1162
      %v1400 = vsel %vm1313, %v1120, %v1164
      %v1403 = vsel %vm1313, %v1121, %v1166
      %v1406 = vsel %vm1313, %v1122, %v1168
      %v1409 = vsel %vm1313, %v1123, %v1170
      %v1412 = vsel %vm1313, %v1124, %v1172
      %v1415 = vsel %vm1313, %v1125, %v1174
      %v1418 = vsel %vm1313, %v1126, %v1176
      %v1420 = vsel %vm1313, %v1112, %v1178
      %v1423 = vsel %vm1313, %v1127, %v1180
      %v1426 = vsel %vm1313, %v1128, %v1182
      %v1429 = vsel %vm1313, %v1129, %v1184
      %v1432 = vsel %vm1313, %v1130, %v1186
      %v1435 = vsel %vm1313, %v1131, %v1188
      %v1438 = vsel %vm1313, %v1132, %v1190
      %v1441 = vsel %vm1313, %v1133, %v1192
      %v1443 = vsel %vm1313, %v1112, %v1194
      %v1446 = vsel %vm1313, %v1134, %v1196
      %v1449 = vsel %vm1313, %v1135, %v1198
      %v1452 = vsel %vm1313, %v1136, %v1200
      %v1455 = vsel %vm1313, %v1137, %v1202
      %v1458 = vsel %vm1313, %v1138, %v1204
      %v1461 = vsel %vm1313, %v1139, %v1206
      %v1464 = vsel %vm1313, %v1140, %v1208
      %v1467 = vsel %vm1313, %v835, %v1242
      %v1470 = vsel %vm1313, %v842, %v1244
      %v1473 = vsel %vm1313, %v849, %v1246
      %v1476 = vsel %vm1313, %v856, %v1248
      %v1479 = vsel %vm1313, %v863, %v1250
      %v1482 = vsel %vm1313, %v870, %v1252
      %v1485 = vsel %vm1313, %v877, %v1254
      %v1488 = vsel %vm1313, %v1215, %v1256
      %v1491 = vsel %vm1313, %v884, %v1258
      %v1494 = vsel %vm1313, %v891, %v1260
      %v1497 = vsel %vm1313, %v898, %v1262
      %v1500 = vsel %vm1313, %v905, %v1264
      %v1503 = vsel %vm1313, %v912, %v1266
      %v1506 = vsel %vm1313, %v919, %v1268
      %v1509 = vsel %vm1313, %v926, %v1270
      %v1512 = vsel %vm1313, %v1222, %v1272
      %v1515 = vsel %vm1313, %v933, %v1274
      %v1518 = vsel %vm1313, %v940, %v1276
      %v1521 = vsel %vm1313, %v947, %v1278
      %v1524 = vsel %vm1313, %v954, %v1280
      %v1527 = vsel %vm1313, %v961, %v1282
      %v1530 = vsel %vm1313, %v968, %v1284
      %v1533 = vsel %vm1313, %v975, %v1286
      %v1536 = vsel %vm1313, %v1229, %v1288
      %v1539 = vsel %vm1313, %v982, %v1290
      %v1542 = vsel %vm1313, %v989, %v1292
      %v1545 = vsel %vm1313, %v996, %v1294
      %v1548 = vsel %vm1313, %v1003, %v1296
      %v1551 = vsel %vm1313, %v1010, %v1298
      %v1554 = vsel %vm1313, %v1017, %v1300
      %v1557 = vsel %vm1313, %v1024, %v1302
      %v1560 = vsel %vm1313, %v1236, %v1304
      %v1562 = vsel %vm1313, %v797, %v1306
      %v1564 = vsel %vm1313, %v805, %v1308
      %v1566 = vsel %vm1313, %v813, %v1310
      %v1568 = vsel %vm1313, %v821, %v1312
      %v1666 = vunpack.c.l.b16 %v1315
      %v1667 = vunpack.c.l.b16 %v1374
      %v1668 = vunpack.c.l.b16 %v1467
      %v1669 = vunpack.c.l.b16 %v1319
      %v1670 = vunpack.c.l.b16 %v1114
      %v1671 = vunpack.c.l.b16 %v1317
      %v1672 = vunpack.c.l.b16 %v1377
      %v1673 = vunpack.c.l.b16 %v1470
      %v1674 = vunpack.c.l.b16 %v1321
      %v1675 = vunpack.c.l.b16 %v1115
      %v1676 = vunpack.c.l.b16 %v1380
      %v1677 = vunpack.c.l.b16 %v1473
      %v1678 = vunpack.c.l.b16 %v1323
      %v1679 = vunpack.c.l.b16 %v1116
      %v1680 = vunpack.c.l.b16 %v1383
      %v1681 = vunpack.c.l.b16 %v1476
      %v1682 = vunpack.c.l.b16 %v1325
      %v1683 = vunpack.c.l.b16 %v1117
      %v1684 = vunpack.c.l.b16 %v1386
      %v1685 = vunpack.c.l.b16 %v1479
      %v1686 = vunpack.c.l.b16 %v1327
      %v1687 = vunpack.c.l.b16 %v1118
      %v1688 = vunpack.c.l.b16 %v1389
      %v1689 = vunpack.c.l.b16 %v1482
      %v1690 = vunpack.c.l.b16 %v1329
      %v1691 = vunpack.c.l.b16 %v1119
      %v1692 = vunpack.c.l.b16 %v1392
      %v1693 = vunpack.c.l.b16 %v1485
      %v1694 = vunpack.c.l.b16 %v1562
      %v1695 = vunpack.c.l.b16 %v1237
      %v1696 = vunpack.c.l.b16 %v1395
      %v1697 = vunpack.c.l.b16 %v1488
      %v1698 = vunpack.c.l.b16 %v1112
      %v1699 = vunpack.c.l.b16 %v1397
      %v1700 = vunpack.c.l.b16 %v1491
      %v1701 = vunpack.c.l.b16 %v1333
      %v1702 = vunpack.c.l.b16 %v1121
      %v1703 = vunpack.c.l.b16 %v1331
      %v1704 = vunpack.c.l.b16 %v1400
      %v1705 = vunpack.c.l.b16 %v1494
      %v1706 = vunpack.c.l.b16 %v1335
      %v1707 = vunpack.c.l.b16 %v1122
      %v1708 = vunpack.c.l.b16 %v1403
      %v1709 = vunpack.c.l.b16 %v1497
      %v1710 = vunpack.c.l.b16 %v1337
      %v1711 = vunpack.c.l.b16 %v1123
      %v1712 = vunpack.c.l.b16 %v1406
      %v1713 = vunpack.c.l.b16 %v1500
      %v1714 = vunpack.c.l.b16 %v1339
      %v1715 = vunpack.c.l.b16 %v1124
      %v1716 = vunpack.c.l.b16 %v1409
      %v1717 = vunpack.c.l.b16 %v1503
      %v1718 = vunpack.c.l.b16 %v1341
      %v1719 = vunpack.c.l.b16 %v1125
      %v1720 = vunpack.c.l.b16 %v1412
      %v1721 = vunpack.c.l.b16 %v1506
      %v1722 = vunpack.c.l.b16 %v1343
      %v1723 = vunpack.c.l.b16 %v1126
      %v1724 = vunpack.c.l.b16 %v1415
      %v1725 = vunpack.c.l.b16 %v1509
      %v1726 = vunpack.c.l.b16 %v1564
      %v1727 = vunpack.c.l.b16 %v1238
      %v1728 = vunpack.c.l.b16 %v1418
      %v1729 = vunpack.c.l.b16 %v1512
      %v1730 = vunpack.c.l.b16 %v1420
      %v1731 = vunpack.c.l.b16 %v1515
      %v1732 = vunpack.c.l.b16 %v1347
      %v1733 = vunpack.c.l.b16 %v1128
      %v1734 = vunpack.c.l.b16 %v1345
      %v1735 = vunpack.c.l.b16 %v1423
      %v1736 = vunpack.c.l.b16 %v1518
      %v1737 = vunpack.c.l.b16 %v1349
      %v1738 = vunpack.c.l.b16 %v1129
      %v1739 = vunpack.c.l.b16 %v1426
      %v1740 = vunpack.c.l.b16 %v1521
      %v1741 = vunpack.c.l.b16 %v1351
      %v1742 = vunpack.c.l.b16 %v1130
      %v1743 = vunpack.c.l.b16 %v1429
      %v1744 = vunpack.c.l.b16 %v1524
      %v1745 = vunpack.c.l.b16 %v1353
      %v1746 = vunpack.c.l.b16 %v1131
      %v1747 = vunpack.c.l.b16 %v1432
      %v1748 = vunpack.c.l.b16 %v1527
      %v1749 = vunpack.c.l.b16 %v1355
      %v1750 = vunpack.c.l.b16 %v1132
      %v1751 = vunpack.c.l.b16 %v1435
      %v1752 = vunpack.c.l.b16 %v1530
      %v1753 = vunpack.c.l.b16 %v1357
      %v1754 = vunpack.c.l.b16 %v1133
      %v1755 = vunpack.c.l.b16 %v1438
      %v1756 = vunpack.c.l.b16 %v1533
      %v1757 = vunpack.c.l.b16 %v1566
      %v1758 = vunpack.c.l.b16 %v1239
      %v1759 = vunpack.c.l.b16 %v1441
      %v1760 = vunpack.c.l.b16 %v1536
      %v1761 = vunpack.c.l.b16 %v1443
      %v1762 = vunpack.c.l.b16 %v1539
      %v1763 = vunpack.c.l.b16 %v1361
      %v1764 = vunpack.c.l.b16 %v1135
      %v1765 = vunpack.c.l.b16 %v1359
      %v1766 = vunpack.c.l.b16 %v1446
      %v1767 = vunpack.c.l.b16 %v1542
      %v1768 = vunpack.c.l.b16 %v1363
      %v1769 = vunpack.c.l.b16 %v1136
      %v1770 = vunpack.c.l.b16 %v1449
      %v1771 = vunpack.c.l.b16 %v1545
      %v1772 = vunpack.c.l.b16 %v1365
      %v1773 = vunpack.c.l.b16 %v1137
      %v1774 = vunpack.c.l.b16 %v1452
      %v1775 = vunpack.c.l.b16 %v1548
      %v1776 = vunpack.c.l.b16 %v1367
      %v1777 = vunpack.c.l.b16 %v1138
      %v1778 = vunpack.c.l.b16 %v1455
      %v1779 = vunpack.c.l.b16 %v1551
      %v1780 = vunpack.c.l.b16 %v1369
      %v1781 = vunpack.c.l.b16 %v1139
      %v1782 = vunpack.c.l.b16 %v1458
      %v1783 = vunpack.c.l.b16 %v1554
      %v1784 = vunpack.c.l.b16 %v1371
      %v1785 = vunpack.c.l.b16 %v1140
      %v1786 = vunpack.c.l.b16 %v1461
      %v1787 = vunpack.c.l.b16 %v1557
      %v1788 = vunpack.c.l.b16 %v1568
      %v1789 = vunpack.c.l.b16 %v1240
      %v1790 = vunpack.c.l.b16 %v1464
      %v1791 = vunpack.c.l.b16 %v1560
      %v1792 = vld [vmem:[%s2] sm:$0xf]
      %v1793 = vld [vmem:[%s2 + $0x4] sm:$0xf]
      %v1794 = vld [vmem:[%s2 + $0x8] sm:$0xf]
      %v1795 = vld [vmem:[%s2 + $0xc] sm:$0xf]
      %v1796 = vld [vmem:[%s2 + $0x10] sm:$0xf]
      %v1797 = vld [vmem:[%s2 + $0x14] sm:$0xf]
      %v1798 = vld [vmem:[%s2 + $0x18] sm:$0xf]
      %v1799 = vld [vmem:[%s2 + $0x1c] sm:$0xf]
      %v1800 = vld [vmem:[%s2 + $0x20] sm:$0xf]
      %v1801 = vld [vmem:[%s2 + $0x24] sm:$0xf]
      %v1802 = vld [vmem:[%s2 + $0x28] sm:$0xf]
      %v1803 = vld [vmem:[%s2 + $0x2c] sm:$0xf]
      %v1804 = vld [vmem:[%s2 + $0x30] sm:$0xf]
      %v1805 = vld [vmem:[%s2 + $0x34] sm:$0xf]
      %v1806 = vld [vmem:[%s2 + $0x38] sm:$0xf]
      %v1807 = vld [vmem:[%s2 + $0x3c] sm:$0xf]
      %v1808 = vld [vmem:[%s2 + $0x40] sm:$0xf]
      %v1809 = vld [vmem:[%s2 + $0x44] sm:$0xf]
      %v1810 = vld [vmem:[%s2 + $0x48] sm:$0xf]
      %v1811 = vld [vmem:[%s2 + $0x4c] sm:$0xf]
      %v1812 = vld [vmem:[%s2 + $0x50] sm:$0xf]
      %v1813 = vld [vmem:[%s2 + $0x54] sm:$0xf]
      %v1814 = vld [vmem:[%s2 + $0x58] sm:$0xf]
      %v1815 = vld [vmem:[%s2 + $0x5c] sm:$0xf]
      %v1816 = vld [vmem:[%s2 + $0x60] sm:$0xf]
      %v1817 = vld [vmem:[%s2 + $0x64] sm:$0xf]
      %v1818 = vld [vmem:[%s2 + $0x68] sm:$0xf]
      %v1819 = vld [vmem:[%s2 + $0x6c] sm:$0xf]
      %v1820 = vld [vmem:[%s2 + $0x70] sm:$0xf]
      %v1821 = vld [vmem:[%s2 + $0x74] sm:$0xf]
      %v1822 = vld [vmem:[%s2 + $0x78] sm:$0xf]
      %v1823 = vld [vmem:[%s2 + $0x7c] sm:$0xf]
      %v1824 = vld [vmem:[%s2 + $0x80] sm:$0xf]
      %v1825 = vld [vmem:[%s2 + $0x84] sm:$0xf]
      %v1826 = vld [vmem:[%s2 + $0x88] sm:$0xf]
      %v1827 = vld [vmem:[%s2 + $0x8c] sm:$0xf]
      %v1828 = vld [vmem:[%s2 + $0x90] sm:$0xf]
      %v1829 = vld [vmem:[%s2 + $0x94] sm:$0xf]
      %v1830 = vld [vmem:[%s2 + $0x98] sm:$0xf]
      %v1831 = vld [vmem:[%s2 + $0x9c] sm:$0xf]
      %v1832 = vld [vmem:[%s2 + $0xa0] sm:$0xf]
      %v1833 = vld [vmem:[%s2 + $0xa4] sm:$0xf]
      %v1834 = vld [vmem:[%s2 + $0xa8] sm:$0xf]
      %v1835 = vld [vmem:[%s2 + $0xac] sm:$0xf]
      %v1836 = vld [vmem:[%s2 + $0xb0] sm:$0xf]
      %v1837 = vld [vmem:[%s2 + $0xb4] sm:$0xf]
      %v1838 = vld [vmem:[%s2 + $0xb8] sm:$0xf]
      %v1839 = vld [vmem:[%s2 + $0xbc] sm:$0xf]
      %v1840 = vld [vmem:[%s2 + $0xc0] sm:$0xf]
      %v1841 = vld [vmem:[%s2 + $0xc4] sm:$0xf]
      %v1842 = vld [vmem:[%s2 + $0xc8] sm:$0xf]
      %v1843 = vld [vmem:[%s2 + $0xcc] sm:$0xf]
      %v1844 = vld [vmem:[%s2 + $0xd0] sm:$0xf]
      %v1845 = vld [vmem:[%s2 + $0xd4] sm:$0xf]
      %v1846 = vld [vmem:[%s2 + $0xd8] sm:$0xf]
      %v1847 = vld [vmem:[%s2 + $0xdc] sm:$0xf]
      %v1848 = vld [vmem:[%s2 + $0xe0] sm:$0xf]
      %v1849 = vld [vmem:[%s2 + $0xe4] sm:$0xf]
      %v1850 = vld [vmem:[%s2 + $0xe8] sm:$0xf]
      %v1851 = vld [vmem:[%s2 + $0xec] sm:$0xf]
      %v1852 = vld [vmem:[%s2 + $0xf0] sm:$0xf]
      %v1853 = vld [vmem:[%s2 + $0xf4] sm:$0xf]
      %v1854 = vld [vmem:[%s2 + $0xf8] sm:$0xf]
      %v1855 = vld [vmem:[%s2 + $0xfc] sm:$0xf]
      %v1856 = vld [vmem:[%s2 + $0x100] sm:$0xf]
      %v1857 = vld [vmem:[%s2 + $0x104] sm:$0xf]
      %v1858 = vld [vmem:[%s2 + $0x108] sm:$0xf]
      %v1859 = vld [vmem:[%s2 + $0x10c] sm:$0xf]
      %v1860 = vld [vmem:[%s2 + $0x110] sm:$0xf]
      %v1861 = vld [vmem:[%s2 + $0x114] sm:$0xf]
      %v1862 = vld [vmem:[%s2 + $0x118] sm:$0xf]
      %v1863 = vld [vmem:[%s2 + $0x11c] sm:$0xf]
      %v1864 = vld [vmem:[%s4] sm:$0x1]
      %v1866 = vlaneseq
      %v1867 = vshrl.u32 %v1866, 7
      %v1868 = vsub.s32 0, %v1867
      %v1869 = vrot.slane %v1864, %v1868
      %v1871 = vpack.c.b16 %v1671, %v1666
      %v1872 = vpack.c.b16 %v1672, %v1667
      %v1873 = vpack.c.b16 %v1673, %v1668
      %v1874 = vpack.c.b16 %v1674, %v1669
      %v1875 = vpack.c.b16 %v1675, %v1670
      %v1876 = vpack.c.b16 %v1680, %v1676
      %v1877 = vpack.c.b16 %v1681, %v1677
      %v1878 = vpack.c.b16 %v1682, %v1678
      %v1879 = vpack.c.b16 %v1683, %v1679
      %v1880 = vpack.c.b16 %v1688, %v1684
      %v1881 = vpack.c.b16 %v1689, %v1685
      %v1882 = vpack.c.b16 %v1690, %v1686
      %v1883 = vpack.c.b16 %v1691, %v1687
      %v1884 = vpack.c.b16 %v1696, %v1692
      %v1885 = vpack.c.b16 %v1697, %v1693
      %v1886 = vpack.c.b16 %v1666, %v1694
      %v1887 = vpack.c.b16 %v1698, %v1695
      %v1888 = vpack.c.b16 %v1703, %v1666
      %v1889 = vpack.c.b16 %v1704, %v1699
      %v1890 = vpack.c.b16 %v1705, %v1700
      %v1891 = vpack.c.b16 %v1706, %v1701
      %v1892 = vpack.c.b16 %v1707, %v1702
      %v1893 = vpack.c.b16 %v1712, %v1708
      %v1894 = vpack.c.b16 %v1713, %v1709
      %v1895 = vpack.c.b16 %v1714, %v1710
      %v1896 = vpack.c.b16 %v1715, %v1711
      %v1897 = vpack.c.b16 %v1720, %v1716
      %v1898 = vpack.c.b16 %v1721, %v1717
      %v1899 = vpack.c.b16 %v1722, %v1718
      %v1900 = vpack.c.b16 %v1723, %v1719
      %v1901 = vpack.c.b16 %v1728, %v1724
      %v1902 = vpack.c.b16 %v1729, %v1725
      %v1903 = vpack.c.b16 %v1666, %v1726
      %v1904 = vpack.c.b16 %v1698, %v1727
      %v1905 = vpack.c.b16 %v1734, %v1666
      %v1906 = vpack.c.b16 %v1735, %v1730
      %v1907 = vpack.c.b16 %v1736, %v1731
      %v1908 = vpack.c.b16 %v1737, %v1732
      %v1909 = vpack.c.b16 %v1738, %v1733
      %v1910 = vpack.c.b16 %v1743, %v1739
      %v1911 = vpack.c.b16 %v1744, %v1740
      %v1912 = vpack.c.b16 %v1745, %v1741
      %v1913 = vpack.c.b16 %v1746, %v1742
      %v1914 = vpack.c.b16 %v1751, %v1747
      %v1915 = vpack.c.b16 %v1752, %v1748
      %v1916 = vpack.c.b16 %v1753, %v1749
      %v1917 = vpack.c.b16 %v1754, %v1750
      %v1918 = vpack.c.b16 %v1759, %v1755
      %v1919 = vpack.c.b16 %v1760, %v1756
      %v1920 = vpack.c.b16 %v1666, %v1757
      %v1921 = vpack.c.b16 %v1698, %v1758
      %v1922 = vpack.c.b16 %v1765, %v1666
      %v1923 = vpack.c.b16 %v1766, %v1761
      %v1924 = vpack.c.b16 %v1767, %v1762
      %v1925 = vpack.c.b16 %v1768, %v1763
      %v1926 = vpack.c.b16 %v1769, %v1764
      %v1927 = vpack.c.b16 %v1774, %v1770
      %v1928 = vpack.c.b16 %v1775, %v1771
      %v1929 = vpack.c.b16 %v1776, %v1772
      %v1930 = vpack.c.b16 %v1777, %v1773
      %v1931 = vpack.c.b16 %v1782, %v1778
      %v1932 = vpack.c.b16 %v1783, %v1779
      %v1933 = vpack.c.b16 %v1784, %v1780
      %v1934 = vpack.c.b16 %v1785, %v1781
      %v1935 = vpack.c.b16 %v1790, %v1786
      %v1936 = vpack.c.b16 %v1791, %v1787
      %v1937 = vpack.c.b16 %v1666, %v1788
      %v1938 = vpack.c.b16 %v1698, %v1789
      %v2063 = vunpack.c.l.b16 %v1792
      %v2064 = vunpack.c.l.b16 %v1793
      %v2065 = vunpack.c.l.b16 %v1794
      %v2066 = vunpack.c.l.b16 %v1795
      %v2067 = vunpack.c.l.b16 %v1796
      %v2068 = vunpack.c.l.b16 %v1797
      %v2069 = vunpack.c.l.b16 %v1798
      %v2070 = vunpack.c.l.b16 %v1799
      %v2071 = vunpack.c.l.b16 %v1800
      %v2072 = vunpack.c.l.b16 %v1801
      %v2073 = vunpack.c.l.b16 %v1802
      %v2074 = vunpack.c.l.b16 %v1803
      %v2075 = vunpack.c.l.b16 %v1804
      %v2076 = vunpack.c.l.b16 %v1805
      %v2077 = vunpack.c.l.b16 %v1806
      %v2078 = vunpack.c.l.b16 %v1807
      %v2079 = vunpack.c.l.b16 %v1808
      %v2080 = vunpack.c.l.b16 %v1809
      %v2081 = vunpack.c.l.b16 %v1810
      %v2082 = vunpack.c.l.b16 %v1811
      %v2083 = vunpack.c.l.b16 %v1812
      %v2084 = vunpack.c.l.b16 %v1813
      %v2085 = vunpack.c.l.b16 %v1814
      %v2086 = vunpack.c.l.b16 %v1815
      %v2087 = vunpack.c.l.b16 %v1816
      %v2088 = vunpack.c.l.b16 %v1817
      %v2089 = vunpack.c.l.b16 %v1818
      %v2090 = vunpack.c.l.b16 %v1819
      %v2091 = vunpack.c.l.b16 %v1820
      %v2092 = vunpack.c.l.b16 %v1821
      %v2093 = vunpack.c.l.b16 %v1822
      %v2094 = vunpack.c.l.b16 %v1823
      %v2095 = vunpack.c.l.b16 %v1824
      %v2096 = vunpack.c.l.b16 %v1825
      %v2097 = vunpack.c.l.b16 %v1826
      %v2098 = vunpack.c.l.b16 %v1827
      %v2099 = vunpack.c.l.b16 %v1828
      %v2100 = vunpack.c.l.b16 %v1829
      %v2101 = vunpack.c.l.b16 %v1830
      %v2102 = vunpack.c.l.b16 %v1831
      %v2103 = vunpack.c.l.b16 %v1832
      %v2104 = vunpack.c.l.b16 %v1833
      %v2105 = vunpack.c.l.b16 %v1834
      %v2106 = vunpack.c.l.b16 %v1835
      %v2107 = vunpack.c.l.b16 %v1836
      %v2108 = vunpack.c.l.b16 %v1837
      %v2109 = vunpack.c.l.b16 %v1838
      %v2110 = vunpack.c.l.b16 %v1839
      %v2111 = vunpack.c.l.b16 %v1840
      %v2112 = vunpack.c.l.b16 %v1841
      %v2113 = vunpack.c.l.b16 %v1842
      %v2114 = vunpack.c.l.b16 %v1843
      %v2115 = vunpack.c.l.b16 %v1844
      %v2116 = vunpack.c.l.b16 %v1845
      %v2117 = vunpack.c.l.b16 %v1846
      %v2118 = vunpack.c.l.b16 %v1847
      %v2119 = vunpack.c.l.b16 %v1848
      %v2120 = vunpack.c.l.b16 %v1849
      %v2121 = vunpack.c.l.b16 %v1850
      %v2122 = vunpack.c.l.b16 %v1851
      %v2123 = vunpack.c.l.b16 %v1852
      %v2124 = vunpack.c.l.b16 %v1853
      %v2125 = vunpack.c.l.b16 %v1854
      %v2126 = vunpack.c.l.b16 %v1855
      %v2127 = vunpack.c.l.b16 %v1856
      %v2128 = vunpack.c.l.b16 %v1857
      %v2129 = vunpack.c.l.b16 %v1858
      %v2130 = vunpack.c.l.b16 %v1859
      %v2131 = vunpack.c.l.b16 %v1860
      %v2132 = vunpack.c.l.b16 %v1861
      %v2133 = vunpack.c.l.b16 %v1862
      %v2134 = vunpack.c.l.b16 %v1863
      %v2135 = vpack.c.b16 %v2064, %v2063
      %v2136 = vpack.c.b16 %v2066, %v2065
      %v2137 = vpack.c.b16 %v2068, %v2067
      %v2138 = vpack.c.b16 %v2070, %v2069
      %v2139 = vpack.c.b16 %v2072, %v2071
      %v2140 = vpack.c.b16 %v2074, %v2073
      %v2141 = vpack.c.b16 %v2076, %v2075
      %v2142 = vpack.c.b16 %v2078, %v2077
      %v2143 = vpack.c.b16 %v2080, %v2079
      %v2144 = vpack.c.b16 %v2082, %v2081
      %v2145 = vpack.c.b16 %v2084, %v2083
      %v2146 = vpack.c.b16 %v2086, %v2085
      %v2147 = vpack.c.b16 %v2088, %v2087
      %v2148 = vpack.c.b16 %v2090, %v2089
      %v2149 = vpack.c.b16 %v2092, %v2091
      %v2150 = vpack.c.b16 %v2094, %v2093
      %v2151 = vpack.c.b16 %v2096, %v2095
      %v2152 = vpack.c.b16 %v2098, %v2097
      %v2153 = vpack.c.b16 %v2100, %v2099
      %v2154 = vpack.c.b16 %v2102, %v2101
      %v2155 = vpack.c.b16 %v2104, %v2103
      %v2156 = vpack.c.b16 %v2106, %v2105
      %v2157 = vpack.c.b16 %v2108, %v2107
      %v2158 = vpack.c.b16 %v2110, %v2109
      %v2159 = vpack.c.b16 %v2112, %v2111
      %v2160 = vpack.c.b16 %v2114, %v2113
      %v2161 = vpack.c.b16 %v2116, %v2115
      %v2162 = vpack.c.b16 %v2118, %v2117
      %v2163 = vpack.c.b16 %v2120, %v2119
      %v2164 = vpack.c.b16 %v2122, %v2121
      %v2165 = vpack.c.b16 %v2124, %v2123
      %v2166 = vpack.c.b16 %v2126, %v2125
      %v2167 = vpack.c.b16 %v2128, %v2127
      %v2168 = vpack.c.b16 %v2130, %v2129
      %v2169 = vpack.c.b16 %v2132, %v2131
      %v2170 = vpack.c.b16 %v2134, %v2133
      %v2208 = vsel %vm1313, %v1875, 0
      %v2211 = vsel %vm1313, %v1879, 0
      %v2214 = vsel %vm1313, %v1883, 0
      %v2217 = vsel %vm1313, %v1887, 0
      %v2220 = vsel %vm1313, %v1892, 0
      %v2223 = vsel %vm1313, %v1896, 0
      %v2226 = vsel %vm1313, %v1900, 0
      %v2229 = vsel %vm1313, %v1904, 0
      %v2232 = vsel %vm1313, %v1909, 0
      %v2235 = vsel %vm1313, %v1913, 0
      %v2238 = vsel %vm1313, %v1917, 0
      %v2241 = vsel %vm1313, %v1921, 0
      %v2244 = vsel %vm1313, %v1926, 0
      %v2247 = vsel %vm1313, %v1930, 0
      %v2250 = vsel %vm1313, %v1934, 0
      %v2253 = vsel %vm1313, %v1938, 0
      %2255 = vmatprep.subr.bf16.mxu0 0
      %2256 = vmatpush1.bf16.msra.mxu0 %v2135
      %2257 = vmatprep.subr.bf16.mxu0 0
      %2258 = vmatpush1.bf16.msra.mxu0 %v2136
      %2259 = vmatprep.subr.bf16.mxu0 0
      %2260 = vmatpush1.bf16.msra.mxu0 %v2137
      %2261 = vmatprep.subr.bf16.mxu0 0
      %2262 = vmatpush1.bf16.msra.mxu0 %v2138
      %2263 = vmatprep.subr.bf16.mxu0 0
      %2264 = vmatpush1.bf16.msra.mxu0 %v2139
      %2265 = vmatprep.subr.bf16.mxu0 0
      %2266 = vmatpush1.bf16.msra.mxu0 %v2140
      %2267 = vmatprep.subr.bf16.mxu0 0
      %2268 = vmatpush1.bf16.msra.mxu0 %v2141
      %2269 = vmatprep.subr.bf16.mxu0 0
      %2270 = vmatpush1.bf16.msra.mxu0 %v2142
      %2271 = vmatprep.subr.bf16.mxu0 0
      %2272 = vmatpush1.bf16.msra.mxu0 %v2143
      %2273 = vmatprep.subr.bf16.mxu0 0
      %2274 = vmatpush1.bf16.msra.mxu0 %v2144
      %2275 = vmatprep.subr.bf16.mxu0 0
      %2276 = vmatpush1.bf16.msra.mxu0 %v2145
      %2277 = vmatprep.subr.bf16.mxu0 0
      %2278 = vmatpush1.bf16.msra.mxu0 %v2146
      %2279 = vmatprep.subr.bf16.mxu0 0
      %2280 = vmatpush1.bf16.msra.mxu0 %v2147
      %2281 = vmatprep.subr.bf16.mxu0 0
      %2282 = vmatpush1.bf16.msra.mxu0 %v2148
      %2283 = vmatprep.subr.bf16.mxu0 0
      %2284 = vmatpush1.bf16.msra.mxu0 %v2149
      %2285 = vmatprep.subr.bf16.mxu0 0
      %2286 = vmatpush1.bf16.msra.mxu0 %v2150
      %2287 = vmatprep.mubr.bf16.mxu0 %v1872
      %2288 = vmatmul.mubr.bf16.gmra.mrb[0].mxu0 %v1871
      %v2289 = vpop.f32.mrb[0].mxu0
      %v2290 = vadd.f32 %v1869, %v2289
      %v2291 = vpop.f32.mrb[0].mxu0
      %v2292 = vpop.f32.mrb[0].mxu0
      %v2293 = vadd.f32 %v1869, %v2292
      %v2294 = vpop.f32.mrb[0].mxu0
      %2295 = vmatprep.mubr.bf16.mxu0 %v1876
      %2296 = vmatmul.mubr.bf16.gmra.mrb[0].mxu0 %v1874
      %v2297 = vpop.f32.mrb[0].mxu0
      %v2298 = vadd.f32 %v1869, %v2297
      %v2299 = vpop.f32.mrb[0].mxu0
      %v2300 = vpop.f32.mrb[0].mxu0
      %v2301 = vadd.f32 %v1869, %v2300
      %v2302 = vpop.f32.mrb[0].mxu0
      %2303 = vmatprep.mubr.bf16.mxu0 %v1880
      %2304 = vmatmul.mubr.bf16.gmra.mrb[0].mxu0 %v1878
      %v2305 = vpop.f32.mrb[0].mxu0
      %v2306 = vadd.f32 %v1869, %v2305
      %v2307 = vpop.f32.mrb[0].mxu0
      %v2308 = vpop.f32.mrb[0].mxu0
      %v2309 = vadd.f32 %v1869, %v2308
      %v2310 = vpop.f32.mrb[0].mxu0
      %2311 = vmatprep.mubr.bf16.mxu0 %v1884
      %2312 = vmatmul.mubr.bf16.gmra.mrb[0].mxu0 %v1882
      %v2313 = vpop.f32.mrb[0].mxu0
      %v2314 = vadd.f32 %v1869, %v2313
      %v2315 = vpop.f32.mrb[0].mxu0
      %v2316 = vpop.f32.mrb[0].mxu0
      %v2317 = vadd.f32 %v1869, %v2316
      %v2318 = vpop.f32.mrb[0].mxu0
      %2319 = vmatprep.mubr.bf16.mxu0 %v1889
      %2320 = vmatmul.mubr.bf16.gmra.mrb[0].mxu0 %v1888
      %v2321 = vpop.f32.mrb[0].mxu0
      %v2322 = vadd.f32 %v1869, %v2321
      %v2323 = vpop.f32.mrb[0].mxu0
      %v2324 = vpop.f32.mrb[0].mxu0
      %v2325 = vadd.f32 %v1869, %v2324
      %v2326 = vpop.f32.mrb[0].mxu0
      %2327 = vmatprep.mubr.bf16.mxu0 %v1893
      %2328 = vmatmul.mubr.bf16.gmra.mrb[0].mxu0 %v1891
      %v2329 = vpop.f32.mrb[0].mxu0
      %v2330 = vadd.f32 %v1869, %v2329
      %v2331 = vpop.f32.mrb[0].mxu0
      %v2332 = vpop.f32.mrb[0].mxu0
      %v2333 = vadd.f32 %v1869, %v2332
      %v2334 = vpop.f32.mrb[0].mxu0
      %2335 = vmatprep.mubr.bf16.mxu0 %v1897
      %2336 = vmatmul.mubr.bf16.gmra.mrb[0].mxu0 %v1895
      %v2337 = vpop.f32.mrb[0].mxu0
      %v2338 = vadd.f32 %v1869, %v2337
      %v2339 = vpop.f32.mrb[0].mxu0
      %v2340 = vpop.f32.mrb[0].mxu0
      %v2341 = vadd.f32 %v1869, %v2340
      %v2342 = vpop.f32.mrb[0].mxu0
      %2343 = vmatprep.mubr.bf16.mxu0 %v1901
      %2344 = vmatmul.mubr.bf16.gmra.mrb[0].mxu0 %v1899
      %v2345 = vpop.f32.mrb[0].mxu0
      %v2346 = vadd.f32 %v1869, %v2345
      %v2347 = vpop.f32.mrb[0].mxu0
      %v2348 = vpop.f32.mrb[0].mxu0
      %v2349 = vadd.f32 %v1869, %v2348
      %v2350 = vpop.f32.mrb[0].mxu0
      %2351 = vmatprep.mubr.bf16.mxu0 %v1906
      %2352 = vmatmul.mubr.bf16.gmra.mrb[0].mxu0 %v1905
      %v2353 = vpop.f32.mrb[0].mxu0
      %v2354 = vadd.f32 %v1869, %v2353
      %v2355 = vpop.f32.mrb[0].mxu0
      %v2356 = vpop.f32.mrb[0].mxu0
      %v2357 = vadd.f32 %v1869, %v2356
      %v2358 = vpop.f32.mrb[0].mxu0
      %2359 = vmatprep.mubr.bf16.mxu0 %v1910
      %2360 = vmatmul.mubr.bf16.gmra.mrb[0].mxu0 %v1908
      %v2361 = vpop.f32.mrb[0].mxu0
      %v2362 = vadd.f32 %v1869, %v2361
      %v2363 = vpop.f32.mrb[0].mxu0
      %v2364 = vpop.f32.mrb[0].mxu0
      %v2365 = vadd.f32 %v1869, %v2364
      %v2366 = vpop.f32.mrb[0].mxu0
      %2367 = vmatprep.mubr.bf16.mxu0 %v1914
      %2368 = vmatmul.mubr.bf16.gmra.mrb[0].mxu0 %v1912
      %v2369 = vpop.f32.mrb[0].mxu0
      %v2370 = vadd.f32 %v1869, %v2369
      %v2371 = vpop.f32.mrb[0].mxu0
      %v2372 = vpop.f32.mrb[0].mxu0
      %v2373 = vadd.f32 %v1869, %v2372
      %v2374 = vpop.f32.mrb[0].mxu0
      %2375 = vmatprep.mubr.bf16.mxu0 %v1918
      %2376 = vmatmul.mubr.bf16.gmra.mrb[0].mxu0 %v1916
      %v2377 = vpop.f32.mrb[0].mxu0
      %v2378 = vadd.f32 %v1869, %v2377
      %v2379 = vpop.f32.mrb[0].mxu0
      %v2380 = vpop.f32.mrb[0].mxu0
      %v2381 = vadd.f32 %v1869, %v2380
      %v2382 = vpop.f32.mrb[0].mxu0
      %2383 = vmatprep.mubr.bf16.mxu0 %v1923
      %2384 = vmatmul.mubr.bf16.gmra.mrb[0].mxu0 %v1922
      %v2385 = vpop.f32.mrb[0].mxu0
      %v2386 = vadd.f32 %v1869, %v2385
      %v2387 = vpop.f32.mrb[0].mxu0
      %v2388 = vpop.f32.mrb[0].mxu0
      %v2389 = vadd.f32 %v1869, %v2388
      %v2390 = vpop.f32.mrb[0].mxu0
      %2391 = vmatprep.mubr.bf16.mxu0 %v1927
      %2392 = vmatmul.mubr.bf16.gmra.mrb[0].mxu0 %v1925
      %v2393 = vpop.f32.mrb[0].mxu0
      %v2394 = vadd.f32 %v1869, %v2393
      %v2395 = vpop.f32.mrb[0].mxu0
      %v2396 = vpop.f32.mrb[0].mxu0
      %v2397 = vadd.f32 %v1869, %v2396
      %v2398 = vpop.f32.mrb[0].mxu0
      %2399 = vmatprep.mubr.bf16.mxu0 %v1931
      %2400 = vmatmul.mubr.bf16.gmra.mrb[0].mxu0 %v1929
      %v2401 = vpop.f32.mrb[0].mxu0
      %v2402 = vadd.f32 %v1869, %v2401
      %v2403 = vpop.f32.mrb[0].mxu0
      %v2404 = vpop.f32.mrb[0].mxu0
      %v2405 = vadd.f32 %v1869, %v2404
      %v2406 = vpop.f32.mrb[0].mxu0
      %2407 = vmatprep.mubr.bf16.mxu0 %v1935
      %2408 = vmatmul.mubr.bf16.gmra.mrb[0].mxu0 %v1933
      %v2409 = vpop.f32.mrb[0].mxu0
      %v2410 = vadd.f32 %v1869, %v2409
      %v2411 = vpop.f32.mrb[0].mxu0
      %v2412 = vpop.f32.mrb[0].mxu0
      %v2413 = vadd.f32 %v1869, %v2412
      %v2414 = vpop.f32.mrb[0].mxu0
      %2415 = vdwg.mxu0
      %2416 = vmatprep.subr.bf16.mxu0 0
      %2417 = vmatpush1.bf16.msra.mxu0 %v2151
      %2418 = vmatprep.subr.bf16.mxu0 0
      %2419 = vmatpush1.bf16.msra.mxu0 %v2152
      %2420 = vmatprep.subr.bf16.mxu0 0
      %2421 = vmatpush1.bf16.msra.mxu0 %v2153
      %2422 = vmatprep.subr.bf16.mxu0 0
      %2423 = vmatpush1.bf16.msra.mxu0 %v2154
      %2424 = vmatprep.subr.bf16.mxu0 0
      %2425 = vmatpush1.bf16.msra.mxu0 %v2155
      %2426 = vmatprep.subr.bf16.mxu0 0
      %2427 = vmatpush1.bf16.msra.mxu0 %v2156
      %2428 = vmatprep.subr.bf16.mxu0 0
      %2429 = vmatpush1.bf16.msra.mxu0 %v2157
      %2430 = vmatprep.subr.bf16.mxu0 0
      %2431 = vmatpush1.bf16.msra.mxu0 %v2158
      %2432 = vmatprep.subr.bf16.mxu0 0
      %2433 = vmatpush1.bf16.msra.mxu0 %v2159
      %2434 = vmatprep.subr.bf16.mxu0 0
      %2435 = vmatpush1.bf16.msra.mxu0 %v2160
      %2436 = vmatprep.subr.bf16.mxu0 0
      %2437 = vmatpush1.bf16.msra.mxu0 %v2161
      %2438 = vmatprep.subr.bf16.mxu0 0
      %2439 = vmatpush1.bf16.msra.mxu0 %v2162
      %2440 = vmatprep.subr.bf16.mxu0 0
      %2441 = vmatpush1.bf16.msra.mxu0 %v2163
      %2442 = vmatprep.subr.bf16.mxu0 0
      %2443 = vmatpush1.bf16.msra.mxu0 %v2164
      %2444 = vmatprep.subr.bf16.mxu0 0
      %2445 = vmatpush1.bf16.msra.mxu0 %v2165
      %2446 = vmatprep.subr.bf16.mxu0 0
      %2447 = vmatpush1.bf16.msra.mxu0 %v2166
      %2448 = vmatprep.mubr.bf16.mxu0 %v1874
      %2449 = vmatmul.mubr.bf16.gmra.mrb[0].mxu0 %v1873
      %v2450 = vpop.f32.mrb[0].mxu0
      %v2451 = vadd.f32 %v2290, %v2450
      %v2452 = vpop.f32.mrb[0].mxu0
      %v2453 = vpop.f32.mrb[0].mxu0
      %v2454 = vadd.f32 %v2293, %v2453
      %v2455 = vpop.f32.mrb[0].mxu0
      %2456 = vmatprep.mubr.bf16.mxu0 %v1878
      %2457 = vmatmul.mubr.bf16.gmra.mrb[0].mxu0 %v1877
      %v2458 = vpop.f32.mrb[0].mxu0
      %v2459 = vadd.f32 %v2298, %v2458
      %v2460 = vpop.f32.mrb[0].mxu0
      %v2461 = vpop.f32.mrb[0].mxu0
      %v2462 = vadd.f32 %v2301, %v2461
      %v2463 = vpop.f32.mrb[0].mxu0
      %2464 = vmatprep.mubr.bf16.mxu0 %v1882
      %2465 = vmatmul.mubr.bf16.gmra.mrb[0].mxu0 %v1881
      %v2466 = vpop.f32.mrb[0].mxu0
      %v2467 = vadd.f32 %v2306, %v2466
      %v2468 = vpop.f32.mrb[0].mxu0
      %v2469 = vpop.f32.mrb[0].mxu0
      %v2470 = vadd.f32 %v2309, %v2469
      %v2471 = vpop.f32.mrb[0].mxu0
      %2472 = vmatprep.mubr.bf16.mxu0 %v1886
      %2473 = vmatmul.mubr.bf16.gmra.mrb[0].mxu0 %v1885
      %v2474 = vpop.f32.mrb[0].mxu0
      %v2475 = vadd.f32 %v2314, %v2474
      %v2476 = vpop.f32.mrb[0].mxu0
      %v2477 = vpop.f32.mrb[0].mxu0
      %v2478 = vadd.f32 %v2317, %v2477
      %v2479 = vpop.f32.mrb[0].mxu0
      %2480 = vmatprep.mubr.bf16.mxu0 %v1891
      %2481 = vmatmul.mubr.bf16.gmra.mrb[0].mxu0 %v1890
      %v2482 = vpop.f32.mrb[0].mxu0
      %v2483 = vadd.f32 %v2322, %v2482
      %v2484 = vpop.f32.mrb[0].mxu0
      %v2485 = vpop.f32.mrb[0].mxu0
      %v2486 = vadd.f32 %v2325, %v2485
      %v2487 = vpop.f32.mrb[0].mxu0
      %2488 = vmatprep.mubr.bf16.mxu0 %v1895
      %2489 = vmatmul.mubr.bf16.gmra.mrb[0].mxu0 %v1894
      %v2490 = vpop.f32.mrb[0].mxu0
      %v2491 = vadd.f32 %v2330, %v2490
      %v2492 = vpop.f32.mrb[0].mxu0
      %v2493 = vpop.f32.mrb[0].mxu0
      %v2494 = vadd.f32 %v2333, %v2493
      %v2495 = vpop.f32.mrb[0].mxu0
      %2496 = vmatprep.mubr.bf16.mxu0 %v1899
      %2497 = vmatmul.mubr.bf16.gmra.mrb[0].mxu0 %v1898
      %v2498 = vpop.f32.mrb[0].mxu0
      %v2499 = vadd.f32 %v2338, %v2498
      %v2500 = vpop.f32.mrb[0].mxu0
      %v2501 = vpop.f32.mrb[0].mxu0
      %v2502 = vadd.f32 %v2341, %v2501
      %v2503 = vpop.f32.mrb[0].mxu0
      %2504 = vmatprep.mubr.bf16.mxu0 %v1903
      %2505 = vmatmul.mubr.bf16.gmra.mrb[0].mxu0 %v1902
      %v2506 = vpop.f32.mrb[0].mxu0
      %v2507 = vadd.f32 %v2346, %v2506
      %v2508 = vpop.f32.mrb[0].mxu0
      %v2509 = vpop.f32.mrb[0].mxu0
      %v2510 = vadd.f32 %v2349, %v2509
      %v2511 = vpop.f32.mrb[0].mxu0
      %2512 = vmatprep.mubr.bf16.mxu0 %v1908
      %2513 = vmatmul.mubr.bf16.gmra.mrb[0].mxu0 %v1907
      %v2514 = vpop.f32.mrb[0].mxu0
      %v2515 = vadd.f32 %v2354, %v2514
      %v2516 = vpop.f32.mrb[0].mxu0
      %v2517 = vpop.f32.mrb[0].mxu0
      %v2518 = vadd.f32 %v2357, %v2517
      %v2519 = vpop.f32.mrb[0].mxu0
      %2520 = vmatprep.mubr.bf16.mxu0 %v1912
      %2521 = vmatmul.mubr.bf16.gmra.mrb[0].mxu0 %v1911
      %v2522 = vpop.f32.mrb[0].mxu0
      %v2523 = vadd.f32 %v2362, %v2522
      %v2524 = vpop.f32.mrb[0].mxu0
      %v2525 = vpop.f32.mrb[0].mxu0
      %v2526 = vadd.f32 %v2365, %v2525
      %v2527 = vpop.f32.mrb[0].mxu0
      %2528 = vmatprep.mubr.bf16.mxu0 %v1916
      %2529 = vmatmul.mubr.bf16.gmra.mrb[0].mxu0 %v1915
      %v2530 = vpop.f32.mrb[0].mxu0
      %v2531 = vadd.f32 %v2370, %v2530
      %v2532 = vpop.f32.mrb[0].mxu0
      %v2533 = vpop.f32.mrb[0].mxu0
      %v2534 = vadd.f32 %v2373, %v2533
      %v2535 = vpop.f32.mrb[0].mxu0
      %2536 = vmatprep.mubr.bf16.mxu0 %v1920
      %2537 = vmatmul.mubr.bf16.gmra.mrb[0].mxu0 %v1919
      %v2538 = vpop.f32.mrb[0].mxu0
      %v2539 = vadd.f32 %v2378, %v2538
      %v2540 = vpop.f32.mrb[0].mxu0
      %v2541 = vpop.f32.mrb[0].mxu0
      %v2542 = vadd.f32 %v2381, %v2541
      %v2543 = vpop.f32.mrb[0].mxu0
      %2544 = vmatprep.mubr.bf16.mxu0 %v1925
      %2545 = vmatmul.mubr.bf16.gmra.mrb[0].mxu0 %v1924
      %v2546 = vpop.f32.mrb[0].mxu0
      %v2547 = vadd.f32 %v2386, %v2546
      %v2548 = vpop.f32.mrb[0].mxu0
      %v2549 = vpop.f32.mrb[0].mxu0
      %v2550 = vadd.f32 %v2389, %v2549
      %v2551 = vpop.f32.mrb[0].mxu0
      %2552 = vmatprep.mubr.bf16.mxu0 %v1929
      %2553 = vmatmul.mubr.bf16.gmra.mrb[0].mxu0 %v1928
      %v2554 = vpop.f32.mrb[0].mxu0
      %v2555 = vadd.f32 %v2394, %v2554
      %v2556 = vpop.f32.mrb[0].mxu0
      %v2557 = vpop.f32.mrb[0].mxu0
      %v2558 = vadd.f32 %v2397, %v2557
      %v2559 = vpop.f32.mrb[0].mxu0
      %2560 = vmatprep.mubr.bf16.mxu0 %v1933
      %2561 = vmatmul.mubr.bf16.gmra.mrb[0].mxu0 %v1932
      %v2562 = vpop.f32.mrb[0].mxu0
      %v2563 = vadd.f32 %v2402, %v2562
      %v2564 = vpop.f32.mrb[0].mxu0
      %v2565 = vpop.f32.mrb[0].mxu0
      %v2566 = vadd.f32 %v2405, %v2565
      %v2567 = vpop.f32.mrb[0].mxu0
      %2568 = vmatprep.mubr.bf16.mxu0 %v1937
      %2569 = vmatmul.mubr.bf16.gmra.mrb[0].mxu0 %v1936
      %v2570 = vpop.f32.mrb[0].mxu0
      %v2571 = vadd.f32 %v2410, %v2570
      %v2572 = vpop.f32.mrb[0].mxu0
      %v2573 = vpop.f32.mrb[0].mxu0
      %v2574 = vadd.f32 %v2413, %v2573
      %v2575 = vpop.f32.mrb[0].mxu0
      %2576 = vdwg.mxu0
      %2577 = vmatprep.subr.bf16.mxu0 0
      %2578 = vmatpush1.bf16.msra.mxu0 %v2167
      %2579 = vmatprep.subr.bf16.mxu0 0
      %2580 = vmatpush1.bf16.msra.mxu0 %v2168
      %2581 = vmatprep.subr.bf16.mxu0 0
      %2582 = vmatpush1.bf16.msra.mxu0 %v2169
      %2583 = vmatprep.subr.bf16.mxu0 0
      %2584 = vmatpush1.bf16.msra.mxu0 %v2170
      %2585 = vmatprep.subr.bf16.mxu0 0
      %2586 = vmatpush1.bf16.msra.mxu0 0
      %2587 = vmatprep.subr.bf16.mxu0 0
      %2588 = vmatpush1.bf16.msra.mxu0 0
      %2589 = vmatprep.subr.bf16.mxu0 0
      %2590 = vmatpush1.bf16.msra.mxu0 0
      %2591 = vmatprep.subr.bf16.mxu0 0
      %2592 = vmatpush1.bf16.msra.mxu0 0
      %2593 = vmatprep.subr.bf16.mxu0 0
      %2594 = vmatpush1.bf16.msra.mxu0 0
      %2595 = vmatprep.subr.bf16.mxu0 0
      %2596 = vmatpush1.bf16.msra.mxu0 0
      %2597 = vmatprep.subr.bf16.mxu0 0
      %2598 = vmatpush1.bf16.msra.mxu0 0
      %2599 = vmatprep.subr.bf16.mxu0 0
      %2600 = vmatpush1.bf16.msra.mxu0 0
      %2601 = vmatprep.subr.bf16.mxu0 0
      %2602 = vmatpush1.bf16.msra.mxu0 0
      %2603 = vmatprep.subr.bf16.mxu0 0
      %2604 = vmatpush1.bf16.msra.mxu0 0
      %2605 = vmatprep.subr.bf16.mxu0 0
      %2606 = vmatpush1.bf16.msra.mxu0 0
      %2607 = vmatprep.subr.bf16.mxu0 0
      %2608 = vmatpush1.bf16.msra.mxu0 0
      %2609 = vmatprep.mubr.bf16.mxu0 0
      %2610 = vmatmul.mubr.bf16.gmra.mrb[0].mxu0 %v2208
      %v2611 = vpop.f32.mrb[0].mxu0
      %v2612 = vadd.f32 %v2451, %v2611
      %v2613 = vpop.f32.mrb[0].mxu0
      %v2614 = vpop.f32.mrb[0].mxu0
      %v2615 = vadd.f32 %v2454, %v2614
      %v2616 = vpop.f32.mrb[0].mxu0
      %2617 = vmatprep.mubr.bf16.mxu0 0
      %2618 = vmatmul.mubr.bf16.gmra.mrb[0].mxu0 %v2211
      %v2619 = vpop.f32.mrb[0].mxu0
      %v2620 = vadd.f32 %v2459, %v2619
      %v2621 = vpop.f32.mrb[0].mxu0
      %v2622 = vpop.f32.mrb[0].mxu0
      %v2623 = vadd.f32 %v2462, %v2622
      %v2624 = vpop.f32.mrb[0].mxu0
      %2625 = vmatprep.mubr.bf16.mxu0 0
      %2626 = vmatmul.mubr.bf16.gmra.mrb[0].mxu0 %v2214
      %v2627 = vpop.f32.mrb[0].mxu0
      %v2628 = vadd.f32 %v2467, %v2627
      %v2629 = vpop.f32.mrb[0].mxu0
      %v2630 = vpop.f32.mrb[0].mxu0
      %v2631 = vadd.f32 %v2470, %v2630
      %v2632 = vpop.f32.mrb[0].mxu0
      %2633 = vmatprep.mubr.bf16.mxu0 0
      %2634 = vmatmul.mubr.bf16.gmra.mrb[0].mxu0 %v2217
      %v2635 = vpop.f32.mrb[0].mxu0
      %v2636 = vadd.f32 %v2475, %v2635
      %v2637 = vpop.f32.mrb[0].mxu0
      %v2638 = vpop.f32.mrb[0].mxu0
      %v2639 = vadd.f32 %v2478, %v2638
      %v2640 = vpop.f32.mrb[0].mxu0
      %2641 = vmatprep.mubr.bf16.mxu0 0
      %2642 = vmatmul.mubr.bf16.gmra.mrb[0].mxu0 %v2220
      %v2643 = vpop.f32.mrb[0].mxu0
      %v2644 = vadd.f32 %v2483, %v2643
      %v2645 = vpop.f32.mrb[0].mxu0
      %v2646 = vpop.f32.mrb[0].mxu0
      %v2647 = vadd.f32 %v2486, %v2646
      %v2648 = vpop.f32.mrb[0].mxu0
      %2649 = vmatprep.mubr.bf16.mxu0 0
      %2650 = vmatmul.mubr.bf16.gmra.mrb[0].mxu0 %v2223
      %v2651 = vpop.f32.mrb[0].mxu0
      %v2652 = vadd.f32 %v2491, %v2651
      %v2653 = vpop.f32.mrb[0].mxu0
      %v2654 = vpop.f32.mrb[0].mxu0
      %v2655 = vadd.f32 %v2494, %v2654
      %v2656 = vpop.f32.mrb[0].mxu0
      %2657 = vmatprep.mubr.bf16.mxu0 0
      %2658 = vmatmul.mubr.bf16.gmra.mrb[0].mxu0 %v2226
      %v2659 = vpop.f32.mrb[0].mxu0
      %v2660 = vadd.f32 %v2499, %v2659
      %v2661 = vpop.f32.mrb[0].mxu0
      %v2662 = vpop.f32.mrb[0].mxu0
      %v2663 = vadd.f32 %v2502, %v2662
      %v2664 = vpop.f32.mrb[0].mxu0
      %2665 = vmatprep.mubr.bf16.mxu0 0
      %2666 = vmatmul.mubr.bf16.gmra.mrb[0].mxu0 %v2229
      %v2667 = vpop.f32.mrb[0].mxu0
      %v2668 = vadd.f32 %v2507, %v2667
      %v2669 = vpop.f32.mrb[0].mxu0
      %v2670 = vpop.f32.mrb[0].mxu0
      %v2671 = vadd.f32 %v2510, %v2670
      %v2672 = vpop.f32.mrb[0].mxu0
      %2673 = vmatprep.mubr.bf16.mxu0 0
      %2674 = vmatmul.mubr.bf16.gmra.mrb[0].mxu0 %v2232
      %v2675 = vpop.f32.mrb[0].mxu0
      %v2676 = vadd.f32 %v2515, %v2675
      %v2677 = vpop.f32.mrb[0].mxu0
      %v2678 = vpop.f32.mrb[0].mxu0
      %v2679 = vadd.f32 %v2518, %v2678
      %v2680 = vpop.f32.mrb[0].mxu0
      %2681 = vmatprep.mubr.bf16.mxu0 0
      %2682 = vmatmul.mubr.bf16.gmra.mrb[0].mxu0 %v2235
      %v2683 = vpop.f32.mrb[0].mxu0
      %v2684 = vadd.f32 %v2523, %v2683
      %v2685 = vpop.f32.mrb[0].mxu0
      %v2686 = vpop.f32.mrb[0].mxu0
      %v2687 = vadd.f32 %v2526, %v2686
      %v2688 = vpop.f32.mrb[0].mxu0
      %2689 = vmatprep.mubr.bf16.mxu0 0
      %2690 = vmatmul.mubr.bf16.gmra.mrb[0].mxu0 %v2238
      %v2691 = vpop.f32.mrb[0].mxu0
      %v2692 = vadd.f32 %v2531, %v2691
      %v2693 = vpop.f32.mrb[0].mxu0
      %v2694 = vpop.f32.mrb[0].mxu0
      %v2695 = vadd.f32 %v2534, %v2694
      %v2696 = vpop.f32.mrb[0].mxu0
      %2697 = vmatprep.mubr.bf16.mxu0 0
      %2698 = vmatmul.mubr.bf16.gmra.mrb[0].mxu0 %v2241
      %v2699 = vpop.f32.mrb[0].mxu0
      %v2700 = vadd.f32 %v2539, %v2699
      %v2701 = vpop.f32.mrb[0].mxu0
      %v2702 = vpop.f32.mrb[0].mxu0
      %v2703 = vadd.f32 %v2542, %v2702
      %v2704 = vpop.f32.mrb[0].mxu0
      %2705 = vmatprep.mubr.bf16.mxu0 0
      %2706 = vmatmul.mubr.bf16.gmra.mrb[0].mxu0 %v2244
      %v2707 = vpop.f32.mrb[0].mxu0
      %v2708 = vadd.f32 %v2547, %v2707
      %v2709 = vpop.f32.mrb[0].mxu0
      %v2710 = vpop.f32.mrb[0].mxu0
      %v2711 = vadd.f32 %v2550, %v2710
      %v2712 = vpop.f32.mrb[0].mxu0
      %2713 = vmatprep.mubr.bf16.mxu0 0
      %2714 = vmatmul.mubr.bf16.gmra.mrb[0].mxu0 %v2247
      %v2715 = vpop.f32.mrb[0].mxu0
      %v2716 = vadd.f32 %v2555, %v2715
      %v2717 = vpop.f32.mrb[0].mxu0
      %v2718 = vpop.f32.mrb[0].mxu0
      %v2719 = vadd.f32 %v2558, %v2718
      %v2720 = vpop.f32.mrb[0].mxu0
      %2721 = vmatprep.mubr.bf16.mxu0 0
      %2722 = vmatmul.mubr.bf16.gmra.mrb[0].mxu0 %v2250
      %v2723 = vpop.f32.mrb[0].mxu0
      %v2724 = vadd.f32 %v2563, %v2723
      %v2725 = vpop.f32.mrb[0].mxu0
      %v2726 = vpop.f32.mrb[0].mxu0
      %v2727 = vadd.f32 %v2566, %v2726
      %v2728 = vpop.f32.mrb[0].mxu0
      %2729 = vmatprep.mubr.bf16.mxu0 0
      %2730 = vmatmul.mubr.bf16.gmra.mrb[0].mxu0 %v2253
      %v2731 = vpop.f32.mrb[0].mxu0
      %v2732 = vadd.f32 %v2571, %v2731
      %v2733 = vpop.f32.mrb[0].mxu0
      %v2734 = vpop.f32.mrb[0].mxu0
      %v2735 = vadd.f32 %v2574, %v2734
      %v2736 = vpop.f32.mrb[0].mxu0
      %2737 = vdwg.mxu0
      %v2738 = vadd.f32 %v2612, %v2615
      %v2739 = vadd.f32 %v2738, %v2620
      %v2740 = vadd.f32 %v2739, %v2623
      %v2741 = vadd.f32 %v2740, %v2628
      %v2742 = vadd.f32 %v2741, %v2631
      %v2743 = vadd.f32 %v2742, %v2636
      %v2744 = vadd.f32 %v2743, %v2639
      %v2745 = vrot.slane %v2744, 4
      %v2746 = vadd.f32 %v2744, %v2745
      %v2747 = vrot.slane %v2746, 2
      %v2748 = vadd.f32 %v2746, %v2747
      %v2749 = vrot.slane %v2748, 1
      %v2750 = vadd.f32 %v2748, %v2749
      %v2751 = vadd.f32 %v2644, %v2647
      %v2752 = vadd.f32 %v2751, %v2652
      %v2753 = vadd.f32 %v2752, %v2655
      %v2754 = vadd.f32 %v2753, %v2660
      %v2755 = vadd.f32 %v2754, %v2663
      %v2756 = vadd.f32 %v2755, %v2668
      %v2757 = vadd.f32 %v2756, %v2671
      %v2758 = vrot.slane %v2757, 4
      %v2759 = vadd.f32 %v2757, %v2758
      %v2760 = vrot.slane %v2759, 2
      %v2761 = vadd.f32 %v2759, %v2760
      %v2762 = vrot.slane %v2761, 1
      %v2763 = vadd.f32 %v2761, %v2762
      %v2764 = vadd.f32 %v2676, %v2679
      %v2765 = vadd.f32 %v2764, %v2684
      %v2766 = vadd.f32 %v2765, %v2687
      %v2767 = vadd.f32 %v2766, %v2692
      %v2768 = vadd.f32 %v2767, %v2695
      %v2769 = vadd.f32 %v2768, %v2700
      %v2770 = vadd.f32 %v2769, %v2703
      %v2771 = vrot.slane %v2770, 4
      %v2772 = vadd.f32 %v2770, %v2771
      %v2773 = vrot.slane %v2772, 2
      %v2774 = vadd.f32 %v2772, %v2773
      %v2775 = vrot.slane %v2774, 1
      %v2776 = vadd.f32 %v2774, %v2775
      %v2777 = vadd.f32 %v2708, %v2711
      %v2778 = vadd.f32 %v2777, %v2716
      %v2779 = vadd.f32 %v2778, %v2719
      %v2780 = vadd.f32 %v2779, %v2724
      %v2781 = vadd.f32 %v2780, %v2727
      %v2782 = vadd.f32 %v2781, %v2732
      %v2783 = vadd.f32 %v2782, %v2735
      %v2784 = vrot.slane %v2783, 4
      %v2785 = vadd.f32 %v2783, %v2784
      %v2786 = vrot.slane %v2785, 2
      %v2787 = vadd.f32 %v2785, %v2786
      %v2788 = vrot.slane %v2787, 1
      %v2789 = vadd.f32 %v2787, %v2788
      %v2790 = vmul.f32 %v2612, %v2612
      %v2791 = vmul.f32 %v2615, %v2615
      %v2792 = vmul.f32 %v2620, %v2620
      %v2793 = vmul.f32 %v2623, %v2623
      %v2794 = vmul.f32 %v2628, %v2628
      %v2795 = vmul.f32 %v2631, %v2631
      %v2796 = vmul.f32 %v2636, %v2636
      %v2797 = vmul.f32 %v2639, %v2639
      %v2798 = vmul.f32 %v2644, %v2644
      %v2799 = vmul.f32 %v2647, %v2647
      %v2800 = vmul.f32 %v2652, %v2652
      %v2801 = vmul.f32 %v2655, %v2655
      %v2802 = vmul.f32 %v2660, %v2660
      %v2803 = vmul.f32 %v2663, %v2663
      %v2804 = vmul.f32 %v2668, %v2668
      %v2805 = vmul.f32 %v2671, %v2671
      %v2806 = vmul.f32 %v2676, %v2676
      %v2807 = vmul.f32 %v2679, %v2679
      %v2808 = vmul.f32 %v2684, %v2684
      %v2809 = vmul.f32 %v2687, %v2687
      %v2810 = vmul.f32 %v2692, %v2692
      %v2811 = vmul.f32 %v2695, %v2695
      %v2812 = vmul.f32 %v2700, %v2700
      %v2813 = vmul.f32 %v2703, %v2703
      %v2814 = vmul.f32 %v2708, %v2708
      %v2815 = vmul.f32 %v2711, %v2711
      %v2816 = vmul.f32 %v2716, %v2716
      %v2817 = vmul.f32 %v2719, %v2719
      %v2818 = vmul.f32 %v2724, %v2724
      %v2819 = vmul.f32 %v2727, %v2727
      %v2820 = vmul.f32 %v2732, %v2732
      %v2821 = vmul.f32 %v2735, %v2735
      %v2822 = vadd.f32 %v2790, %v2791
      %v2823 = vadd.f32 %v2822, %v2792
      %v2824 = vadd.f32 %v2823, %v2793
      %v2825 = vadd.f32 %v2824, %v2794
      %v2826 = vadd.f32 %v2825, %v2795
      %v2827 = vadd.f32 %v2826, %v2796
      %v2828 = vadd.f32 %v2827, %v2797
      %v2829 = vrot.slane %v2828, 4
      %v2830 = vadd.f32 %v2828, %v2829
      %v2831 = vrot.slane %v2830, 2
      %v2832 = vadd.f32 %v2830, %v2831
      %v2833 = vrot.slane %v2832, 1
      %v2834 = vadd.f32 %v2832, %v2833
      %v2835 = vadd.f32 %v2798, %v2799
      %v2836 = vadd.f32 %v2835, %v2800
      %v2837 = vadd.f32 %v2836, %v2801
      %v2838 = vadd.f32 %v2837, %v2802
      %v2839 = vadd.f32 %v2838, %v2803
      %v2840 = vadd.f32 %v2839, %v2804
      %v2841 = vadd.f32 %v2840, %v2805
      %v2842 = vrot.slane %v2841, 4
      %v2843 = vadd.f32 %v2841, %v2842
      %v2844 = vrot.slane %v2843, 2
      %v2845 = vadd.f32 %v2843, %v2844
      %v2846 = vrot.slane %v2845, 1
      %v2847 = vadd.f32 %v2845, %v2846
      %v2848 = vadd.f32 %v2806, %v2807
      %v2849 = vadd.f32 %v2848, %v2808
      %v2850 = vadd.f32 %v2849, %v2809
      %v2851 = vadd.f32 %v2850, %v2810
      %v2852 = vadd.f32 %v2851, %v2811
      %v2853 = vadd.f32 %v2852, %v2812
      %v2854 = vadd.f32 %v2853, %v2813
      %v2855 = vrot.slane %v2854, 4
      %v2856 = vadd.f32 %v2854, %v2855
      %v2857 = vrot.slane %v2856, 2
      %v2858 = vadd.f32 %v2856, %v2857
      %v2859 = vrot.slane %v2858, 1
      %v2860 = vadd.f32 %v2858, %v2859
      %v2861 = vadd.f32 %v2814, %v2815
      %v2862 = vadd.f32 %v2861, %v2816
      %v2863 = vadd.f32 %v2862, %v2817
      %v2864 = vadd.f32 %v2863, %v2818
      %v2865 = vadd.f32 %v2864, %v2819
      %v2866 = vadd.f32 %v2865, %v2820
      %v2867 = vadd.f32 %v2866, %v2821
      %v2868 = vrot.slane %v2867, 4
      %v2869 = vadd.f32 %v2867, %v2868
      %v2870 = vrot.slane %v2869, 2
      %v2871 = vadd.f32 %v2869, %v2870
      %v2872 = vrot.slane %v2871, 1
      %v2873 = vadd.f32 %v2871, %v2872
      %vm2878 = vcmask 1041409
      %v2879 = vsel %vm2878, %v2763, %v2750
      %vm2880 = vcmask 1042434
      %v2881 = vsel %vm2880, %v2776, %v2879
      %vm2882 = vcmask 1043459
      %v2883 = vsel %vm2882, %v2789, %v2881
      %vm2889 = vcmask 1045509
      %v2890 = vsel %vm2889, %v2847, %v2834
      %vm2891 = vcmask 1046534
      %v2892 = vsel %vm2891, %v2860, %v2890
      %vm2893 = vcmask 1047559
      %v2894 = vsel %vm2893, %v2873, %v2892
      %vm2896 = vcmask 1043456
      %v2897 = vsel %vm2896, %v2883, %v2894
      %2898 = vmatprep.subr.mxu0 0.0
      %2899 = vmatpush1.msra.mxu0 %v430
      %2900 = vmatprep.subr.mxu0 0.0
      %2901 = vmatpush1.msra.mxu0 %v431
      %2902 = vmatprep.subr.mxu0 0.0
      %2903 = vmatpush1.msra.mxu0 %v432
      %2904 = vmatprep.subr.mxu0 0.0
      %2905 = vmatpush1.msra.mxu0 %v433
      %2906 = vmatprep.subr.mxu0 0.0
      %2907 = vmatpush1.msra.mxu0 %v434
      %2908 = vmatprep.subr.mxu0 0.0
      %2909 = vmatpush1.msra.mxu0 %v435
      %2910 = vmatprep.subr.mxu0 0.0
      %2911 = vmatpush1.msra.mxu0 %v436
      %2912 = vmatprep.subr.mxu0 0.0
      %2913 = vmatpush1.msra.mxu0 %v437
      %2914 = vmatprep.subr.mxu0 0.0
      %2915 = vmatpush1.msra.mxu0 %v438
      %2916 = vmatprep.subr.mxu0 0.0
      %2917 = vmatpush1.msra.mxu0 %v439
      %2918 = vmatprep.subr.mxu0 0.0
      %2919 = vmatpush1.msra.mxu0 %v440
      %2920 = vmatprep.subr.mxu0 0.0
      %2921 = vmatpush1.msra.mxu0 %v441
      %2922 = vmatprep.subr.mxu0 0.0
      %2923 = vmatpush1.msra.mxu0 %v442
      %2924 = vmatprep.subr.mxu0 0.0
      %2925 = vmatpush1.msra.mxu0 %v443
      %2926 = vmatprep.subr.mxu0 0.0
      %2927 = vmatpush1.msra.mxu0 %v444
      %2928 = vmatprep.subr.mxu0 0.0
      %2929 = vmatpush1.msra.mxu0 %v445
      %2930 = vmatprep.subr.mxu0 0.0
      %2931 = vmatpush1.msra.mxu0 0.0
      %2932 = vmatprep.subr.mxu0 0.0
      %2933 = vmatpush1.msra.mxu0 0.0
      %2934 = vmatprep.subr.mxu0 0.0
      %2935 = vmatpush1.msra.mxu0 0.0
      %2936 = vmatprep.subr.mxu0 0.0
      %2937 = vmatpush1.msra.mxu0 0.0
      %2938 = vmatprep.subr.mxu0 0.0
      %2939 = vmatpush1.msra.mxu0 0.0
      %2940 = vmatprep.subr.mxu0 0.0
      %2941 = vmatpush1.msra.mxu0 0.0
      %2942 = vmatprep.subr.mxu0 0.0
      %2943 = vmatpush1.msra.mxu0 0.0
      %2944 = vmatprep.subr.mxu0 0.0
      %2945 = vmatpush1.msra.mxu0 0.0
      %2946 = vmatprep.subr.mxu0 0.0
      %2947 = vmatpush1.msra.mxu0 0.0
      %2948 = vmatprep.subr.mxu0 0.0
      %2949 = vmatpush1.msra.mxu0 0.0
      %2950 = vmatprep.subr.mxu0 0.0
      %2951 = vmatpush1.msra.mxu0 0.0
      %2952 = vmatprep.subr.mxu0 0.0
      %2953 = vmatpush1.msra.mxu0 0.0
      %2954 = vmatprep.subr.mxu0 0.0
      %2955 = vmatpush1.msra.mxu0 0.0
      %2956 = vmatprep.subr.mxu0 0.0
      %2957 = vmatpush1.msra.mxu0 0.0
      %2958 = vmatprep.subr.mxu0 0.0
      %2959 = vmatpush1.msra.mxu0 0.0
      %2960 = vmatprep.subr.mxu0 0.0
      %2961 = vmatpush1.msra.mxu0 0.0
      %2962 = vmatprep.mubr.f32.mxu0 0.0
      %2963 = vmatmul.mubr.f32.gmra.mrb[0].mxu0 %v2897
      %v2964 = vpop.f32.mrb[0].mxu0
      %v2965 = vadd.f32 0.0, %v2964
      %v2966 = vpop.f32.mrb[0].mxu0
      %2967 = vdwg.mxu0
      %v2968 = vmul.f32 %v2965, 0.0078125
      %v2969 = vmul.f32 %v2968, %v2968
      %v2971 = vrot.slane %v2969, 4
      %v2973 = vsub.f32 %v2968, %v2971
      %v2974 = vadd.f32 %v2973, 1e-05
      %v2975 = vrsqrt.pop %v2974
      %v2976 = vsel %vm2896, %v2968, %v2975
      %v2978 = vsel %vm1313, %v2976, 0
      %2980 = vmatprep.subr.mxu0 0.0
      %2981 = vmatpush1.msra.mxu0 %v446
      %2982 = vmatprep.subr.mxu0 0.0
      %2983 = vmatpush1.msra.mxu0 %v447
      %2984 = vmatprep.subr.mxu0 0.0
      %2985 = vmatpush1.msra.mxu0 %v448
      %2986 = vmatprep.subr.mxu0 0.0
      %2987 = vmatpush1.msra.mxu0 %v449
      %2988 = vmatprep.subr.mxu0 0.0
      %2989 = vmatpush1.msra.mxu0 %v450
      %2990 = vmatprep.subr.mxu0 0.0
      %2991 = vmatpush1.msra.mxu0 %v451
      %2992 = vmatprep.subr.mxu0 0.0
      %2993 = vmatpush1.msra.mxu0 %v452
      %2994 = vmatprep.subr.mxu0 0.0
      %2995 = vmatpush1.msra.mxu0 %v453
      %2996 = vmatprep.subr.mxu0 0.0
      %2997 = vmatpush1.msra.mxu0 0.0
      %2998 = vmatprep.subr.mxu0 0.0
      %2999 = vmatpush1.msra.mxu0 0.0
      %3000 = vmatprep.subr.mxu0 0.0
      %3001 = vmatpush1.msra.mxu0 0.0
      %3002 = vmatprep.subr.mxu0 0.0
      %3003 = vmatpush1.msra.mxu0 0.0
      %3004 = vmatprep.subr.mxu0 0.0
      %3005 = vmatpush1.msra.mxu0 0.0
      %3006 = vmatprep.subr.mxu0 0.0
      %3007 = vmatpush1.msra.mxu0 0.0
      %3008 = vmatprep.subr.mxu0 0.0
      %3009 = vmatpush1.msra.mxu0 0.0
      %3010 = vmatprep.subr.mxu0 0.0
      %3011 = vmatpush1.msra.mxu0 0.0
      %3012 = vmatprep.subr.mxu0 0.0
      %3013 = vmatpush1.msra.mxu0 0.0
      %3014 = vmatprep.subr.mxu0 0.0
      %3015 = vmatpush1.msra.mxu0 0.0
      %3016 = vmatprep.subr.mxu0 0.0
      %3017 = vmatpush1.msra.mxu0 0.0
      %3018 = vmatprep.subr.mxu0 0.0
      %3019 = vmatpush1.msra.mxu0 0.0
      %3020 = vmatprep.subr.mxu0 0.0
      %3021 = vmatpush1.msra.mxu0 0.0
      %3022 = vmatprep.subr.mxu0 0.0
      %3023 = vmatpush1.msra.mxu0 0.0
      %3024 = vmatprep.subr.mxu0 0.0
      %3025 = vmatpush1.msra.mxu0 0.0
      %3026 = vmatprep.subr.mxu0 0.0
      %3027 = vmatpush1.msra.mxu0 0.0
      %3028 = vmatprep.subr.mxu0 0.0
      %3029 = vmatpush1.msra.mxu0 0.0
      %3030 = vmatprep.subr.mxu0 0.0
      %3031 = vmatpush1.msra.mxu0 0.0
      %3032 = vmatprep.subr.mxu0 0.0
      %3033 = vmatpush1.msra.mxu0 0.0
      %3034 = vmatprep.subr.mxu0 0.0
      %3035 = vmatpush1.msra.mxu0 0.0
      %3036 = vmatprep.subr.mxu0 0.0
      %3037 = vmatpush1.msra.mxu0 0.0
      %3038 = vmatprep.subr.mxu0 0.0
      %3039 = vmatpush1.msra.mxu0 0.0
      %3040 = vmatprep.subr.mxu0 0.0
      %3041 = vmatpush1.msra.mxu0 0.0
      %3042 = vmatprep.subr.mxu0 0.0
      %3043 = vmatpush1.msra.mxu0 0.0
      %3044 = vmatprep.mubr.f32.mxu0 0.0
      %3045 = vmatmul.mubr.f32.gmra.mrb[0].mxu0 %v2978
      %v3046 = vpop.f32.mrb[0].mxu0
      %v3047 = vadd.f32 0.0, %v3046
      %v3048 = vpop.f32.mrb[0].mxu0
      %3049 = vdwg.mxu0
      %v3050 = vld [vmem:[%s5] sm:$0x1]
      %v3052 = vlaneseq
      %v3053 = vshrl.u32 %v3052, 7
      %v3054 = vsub.s32 0, %v3053
      %v3055 = vrot.slane %v3050, %v3054
      %v3057 = vmul.f32 %v3047, %v3055
      %v3058 = vld [vmem:[%s6] sm:$0x1]
      %v3060 = vrot.slane %v3057, 4
      %v3062 = vmul.f32 %v3047, %v3060
      %v3064 = vlaneseq
      %v3065 = vshrl.u32 %v3064, 7
      %v3066 = vsub.s32 0, %v3065
      %v3067 = vrot.slane %v3058, %v3066
      %v3069 = vsub.f32 %v3067, %v3062
      %v3070 = vcombine.high %v3057, %v3057
      %v3072 = vunpack.c.l.s4 1966171168
      %v3073 = vunpack.c.0.s8 %v3072
      %v3074 = vlaneseq
      %v3075 = vshrl.u32 %v3074, 7
      %v3076 = vsub.s32 %v3073, %v3075
      %v3077 = vrot.slane %v3070, %v3076
      %v3078 = vcombine.high %v3077, %v3077
      %v3080 = vunpack.c.l.s4 1966171168
      %v3081 = vunpack.c.0.s8 %v3080
      %v3082 = vlaneseq
      %v3083 = vshrl.u32 %v3082, 7
      %v3084 = vsub.s32 %v3081, %v3083
      %v3085 = vrot.slane %v3077, %v3084
      %v3087 = vunpack.c.l.s4 1966171168
      %v3088 = vunpack.c.0.s8 %v3087
      %v3089 = vlaneseq
      %v3090 = vshrl.u32 %v3089, 7
      %v3091 = vsub.s32 %v3088, %v3090
      %v3092 = vrot.slane %v3078, %v3091
      %v3093 = vcombine.high %v3085, %v3085
      %v3094 = vcombine.high %v3092, %v3092
      %v3095 = vlaneseq
      %v3096 = vshrl.u32 %v3095, 7
      %v3097 = vsub.s32 0, %v3096
      %v3098 = vrot.slane %v3085, %v3097
      %v3099 = vlaneseq
      %v3100 = vshrl.u32 %v3099, 7
      %v3101 = vsub.s32 0, %v3100
      %v3102 = vrot.slane %v3092, %v3101
      %v3103 = vlaneseq
      %v3104 = vshrl.u32 %v3103, 7
      %v3105 = vsub.s32 0, %v3104
      %v3106 = vrot.slane %v3093, %v3105
      %v3107 = vlaneseq
      %v3108 = vshrl.u32 %v3107, 7
      %v3109 = vsub.s32 0, %v3108
      %v3110 = vrot.slane %v3094, %v3109
      %v3115 = vmul.f32 %v2612, %v3098
      %v3116 = vmul.f32 %v2615, %v3098
      %v3117 = vmul.f32 %v2620, %v3098
      %v3118 = vmul.f32 %v2623, %v3098
      %v3119 = vmul.f32 %v2628, %v3098
      %v3120 = vmul.f32 %v2631, %v3098
      %v3121 = vmul.f32 %v2636, %v3098
      %v3122 = vmul.f32 %v2639, %v3098
      %v3123 = vmul.f32 %v2644, %v3102
      %v3124 = vmul.f32 %v2647, %v3102
      %v3125 = vmul.f32 %v2652, %v3102
      %v3126 = vmul.f32 %v2655, %v3102
      %v3127 = vmul.f32 %v2660, %v3102
      %v3128 = vmul.f32 %v2663, %v3102
      %v3129 = vmul.f32 %v2668, %v3102
      %v3130 = vmul.f32 %v2671, %v3102
      %v3131 = vmul.f32 %v2676, %v3106
      %v3132 = vmul.f32 %v2679, %v3106
      %v3133 = vmul.f32 %v2684, %v3106
      %v3134 = vmul.f32 %v2687, %v3106
      %v3135 = vmul.f32 %v2692, %v3106
      %v3136 = vmul.f32 %v2695, %v3106
      %v3137 = vmul.f32 %v2700, %v3106
      %v3138 = vmul.f32 %v2703, %v3106
      %v3139 = vmul.f32 %v2708, %v3110
      %v3140 = vmul.f32 %v2711, %v3110
      %v3141 = vmul.f32 %v2716, %v3110
      %v3142 = vmul.f32 %v2719, %v3110
      %v3143 = vmul.f32 %v2724, %v3110
      %v3144 = vmul.f32 %v2727, %v3110
      %v3145 = vmul.f32 %v2732, %v3110
      %v3146 = vmul.f32 %v2735, %v3110
      %v3149 = vunpack.c.l.s4 1966171168
      %v3150 = vunpack.c.0.s8 %v3149
      %v3151 = vlaneseq
      %v3152 = vshrl.u32 %v3151, 7
      %v3153 = vsub.s32 %v3150, %v3152
      %v3154 = vrot.slane %v3069, %v3153
      %v3155 = vcombine.high %v3154, %v3154
      %v3157 = vunpack.c.l.s4 1966171168
      %v3158 = vunpack.c.0.s8 %v3157
      %v3159 = vlaneseq
      %v3160 = vshrl.u32 %v3159, 7
      %v3161 = vsub.s32 %v3158, %v3160
      %v3162 = vrot.slane %v3154, %v3161
      %v3164 = vunpack.c.l.s4 1966171168
      %v3165 = vunpack.c.0.s8 %v3164
      %v3166 = vlaneseq
      %v3167 = vshrl.u32 %v3166, 7
      %v3168 = vsub.s32 %v3165, %v3167
      %v3169 = vrot.slane %v3155, %v3168
      %v3170 = vcombine.high %v3162, %v3162
      %v3171 = vcombine.high %v3169, %v3169
      %v3172 = vlaneseq
      %v3173 = vshrl.u32 %v3172, 7
      %v3174 = vsub.s32 0, %v3173
      %v3175 = vrot.slane %v3162, %v3174
      %v3176 = vlaneseq
      %v3177 = vshrl.u32 %v3176, 7
      %v3178 = vsub.s32 0, %v3177
      %v3179 = vrot.slane %v3169, %v3178
      %v3180 = vlaneseq
      %v3181 = vshrl.u32 %v3180, 7
      %v3182 = vsub.s32 0, %v3181
      %v3183 = vrot.slane %v3170, %v3182
      %v3184 = vlaneseq
      %v3185 = vshrl.u32 %v3184, 7
      %v3186 = vsub.s32 0, %v3185
      %v3187 = vrot.slane %v3171, %v3186
      %v3192 = vadd.f32 %v3115, %v3175
      %v3193 = vadd.f32 %v3116, %v3175
      %v3194 = vadd.f32 %v3117, %v3175
      %v3195 = vadd.f32 %v3118, %v3175
      %v3196 = vadd.f32 %v3119, %v3175
      %v3197 = vadd.f32 %v3120, %v3175
      %v3198 = vadd.f32 %v3121, %v3175
      %v3199 = vadd.f32 %v3122, %v3175
      %v3200 = vadd.f32 %v3123, %v3179
      %v3201 = vadd.f32 %v3124, %v3179
      %v3202 = vadd.f32 %v3125, %v3179
      %v3203 = vadd.f32 %v3126, %v3179
      %v3204 = vadd.f32 %v3127, %v3179
      %v3205 = vadd.f32 %v3128, %v3179
      %v3206 = vadd.f32 %v3129, %v3179
      %v3207 = vadd.f32 %v3130, %v3179
      %v3208 = vadd.f32 %v3131, %v3183
      %v3209 = vadd.f32 %v3132, %v3183
      %v3210 = vadd.f32 %v3133, %v3183
      %v3211 = vadd.f32 %v3134, %v3183
      %v3212 = vadd.f32 %v3135, %v3183
      %v3213 = vadd.f32 %v3136, %v3183
      %v3214 = vadd.f32 %v3137, %v3183
      %v3215 = vadd.f32 %v3138, %v3183
      %v3216 = vadd.f32 %v3139, %v3187
      %v3217 = vadd.f32 %v3140, %v3187
      %v3218 = vadd.f32 %v3141, %v3187
      %v3219 = vadd.f32 %v3142, %v3187
      %v3220 = vadd.f32 %v3143, %v3187
      %v3221 = vadd.f32 %v3144, %v3187
      %v3222 = vadd.f32 %v3145, %v3187
      %v3223 = vadd.f32 %v3146, %v3187
      %v3224 = vmax.f32 %v3192, 0.0
      %v3225 = vmax.f32 %v3193, 0.0
      %v3226 = vmax.f32 %v3194, 0.0
      %v3227 = vmax.f32 %v3195, 0.0
      %v3228 = vmax.f32 %v3196, 0.0
      %v3229 = vmax.f32 %v3197, 0.0
      %v3230 = vmax.f32 %v3198, 0.0
      %v3231 = vmax.f32 %v3199, 0.0
      %v3232 = vmax.f32 %v3200, 0.0
      %v3233 = vmax.f32 %v3201, 0.0
      %v3234 = vmax.f32 %v3202, 0.0
      %v3235 = vmax.f32 %v3203, 0.0
      %v3236 = vmax.f32 %v3204, 0.0
      %v3237 = vmax.f32 %v3205, 0.0
      %v3238 = vmax.f32 %v3206, 0.0
      %v3239 = vmax.f32 %v3207, 0.0
      %v3240 = vmax.f32 %v3208, 0.0
      %v3241 = vmax.f32 %v3209, 0.0
      %v3242 = vmax.f32 %v3210, 0.0
      %v3243 = vmax.f32 %v3211, 0.0
      %v3244 = vmax.f32 %v3212, 0.0
      %v3245 = vmax.f32 %v3213, 0.0
      %v3246 = vmax.f32 %v3214, 0.0
      %v3247 = vmax.f32 %v3215, 0.0
      %v3248 = vmax.f32 %v3216, 0.0
      %v3249 = vmax.f32 %v3217, 0.0
      %v3250 = vmax.f32 %v3218, 0.0
      %v3251 = vmax.f32 %v3219, 0.0
      %v3252 = vmax.f32 %v3220, 0.0
      %v3253 = vmax.f32 %v3221, 0.0
      %v3254 = vmax.f32 %v3222, 0.0
      %v3255 = vmax.f32 %v3223, 0.0
      %v3256 = vpack.c.bf16 %v3224, %v3224
      %v3257 = vpack.c.bf16 %v3225, %v3225
      %v3258 = vpack.c.bf16 %v3226, %v3226
      %v3259 = vpack.c.bf16 %v3227, %v3227
      %v3260 = vpack.c.bf16 %v3228, %v3228
      %v3261 = vpack.c.bf16 %v3229, %v3229
      %v3262 = vpack.c.bf16 %v3230, %v3230
      %v3263 = vpack.c.bf16 %v3231, %v3231
      %v3264 = vpack.c.bf16 %v3232, %v3232
      %v3265 = vpack.c.bf16 %v3233, %v3233
      %v3266 = vpack.c.bf16 %v3234, %v3234
      %v3267 = vpack.c.bf16 %v3235, %v3235
      %v3268 = vpack.c.bf16 %v3236, %v3236
      %v3269 = vpack.c.bf16 %v3237, %v3237
      %v3270 = vpack.c.bf16 %v3238, %v3238
      %v3271 = vpack.c.bf16 %v3239, %v3239
      %v3272 = vpack.c.bf16 %v3240, %v3240
      %v3273 = vpack.c.bf16 %v3241, %v3241
      %v3274 = vpack.c.bf16 %v3242, %v3242
      %v3275 = vpack.c.bf16 %v3243, %v3243
      %v3276 = vpack.c.bf16 %v3244, %v3244
      %v3277 = vpack.c.bf16 %v3245, %v3245
      %v3278 = vpack.c.bf16 %v3246, %v3246
      %v3279 = vpack.c.bf16 %v3247, %v3247
      %v3280 = vpack.c.bf16 %v3248, %v3248
      %v3281 = vpack.c.bf16 %v3249, %v3249
      %v3282 = vpack.c.bf16 %v3250, %v3250
      %v3283 = vpack.c.bf16 %v3251, %v3251
      %v3284 = vpack.c.bf16 %v3252, %v3252
      %v3285 = vpack.c.bf16 %v3253, %v3253
      %v3286 = vpack.c.bf16 %v3254, %v3254
      %v3287 = vpack.c.bf16 %v3255, %v3255
      %v3289 = vshrl.u32 %v3256, 16
      %v3291 = vrot.slane %v3289, 7
      %v3292 = vshll.u32 %v3256, 16
      %v3294 = vor.u32 %v3291, %v3292
      %v3296 = vshrl.u32 %v3257, 16
      %v3298 = vrot.slane %v3296, 7
      %v3299 = vshll.u32 %v3257, 16
      %v3301 = vor.u32 %v3298, %v3299
      %v3303 = vshrl.u32 %v3258, 16
      %v3305 = vrot.slane %v3303, 7
      %v3306 = vshll.u32 %v3258, 16
      %v3308 = vor.u32 %v3305, %v3306
      %v3310 = vshrl.u32 %v3259, 16
      %v3312 = vrot.slane %v3310, 7
      %v3313 = vshll.u32 %v3259, 16
      %v3315 = vor.u32 %v3312, %v3313
      %v3317 = vshrl.u32 %v3260, 16
      %v3319 = vrot.slane %v3317, 7
      %v3320 = vshll.u32 %v3260, 16
      %v3322 = vor.u32 %v3319, %v3320
      %v3324 = vshrl.u32 %v3261, 16
      %v3326 = vrot.slane %v3324, 7
      %v3327 = vshll.u32 %v3261, 16
      %v3329 = vor.u32 %v3326, %v3327
      %v3331 = vshrl.u32 %v3262, 16
      %v3333 = vrot.slane %v3331, 7
      %v3334 = vshll.u32 %v3262, 16
      %v3336 = vor.u32 %v3333, %v3334
      %v3338 = vshrl.u32 %v3263, 16
      %v3340 = vrot.slane %v3338, 7
      %v3341 = vshll.u32 %v3263, 16
      %v3343 = vor.u32 %v3340, %v3341
      %v3345 = vshrl.u32 %v3264, 16
      %v3347 = vrot.slane %v3345, 7
      %v3348 = vshll.u32 %v3264, 16
      %v3350 = vor.u32 %v3347, %v3348
      %v3352 = vshrl.u32 %v3265, 16
      %v3354 = vrot.slane %v3352, 7
      %v3355 = vshll.u32 %v3265, 16
      %v3357 = vor.u32 %v3354, %v3355
      %v3359 = vshrl.u32 %v3266, 16
      %v3361 = vrot.slane %v3359, 7
      %v3362 = vshll.u32 %v3266, 16
      %v3364 = vor.u32 %v3361, %v3362
      %v3366 = vshrl.u32 %v3267, 16
      %v3368 = vrot.slane %v3366, 7
      %v3369 = vshll.u32 %v3267, 16
      %v3371 = vor.u32 %v3368, %v3369
      %v3373 = vshrl.u32 %v3268, 16
      %v3375 = vrot.slane %v3373, 7
      %v3376 = vshll.u32 %v3268, 16
      %v3378 = vor.u32 %v3375, %v3376
      %v3380 = vshrl.u32 %v3269, 16
      %v3382 = vrot.slane %v3380, 7
      %v3383 = vshll.u32 %v3269, 16
      %v3385 = vor.u32 %v3382, %v3383
      %v3387 = vshrl.u32 %v3270, 16
      %v3389 = vrot.slane %v3387, 7
      %v3390 = vshll.u32 %v3270, 16
      %v3392 = vor.u32 %v3389, %v3390
      %v3394 = vshrl.u32 %v3271, 16
      %v3396 = vrot.slane %v3394, 7
      %v3397 = vshll.u32 %v3271, 16
      %v3399 = vor.u32 %v3396, %v3397
      %v3401 = vshrl.u32 %v3272, 16
      %v3403 = vrot.slane %v3401, 7
      %v3404 = vshll.u32 %v3272, 16
      %v3406 = vor.u32 %v3403, %v3404
      %v3408 = vshrl.u32 %v3273, 16
      %v3410 = vrot.slane %v3408, 7
      %v3411 = vshll.u32 %v3273, 16
      %v3413 = vor.u32 %v3410, %v3411
      %v3415 = vshrl.u32 %v3274, 16
      %v3417 = vrot.slane %v3415, 7
      %v3418 = vshll.u32 %v3274, 16
      %v3420 = vor.u32 %v3417, %v3418
      %v3422 = vshrl.u32 %v3275, 16
      %v3424 = vrot.slane %v3422, 7
      %v3425 = vshll.u32 %v3275, 16
      %v3427 = vor.u32 %v3424, %v3425
      %v3429 = vshrl.u32 %v3276, 16
      %v3431 = vrot.slane %v3429, 7
      %v3432 = vshll.u32 %v3276, 16
      %v3434 = vor.u32 %v3431, %v3432
      %v3436 = vshrl.u32 %v3277, 16
      %v3438 = vrot.slane %v3436, 7
      %v3439 = vshll.u32 %v3277, 16
      %v3441 = vor.u32 %v3438, %v3439
      %v3443 = vshrl.u32 %v3278, 16
      %v3445 = vrot.slane %v3443, 7
      %v3446 = vshll.u32 %v3278, 16
      %v3448 = vor.u32 %v3445, %v3446
      %v3450 = vshrl.u32 %v3279, 16
      %v3452 = vrot.slane %v3450, 7
      %v3453 = vshll.u32 %v3279, 16
      %v3455 = vor.u32 %v3452, %v3453
      %v3457 = vshrl.u32 %v3280, 16
      %v3459 = vrot.slane %v3457, 7
      %v3460 = vshll.u32 %v3280, 16
      %v3462 = vor.u32 %v3459, %v3460
      %v3464 = vshrl.u32 %v3281, 16
      %v3466 = vrot.slane %v3464, 7
      %v3467 = vshll.u32 %v3281, 16
      %v3469 = vor.u32 %v3466, %v3467
      %v3471 = vshrl.u32 %v3282, 16
      %v3473 = vrot.slane %v3471, 7
      %v3474 = vshll.u32 %v3282, 16
      %v3476 = vor.u32 %v3473, %v3474
      %v3478 = vshrl.u32 %v3283, 16
      %v3480 = vrot.slane %v3478, 7
      %v3481 = vshll.u32 %v3283, 16
      %v3483 = vor.u32 %v3480, %v3481
      %v3485 = vshrl.u32 %v3284, 16
      %v3487 = vrot.slane %v3485, 7
      %v3488 = vshll.u32 %v3284, 16
      %v3490 = vor.u32 %v3487, %v3488
      %v3492 = vshrl.u32 %v3285, 16
      %v3494 = vrot.slane %v3492, 7
      %v3495 = vshll.u32 %v3285, 16
      %v3497 = vor.u32 %v3494, %v3495
      %v3499 = vshrl.u32 %v3286, 16
      %v3501 = vrot.slane %v3499, 7
      %v3502 = vshll.u32 %v3286, 16
      %v3504 = vor.u32 %v3501, %v3502
      %v3506 = vshrl.u32 %v3287, 16
      %v3508 = vrot.slane %v3506, 7
      %v3509 = vshll.u32 %v3287, 16
      %v3511 = vor.u32 %v3508, %v3509
      %v3544 = vsel %vm752, 0, %v3294
      %v3545 = vsel %vm752, 0, %v3301
      %v3546 = vsel %vm752, 0, %v3308
      %v3547 = vsel %vm752, 0, %v3315
      %v3548 = vsel %vm752, 0, %v3322
      %v3549 = vsel %vm752, 0, %v3329
      %v3550 = vsel %vm752, 0, %v3336
      %v3551 = vsel %vm752, 0, %v3343
      %v3552 = vsel %vm752, 0, %v3350
      %v3553 = vsel %vm752, 0, %v3357
      %v3554 = vsel %vm752, 0, %v3364
      %v3555 = vsel %vm752, 0, %v3371
      %v3556 = vsel %vm752, 0, %v3378
      %v3557 = vsel %vm752, 0, %v3385
      %v3558 = vsel %vm752, 0, %v3392
      %v3559 = vsel %vm752, 0, %v3399
      %v3560 = vsel %vm752, 0, %v3406
      %v3561 = vsel %vm752, 0, %v3413
      %v3562 = vsel %vm752, 0, %v3420
      %v3563 = vsel %vm752, 0, %v3427
      %v3564 = vsel %vm752, 0, %v3434
      %v3565 = vsel %vm752, 0, %v3441
      %v3566 = vsel %vm752, 0, %v3448
      %v3567 = vsel %vm752, 0, %v3455
      %v3568 = vsel %vm752, 0, %v3462
      %v3569 = vsel %vm752, 0, %v3469
      %v3570 = vsel %vm752, 0, %v3476
      %v3571 = vsel %vm752, 0, %v3483
      %v3572 = vsel %vm752, 0, %v3490
      %v3573 = vsel %vm752, 0, %v3497
      %v3574 = vsel %vm752, 0, %v3504
      %v3575 = vsel %vm752, 0, %v3511
      %v3576 = vsel %vm788, %v3544, 0
      %v3577 = vsel %vm788, %v3545, 0
      %v3578 = vsel %vm788, %v3546, 0
      %v3579 = vsel %vm788, %v3547, 0
      %v3580 = vsel %vm788, %v3548, 0
      %v3581 = vsel %vm788, %v3549, 0
      %v3582 = vsel %vm788, %v3550, 0
      %v3583 = vsel %vm788, %v3551, 0
      %v3584 = vsel %vm788, %v3552, 0
      %v3585 = vsel %vm788, %v3553, 0
      %v3586 = vsel %vm788, %v3554, 0
      %v3587 = vsel %vm788, %v3555, 0
      %v3588 = vsel %vm788, %v3556, 0
      %v3589 = vsel %vm788, %v3557, 0
      %v3590 = vsel %vm788, %v3558, 0
      %v3591 = vsel %vm788, %v3559, 0
      %v3592 = vsel %vm788, %v3560, 0
      %v3593 = vsel %vm788, %v3561, 0
      %v3594 = vsel %vm788, %v3562, 0
      %v3595 = vsel %vm788, %v3563, 0
      %v3596 = vsel %vm788, %v3564, 0
      %v3597 = vsel %vm788, %v3565, 0
      %v3598 = vsel %vm788, %v3566, 0
      %v3599 = vsel %vm788, %v3567, 0
      %v3600 = vsel %vm788, %v3568, 0
      %v3601 = vsel %vm788, %v3569, 0
      %v3602 = vsel %vm788, %v3570, 0
      %v3603 = vsel %vm788, %v3571, 0
      %v3604 = vsel %vm788, %v3572, 0
      %v3605 = vsel %vm788, %v3573, 0
      %v3606 = vsel %vm788, %v3574, 0
      %v3607 = vsel %vm788, %v3575, 0
      %v3609 = vshrl.u32 %v3576, 16
      %v3611 = vshll.u32 %v3576, 16
      %v3613 = vrot.slane %v3611, 1
      %v3614 = vor.u32 %v3609, %v3613
      %v3616 = vshrl.u32 %v3577, 16
      %v3618 = vshll.u32 %v3577, 16
      %v3620 = vrot.slane %v3618, 1
      %v3621 = vor.u32 %v3616, %v3620
      %v3623 = vshrl.u32 %v3578, 16
      %v3625 = vshll.u32 %v3578, 16
      %v3627 = vrot.slane %v3625, 1
      %v3628 = vor.u32 %v3623, %v3627
      %v3630 = vshrl.u32 %v3579, 16
      %v3632 = vshll.u32 %v3579, 16
      %v3634 = vrot.slane %v3632, 1
      %v3635 = vor.u32 %v3630, %v3634
      %v3637 = vshrl.u32 %v3580, 16
      %v3639 = vshll.u32 %v3580, 16
      %v3641 = vrot.slane %v3639, 1
      %v3642 = vor.u32 %v3637, %v3641
      %v3644 = vshrl.u32 %v3581, 16
      %v3646 = vshll.u32 %v3581, 16
      %v3648 = vrot.slane %v3646, 1
      %v3649 = vor.u32 %v3644, %v3648
      %v3651 = vshrl.u32 %v3582, 16
      %v3653 = vshll.u32 %v3582, 16
      %v3655 = vrot.slane %v3653, 1
      %v3656 = vor.u32 %v3651, %v3655
      %v3658 = vshrl.u32 %v3584, 16
      %v3660 = vshll.u32 %v3584, 16
      %v3662 = vrot.slane %v3660, 1
      %v3663 = vor.u32 %v3658, %v3662
      %v3665 = vshrl.u32 %v3585, 16
      %v3667 = vshll.u32 %v3585, 16
      %v3669 = vrot.slane %v3667, 1
      %v3670 = vor.u32 %v3665, %v3669
      %v3672 = vshrl.u32 %v3586, 16
      %v3674 = vshll.u32 %v3586, 16
      %v3676 = vrot.slane %v3674, 1
      %v3677 = vor.u32 %v3672, %v3676
      %v3679 = vshrl.u32 %v3587, 16
      %v3681 = vshll.u32 %v3587, 16
      %v3683 = vrot.slane %v3681, 1
      %v3684 = vor.u32 %v3679, %v3683
      %v3686 = vshrl.u32 %v3588, 16
      %v3688 = vshll.u32 %v3588, 16
      %v3690 = vrot.slane %v3688, 1
      %v3691 = vor.u32 %v3686, %v3690
      %v3693 = vshrl.u32 %v3589, 16
      %v3695 = vshll.u32 %v3589, 16
      %v3697 = vrot.slane %v3695, 1
      %v3698 = vor.u32 %v3693, %v3697
      %v3700 = vshrl.u32 %v3590, 16
      %v3702 = vshll.u32 %v3590, 16
      %v3704 = vrot.slane %v3702, 1
      %v3705 = vor.u32 %v3700, %v3704
      %v3707 = vshrl.u32 %v3592, 16
      %v3709 = vshll.u32 %v3592, 16
      %v3711 = vrot.slane %v3709, 1
      %v3712 = vor.u32 %v3707, %v3711
      %v3714 = vshrl.u32 %v3593, 16
      %v3716 = vshll.u32 %v3593, 16
      %v3718 = vrot.slane %v3716, 1
      %v3719 = vor.u32 %v3714, %v3718
      %v3721 = vshrl.u32 %v3594, 16
      %v3723 = vshll.u32 %v3594, 16
      %v3725 = vrot.slane %v3723, 1
      %v3726 = vor.u32 %v3721, %v3725
      %v3728 = vshrl.u32 %v3595, 16
      %v3730 = vshll.u32 %v3595, 16
      %v3732 = vrot.slane %v3730, 1
      %v3733 = vor.u32 %v3728, %v3732
      %v3735 = vshrl.u32 %v3596, 16
      %v3737 = vshll.u32 %v3596, 16
      %v3739 = vrot.slane %v3737, 1
      %v3740 = vor.u32 %v3735, %v3739
      %v3742 = vshrl.u32 %v3597, 16
      %v3744 = vshll.u32 %v3597, 16
      %v3746 = vrot.slane %v3744, 1
      %v3747 = vor.u32 %v3742, %v3746
      %v3749 = vshrl.u32 %v3598, 16
      %v3751 = vshll.u32 %v3598, 16
      %v3753 = vrot.slane %v3751, 1
      %v3754 = vor.u32 %v3749, %v3753
      %v3756 = vshrl.u32 %v3600, 16
      %v3758 = vshll.u32 %v3600, 16
      %v3760 = vrot.slane %v3758, 1
      %v3761 = vor.u32 %v3756, %v3760
      %v3763 = vshrl.u32 %v3601, 16
      %v3765 = vshll.u32 %v3601, 16
      %v3767 = vrot.slane %v3765, 1
      %v3768 = vor.u32 %v3763, %v3767
      %v3770 = vshrl.u32 %v3602, 16
      %v3772 = vshll.u32 %v3602, 16
      %v3774 = vrot.slane %v3772, 1
      %v3775 = vor.u32 %v3770, %v3774
      %v3777 = vshrl.u32 %v3603, 16
      %v3779 = vshll.u32 %v3603, 16
      %v3781 = vrot.slane %v3779, 1
      %v3782 = vor.u32 %v3777, %v3781
      %v3784 = vshrl.u32 %v3604, 16
      %v3786 = vshll.u32 %v3604, 16
      %v3788 = vrot.slane %v3786, 1
      %v3789 = vor.u32 %v3784, %v3788
      %v3791 = vshrl.u32 %v3605, 16
      %v3793 = vshll.u32 %v3605, 16
      %v3795 = vrot.slane %v3793, 1
      %v3796 = vor.u32 %v3791, %v3795
      %v3798 = vshrl.u32 %v3606, 16
      %v3800 = vshll.u32 %v3606, 16
      %v3802 = vrot.slane %v3800, 1
      %v3803 = vor.u32 %v3798, %v3802
      %v3832 = vrot.slane %v3576, 1
      %v3833 = vrot.slane %v3577, 1
      %v3834 = vrot.slane %v3578, 1
      %v3835 = vrot.slane %v3579, 1
      %v3836 = vrot.slane %v3580, 1
      %v3837 = vrot.slane %v3581, 1
      %v3838 = vrot.slane %v3582, 1
      %v3839 = vrot.slane %v3584, 1
      %v3840 = vrot.slane %v3585, 1
      %v3841 = vrot.slane %v3586, 1
      %v3842 = vrot.slane %v3587, 1
      %v3843 = vrot.slane %v3588, 1
      %v3844 = vrot.slane %v3589, 1
      %v3845 = vrot.slane %v3590, 1
      %v3846 = vrot.slane %v3592, 1
      %v3847 = vrot.slane %v3593, 1
      %v3848 = vrot.slane %v3594, 1
      %v3849 = vrot.slane %v3595, 1
      %v3850 = vrot.slane %v3596, 1
      %v3851 = vrot.slane %v3597, 1
      %v3852 = vrot.slane %v3598, 1
      %v3853 = vrot.slane %v3600, 1
      %v3854 = vrot.slane %v3601, 1
      %v3855 = vrot.slane %v3602, 1
      %v3856 = vrot.slane %v3603, 1
      %v3857 = vrot.slane %v3604, 1
      %v3858 = vrot.slane %v3605, 1
      %v3859 = vrot.slane %v3606, 1
      %v3861 = vshrl.u32 %v3583, 16
      %v3863 = vshll.u32 %v3583, 16
      %v3865 = vrot.slane %v3863, 1
      %v3866 = vor.u32 %v3861, %v3865
      %v3868 = vshrl.u32 %v3591, 16
      %v3870 = vshll.u32 %v3591, 16
      %v3872 = vrot.slane %v3870, 1
      %v3873 = vor.u32 %v3868, %v3872
      %v3875 = vshrl.u32 %v3599, 16
      %v3877 = vshll.u32 %v3599, 16
      %v3879 = vrot.slane %v3877, 1
      %v3880 = vor.u32 %v3875, %v3879
      %v3882 = vshrl.u32 %v3607, 16
      %v3884 = vshll.u32 %v3607, 16
      %v3886 = vrot.slane %v3884, 1
      %v3887 = vor.u32 %v3882, %v3886
      %v3892 = vrot.slane %v3583, 1
      %v3893 = vrot.slane %v3591, 1
      %v3894 = vrot.slane %v3599, 1
      %v3895 = vrot.slane %v3607, 1
      %v3896 = vunpack.c.l.b16 %v789
      %v3897 = vunpack.c.l.b16 %v828
      %v3898 = vunpack.c.l.b16 %v3576
      %v3899 = vunpack.c.l.b16 %v3614
      %v3900 = vunpack.c.l.b16 %v3832
      %v3901 = vunpack.c.l.b16 %v3577
      %v3902 = vunpack.c.l.b16 %v3621
      %v3903 = vunpack.c.l.b16 %v3833
      %v3904 = vunpack.c.l.b16 %v3578
      %v3905 = vunpack.c.l.b16 %v3628
      %v3906 = vunpack.c.l.b16 %v3834
      %v3907 = vunpack.c.l.b16 %v3579
      %v3908 = vunpack.c.l.b16 %v3635
      %v3909 = vunpack.c.l.b16 %v3835
      %v3910 = vunpack.c.l.b16 %v3580
      %v3911 = vunpack.c.l.b16 %v3642
      %v3912 = vunpack.c.l.b16 %v3836
      %v3913 = vunpack.c.l.b16 %v3581
      %v3914 = vunpack.c.l.b16 %v3649
      %v3915 = vunpack.c.l.b16 %v3837
      %v3916 = vunpack.c.l.b16 %v3582
      %v3917 = vunpack.c.l.b16 %v3656
      %v3918 = vunpack.c.l.b16 %v3838
      %v3919 = vunpack.c.l.b16 %v3583
      %v3920 = vunpack.c.l.b16 %v3866
      %v3921 = vunpack.c.l.b16 %v3892
      %v3922 = vunpack.c.l.b16 %v3584
      %v3923 = vunpack.c.l.b16 %v3663
      %v3924 = vunpack.c.l.b16 %v3839
      %v3925 = vunpack.c.l.b16 %v3585
      %v3926 = vunpack.c.l.b16 %v3670
      %v3927 = vunpack.c.l.b16 %v3840
      %v3928 = vunpack.c.l.b16 %v3586
      %v3929 = vunpack.c.l.b16 %v3677
      %v3930 = vunpack.c.l.b16 %v3841
      %v3931 = vunpack.c.l.b16 %v3587
      %v3932 = vunpack.c.l.b16 %v3684
      %v3933 = vunpack.c.l.b16 %v3842
      %v3934 = vunpack.c.l.b16 %v3588
      %v3935 = vunpack.c.l.b16 %v3691
      %v3936 = vunpack.c.l.b16 %v3843
      %v3937 = vunpack.c.l.b16 %v3589
      %v3938 = vunpack.c.l.b16 %v3698
      %v3939 = vunpack.c.l.b16 %v3844
      %v3940 = vunpack.c.l.b16 %v3590
      %v3941 = vunpack.c.l.b16 %v3705
      %v3942 = vunpack.c.l.b16 %v3845
      %v3943 = vunpack.c.l.b16 %v3591
      %v3944 = vunpack.c.l.b16 %v3873
      %v3945 = vunpack.c.l.b16 %v3893
      %v3946 = vunpack.c.l.b16 %v3592
      %v3947 = vunpack.c.l.b16 %v3712
      %v3948 = vunpack.c.l.b16 %v3846
      %v3949 = vunpack.c.l.b16 %v3593
      %v3950 = vunpack.c.l.b16 %v3719
      %v3951 = vunpack.c.l.b16 %v3847
      %v3952 = vunpack.c.l.b16 %v3594
      %v3953 = vunpack.c.l.b16 %v3726
      %v3954 = vunpack.c.l.b16 %v3848
      %v3955 = vunpack.c.l.b16 %v3595
      %v3956 = vunpack.c.l.b16 %v3733
      %v3957 = vunpack.c.l.b16 %v3849
      %v3958 = vunpack.c.l.b16 %v3596
      %v3959 = vunpack.c.l.b16 %v3740
      %v3960 = vunpack.c.l.b16 %v3850
      %v3961 = vunpack.c.l.b16 %v3597
      %v3962 = vunpack.c.l.b16 %v3747
      %v3963 = vunpack.c.l.b16 %v3851
      %v3964 = vunpack.c.l.b16 %v3598
      %v3965 = vunpack.c.l.b16 %v3754
      %v3966 = vunpack.c.l.b16 %v3852
      %v3967 = vunpack.c.l.b16 %v3599
      %v3968 = vunpack.c.l.b16 %v3880
      %v3969 = vunpack.c.l.b16 %v3894
      %v3970 = vunpack.c.l.b16 %v3600
      %v3971 = vunpack.c.l.b16 %v3761
      %v3972 = vunpack.c.l.b16 %v3853
      %v3973 = vunpack.c.l.b16 %v3601
      %v3974 = vunpack.c.l.b16 %v3768
      %v3975 = vunpack.c.l.b16 %v3854
      %v3976 = vunpack.c.l.b16 %v3602
      %v3977 = vunpack.c.l.b16 %v3775
      %v3978 = vunpack.c.l.b16 %v3855
      %v3979 = vunpack.c.l.b16 %v3603
      %v3980 = vunpack.c.l.b16 %v3782
      %v3981 = vunpack.c.l.b16 %v3856
      %v3982 = vunpack.c.l.b16 %v3604
      %v3983 = vunpack.c.l.b16 %v3789
      %v3984 = vunpack.c.l.b16 %v3857
      %v3985 = vunpack.c.l.b16 %v3605
      %v3986 = vunpack.c.l.b16 %v3796
      %v3987 = vunpack.c.l.b16 %v3858
      %v3988 = vunpack.c.l.b16 %v3606
      %v3989 = vunpack.c.l.b16 %v3803
      %v3990 = vunpack.c.l.b16 %v3859
      %v3991 = vunpack.c.l.b16 %v3607
      %v3992 = vunpack.c.l.b16 %v3887
      %v3993 = vunpack.c.l.b16 %v3895
      %v3994 = vld [vmem:[%s3] sm:$0xf]
      %v3995 = vld [vmem:[%s3 + $0x4] sm:$0xf]
      %v3996 = vld [vmem:[%s3 + $0x8] sm:$0xf]
      %v3997 = vld [vmem:[%s3 + $0xc] sm:$0xf]
      %v3998 = vld [vmem:[%s3 + $0x10] sm:$0xf]
      %v3999 = vld [vmem:[%s3 + $0x14] sm:$0xf]
      %v4000 = vld [vmem:[%s3 + $0x18] sm:$0xf]
      %v4001 = vld [vmem:[%s3 + $0x1c] sm:$0xf]
      %v4002 = vld [vmem:[%s3 + $0x20] sm:$0xf]
      %v4003 = vld [vmem:[%s3 + $0x24] sm:$0xf]
      %v4004 = vld [vmem:[%s3 + $0x28] sm:$0xf]
      %v4005 = vld [vmem:[%s3 + $0x2c] sm:$0xf]
      %v4006 = vld [vmem:[%s3 + $0x30] sm:$0xf]
      %v4007 = vld [vmem:[%s3 + $0x34] sm:$0xf]
      %v4008 = vld [vmem:[%s3 + $0x38] sm:$0xf]
      %v4009 = vld [vmem:[%s3 + $0x3c] sm:$0xf]
      %v4010 = vld [vmem:[%s3 + $0x40] sm:$0xf]
      %v4011 = vld [vmem:[%s3 + $0x44] sm:$0xf]
      %v4012 = vld [vmem:[%s3 + $0x48] sm:$0xf]
      %v4013 = vld [vmem:[%s3 + $0x4c] sm:$0xf]
      %v4014 = vld [vmem:[%s3 + $0x50] sm:$0xf]
      %v4015 = vld [vmem:[%s3 + $0x54] sm:$0xf]
      %v4016 = vld [vmem:[%s3 + $0x58] sm:$0xf]
      %v4017 = vld [vmem:[%s3 + $0x5c] sm:$0xf]
      %v4018 = vld [vmem:[%s3 + $0x60] sm:$0xf]
      %v4019 = vld [vmem:[%s3 + $0x64] sm:$0xf]
      %v4020 = vld [vmem:[%s3 + $0x68] sm:$0xf]
      %v4021 = vld [vmem:[%s3 + $0x6c] sm:$0xf]
      %v4022 = vld [vmem:[%s3 + $0x70] sm:$0xf]
      %v4023 = vld [vmem:[%s3 + $0x74] sm:$0xf]
      %v4024 = vld [vmem:[%s3 + $0x78] sm:$0xf]
      %v4025 = vld [vmem:[%s3 + $0x7c] sm:$0xf]
      %v4026 = vld [vmem:[%s3 + $0x80] sm:$0xf]
      %v4027 = vld [vmem:[%s3 + $0x84] sm:$0xf]
      %v4028 = vld [vmem:[%s3 + $0x88] sm:$0xf]
      %v4029 = vld [vmem:[%s3 + $0x8c] sm:$0xf]
      %v4030 = vld [vmem:[%s3 + $0x90] sm:$0xf]
      %v4031 = vld [vmem:[%s3 + $0x94] sm:$0xf]
      %v4032 = vld [vmem:[%s3 + $0x98] sm:$0xf]
      %v4033 = vld [vmem:[%s3 + $0x9c] sm:$0xf]
      %v4034 = vld [vmem:[%s3 + $0xa0] sm:$0xf]
      %v4035 = vld [vmem:[%s3 + $0xa4] sm:$0xf]
      %v4036 = vld [vmem:[%s3 + $0xa8] sm:$0xf]
      %v4037 = vld [vmem:[%s3 + $0xac] sm:$0xf]
      %v4038 = vld [vmem:[%s3 + $0xb0] sm:$0xf]
      %v4039 = vld [vmem:[%s3 + $0xb4] sm:$0xf]
      %v4040 = vld [vmem:[%s3 + $0xb8] sm:$0xf]
      %v4041 = vld [vmem:[%s3 + $0xbc] sm:$0xf]
      %v4042 = vld [vmem:[%s3 + $0xc0] sm:$0xf]
      %v4043 = vld [vmem:[%s3 + $0xc4] sm:$0xf]
      %v4044 = vld [vmem:[%s3 + $0xc8] sm:$0xf]
      %v4045 = vld [vmem:[%s3 + $0xcc] sm:$0xf]
      %v4046 = vld [vmem:[%s3 + $0xd0] sm:$0xf]
      %v4047 = vld [vmem:[%s3 + $0xd4] sm:$0xf]
      %v4048 = vld [vmem:[%s3 + $0xd8] sm:$0xf]
      %v4049 = vld [vmem:[%s3 + $0xdc] sm:$0xf]
      %v4050 = vld [vmem:[%s3 + $0xe0] sm:$0xf]
      %v4051 = vld [vmem:[%s3 + $0xe4] sm:$0xf]
      %v4052 = vld [vmem:[%s3 + $0xe8] sm:$0xf]
      %v4053 = vld [vmem:[%s3 + $0xec] sm:$0xf]
      %v4054 = vld [vmem:[%s3 + $0xf0] sm:$0xf]
      %v4055 = vld [vmem:[%s3 + $0xf4] sm:$0xf]
      %v4056 = vld [vmem:[%s3 + $0xf8] sm:$0xf]
      %v4057 = vld [vmem:[%s3 + $0xfc] sm:$0xf]
      %v4058 = vld [vmem:[%s3 + $0x100] sm:$0xf]
      %v4059 = vld [vmem:[%s3 + $0x104] sm:$0xf]
      %v4060 = vld [vmem:[%s3 + $0x108] sm:$0xf]
      %v4061 = vld [vmem:[%s3 + $0x10c] sm:$0xf]
      %v4062 = vld [vmem:[%s3 + $0x110] sm:$0xf]
      %v4063 = vld [vmem:[%s3 + $0x114] sm:$0xf]
      %v4064 = vld [vmem:[%s3 + $0x118] sm:$0xf]
      %v4065 = vld [vmem:[%s3 + $0x11c] sm:$0xf]
      %v4066 = vld [vmem:[%s3 + $0x120] sm:$0xf]
      %v4067 = vld [vmem:[%s3 + $0x124] sm:$0xf]
      %v4068 = vld [vmem:[%s3 + $0x128] sm:$0xf]
      %v4069 = vld [vmem:[%s3 + $0x12c] sm:$0xf]
      %v4070 = vld [vmem:[%s3 + $0x130] sm:$0xf]
      %v4071 = vld [vmem:[%s3 + $0x134] sm:$0xf]
      %v4072 = vld [vmem:[%s3 + $0x138] sm:$0xf]
      %v4073 = vld [vmem:[%s3 + $0x13c] sm:$0xf]
      %v4074 = vld [vmem:[%s3 + $0x140] sm:$0xf]
      %v4075 = vld [vmem:[%s3 + $0x144] sm:$0xf]
      %v4076 = vld [vmem:[%s3 + $0x148] sm:$0xf]
      %v4077 = vld [vmem:[%s3 + $0x14c] sm:$0xf]
      %v4078 = vld [vmem:[%s3 + $0x150] sm:$0xf]
      %v4079 = vld [vmem:[%s3 + $0x154] sm:$0xf]
      %v4080 = vld [vmem:[%s3 + $0x158] sm:$0xf]
      %v4081 = vld [vmem:[%s3 + $0x15c] sm:$0xf]
      %v4082 = vld [vmem:[%s3 + $0x160] sm:$0xf]
      %v4083 = vld [vmem:[%s3 + $0x164] sm:$0xf]
      %v4084 = vld [vmem:[%s3 + $0x168] sm:$0xf]
      %v4085 = vld [vmem:[%s3 + $0x16c] sm:$0xf]
      %v4086 = vld [vmem:[%s3 + $0x170] sm:$0xf]
      %v4087 = vld [vmem:[%s3 + $0x174] sm:$0xf]
      %v4088 = vld [vmem:[%s3 + $0x178] sm:$0xf]
      %v4089 = vld [vmem:[%s3 + $0x17c] sm:$0xf]
      %v4090 = vld [vmem:[%s3 + $0x180] sm:$0xf]
      %v4091 = vld [vmem:[%s3 + $0x184] sm:$0xf]
      %v4092 = vld [vmem:[%s3 + $0x188] sm:$0xf]
      %v4093 = vld [vmem:[%s3 + $0x18c] sm:$0xf]
      %v4094 = vld [vmem:[%s3 + $0x190] sm:$0xf]
      %v4095 = vld [vmem:[%s3 + $0x194] sm:$0xf]
      %v4096 = vld [vmem:[%s3 + $0x198] sm:$0xf]
      %v4097 = vld [vmem:[%s3 + $0x19c] sm:$0xf]
      %v4098 = vld [vmem:[%s3 + $0x1a0] sm:$0xf]
      %v4099 = vld [vmem:[%s3 + $0x1a4] sm:$0xf]
      %v4100 = vld [vmem:[%s3 + $0x1a8] sm:$0xf]
      %v4101 = vld [vmem:[%s3 + $0x1ac] sm:$0xf]
      %v4102 = vld [vmem:[%s3 + $0x1b0] sm:$0xf]
      %v4103 = vld [vmem:[%s3 + $0x1b4] sm:$0xf]
      %v4104 = vld [vmem:[%s3 + $0x1b8] sm:$0xf]
      %v4105 = vld [vmem:[%s3 + $0x1bc] sm:$0xf]
      %v4106 = vld [vmem:[%s3 + $0x1c0] sm:$0xf]
      %v4107 = vld [vmem:[%s3 + $0x1c4] sm:$0xf]
      %v4108 = vld [vmem:[%s3 + $0x1c8] sm:$0xf]
      %v4109 = vld [vmem:[%s3 + $0x1cc] sm:$0xf]
      %v4110 = vld [vmem:[%s3 + $0x1d0] sm:$0xf]
      %v4111 = vld [vmem:[%s3 + $0x1d4] sm:$0xf]
      %v4112 = vld [vmem:[%s3 + $0x1d8] sm:$0xf]
      %v4113 = vld [vmem:[%s3 + $0x1dc] sm:$0xf]
      %v4114 = vld [vmem:[%s3 + $0x1e0] sm:$0xf]
      %v4115 = vld [vmem:[%s3 + $0x1e4] sm:$0xf]
      %v4116 = vld [vmem:[%s3 + $0x1e8] sm:$0xf]
      %v4117 = vld [vmem:[%s3 + $0x1ec] sm:$0xf]
      %v4118 = vld [vmem:[%s3 + $0x1f0] sm:$0xf]
      %v4119 = vld [vmem:[%s3 + $0x1f4] sm:$0xf]
      %v4120 = vld [vmem:[%s3 + $0x1f8] sm:$0xf]
      %v4121 = vld [vmem:[%s3 + $0x1fc] sm:$0xf]
      %v4122 = vld [vmem:[%s3 + $0x200] sm:$0xf]
      %v4123 = vld [vmem:[%s3 + $0x204] sm:$0xf]
      %v4124 = vld [vmem:[%s3 + $0x208] sm:$0xf]
      %v4125 = vld [vmem:[%s3 + $0x20c] sm:$0xf]
      %v4126 = vld [vmem:[%s3 + $0x210] sm:$0xf]
      %v4127 = vld [vmem:[%s3 + $0x214] sm:$0xf]
      %v4128 = vld [vmem:[%s3 + $0x218] sm:$0xf]
      %v4129 = vld [vmem:[%s3 + $0x21c] sm:$0xf]
      %v4130 = vld [vmem:[%s3 + $0x220] sm:$0xf]
      %v4131 = vld [vmem:[%s3 + $0x224] sm:$0xf]
      %v4132 = vld [vmem:[%s3 + $0x228] sm:$0xf]
      %v4133 = vld [vmem:[%s3 + $0x22c] sm:$0xf]
      %v4134 = vld [vmem:[%s3 + $0x230] sm:$0xf]
      %v4135 = vld [vmem:[%s3 + $0x234] sm:$0xf]
      %v4136 = vld [vmem:[%s3 + $0x238] sm:$0xf]
      %v4137 = vld [vmem:[%s3 + $0x23c] sm:$0xf]
      %s4138 = scalar_lea.vmem %s4, 1
      %v4139 = vld [vmem:[%s4138] sm:$0x1]
      %v4141 = vlaneseq
      %v4142 = vshrl.u32 %v4141, 7
      %v4143 = vsub.s32 0, %v4142
      %v4144 = vrot.slane %v4139, %v4143
      %v4146 = vpack.c.b16 %v3898, %v3896
      %v4147 = vpack.c.b16 %v3899, %v3897
      %v4148 = vpack.c.b16 %v3900, %v1698
      %v4149 = vpack.c.b16 %v3901, %v3898
      %v4150 = vpack.c.b16 %v3902, %v3899
      %v4151 = vpack.c.b16 %v3903, %v3900
      %v4152 = vpack.c.b16 %v3904, %v3901
      %v4153 = vpack.c.b16 %v3905, %v3902
      %v4154 = vpack.c.b16 %v3906, %v3903
      %v4155 = vpack.c.b16 %v3907, %v3904
      %v4156 = vpack.c.b16 %v3908, %v3905
      %v4157 = vpack.c.b16 %v3909, %v3906
      %v4158 = vpack.c.b16 %v3910, %v3907
      %v4159 = vpack.c.b16 %v3911, %v3908
      %v4160 = vpack.c.b16 %v3912, %v3909
      %v4161 = vpack.c.b16 %v3913, %v3910
      %v4162 = vpack.c.b16 %v3914, %v3911
      %v4163 = vpack.c.b16 %v3915, %v3912
      %v4164 = vpack.c.b16 %v3916, %v3913
      %v4165 = vpack.c.b16 %v3917, %v3914
      %v4166 = vpack.c.b16 %v3918, %v3915
      %v4167 = vpack.c.b16 %v3919, %v3916
      %v4168 = vpack.c.b16 %v3920, %v3917
      %v4169 = vpack.c.b16 %v3921, %v3918
      %v4170 = vpack.c.b16 %v3896, %v3919
      %v4171 = vpack.c.b16 %v3897, %v3920
      %v4172 = vpack.c.b16 %v1698, %v3921
      %v4173 = vpack.c.b16 %v3922, %v3896
      %v4174 = vpack.c.b16 %v3923, %v3897
      %v4175 = vpack.c.b16 %v3924, %v1698
      %v4176 = vpack.c.b16 %v3925, %v3922
      %v4177 = vpack.c.b16 %v3926, %v3923
      %v4178 = vpack.c.b16 %v3927, %v3924
      %v4179 = vpack.c.b16 %v3928, %v3925
      %v4180 = vpack.c.b16 %v3929, %v3926
      %v4181 = vpack.c.b16 %v3930, %v3927
      %v4182 = vpack.c.b16 %v3931, %v3928
      %v4183 = vpack.c.b16 %v3932, %v3929
      %v4184 = vpack.c.b16 %v3933, %v3930
      %v4185 = vpack.c.b16 %v3934, %v3931
      %v4186 = vpack.c.b16 %v3935, %v3932
      %v4187 = vpack.c.b16 %v3936, %v3933
      %v4188 = vpack.c.b16 %v3937, %v3934
      %v4189 = vpack.c.b16 %v3938, %v3935
      %v4190 = vpack.c.b16 %v3939, %v3936
      %v4191 = vpack.c.b16 %v3940, %v3937
      %v4192 = vpack.c.b16 %v3941, %v3938
      %v4193 = vpack.c.b16 %v3942, %v3939
      %v4194 = vpack.c.b16 %v3943, %v3940
      %v4195 = vpack.c.b16 %v3944, %v3941
      %v4196 = vpack.c.b16 %v3945, %v3942
      %v4197 = vpack.c.b16 %v3896, %v3943
      %v4198 = vpack.c.b16 %v3897, %v3944
      %v4199 = vpack.c.b16 %v1698, %v3945
      %v4200 = vpack.c.b16 %v3946, %v3896
      %v4201 = vpack.c.b16 %v3947, %v3897
      %v4202 = vpack.c.b16 %v3948, %v1698
      %v4203 = vpack.c.b16 %v3949, %v3946
      %v4204 = vpack.c.b16 %v3950, %v3947
      %v4205 = vpack.c.b16 %v3951, %v3948
      %v4206 = vpack.c.b16 %v3952, %v3949
      %v4207 = vpack.c.b16 %v3953, %v3950
      %v4208 = vpack.c.b16 %v3954, %v3951
      %v4209 = vpack.c.b16 %v3955, %v3952
      %v4210 = vpack.c.b16 %v3956, %v3953
      %v4211 = vpack.c.b16 %v3957, %v3954
      %v4212 = vpack.c.b16 %v3958, %v3955
      %v4213 = vpack.c.b16 %v3959, %v3956
      %v4214 = vpack.c.b16 %v3960, %v3957
      %v4215 = vpack.c.b16 %v3961, %v3958
      %v4216 = vpack.c.b16 %v3962, %v3959
      %v4217 = vpack.c.b16 %v3963, %v3960
      %v4218 = vpack.c.b16 %v3964, %v3961
      %v4219 = vpack.c.b16 %v3965, %v3962
      %v4220 = vpack.c.b16 %v3966, %v3963
      %v4221 = vpack.c.b16 %v3967, %v3964
      %v4222 = vpack.c.b16 %v3968, %v3965
      %v4223 = vpack.c.b16 %v3969, %v3966
      %v4224 = vpack.c.b16 %v3896, %v3967
      %v4225 = vpack.c.b16 %v3897, %v3968
      %v4226 = vpack.c.b16 %v1698, %v3969
      %v4227 = vpack.c.b16 %v3970, %v3896
      %v4228 = vpack.c.b16 %v3971, %v3897
      %v4229 = vpack.c.b16 %v3972, %v1698
      %v4230 = vpack.c.b16 %v3973, %v3970
      %v4231 = vpack.c.b16 %v3974, %v3971
      %v4232 = vpack.c.b16 %v3975, %v3972
      %v4233 = vpack.c.b16 %v3976, %v3973
      %v4234 = vpack.c.b16 %v3977, %v3974
      %v4235 = vpack.c.b16 %v3978, %v3975
      %v4236 = vpack.c.b16 %v3979, %v3976
      %v4237 = vpack.c.b16 %v3980, %v3977
      %v4238 = vpack.c.b16 %v3981, %v3978
      %v4239 = vpack.c.b16 %v3982, %v3979
      %v4240 = vpack.c.b16 %v3983, %v3980
      %v4241 = vpack.c.b16 %v3984, %v3981
      %v4242 = vpack.c.b16 %v3985, %v3982
      %v4243 = vpack.c.b16 %v3986, %v3983
      %v4244 = vpack.c.b16 %v3987, %v3984
      %v4245 = vpack.c.b16 %v3988, %v3985
      %v4246 = vpack.c.b16 %v3989, %v3986
      %v4247 = vpack.c.b16 %v3990, %v3987
      %v4248 = vpack.c.b16 %v3991, %v3988
      %v4249 = vpack.c.b16 %v3992, %v3989
      %v4250 = vpack.c.b16 %v3993, %v3990
      %v4251 = vpack.c.b16 %v3896, %v3991
      %v4252 = vpack.c.b16 %v3897, %v3992
      %v4253 = vpack.c.b16 %v1698, %v3993
      %v4506 = vunpack.c.l.b16 %v3994
      %v4507 = vunpack.c.l.b16 %v3995
      %v4508 = vunpack.c.l.b16 %v3996
      %v4509 = vunpack.c.l.b16 %v3997
      %v4510 = vunpack.c.l.b16 %v3998
      %v4511 = vunpack.c.l.b16 %v3999
      %v4512 = vunpack.c.l.b16 %v4000
      %v4513 = vunpack.c.l.b16 %v4001
      %v4514 = vunpack.c.l.b16 %v4002
      %v4515 = vunpack.c.l.b16 %v4003
      %v4516 = vunpack.c.l.b16 %v4004
      %v4517 = vunpack.c.l.b16 %v4005
      %v4518 = vunpack.c.l.b16 %v4006
      %v4519 = vunpack.c.l.b16 %v4007
      %v4520 = vunpack.c.l.b16 %v4008
      %v4521 = vunpack.c.l.b16 %v4009
      %v4522 = vunpack.c.l.b16 %v4010
      %v4523 = vunpack.c.l.b16 %v4011
      %v4524 = vunpack.c.l.b16 %v4012
      %v4525 = vunpack.c.l.b16 %v4013
      %v4526 = vunpack.c.l.b16 %v4014
      %v4527 = vunpack.c.l.b16 %v4015
      %v4528 = vunpack.c.l.b16 %v4016
      %v4529 = vunpack.c.l.b16 %v4017
      %v4530 = vunpack.c.l.b16 %v4018
      %v4531 = vunpack.c.l.b16 %v4019
      %v4532 = vunpack.c.l.b16 %v4020
      %v4533 = vunpack.c.l.b16 %v4021
      %v4534 = vunpack.c.l.b16 %v4022
      %v4535 = vunpack.c.l.b16 %v4023
      %v4536 = vunpack.c.l.b16 %v4024
      %v4537 = vunpack.c.l.b16 %v4025
      %v4538 = vunpack.c.l.b16 %v4026
      %v4539 = vunpack.c.l.b16 %v4027
      %v4540 = vunpack.c.l.b16 %v4028
      %v4541 = vunpack.c.l.b16 %v4029
      %v4542 = vunpack.c.l.b16 %v4030
      %v4543 = vunpack.c.l.b16 %v4031
      %v4544 = vunpack.c.l.b16 %v4032
      %v4545 = vunpack.c.l.b16 %v4033
      %v4546 = vunpack.c.l.b16 %v4034
      %v4547 = vunpack.c.l.b16 %v4035
      %v4548 = vunpack.c.l.b16 %v4036
      %v4549 = vunpack.c.l.b16 %v4037
      %v4550 = vunpack.c.l.b16 %v4038
      %v4551 = vunpack.c.l.b16 %v4039
      %v4552 = vunpack.c.l.b16 %v4040
      %v4553 = vunpack.c.l.b16 %v4041
      %v4554 = vunpack.c.l.b16 %v4042
      %v4555 = vunpack.c.l.b16 %v4043
      %v4556 = vunpack.c.l.b16 %v4044
      %v4557 = vunpack.c.l.b16 %v4045
      %v4558 = vunpack.c.l.b16 %v4046
      %v4559 = vunpack.c.l.b16 %v4047
      %v4560 = vunpack.c.l.b16 %v4048
      %v4561 = vunpack.c.l.b16 %v4049
      %v4562 = vunpack.c.l.b16 %v4050
      %v4563 = vunpack.c.l.b16 %v4051
      %v4564 = vunpack.c.l.b16 %v4052
      %v4565 = vunpack.c.l.b16 %v4053
      %v4566 = vunpack.c.l.b16 %v4054
      %v4567 = vunpack.c.l.b16 %v4055
      %v4568 = vunpack.c.l.b16 %v4056
      %v4569 = vunpack.c.l.b16 %v4057
      %v4570 = vunpack.c.l.b16 %v4058
      %v4571 = vunpack.c.l.b16 %v4059
      %v4572 = vunpack.c.l.b16 %v4060
      %v4573 = vunpack.c.l.b16 %v4061
      %v4574 = vunpack.c.l.b16 %v4062
      %v4575 = vunpack.c.l.b16 %v4063
      %v4576 = vunpack.c.l.b16 %v4064
      %v4577 = vunpack.c.l.b16 %v4065
      %v4578 = vunpack.c.l.b16 %v4066
      %v4579 = vunpack.c.l.b16 %v4067
      %v4580 = vunpack.c.l.b16 %v4068
      %v4581 = vunpack.c.l.b16 %v4069
      %v4582 = vunpack.c.l.b16 %v4070
      %v4583 = vunpack.c.l.b16 %v4071
      %v4584 = vunpack.c.l.b16 %v4072
      %v4585 = vunpack.c.l.b16 %v4073
      %v4586 = vunpack.c.l.b16 %v4074
      %v4587 = vunpack.c.l.b16 %v4075
      %v4588 = vunpack.c.l.b16 %v4076
      %v4589 = vunpack.c.l.b16 %v4077
      %v4590 = vunpack.c.l.b16 %v4078
      %v4591 = vunpack.c.l.b16 %v4079
      %v4592 = vunpack.c.l.b16 %v4080
      %v4593 = vunpack.c.l.b16 %v4081
      %v4594 = vunpack.c.l.b16 %v4082
      %v4595 = vunpack.c.l.b16 %v4083
      %v4596 = vunpack.c.l.b16 %v4084
      %v4597 = vunpack.c.l.b16 %v4085
      %v4598 = vunpack.c.l.b16 %v4086
      %v4599 = vunpack.c.l.b16 %v4087
      %v4600 = vunpack.c.l.b16 %v4088
      %v4601 = vunpack.c.l.b16 %v4089
      %v4602 = vunpack.c.l.b16 %v4090
      %v4603 = vunpack.c.l.b16 %v4091
      %v4604 = vunpack.c.l.b16 %v4092
      %v4605 = vunpack.c.l.b16 %v4093
      %v4606 = vunpack.c.l.b16 %v4094
      %v4607 = vunpack.c.l.b16 %v4095
      %v4608 = vunpack.c.l.b16 %v4096
      %v4609 = vunpack.c.l.b16 %v4097
      %v4610 = vunpack.c.l.b16 %v4098
      %v4611 = vunpack.c.l.b16 %v4099
      %v4612 = vunpack.c.l.b16 %v4100
      %v4613 = vunpack.c.l.b16 %v4101
      %v4614 = vunpack.c.l.b16 %v4102
      %v4615 = vunpack.c.l.b16 %v4103
      %v4616 = vunpack.c.l.b16 %v4104
      %v4617 = vunpack.c.l.b16 %v4105
      %v4618 = vunpack.c.l.b16 %v4106
      %v4619 = vunpack.c.l.b16 %v4107
      %v4620 = vunpack.c.l.b16 %v4108
      %v4621 = vunpack.c.l.b16 %v4109
      %v4622 = vunpack.c.l.b16 %v4110
      %v4623 = vunpack.c.l.b16 %v4111
      %v4624 = vunpack.c.l.b16 %v4112
      %v4625 = vunpack.c.l.b16 %v4113
      %v4626 = vunpack.c.l.b16 %v4114
      %v4627 = vunpack.c.l.b16 %v4115
      %v4628 = vunpack.c.l.b16 %v4116
      %v4629 = vunpack.c.l.b16 %v4117
      %v4630 = vunpack.c.l.b16 %v4118
      %v4631 = vunpack.c.l.b16 %v4119
      %v4632 = vunpack.c.l.b16 %v4120
      %v4633 = vunpack.c.l.b16 %v4121
      %v4634 = vunpack.c.l.b16 %v4122
      %v4635 = vunpack.c.l.b16 %v4123
      %v4636 = vunpack.c.l.b16 %v4124
      %v4637 = vunpack.c.l.b16 %v4125
      %v4638 = vunpack.c.l.b16 %v4126
      %v4639 = vunpack.c.l.b16 %v4127
      %v4640 = vunpack.c.l.b16 %v4128
      %v4641 = vunpack.c.l.b16 %v4129
      %v4642 = vunpack.c.l.b16 %v4130
      %v4643 = vunpack.c.l.b16 %v4131
      %v4644 = vunpack.c.l.b16 %v4132
      %v4645 = vunpack.c.l.b16 %v4133
      %v4646 = vunpack.c.l.b16 %v4134
      %v4647 = vunpack.c.l.b16 %v4135
      %v4648 = vunpack.c.l.b16 %v4136
      %v4649 = vunpack.c.l.b16 %v4137
      %v4650 = vpack.c.b16 %v4507, %v4506
      %v4651 = vpack.c.b16 %v4509, %v4508
      %v4652 = vpack.c.b16 %v4511, %v4510
      %v4653 = vpack.c.b16 %v4513, %v4512
      %v4654 = vpack.c.b16 %v4515, %v4514
      %v4655 = vpack.c.b16 %v4517, %v4516
      %v4656 = vpack.c.b16 %v4519, %v4518
      %v4657 = vpack.c.b16 %v4521, %v4520
      %v4658 = vpack.c.b16 %v4523, %v4522
      %v4659 = vpack.c.b16 %v4525, %v4524
      %v4660 = vpack.c.b16 %v4527, %v4526
      %v4661 = vpack.c.b16 %v4529, %v4528
      %v4662 = vpack.c.b16 %v4531, %v4530
      %v4663 = vpack.c.b16 %v4533, %v4532
      %v4664 = vpack.c.b16 %v4535, %v4534
      %v4665 = vpack.c.b16 %v4537, %v4536
      %v4666 = vpack.c.b16 %v4539, %v4538
      %v4667 = vpack.c.b16 %v4541, %v4540
      %v4668 = vpack.c.b16 %v4543, %v4542
      %v4669 = vpack.c.b16 %v4545, %v4544
      %v4670 = vpack.c.b16 %v4547, %v4546
      %v4671 = vpack.c.b16 %v4549, %v4548
      %v4672 = vpack.c.b16 %v4551, %v4550
      %v4673 = vpack.c.b16 %v4553, %v4552
      %v4674 = vpack.c.b16 %v4555, %v4554
      %v4675 = vpack.c.b16 %v4557, %v4556
      %v4676 = vpack.c.b16 %v4559, %v4558
      %v4677 = vpack.c.b16 %v4561, %v4560
      %v4678 = vpack.c.b16 %v4563, %v4562
      %v4679 = vpack.c.b16 %v4565, %v4564
      %v4680 = vpack.c.b16 %v4567, %v4566
      %v4681 = vpack.c.b16 %v4569, %v4568
      %v4682 = vpack.c.b16 %v4571, %v4570
      %v4683 = vpack.c.b16 %v4573, %v4572
      %v4684 = vpack.c.b16 %v4575, %v4574
      %v4685 = vpack.c.b16 %v4577, %v4576
      %v4686 = vpack.c.b16 %v4579, %v4578
      %v4687 = vpack.c.b16 %v4581, %v4580
      %v4688 = vpack.c.b16 %v4583, %v4582
      %v4689 = vpack.c.b16 %v4585, %v4584
      %v4690 = vpack.c.b16 %v4587, %v4586
      %v4691 = vpack.c.b16 %v4589, %v4588
      %v4692 = vpack.c.b16 %v4591, %v4590
      %v4693 = vpack.c.b16 %v4593, %v4592
      %v4694 = vpack.c.b16 %v4595, %v4594
      %v4695 = vpack.c.b16 %v4597, %v4596
      %v4696 = vpack.c.b16 %v4599, %v4598
      %v4697 = vpack.c.b16 %v4601, %v4600
      %v4698 = vpack.c.b16 %v4603, %v4602
      %v4699 = vpack.c.b16 %v4605, %v4604
      %v4700 = vpack.c.b16 %v4607, %v4606
      %v4701 = vpack.c.b16 %v4609, %v4608
      %v4702 = vpack.c.b16 %v4611, %v4610
      %v4703 = vpack.c.b16 %v4613, %v4612
      %v4704 = vpack.c.b16 %v4615, %v4614
      %v4705 = vpack.c.b16 %v4617, %v4616
      %v4706 = vpack.c.b16 %v4619, %v4618
      %v4707 = vpack.c.b16 %v4621, %v4620
      %v4708 = vpack.c.b16 %v4623, %v4622
      %v4709 = vpack.c.b16 %v4625, %v4624
      %v4710 = vpack.c.b16 %v4627, %v4626
      %v4711 = vpack.c.b16 %v4629, %v4628
      %v4712 = vpack.c.b16 %v4631, %v4630
      %v4713 = vpack.c.b16 %v4633, %v4632
      %v4714 = vpack.c.b16 %v4635, %v4634
      %v4715 = vpack.c.b16 %v4637, %v4636
      %v4716 = vpack.c.b16 %v4639, %v4638
      %v4717 = vpack.c.b16 %v4641, %v4640
      %v4718 = vpack.c.b16 %v4643, %v4642
      %v4719 = vpack.c.b16 %v4645, %v4644
      %v4720 = vpack.c.b16 %v4647, %v4646
      %v4721 = vpack.c.b16 %v4649, %v4648
      %4794 = vmatprep.subr.bf16.mxu0 0
      %4795 = vmatpush1.bf16.msra.mxu0 %v4650
      %4796 = vmatprep.subr.bf16.mxu0 0
      %4797 = vmatpush1.bf16.msra.mxu0 %v4651
      %4798 = vmatprep.subr.bf16.mxu0 0
      %4799 = vmatpush1.bf16.msra.mxu0 %v4652
      %4800 = vmatprep.subr.bf16.mxu0 0
      %4801 = vmatpush1.bf16.msra.mxu0 %v4653
      %4802 = vmatprep.subr.bf16.mxu0 0
      %4803 = vmatpush1.bf16.msra.mxu0 %v4654
      %4804 = vmatprep.subr.bf16.mxu0 0
      %4805 = vmatpush1.bf16.msra.mxu0 %v4655
      %4806 = vmatprep.subr.bf16.mxu0 0
      %4807 = vmatpush1.bf16.msra.mxu0 %v4656
      %4808 = vmatprep.subr.bf16.mxu0 0
      %4809 = vmatpush1.bf16.msra.mxu0 %v4657
      %4810 = vmatprep.subr.bf16.mxu0 0
      %4811 = vmatpush1.bf16.msra.mxu0 %v4658
      %4812 = vmatprep.subr.bf16.mxu0 0
      %4813 = vmatpush1.bf16.msra.mxu0 %v4659
      %4814 = vmatprep.subr.bf16.mxu0 0
      %4815 = vmatpush1.bf16.msra.mxu0 %v4660
      %4816 = vmatprep.subr.bf16.mxu0 0
      %4817 = vmatpush1.bf16.msra.mxu0 %v4661
      %4818 = vmatprep.subr.bf16.mxu0 0
      %4819 = vmatpush1.bf16.msra.mxu0 %v4662
      %4820 = vmatprep.subr.bf16.mxu0 0
      %4821 = vmatpush1.bf16.msra.mxu0 %v4663
      %4822 = vmatprep.subr.bf16.mxu0 0
      %4823 = vmatpush1.bf16.msra.mxu0 %v4664
      %4824 = vmatprep.subr.bf16.mxu0 0
      %4825 = vmatpush1.bf16.msra.mxu0 %v4665
      %4826 = vmatprep.mubr.bf16.mxu0 %v4147
      %4827 = vmatmul.mubr.bf16.gmra.mrb[0].mxu0 %v4146
      %v4828 = vpop.f32.mrb[0].mxu0
      %v4829 = vadd.f32 %v4144, %v4828
      %v4830 = vpop.f32.mrb[0].mxu0
      %v4831 = vpop.f32.mrb[0].mxu0
      %v4832 = vadd.f32 %v4144, %v4831
      %v4833 = vpop.f32.mrb[0].mxu0
      %4834 = vmatprep.mubr.bf16.mxu0 %v4153
      %4835 = vmatmul.mubr.bf16.gmra.mrb[0].mxu0 %v4152
      %v4836 = vpop.f32.mrb[0].mxu0
      %v4837 = vadd.f32 %v4144, %v4836
      %v4838 = vpop.f32.mrb[0].mxu0
      %v4839 = vpop.f32.mrb[0].mxu0
      %v4840 = vadd.f32 %v4144, %v4839
      %v4841 = vpop.f32.mrb[0].mxu0
      %4842 = vmatprep.mubr.bf16.mxu0 %v4159
      %4843 = vmatmul.mubr.bf16.gmra.mrb[0].mxu0 %v4158
      %v4844 = vpop.f32.mrb[0].mxu0
      %v4845 = vadd.f32 %v4144, %v4844
      %v4846 = vpop.f32.mrb[0].mxu0
      %v4847 = vpop.f32.mrb[0].mxu0
      %v4848 = vadd.f32 %v4144, %v4847
      %v4849 = vpop.f32.mrb[0].mxu0
      %4850 = vmatprep.mubr.bf16.mxu0 %v4165
      %4851 = vmatmul.mubr.bf16.gmra.mrb[0].mxu0 %v4164
      %v4852 = vpop.f32.mrb[0].mxu0
      %v4853 = vadd.f32 %v4144, %v4852
      %v4854 = vpop.f32.mrb[0].mxu0
      %v4855 = vpop.f32.mrb[0].mxu0
      %v4856 = vadd.f32 %v4144, %v4855
      %v4857 = vpop.f32.mrb[0].mxu0
      %4858 = vmatprep.mubr.bf16.mxu0 %v4174
      %4859 = vmatmul.mubr.bf16.gmra.mrb[0].mxu0 %v4173
      %v4860 = vpop.f32.mrb[0].mxu0
      %v4861 = vadd.f32 %v4144, %v4860
      %v4862 = vpop.f32.mrb[0].mxu0
      %v4863 = vpop.f32.mrb[0].mxu0
      %v4864 = vadd.f32 %v4144, %v4863
      %v4865 = vpop.f32.mrb[0].mxu0
      %4866 = vmatprep.mubr.bf16.mxu0 %v4180
      %4867 = vmatmul.mubr.bf16.gmra.mrb[0].mxu0 %v4179
      %v4868 = vpop.f32.mrb[0].mxu0
      %v4869 = vadd.f32 %v4144, %v4868
      %v4870 = vpop.f32.mrb[0].mxu0
      %v4871 = vpop.f32.mrb[0].mxu0
      %v4872 = vadd.f32 %v4144, %v4871
      %v4873 = vpop.f32.mrb[0].mxu0
      %4874 = vmatprep.mubr.bf16.mxu0 %v4186
      %4875 = vmatmul.mubr.bf16.gmra.mrb[0].mxu0 %v4185
      %v4876 = vpop.f32.mrb[0].mxu0
      %v4877 = vadd.f32 %v4144, %v4876
      %v4878 = vpop.f32.mrb[0].mxu0
      %v4879 = vpop.f32.mrb[0].mxu0
      %v4880 = vadd.f32 %v4144, %v4879
      %v4881 = vpop.f32.mrb[0].mxu0
      %4882 = vmatprep.mubr.bf16.mxu0 %v4192
      %4883 = vmatmul.mubr.bf16.gmra.mrb[0].mxu0 %v4191
      %v4884 = vpop.f32.mrb[0].mxu0
      %v4885 = vadd.f32 %v4144, %v4884
      %v4886 = vpop.f32.mrb[0].mxu0
      %v4887 = vpop.f32.mrb[0].mxu0
      %v4888 = vadd.f32 %v4144, %v4887
      %v4889 = vpop.f32.mrb[0].mxu0
      %4890 = vmatprep.mubr.bf16.mxu0 %v4201
      %4891 = vmatmul.mubr.bf16.gmra.mrb[0].mxu0 %v4200
      %v4892 = vpop.f32.mrb[0].mxu0
      %v4893 = vadd.f32 %v4144, %v4892
      %v4894 = vpop.f32.mrb[0].mxu0
      %v4895 = vpop.f32.mrb[0].mxu0
      %v4896 = vadd.f32 %v4144, %v4895
      %v4897 = vpop.f32.mrb[0].mxu0
      %4898 = vmatprep.mubr.bf16.mxu0 %v4207
      %4899 = vmatmul.mubr.bf16.gmra.mrb[0].mxu0 %v4206
      %v4900 = vpop.f32.mrb[0].mxu0
      %v4901 = vadd.f32 %v4144, %v4900
      %v4902 = vpop.f32.mrb[0].mxu0
      %v4903 = vpop.f32.mrb[0].mxu0
      %v4904 = vadd.f32 %v4144, %v4903
      %v4905 = vpop.f32.mrb[0].mxu0
      %4906 = vmatprep.mubr.bf16.mxu0 %v4213
      %4907 = vmatmul.mubr.bf16.gmra.mrb[0].mxu0 %v4212
      %v4908 = vpop.f32.mrb[0].mxu0
      %v4909 = vadd.f32 %v4144, %v4908
      %v4910 = vpop.f32.mrb[0].mxu0
      %v4911 = vpop.f32.mrb[0].mxu0
      %v4912 = vadd.f32 %v4144, %v4911
      %v4913 = vpop.f32.mrb[0].mxu0
      %4914 = vmatprep.mubr.bf16.mxu0 %v4219
      %4915 = vmatmul.mubr.bf16.gmra.mrb[0].mxu0 %v4218
      %v4916 = vpop.f32.mrb[0].mxu0
      %v4917 = vadd.f32 %v4144, %v4916
      %v4918 = vpop.f32.mrb[0].mxu0
      %v4919 = vpop.f32.mrb[0].mxu0
      %v4920 = vadd.f32 %v4144, %v4919
      %v4921 = vpop.f32.mrb[0].mxu0
      %4922 = vmatprep.mubr.bf16.mxu0 %v4228
      %4923 = vmatmul.mubr.bf16.gmra.mrb[0].mxu0 %v4227
      %v4924 = vpop.f32.mrb[0].mxu0
      %v4925 = vadd.f32 %v4144, %v4924
      %v4926 = vpop.f32.mrb[0].mxu0
      %v4927 = vpop.f32.mrb[0].mxu0
      %v4928 = vadd.f32 %v4144, %v4927
      %v4929 = vpop.f32.mrb[0].mxu0
      %4930 = vmatprep.mubr.bf16.mxu0 %v4234
      %4931 = vmatmul.mubr.bf16.gmra.mrb[0].mxu0 %v4233
      %v4932 = vpop.f32.mrb[0].mxu0
      %v4933 = vadd.f32 %v4144, %v4932
      %v4934 = vpop.f32.mrb[0].mxu0
      %v4935 = vpop.f32.mrb[0].mxu0
      %v4936 = vadd.f32 %v4144, %v4935
      %v4937 = vpop.f32.mrb[0].mxu0
      %4938 = vmatprep.mubr.bf16.mxu0 %v4240
      %4939 = vmatmul.mubr.bf16.gmra.mrb[0].mxu0 %v4239
      %v4940 = vpop.f32.mrb[0].mxu0
      %v4941 = vadd.f32 %v4144, %v4940
      %v4942 = vpop.f32.mrb[0].mxu0
      %v4943 = vpop.f32.mrb[0].mxu0
      %v4944 = vadd.f32 %v4144, %v4943
      %v4945 = vpop.f32.mrb[0].mxu0
      %4946 = vmatprep.mubr.bf16.mxu0 %v4246
      %4947 = vmatmul.mubr.bf16.gmra.mrb[0].mxu0 %v4245
      %v4948 = vpop.f32.mrb[0].mxu0
      %v4949 = vadd.f32 %v4144, %v4948
      %v4950 = vpop.f32.mrb[0].mxu0
      %v4951 = vpop.f32.mrb[0].mxu0
      %v4952 = vadd.f32 %v4144, %v4951
      %v4953 = vpop.f32.mrb[0].mxu0
      %4954 = vdwg.mxu0
      %4955 = vmatprep.subr.bf16.mxu0 0
      %4956 = vmatpush1.bf16.msra.mxu0 %v4666
      %4957 = vmatprep.subr.bf16.mxu0 0
      %4958 = vmatpush1.bf16.msra.mxu0 %v4667
      %4959 = vmatprep.subr.bf16.mxu0 0
      %4960 = vmatpush1.bf16.msra.mxu0 %v4668
      %4961 = vmatprep.subr.bf16.mxu0 0
      %4962 = vmatpush1.bf16.msra.mxu0 %v4669
      %4963 = vmatprep.subr.bf16.mxu0 0
      %4964 = vmatpush1.bf16.msra.mxu0 %v4670
      %4965 = vmatprep.subr.bf16.mxu0 0
      %4966 = vmatpush1.bf16.msra.mxu0 %v4671
      %4967 = vmatprep.subr.bf16.mxu0 0
      %4968 = vmatpush1.bf16.msra.mxu0 %v4672
      %4969 = vmatprep.subr.bf16.mxu0 0
      %4970 = vmatpush1.bf16.msra.mxu0 %v4673
      %4971 = vmatprep.subr.bf16.mxu0 0
      %4972 = vmatpush1.bf16.msra.mxu0 %v4674
      %4973 = vmatprep.subr.bf16.mxu0 0
      %4974 = vmatpush1.bf16.msra.mxu0 %v4675
      %4975 = vmatprep.subr.bf16.mxu0 0
      %4976 = vmatpush1.bf16.msra.mxu0 %v4676
      %4977 = vmatprep.subr.bf16.mxu0 0
      %4978 = vmatpush1.bf16.msra.mxu0 %v4677
      %4979 = vmatprep.subr.bf16.mxu0 0
      %4980 = vmatpush1.bf16.msra.mxu0 %v4678
      %4981 = vmatprep.subr.bf16.mxu0 0
      %4982 = vmatpush1.bf16.msra.mxu0 %v4679
      %4983 = vmatprep.subr.bf16.mxu0 0
      %4984 = vmatpush1.bf16.msra.mxu0 %v4680
      %4985 = vmatprep.subr.bf16.mxu0 0
      %4986 = vmatpush1.bf16.msra.mxu0 %v4681
      %4987 = vmatprep.mubr.bf16.mxu0 %v4149
      %4988 = vmatmul.mubr.bf16.gmra.mrb[0].mxu0 %v4148
      %v4989 = vpop.f32.mrb[0].mxu0
      %v4990 = vadd.f32 %v4829, %v4989
      %v4991 = vpop.f32.mrb[0].mxu0
      %v4992 = vpop.f32.mrb[0].mxu0
      %v4993 = vadd.f32 %v4832, %v4992
      %v4994 = vpop.f32.mrb[0].mxu0
      %4995 = vmatprep.mubr.bf16.mxu0 %v4155
      %4996 = vmatmul.mubr.bf16.gmra.mrb[0].mxu0 %v4154
      %v4997 = vpop.f32.mrb[0].mxu0
      %v4998 = vadd.f32 %v4837, %v4997
      %v4999 = vpop.f32.mrb[0].mxu0
      %v5000 = vpop.f32.mrb[0].mxu0
      %v5001 = vadd.f32 %v4840, %v5000
      %v5002 = vpop.f32.mrb[0].mxu0
      %5003 = vmatprep.mubr.bf16.mxu0 %v4161
      %5004 = vmatmul.mubr.bf16.gmra.mrb[0].mxu0 %v4160
      %v5005 = vpop.f32.mrb[0].mxu0
      %v5006 = vadd.f32 %v4845, %v5005
      %v5007 = vpop.f32.mrb[0].mxu0
      %v5008 = vpop.f32.mrb[0].mxu0
      %v5009 = vadd.f32 %v4848, %v5008
      %v5010 = vpop.f32.mrb[0].mxu0
      %5011 = vmatprep.mubr.bf16.mxu0 %v4167
      %5012 = vmatmul.mubr.bf16.gmra.mrb[0].mxu0 %v4166
      %v5013 = vpop.f32.mrb[0].mxu0
      %v5014 = vadd.f32 %v4853, %v5013
      %v5015 = vpop.f32.mrb[0].mxu0
      %v5016 = vpop.f32.mrb[0].mxu0
      %v5017 = vadd.f32 %v4856, %v5016
      %v5018 = vpop.f32.mrb[0].mxu0
      %5019 = vmatprep.mubr.bf16.mxu0 %v4176
      %5020 = vmatmul.mubr.bf16.gmra.mrb[0].mxu0 %v4175
      %v5021 = vpop.f32.mrb[0].mxu0
      %v5022 = vadd.f32 %v4861, %v5021
      %v5023 = vpop.f32.mrb[0].mxu0
      %v5024 = vpop.f32.mrb[0].mxu0
      %v5025 = vadd.f32 %v4864, %v5024
      %v5026 = vpop.f32.mrb[0].mxu0
      %5027 = vmatprep.mubr.bf16.mxu0 %v4182
      %5028 = vmatmul.mubr.bf16.gmra.mrb[0].mxu0 %v4181
      %v5029 = vpop.f32.mrb[0].mxu0
      %v5030 = vadd.f32 %v4869, %v5029
      %v5031 = vpop.f32.mrb[0].mxu0
      %v5032 = vpop.f32.mrb[0].mxu0
      %v5033 = vadd.f32 %v4872, %v5032
      %v5034 = vpop.f32.mrb[0].mxu0
      %5035 = vmatprep.mubr.bf16.mxu0 %v4188
      %5036 = vmatmul.mubr.bf16.gmra.mrb[0].mxu0 %v4187
      %v5037 = vpop.f32.mrb[0].mxu0
      %v5038 = vadd.f32 %v4877, %v5037
      %v5039 = vpop.f32.mrb[0].mxu0
      %v5040 = vpop.f32.mrb[0].mxu0
      %v5041 = vadd.f32 %v4880, %v5040
      %v5042 = vpop.f32.mrb[0].mxu0
      %5043 = vmatprep.mubr.bf16.mxu0 %v4194
      %5044 = vmatmul.mubr.bf16.gmra.mrb[0].mxu0 %v4193
      %v5045 = vpop.f32.mrb[0].mxu0
      %v5046 = vadd.f32 %v4885, %v5045
      %v5047 = vpop.f32.mrb[0].mxu0
      %v5048 = vpop.f32.mrb[0].mxu0
      %v5049 = vadd.f32 %v4888, %v5048
      %v5050 = vpop.f32.mrb[0].mxu0
      %5051 = vmatprep.mubr.bf16.mxu0 %v4203
      %5052 = vmatmul.mubr.bf16.gmra.mrb[0].mxu0 %v4202
      %v5053 = vpop.f32.mrb[0].mxu0
      %v5054 = vadd.f32 %v4893, %v5053
      %v5055 = vpop.f32.mrb[0].mxu0
      %v5056 = vpop.f32.mrb[0].mxu0
      %v5057 = vadd.f32 %v4896, %v5056
      %v5058 = vpop.f32.mrb[0].mxu0
      %5059 = vmatprep.mubr.bf16.mxu0 %v4209
      %5060 = vmatmul.mubr.bf16.gmra.mrb[0].mxu0 %v4208
      %v5061 = vpop.f32.mrb[0].mxu0
      %v5062 = vadd.f32 %v4901, %v5061
      %v5063 = vpop.f32.mrb[0].mxu0
      %v5064 = vpop.f32.mrb[0].mxu0
      %v5065 = vadd.f32 %v4904, %v5064
      %v5066 = vpop.f32.mrb[0].mxu0
      %5067 = vmatprep.mubr.bf16.mxu0 %v4215
      %5068 = vmatmul.mubr.bf16.gmra.mrb[0].mxu0 %v4214
      %v5069 = vpop.f32.mrb[0].mxu0
      %v5070 = vadd.f32 %v4909, %v5069
      %v5071 = vpop.f32.mrb[0].mxu0
      %v5072 = vpop.f32.mrb[0].mxu0
      %v5073 = vadd.f32 %v4912, %v5072
      %v5074 = vpop.f32.mrb[0].mxu0
      %5075 = vmatprep.mubr.bf16.mxu0 %v4221
      %5076 = vmatmul.mubr.bf16.gmra.mrb[0].mxu0 %v4220
      %v5077 = vpop.f32.mrb[0].mxu0
      %v5078 = vadd.f32 %v4917, %v5077
      %v5079 = vpop.f32.mrb[0].mxu0
      %v5080 = vpop.f32.mrb[0].mxu0
      %v5081 = vadd.f32 %v4920, %v5080
      %v5082 = vpop.f32.mrb[0].mxu0
      %5083 = vmatprep.mubr.bf16.mxu0 %v4230
      %5084 = vmatmul.mubr.bf16.gmra.mrb[0].mxu0 %v4229
      %v5085 = vpop.f32.mrb[0].mxu0
      %v5086 = vadd.f32 %v4925, %v5085
      %v5087 = vpop.f32.mrb[0].mxu0
      %v5088 = vpop.f32.mrb[0].mxu0
      %v5089 = vadd.f32 %v4928, %v5088
      %v5090 = vpop.f32.mrb[0].mxu0
      %5091 = vmatprep.mubr.bf16.mxu0 %v4236
      %5092 = vmatmul.mubr.bf16.gmra.mrb[0].mxu0 %v4235
      %v5093 = vpop.f32.mrb[0].mxu0
      %v5094 = vadd.f32 %v4933, %v5093
      %v5095 = vpop.f32.mrb[0].mxu0
      %v5096 = vpop.f32.mrb[0].mxu0
      %v5097 = vadd.f32 %v4936, %v5096
      %v5098 = vpop.f32.mrb[0].mxu0
      %5099 = vmatprep.mubr.bf16.mxu0 %v4242
      %5100 = vmatmul.mubr.bf16.gmra.mrb[0].mxu0 %v4241
      %v5101 = vpop.f32.mrb[0].mxu0
      %v5102 = vadd.f32 %v4941, %v5101
      %v5103 = vpop.f32.mrb[0].mxu0
      %v5104 = vpop.f32.mrb[0].mxu0
      %v5105 = vadd.f32 %v4944, %v5104
      %v5106 = vpop.f32.mrb[0].mxu0
      %5107 = vmatprep.mubr.bf16.mxu0 %v4248
      %5108 = vmatmul.mubr.bf16.gmra.mrb[0].mxu0 %v4247
      %v5109 = vpop.f32.mrb[0].mxu0
      %v5110 = vadd.f32 %v4949, %v5109
      %v5111 = vpop.f32.mrb[0].mxu0
      %v5112 = vpop.f32.mrb[0].mxu0
      %v5113 = vadd.f32 %v4952, %v5112
      %v5114 = vpop.f32.mrb[0].mxu0
      %5115 = vdwg.mxu0
      %5116 = vmatprep.subr.bf16.mxu0 0
      %5117 = vmatpush1.bf16.msra.mxu0 %v4682
      %5118 = vmatprep.subr.bf16.mxu0 0
      %5119 = vmatpush1.bf16.msra.mxu0 %v4683
      %5120 = vmatprep.subr.bf16.mxu0 0
      %5121 = vmatpush1.bf16.msra.mxu0 %v4684
      %5122 = vmatprep.subr.bf16.mxu0 0
      %5123 = vmatpush1.bf16.msra.mxu0 %v4685
      %5124 = vmatprep.subr.bf16.mxu0 0
      %5125 = vmatpush1.bf16.msra.mxu0 %v4686
      %5126 = vmatprep.subr.bf16.mxu0 0
      %5127 = vmatpush1.bf16.msra.mxu0 %v4687
      %5128 = vmatprep.subr.bf16.mxu0 0
      %5129 = vmatpush1.bf16.msra.mxu0 %v4688
      %5130 = vmatprep.subr.bf16.mxu0 0
      %5131 = vmatpush1.bf16.msra.mxu0 %v4689
      %5132 = vmatprep.subr.bf16.mxu0 0
      %5133 = vmatpush1.bf16.msra.mxu0 %v4690
      %5134 = vmatprep.subr.bf16.mxu0 0
      %5135 = vmatpush1.bf16.msra.mxu0 %v4691
      %5136 = vmatprep.subr.bf16.mxu0 0
      %5137 = vmatpush1.bf16.msra.mxu0 %v4692
      %5138 = vmatprep.subr.bf16.mxu0 0
      %5139 = vmatpush1.bf16.msra.mxu0 %v4693
      %5140 = vmatprep.subr.bf16.mxu0 0
      %5141 = vmatpush1.bf16.msra.mxu0 %v4694
      %5142 = vmatprep.subr.bf16.mxu0 0
      %5143 = vmatpush1.bf16.msra.mxu0 %v4695
      %5144 = vmatprep.subr.bf16.mxu0 0
      %5145 = vmatpush1.bf16.msra.mxu0 %v4696
      %5146 = vmatprep.subr.bf16.mxu0 0
      %5147 = vmatpush1.bf16.msra.mxu0 %v4697
      %5148 = vmatprep.mubr.bf16.mxu0 %v4151
      %5149 = vmatmul.mubr.bf16.gmra.mrb[0].mxu0 %v4150
      %v5150 = vpop.f32.mrb[0].mxu0
      %v5151 = vadd.f32 %v4990, %v5150
      %v5152 = vpop.f32.mrb[0].mxu0
      %v5153 = vpop.f32.mrb[0].mxu0
      %v5154 = vadd.f32 %v4993, %v5153
      %v5155 = vpop.f32.mrb[0].mxu0
      %5156 = vmatprep.mubr.bf16.mxu0 %v4157
      %5157 = vmatmul.mubr.bf16.gmra.mrb[0].mxu0 %v4156
      %v5158 = vpop.f32.mrb[0].mxu0
      %v5159 = vadd.f32 %v4998, %v5158
      %v5160 = vpop.f32.mrb[0].mxu0
      %v5161 = vpop.f32.mrb[0].mxu0
      %v5162 = vadd.f32 %v5001, %v5161
      %v5163 = vpop.f32.mrb[0].mxu0
      %5164 = vmatprep.mubr.bf16.mxu0 %v4163
      %5165 = vmatmul.mubr.bf16.gmra.mrb[0].mxu0 %v4162
      %v5166 = vpop.f32.mrb[0].mxu0
      %v5167 = vadd.f32 %v5006, %v5166
      %v5168 = vpop.f32.mrb[0].mxu0
      %v5169 = vpop.f32.mrb[0].mxu0
      %v5170 = vadd.f32 %v5009, %v5169
      %v5171 = vpop.f32.mrb[0].mxu0
      %5172 = vmatprep.mubr.bf16.mxu0 %v4169
      %5173 = vmatmul.mubr.bf16.gmra.mrb[0].mxu0 %v4168
      %v5174 = vpop.f32.mrb[0].mxu0
      %v5175 = vadd.f32 %v5014, %v5174
      %v5176 = vpop.f32.mrb[0].mxu0
      %v5177 = vpop.f32.mrb[0].mxu0
      %v5178 = vadd.f32 %v5017, %v5177
      %v5179 = vpop.f32.mrb[0].mxu0
      %5180 = vmatprep.mubr.bf16.mxu0 %v4178
      %5181 = vmatmul.mubr.bf16.gmra.mrb[0].mxu0 %v4177
      %v5182 = vpop.f32.mrb[0].mxu0
      %v5183 = vadd.f32 %v5022, %v5182
      %v5184 = vpop.f32.mrb[0].mxu0
      %v5185 = vpop.f32.mrb[0].mxu0
      %v5186 = vadd.f32 %v5025, %v5185
      %v5187 = vpop.f32.mrb[0].mxu0
      %5188 = vmatprep.mubr.bf16.mxu0 %v4184
      %5189 = vmatmul.mubr.bf16.gmra.mrb[0].mxu0 %v4183
      %v5190 = vpop.f32.mrb[0].mxu0
      %v5191 = vadd.f32 %v5030, %v5190
      %v5192 = vpop.f32.mrb[0].mxu0
      %v5193 = vpop.f32.mrb[0].mxu0
      %v5194 = vadd.f32 %v5033, %v5193
      %v5195 = vpop.f32.mrb[0].mxu0
      %5196 = vmatprep.mubr.bf16.mxu0 %v4190
      %5197 = vmatmul.mubr.bf16.gmra.mrb[0].mxu0 %v4189
      %v5198 = vpop.f32.mrb[0].mxu0
      %v5199 = vadd.f32 %v5038, %v5198
      %v5200 = vpop.f32.mrb[0].mxu0
      %v5201 = vpop.f32.mrb[0].mxu0
      %v5202 = vadd.f32 %v5041, %v5201
      %v5203 = vpop.f32.mrb[0].mxu0
      %5204 = vmatprep.mubr.bf16.mxu0 %v4196
      %5205 = vmatmul.mubr.bf16.gmra.mrb[0].mxu0 %v4195
      %v5206 = vpop.f32.mrb[0].mxu0
      %v5207 = vadd.f32 %v5046, %v5206
      %v5208 = vpop.f32.mrb[0].mxu0
      %v5209 = vpop.f32.mrb[0].mxu0
      %v5210 = vadd.f32 %v5049, %v5209
      %v5211 = vpop.f32.mrb[0].mxu0
      %5212 = vmatprep.mubr.bf16.mxu0 %v4205
      %5213 = vmatmul.mubr.bf16.gmra.mrb[0].mxu0 %v4204
      %v5214 = vpop.f32.mrb[0].mxu0
      %v5215 = vadd.f32 %v5054, %v5214
      %v5216 = vpop.f32.mrb[0].mxu0
      %v5217 = vpop.f32.mrb[0].mxu0
      %v5218 = vadd.f32 %v5057, %v5217
      %v5219 = vpop.f32.mrb[0].mxu0
      %5220 = vmatprep.mubr.bf16.mxu0 %v4211
      %5221 = vmatmul.mubr.bf16.gmra.mrb[0].mxu0 %v4210
      %v5222 = vpop.f32.mrb[0].mxu0
      %v5223 = vadd.f32 %v5062, %v5222
      %v5224 = vpop.f32.mrb[0].mxu0
      %v5225 = vpop.f32.mrb[0].mxu0
      %v5226 = vadd.f32 %v5065, %v5225
      %v5227 = vpop.f32.mrb[0].mxu0
      %5228 = vmatprep.mubr.bf16.mxu0 %v4217
      %5229 = vmatmul.mubr.bf16.gmra.mrb[0].mxu0 %v4216
      %v5230 = vpop.f32.mrb[0].mxu0
      %v5231 = vadd.f32 %v5070, %v5230
      %v5232 = vpop.f32.mrb[0].mxu0
      %v5233 = vpop.f32.mrb[0].mxu0
      %v5234 = vadd.f32 %v5073, %v5233
      %v5235 = vpop.f32.mrb[0].mxu0
      %5236 = vmatprep.mubr.bf16.mxu0 %v4223
      %5237 = vmatmul.mubr.bf16.gmra.mrb[0].mxu0 %v4222
      %v5238 = vpop.f32.mrb[0].mxu0
      %v5239 = vadd.f32 %v5078, %v5238
      %v5240 = vpop.f32.mrb[0].mxu0
      %v5241 = vpop.f32.mrb[0].mxu0
      %v5242 = vadd.f32 %v5081, %v5241
      %v5243 = vpop.f32.mrb[0].mxu0
      %5244 = vmatprep.mubr.bf16.mxu0 %v4232
      %5245 = vmatmul.mubr.bf16.gmra.mrb[0].mxu0 %v4231
      %v5246 = vpop.f32.mrb[0].mxu0
      %v5247 = vadd.f32 %v5086, %v5246
      %v5248 = vpop.f32.mrb[0].mxu0
      %v5249 = vpop.f32.mrb[0].mxu0
      %v5250 = vadd.f32 %v5089, %v5249
      %v5251 = vpop.f32.mrb[0].mxu0
      %5252 = vmatprep.mubr.bf16.mxu0 %v4238
      %5253 = vmatmul.mubr.bf16.gmra.mrb[0].mxu0 %v4237
      %v5254 = vpop.f32.mrb[0].mxu0
      %v5255 = vadd.f32 %v5094, %v5254
      %v5256 = vpop.f32.mrb[0].mxu0
      %v5257 = vpop.f32.mrb[0].mxu0
      %v5258 = vadd.f32 %v5097, %v5257
      %v5259 = vpop.f32.mrb[0].mxu0
      %5260 = vmatprep.mubr.bf16.mxu0 %v4244
      %5261 = vmatmul.mubr.bf16.gmra.mrb[0].mxu0 %v4243
      %v5262 = vpop.f32.mrb[0].mxu0
      %v5263 = vadd.f32 %v5102, %v5262
      %v5264 = vpop.f32.mrb[0].mxu0
      %v5265 = vpop.f32.mrb[0].mxu0
      %v5266 = vadd.f32 %v5105, %v5265
      %v5267 = vpop.f32.mrb[0].mxu0
      %5268 = vmatprep.mubr.bf16.mxu0 %v4250
      %5269 = vmatmul.mubr.bf16.gmra.mrb[0].mxu0 %v4249
      %v5270 = vpop.f32.mrb[0].mxu0
      %v5271 = vadd.f32 %v5110, %v5270
      %v5272 = vpop.f32.mrb[0].mxu0
      %v5273 = vpop.f32.mrb[0].mxu0
      %v5274 = vadd.f32 %v5113, %v5273
      %v5275 = vpop.f32.mrb[0].mxu0
      %5276 = vdwg.mxu0
      %5277 = vmatprep.subr.bf16.mxu0 0
      %5278 = vmatpush1.bf16.msra.mxu0 %v4698
      %5279 = vmatprep.subr.bf16.mxu0 0
      %5280 = vmatpush1.bf16.msra.mxu0 %v4699
      %5281 = vmatprep.subr.bf16.mxu0 0
      %5282 = vmatpush1.bf16.msra.mxu0 %v4700
      %5283 = vmatprep.subr.bf16.mxu0 0
      %5284 = vmatpush1.bf16.msra.mxu0 %v4701
      %5285 = vmatprep.subr.bf16.mxu0 0
      %5286 = vmatpush1.bf16.msra.mxu0 %v4702
      %5287 = vmatprep.subr.bf16.mxu0 0
      %5288 = vmatpush1.bf16.msra.mxu0 %v4703
      %5289 = vmatprep.subr.bf16.mxu0 0
      %5290 = vmatpush1.bf16.msra.mxu0 %v4704
      %5291 = vmatprep.subr.bf16.mxu0 0
      %5292 = vmatpush1.bf16.msra.mxu0 %v4705
      %5293 = vmatprep.subr.bf16.mxu0 0
      %5294 = vmatpush1.bf16.msra.mxu0 %v4706
      %5295 = vmatprep.subr.bf16.mxu0 0
      %5296 = vmatpush1.bf16.msra.mxu0 %v4707
      %5297 = vmatprep.subr.bf16.mxu0 0
      %5298 = vmatpush1.bf16.msra.mxu0 %v4708
      %5299 = vmatprep.subr.bf16.mxu0 0
      %5300 = vmatpush1.bf16.msra.mxu0 %v4709
      %5301 = vmatprep.subr.bf16.mxu0 0
      %5302 = vmatpush1.bf16.msra.mxu0 %v4710
      %5303 = vmatprep.subr.bf16.mxu0 0
      %5304 = vmatpush1.bf16.msra.mxu0 %v4711
      %5305 = vmatprep.subr.bf16.mxu0 0
      %5306 = vmatpush1.bf16.msra.mxu0 %v4712
      %5307 = vmatprep.subr.bf16.mxu0 0
      %5308 = vmatpush1.bf16.msra.mxu0 %v4713
      %5309 = vmatprep.mubr.bf16.mxu0 %v4153
      %5310 = vmatmul.mubr.bf16.gmra.mrb[0].mxu0 %v4152
      %v5311 = vpop.f32.mrb[0].mxu0
      %v5312 = vadd.f32 %v5151, %v5311
      %v5313 = vpop.f32.mrb[0].mxu0
      %v5314 = vpop.f32.mrb[0].mxu0
      %v5315 = vadd.f32 %v5154, %v5314
      %v5316 = vpop.f32.mrb[0].mxu0
      %5317 = vmatprep.mubr.bf16.mxu0 %v4159
      %5318 = vmatmul.mubr.bf16.gmra.mrb[0].mxu0 %v4158
      %v5319 = vpop.f32.mrb[0].mxu0
      %v5320 = vadd.f32 %v5159, %v5319
      %v5321 = vpop.f32.mrb[0].mxu0
      %v5322 = vpop.f32.mrb[0].mxu0
      %v5323 = vadd.f32 %v5162, %v5322
      %v5324 = vpop.f32.mrb[0].mxu0
      %5325 = vmatprep.mubr.bf16.mxu0 %v4165
      %5326 = vmatmul.mubr.bf16.gmra.mrb[0].mxu0 %v4164
      %v5327 = vpop.f32.mrb[0].mxu0
      %v5328 = vadd.f32 %v5167, %v5327
      %v5329 = vpop.f32.mrb[0].mxu0
      %v5330 = vpop.f32.mrb[0].mxu0
      %v5331 = vadd.f32 %v5170, %v5330
      %v5332 = vpop.f32.mrb[0].mxu0
      %5333 = vmatprep.mubr.bf16.mxu0 %v4171
      %5334 = vmatmul.mubr.bf16.gmra.mrb[0].mxu0 %v4170
      %v5335 = vpop.f32.mrb[0].mxu0
      %v5336 = vadd.f32 %v5175, %v5335
      %v5337 = vpop.f32.mrb[0].mxu0
      %v5338 = vpop.f32.mrb[0].mxu0
      %v5339 = vadd.f32 %v5178, %v5338
      %v5340 = vpop.f32.mrb[0].mxu0
      %5341 = vmatprep.mubr.bf16.mxu0 %v4180
      %5342 = vmatmul.mubr.bf16.gmra.mrb[0].mxu0 %v4179
      %v5343 = vpop.f32.mrb[0].mxu0
      %v5344 = vadd.f32 %v5183, %v5343
      %v5345 = vpop.f32.mrb[0].mxu0
      %v5346 = vpop.f32.mrb[0].mxu0
      %v5347 = vadd.f32 %v5186, %v5346
      %v5348 = vpop.f32.mrb[0].mxu0
      %5349 = vmatprep.mubr.bf16.mxu0 %v4186
      %5350 = vmatmul.mubr.bf16.gmra.mrb[0].mxu0 %v4185
      %v5351 = vpop.f32.mrb[0].mxu0
      %v5352 = vadd.f32 %v5191, %v5351
      %v5353 = vpop.f32.mrb[0].mxu0
      %v5354 = vpop.f32.mrb[0].mxu0
      %v5355 = vadd.f32 %v5194, %v5354
      %v5356 = vpop.f32.mrb[0].mxu0
      %5357 = vmatprep.mubr.bf16.mxu0 %v4192
      %5358 = vmatmul.mubr.bf16.gmra.mrb[0].mxu0 %v4191
      %v5359 = vpop.f32.mrb[0].mxu0
      %v5360 = vadd.f32 %v5199, %v5359
      %v5361 = vpop.f32.mrb[0].mxu0
      %v5362 = vpop.f32.mrb[0].mxu0
      %v5363 = vadd.f32 %v5202, %v5362
      %v5364 = vpop.f32.mrb[0].mxu0
      %5365 = vmatprep.mubr.bf16.mxu0 %v4198
      %5366 = vmatmul.mubr.bf16.gmra.mrb[0].mxu0 %v4197
      %v5367 = vpop.f32.mrb[0].mxu0
      %v5368 = vadd.f32 %v5207, %v5367
      %v5369 = vpop.f32.mrb[0].mxu0
      %v5370 = vpop.f32.mrb[0].mxu0
      %v5371 = vadd.f32 %v5210, %v5370
      %v5372 = vpop.f32.mrb[0].mxu0
      %5373 = vmatprep.mubr.bf16.mxu0 %v4207
      %5374 = vmatmul.mubr.bf16.gmra.mrb[0].mxu0 %v4206
      %v5375 = vpop.f32.mrb[0].mxu0
      %v5376 = vadd.f32 %v5215, %v5375
      %v5377 = vpop.f32.mrb[0].mxu0
      %v5378 = vpop.f32.mrb[0].mxu0
      %v5379 = vadd.f32 %v5218, %v5378
      %v5380 = vpop.f32.mrb[0].mxu0
      %5381 = vmatprep.mubr.bf16.mxu0 %v4213
      %5382 = vmatmul.mubr.bf16.gmra.mrb[0].mxu0 %v4212
      %v5383 = vpop.f32.mrb[0].mxu0
      %v5384 = vadd.f32 %v5223, %v5383
      %v5385 = vpop.f32.mrb[0].mxu0
      %v5386 = vpop.f32.mrb[0].mxu0
      %v5387 = vadd.f32 %v5226, %v5386
      %v5388 = vpop.f32.mrb[0].mxu0
      %5389 = vmatprep.mubr.bf16.mxu0 %v4219
      %5390 = vmatmul.mubr.bf16.gmra.mrb[0].mxu0 %v4218
      %v5391 = vpop.f32.mrb[0].mxu0
      %v5392 = vadd.f32 %v5231, %v5391
      %v5393 = vpop.f32.mrb[0].mxu0
      %v5394 = vpop.f32.mrb[0].mxu0
      %v5395 = vadd.f32 %v5234, %v5394
      %v5396 = vpop.f32.mrb[0].mxu0
      %5397 = vmatprep.mubr.bf16.mxu0 %v4225
      %5398 = vmatmul.mubr.bf16.gmra.mrb[0].mxu0 %v4224
      %v5399 = vpop.f32.mrb[0].mxu0
      %v5400 = vadd.f32 %v5239, %v5399
      %v5401 = vpop.f32.mrb[0].mxu0
      %v5402 = vpop.f32.mrb[0].mxu0
      %v5403 = vadd.f32 %v5242, %v5402
      %v5404 = vpop.f32.mrb[0].mxu0
      %5405 = vmatprep.mubr.bf16.mxu0 %v4234
      %5406 = vmatmul.mubr.bf16.gmra.mrb[0].mxu0 %v4233
      %v5407 = vpop.f32.mrb[0].mxu0
      %v5408 = vadd.f32 %v5247, %v5407
      %v5409 = vpop.f32.mrb[0].mxu0
      %v5410 = vpop.f32.mrb[0].mxu0
      %v5411 = vadd.f32 %v5250, %v5410
      %v5412 = vpop.f32.mrb[0].mxu0
      %5413 = vmatprep.mubr.bf16.mxu0 %v4240
      %5414 = vmatmul.mubr.bf16.gmra.mrb[0].mxu0 %v4239
      %v5415 = vpop.f32.mrb[0].mxu0
      %v5416 = vadd.f32 %v5255, %v5415
      %v5417 = vpop.f32.mrb[0].mxu0
      %v5418 = vpop.f32.mrb[0].mxu0
      %v5419 = vadd.f32 %v5258, %v5418
      %v5420 = vpop.f32.mrb[0].mxu0
      %5421 = vmatprep.mubr.bf16.mxu0 %v4246
      %5422 = vmatmul.mubr.bf16.gmra.mrb[0].mxu0 %v4245
      %v5423 = vpop.f32.mrb[0].mxu0
      %v5424 = vadd.f32 %v5263, %v5423
      %v5425 = vpop.f32.mrb[0].mxu0
      %v5426 = vpop.f32.mrb[0].mxu0
      %v5427 = vadd.f32 %v5266, %v5426
      %v5428 = vpop.f32.mrb[0].mxu0
      %5429 = vmatprep.mubr.bf16.mxu0 %v4252
      %5430 = vmatmul.mubr.bf16.gmra.mrb[0].mxu0 %v4251
      %v5431 = vpop.f32.mrb[0].mxu0
      %v5432 = vadd.f32 %v5271, %v5431
      %v5433 = vpop.f32.mrb[0].mxu0
      %v5434 = vpop.f32.mrb[0].mxu0
      %v5435 = vadd.f32 %v5274, %v5434
      %v5436 = vpop.f32.mrb[0].mxu0
      %5437 = vdwg.mxu0
      %5438 = vmatprep.subr.bf16.mxu0 0
      %5439 = vmatpush1.bf16.msra.mxu0 %v4714
      %5440 = vmatprep.subr.bf16.mxu0 0
      %5441 = vmatpush1.bf16.msra.mxu0 %v4715
      %5442 = vmatprep.subr.bf16.mxu0 0
      %5443 = vmatpush1.bf16.msra.mxu0 %v4716
      %5444 = vmatprep.subr.bf16.mxu0 0
      %5445 = vmatpush1.bf16.msra.mxu0 %v4717
      %5446 = vmatprep.subr.bf16.mxu0 0
      %5447 = vmatpush1.bf16.msra.mxu0 %v4718
      %5448 = vmatprep.subr.bf16.mxu0 0
      %5449 = vmatpush1.bf16.msra.mxu0 %v4719
      %5450 = vmatprep.subr.bf16.mxu0 0
      %5451 = vmatpush1.bf16.msra.mxu0 %v4720
      %5452 = vmatprep.subr.bf16.mxu0 0
      %5453 = vmatpush1.bf16.msra.mxu0 %v4721
      %5454 = vmatprep.subr.bf16.mxu0 0
      %5455 = vmatpush1.bf16.msra.mxu0 0
      %5456 = vmatprep.subr.bf16.mxu0 0
      %5457 = vmatpush1.bf16.msra.mxu0 0
      %5458 = vmatprep.subr.bf16.mxu0 0
      %5459 = vmatpush1.bf16.msra.mxu0 0
      %5460 = vmatprep.subr.bf16.mxu0 0
      %5461 = vmatpush1.bf16.msra.mxu0 0
      %5462 = vmatprep.subr.bf16.mxu0 0
      %5463 = vmatpush1.bf16.msra.mxu0 0
      %5464 = vmatprep.subr.bf16.mxu0 0
      %5465 = vmatpush1.bf16.msra.mxu0 0
      %5466 = vmatprep.subr.bf16.mxu0 0
      %5467 = vmatpush1.bf16.msra.mxu0 0
      %5468 = vmatprep.subr.bf16.mxu0 0
      %5469 = vmatpush1.bf16.msra.mxu0 0
      %5470 = vmatprep.mubr.bf16.mxu0 0
      %5471 = vmatmul.mubr.bf16.gmra.mrb[0].mxu0 %v4154
      %v5472 = vpop.f32.mrb[0].mxu0
      %v5473 = vadd.f32 %v5312, %v5472
      %v5474 = vpop.f32.mrb[0].mxu0
      %v5475 = vpop.f32.mrb[0].mxu0
      %v5476 = vadd.f32 %v5315, %v5475
      %v5477 = vpop.f32.mrb[0].mxu0
      %5478 = vmatprep.mubr.bf16.mxu0 0
      %5479 = vmatmul.mubr.bf16.gmra.mrb[0].mxu0 %v4160
      %v5480 = vpop.f32.mrb[0].mxu0
      %v5481 = vadd.f32 %v5320, %v5480
      %v5482 = vpop.f32.mrb[0].mxu0
      %v5483 = vpop.f32.mrb[0].mxu0
      %v5484 = vadd.f32 %v5323, %v5483
      %v5485 = vpop.f32.mrb[0].mxu0
      %5486 = vmatprep.mubr.bf16.mxu0 0
      %5487 = vmatmul.mubr.bf16.gmra.mrb[0].mxu0 %v4166
      %v5488 = vpop.f32.mrb[0].mxu0
      %v5489 = vadd.f32 %v5328, %v5488
      %v5490 = vpop.f32.mrb[0].mxu0
      %v5491 = vpop.f32.mrb[0].mxu0
      %v5492 = vadd.f32 %v5331, %v5491
      %v5493 = vpop.f32.mrb[0].mxu0
      %5494 = vmatprep.mubr.bf16.mxu0 0
      %5495 = vmatmul.mubr.bf16.gmra.mrb[0].mxu0 %v4172
      %v5496 = vpop.f32.mrb[0].mxu0
      %v5497 = vadd.f32 %v5336, %v5496
      %v5498 = vpop.f32.mrb[0].mxu0
      %v5499 = vpop.f32.mrb[0].mxu0
      %v5500 = vadd.f32 %v5339, %v5499
      %v5501 = vpop.f32.mrb[0].mxu0
      %5502 = vmatprep.mubr.bf16.mxu0 0
      %5503 = vmatmul.mubr.bf16.gmra.mrb[0].mxu0 %v4181
      %v5504 = vpop.f32.mrb[0].mxu0
      %v5505 = vadd.f32 %v5344, %v5504
      %v5506 = vpop.f32.mrb[0].mxu0
      %v5507 = vpop.f32.mrb[0].mxu0
      %v5508 = vadd.f32 %v5347, %v5507
      %v5509 = vpop.f32.mrb[0].mxu0
      %5510 = vmatprep.mubr.bf16.mxu0 0
      %5511 = vmatmul.mubr.bf16.gmra.mrb[0].mxu0 %v4187
      %v5512 = vpop.f32.mrb[0].mxu0
      %v5513 = vadd.f32 %v5352, %v5512
      %v5514 = vpop.f32.mrb[0].mxu0
      %v5515 = vpop.f32.mrb[0].mxu0
      %v5516 = vadd.f32 %v5355, %v5515
      %v5517 = vpop.f32.mrb[0].mxu0
      %5518 = vmatprep.mubr.bf16.mxu0 0
      %5519 = vmatmul.mubr.bf16.gmra.mrb[0].mxu0 %v4193
      %v5520 = vpop.f32.mrb[0].mxu0
      %v5521 = vadd.f32 %v5360, %v5520
      %v5522 = vpop.f32.mrb[0].mxu0
      %v5523 = vpop.f32.mrb[0].mxu0
      %v5524 = vadd.f32 %v5363, %v5523
      %v5525 = vpop.f32.mrb[0].mxu0
      %5526 = vmatprep.mubr.bf16.mxu0 0
      %5527 = vmatmul.mubr.bf16.gmra.mrb[0].mxu0 %v4199
      %v5528 = vpop.f32.mrb[0].mxu0
      %v5529 = vadd.f32 %v5368, %v5528
      %v5530 = vpop.f32.mrb[0].mxu0
      %v5531 = vpop.f32.mrb[0].mxu0
      %v5532 = vadd.f32 %v5371, %v5531
      %v5533 = vpop.f32.mrb[0].mxu0
      %5534 = vmatprep.mubr.bf16.mxu0 0
      %5535 = vmatmul.mubr.bf16.gmra.mrb[0].mxu0 %v4208
      %v5536 = vpop.f32.mrb[0].mxu0
      %v5537 = vadd.f32 %v5376, %v5536
      %v5538 = vpop.f32.mrb[0].mxu0
      %v5539 = vpop.f32.mrb[0].mxu0
      %v5540 = vadd.f32 %v5379, %v5539
      %v5541 = vpop.f32.mrb[0].mxu0
      %5542 = vmatprep.mubr.bf16.mxu0 0
      %5543 = vmatmul.mubr.bf16.gmra.mrb[0].mxu0 %v4214
      %v5544 = vpop.f32.mrb[0].mxu0
      %v5545 = vadd.f32 %v5384, %v5544
      %v5546 = vpop.f32.mrb[0].mxu0
      %v5547 = vpop.f32.mrb[0].mxu0
      %v5548 = vadd.f32 %v5387, %v5547
      %v5549 = vpop.f32.mrb[0].mxu0
      %5550 = vmatprep.mubr.bf16.mxu0 0
      %5551 = vmatmul.mubr.bf16.gmra.mrb[0].mxu0 %v4220
      %v5552 = vpop.f32.mrb[0].mxu0
      %v5553 = vadd.f32 %v5392, %v5552
      %v5554 = vpop.f32.mrb[0].mxu0
      %v5555 = vpop.f32.mrb[0].mxu0
      %v5556 = vadd.f32 %v5395, %v5555
      %v5557 = vpop.f32.mrb[0].mxu0
      %5558 = vmatprep.mubr.bf16.mxu0 0
      %5559 = vmatmul.mubr.bf16.gmra.mrb[0].mxu0 %v4226
      %v5560 = vpop.f32.mrb[0].mxu0
      %v5561 = vadd.f32 %v5400, %v5560
      %v5562 = vpop.f32.mrb[0].mxu0
      %v5563 = vpop.f32.mrb[0].mxu0
      %v5564 = vadd.f32 %v5403, %v5563
      %v5565 = vpop.f32.mrb[0].mxu0
      %5566 = vmatprep.mubr.bf16.mxu0 0
      %5567 = vmatmul.mubr.bf16.gmra.mrb[0].mxu0 %v4235
      %v5568 = vpop.f32.mrb[0].mxu0
      %v5569 = vadd.f32 %v5408, %v5568
      %v5570 = vpop.f32.mrb[0].mxu0
      %v5571 = vpop.f32.mrb[0].mxu0
      %v5572 = vadd.f32 %v5411, %v5571
      %v5573 = vpop.f32.mrb[0].mxu0
      %5574 = vmatprep.mubr.bf16.mxu0 0
      %5575 = vmatmul.mubr.bf16.gmra.mrb[0].mxu0 %v4241
      %v5576 = vpop.f32.mrb[0].mxu0
      %v5577 = vadd.f32 %v5416, %v5576
      %v5578 = vpop.f32.mrb[0].mxu0
      %v5579 = vpop.f32.mrb[0].mxu0
      %v5580 = vadd.f32 %v5419, %v5579
      %v5581 = vpop.f32.mrb[0].mxu0
      %5582 = vmatprep.mubr.bf16.mxu0 0
      %5583 = vmatmul.mubr.bf16.gmra.mrb[0].mxu0 %v4247
      %v5584 = vpop.f32.mrb[0].mxu0
      %v5585 = vadd.f32 %v5424, %v5584
      %v5586 = vpop.f32.mrb[0].mxu0
      %v5587 = vpop.f32.mrb[0].mxu0
      %v5588 = vadd.f32 %v5427, %v5587
      %v5589 = vpop.f32.mrb[0].mxu0
      %5590 = vmatprep.mubr.bf16.mxu0 0
      %5591 = vmatmul.mubr.bf16.gmra.mrb[0].mxu0 %v4253
      %v5592 = vpop.f32.mrb[0].mxu0
      %v5593 = vadd.f32 %v5432, %v5592
      %v5594 = vpop.f32.mrb[0].mxu0
      %v5595 = vpop.f32.mrb[0].mxu0
      %v5596 = vadd.f32 %v5435, %v5595
      %v5597 = vpop.f32.mrb[0].mxu0
      %5598 = vdwg.mxu0
      %v5599 = vadd.f32 %v5473, %v5476
      %v5600 = vadd.f32 %v5599, %v5481
      %v5601 = vadd.f32 %v5600, %v5484
      %v5602 = vadd.f32 %v5601, %v5489
      %v5603 = vadd.f32 %v5602, %v5492
      %v5604 = vadd.f32 %v5603, %v5497
      %v5605 = vadd.f32 %v5604, %v5500
      %v5606 = vrot.slane %v5605, 4
      %v5607 = vadd.f32 %v5605, %v5606
      %v5608 = vrot.slane %v5607, 2
      %v5609 = vadd.f32 %v5607, %v5608
      %v5610 = vrot.slane %v5609, 1
      %v5611 = vadd.f32 %v5609, %v5610
      %v5612 = vadd.f32 %v5505, %v5508
      %v5613 = vadd.f32 %v5612, %v5513
      %v5614 = vadd.f32 %v5613, %v5516
      %v5615 = vadd.f32 %v5614, %v5521
      %v5616 = vadd.f32 %v5615, %v5524
      %v5617 = vadd.f32 %v5616, %v5529
      %v5618 = vadd.f32 %v5617, %v5532
      %v5619 = vrot.slane %v5618, 4
      %v5620 = vadd.f32 %v5618, %v5619
      %v5621 = vrot.slane %v5620, 2
      %v5622 = vadd.f32 %v5620, %v5621
      %v5623 = vrot.slane %v5622, 1
      %v5624 = vadd.f32 %v5622, %v5623
      %v5625 = vadd.f32 %v5537, %v5540
      %v5626 = vadd.f32 %v5625, %v5545
      %v5627 = vadd.f32 %v5626, %v5548
      %v5628 = vadd.f32 %v5627, %v5553
      %v5629 = vadd.f32 %v5628, %v5556
      %v5630 = vadd.f32 %v5629, %v5561
      %v5631 = vadd.f32 %v5630, %v5564
      %v5632 = vrot.slane %v5631, 4
      %v5633 = vadd.f32 %v5631, %v5632
      %v5634 = vrot.slane %v5633, 2
      %v5635 = vadd.f32 %v5633, %v5634
      %v5636 = vrot.slane %v5635, 1
      %v5637 = vadd.f32 %v5635, %v5636
      %v5638 = vadd.f32 %v5569, %v5572
      %v5639 = vadd.f32 %v5638, %v5577
      %v5640 = vadd.f32 %v5639, %v5580
      %v5641 = vadd.f32 %v5640, %v5585
      %v5642 = vadd.f32 %v5641, %v5588
      %v5643 = vadd.f32 %v5642, %v5593
      %v5644 = vadd.f32 %v5643, %v5596
      %v5645 = vrot.slane %v5644, 4
      %v5646 = vadd.f32 %v5644, %v5645
      %v5647 = vrot.slane %v5646, 2
      %v5648 = vadd.f32 %v5646, %v5647
      %v5649 = vrot.slane %v5648, 1
      %v5650 = vadd.f32 %v5648, %v5649
      %v5651 = vmul.f32 %v5473, %v5473
      %v5652 = vmul.f32 %v5476, %v5476
      %v5653 = vmul.f32 %v5481, %v5481
      %v5654 = vmul.f32 %v5484, %v5484
      %v5655 = vmul.f32 %v5489, %v5489
      %v5656 = vmul.f32 %v5492, %v5492
      %v5657 = vmul.f32 %v5497, %v5497
      %v5658 = vmul.f32 %v5500, %v5500
      %v5659 = vmul.f32 %v5505, %v5505
      %v5660 = vmul.f32 %v5508, %v5508
      %v5661 = vmul.f32 %v5513, %v5513
      %v5662 = vmul.f32 %v5516, %v5516
      %v5663 = vmul.f32 %v5521, %v5521
      %v5664 = vmul.f32 %v5524, %v5524
      %v5665 = vmul.f32 %v5529, %v5529
      %v5666 = vmul.f32 %v5532, %v5532
      %v5667 = vmul.f32 %v5537, %v5537
      %v5668 = vmul.f32 %v5540, %v5540
      %v5669 = vmul.f32 %v5545, %v5545
      %v5670 = vmul.f32 %v5548, %v5548
      %v5671 = vmul.f32 %v5553, %v5553
      %v5672 = vmul.f32 %v5556, %v5556
      %v5673 = vmul.f32 %v5561, %v5561
      %v5674 = vmul.f32 %v5564, %v5564
      %v5675 = vmul.f32 %v5569, %v5569
      %v5676 = vmul.f32 %v5572, %v5572
      %v5677 = vmul.f32 %v5577, %v5577
      %v5678 = vmul.f32 %v5580, %v5580
      %v5679 = vmul.f32 %v5585, %v5585
      %v5680 = vmul.f32 %v5588, %v5588
      %v5681 = vmul.f32 %v5593, %v5593
      %v5682 = vmul.f32 %v5596, %v5596
      %v5683 = vadd.f32 %v5651, %v5652
      %v5684 = vadd.f32 %v5683, %v5653
      %v5685 = vadd.f32 %v5684, %v5654
      %v5686 = vadd.f32 %v5685, %v5655
      %v5687 = vadd.f32 %v5686, %v5656
      %v5688 = vadd.f32 %v5687, %v5657
      %v5689 = vadd.f32 %v5688, %v5658
      %v5690 = vrot.slane %v5689, 4
      %v5691 = vadd.f32 %v5689, %v5690
      %v5692 = vrot.slane %v5691, 2
      %v5693 = vadd.f32 %v5691, %v5692
      %v5694 = vrot.slane %v5693, 1
      %v5695 = vadd.f32 %v5693, %v5694
      %v5696 = vadd.f32 %v5659, %v5660
      %v5697 = vadd.f32 %v5696, %v5661
      %v5698 = vadd.f32 %v5697, %v5662
      %v5699 = vadd.f32 %v5698, %v5663
      %v5700 = vadd.f32 %v5699, %v5664
      %v5701 = vadd.f32 %v5700, %v5665
      %v5702 = vadd.f32 %v5701, %v5666
      %v5703 = vrot.slane %v5702, 4
      %v5704 = vadd.f32 %v5702, %v5703
      %v5705 = vrot.slane %v5704, 2
      %v5706 = vadd.f32 %v5704, %v5705
      %v5707 = vrot.slane %v5706, 1
      %v5708 = vadd.f32 %v5706, %v5707
      %v5709 = vadd.f32 %v5667, %v5668
      %v5710 = vadd.f32 %v5709, %v5669
      %v5711 = vadd.f32 %v5710, %v5670
      %v5712 = vadd.f32 %v5711, %v5671
      %v5713 = vadd.f32 %v5712, %v5672
      %v5714 = vadd.f32 %v5713, %v5673
      %v5715 = vadd.f32 %v5714, %v5674
      %v5716 = vrot.slane %v5715, 4
      %v5717 = vadd.f32 %v5715, %v5716
      %v5718 = vrot.slane %v5717, 2
      %v5719 = vadd.f32 %v5717, %v5718
      %v5720 = vrot.slane %v5719, 1
      %v5721 = vadd.f32 %v5719, %v5720
      %v5722 = vadd.f32 %v5675, %v5676
      %v5723 = vadd.f32 %v5722, %v5677
      %v5724 = vadd.f32 %v5723, %v5678
      %v5725 = vadd.f32 %v5724, %v5679
      %v5726 = vadd.f32 %v5725, %v5680
      %v5727 = vadd.f32 %v5726, %v5681
      %v5728 = vadd.f32 %v5727, %v5682
      %v5729 = vrot.slane %v5728, 4
      %v5730 = vadd.f32 %v5728, %v5729
      %v5731 = vrot.slane %v5730, 2
      %v5732 = vadd.f32 %v5730, %v5731
      %v5733 = vrot.slane %v5732, 1
      %v5734 = vadd.f32 %v5732, %v5733
      %v5739 = vsel %vm2878, %v5624, %v5611
      %v5740 = vsel %vm2880, %v5637, %v5739
      %v5741 = vsel %vm2882, %v5650, %v5740
      %v5747 = vsel %vm2889, %v5708, %v5695
      %v5748 = vsel %vm2891, %v5721, %v5747
      %v5749 = vsel %vm2893, %v5734, %v5748
      %v5751 = vsel %vm2896, %v5741, %v5749
      %5752 = vmatprep.subr.mxu0 0.0
      %5753 = vmatpush1.msra.mxu0 %v430
      %5754 = vmatprep.subr.mxu0 0.0
      %5755 = vmatpush1.msra.mxu0 %v431
      %5756 = vmatprep.subr.mxu0 0.0
      %5757 = vmatpush1.msra.mxu0 %v432
      %5758 = vmatprep.subr.mxu0 0.0
      %5759 = vmatpush1.msra.mxu0 %v433
      %5760 = vmatprep.subr.mxu0 0.0
      %5761 = vmatpush1.msra.mxu0 %v434
      %5762 = vmatprep.subr.mxu0 0.0
      %5763 = vmatpush1.msra.mxu0 %v435
      %5764 = vmatprep.subr.mxu0 0.0
      %5765 = vmatpush1.msra.mxu0 %v436
      %5766 = vmatprep.subr.mxu0 0.0
      %5767 = vmatpush1.msra.mxu0 %v437
      %5768 = vmatprep.subr.mxu0 0.0
      %5769 = vmatpush1.msra.mxu0 %v438
      %5770 = vmatprep.subr.mxu0 0.0
      %5771 = vmatpush1.msra.mxu0 %v439
      %5772 = vmatprep.subr.mxu0 0.0
      %5773 = vmatpush1.msra.mxu0 %v440
      %5774 = vmatprep.subr.mxu0 0.0
      %5775 = vmatpush1.msra.mxu0 %v441
      %5776 = vmatprep.subr.mxu0 0.0
      %5777 = vmatpush1.msra.mxu0 %v442
      %5778 = vmatprep.subr.mxu0 0.0
      %5779 = vmatpush1.msra.mxu0 %v443
      %5780 = vmatprep.subr.mxu0 0.0
      %5781 = vmatpush1.msra.mxu0 %v444
      %5782 = vmatprep.subr.mxu0 0.0
      %5783 = vmatpush1.msra.mxu0 %v445
      %5784 = vmatprep.subr.mxu0 0.0
      %5785 = vmatpush1.msra.mxu0 0.0
      %5786 = vmatprep.subr.mxu0 0.0
      %5787 = vmatpush1.msra.mxu0 0.0
      %5788 = vmatprep.subr.mxu0 0.0
      %5789 = vmatpush1.msra.mxu0 0.0
      %5790 = vmatprep.subr.mxu0 0.0
      %5791 = vmatpush1.msra.mxu0 0.0
      %5792 = vmatprep.subr.mxu0 0.0
      %5793 = vmatpush1.msra.mxu0 0.0
      %5794 = vmatprep.subr.mxu0 0.0
      %5795 = vmatpush1.msra.mxu0 0.0
      %5796 = vmatprep.subr.mxu0 0.0
      %5797 = vmatpush1.msra.mxu0 0.0
      %5798 = vmatprep.subr.mxu0 0.0
      %5799 = vmatpush1.msra.mxu0 0.0
      %5800 = vmatprep.subr.mxu0 0.0
      %5801 = vmatpush1.msra.mxu0 0.0
      %5802 = vmatprep.subr.mxu0 0.0
      %5803 = vmatpush1.msra.mxu0 0.0
      %5804 = vmatprep.subr.mxu0 0.0
      %5805 = vmatpush1.msra.mxu0 0.0
      %5806 = vmatprep.subr.mxu0 0.0
      %5807 = vmatpush1.msra.mxu0 0.0
      %5808 = vmatprep.subr.mxu0 0.0
      %5809 = vmatpush1.msra.mxu0 0.0
      %5810 = vmatprep.subr.mxu0 0.0
      %5811 = vmatpush1.msra.mxu0 0.0
      %5812 = vmatprep.subr.mxu0 0.0
      %5813 = vmatpush1.msra.mxu0 0.0
      %5814 = vmatprep.subr.mxu0 0.0
      %5815 = vmatpush1.msra.mxu0 0.0
      %5816 = vmatprep.mubr.f32.mxu0 0.0
      %5817 = vmatmul.mubr.f32.gmra.mrb[0].mxu0 %v5751
      %v5818 = vpop.f32.mrb[0].mxu0
      %v5819 = vadd.f32 0.0, %v5818
      %v5820 = vpop.f32.mrb[0].mxu0
      %5821 = vdwg.mxu0
      %v5822 = vmul.f32 %v5819, 0.0078125
      %v5823 = vmul.f32 %v5822, %v5822
      %v5825 = vrot.slane %v5823, 4
      %v5827 = vsub.f32 %v5822, %v5825
      %v5828 = vadd.f32 %v5827, 1e-05
      %v5829 = vrsqrt.pop %v5828
      %v5830 = vsel %vm2896, %v5822, %v5829
      %v5832 = vsel %vm1313, %v5830, 0
      %5834 = vmatprep.subr.mxu0 0.0
      %5835 = vmatpush1.msra.mxu0 %v446
      %5836 = vmatprep.subr.mxu0 0.0
      %5837 = vmatpush1.msra.mxu0 %v447
      %5838 = vmatprep.subr.mxu0 0.0
      %5839 = vmatpush1.msra.mxu0 %v448
      %5840 = vmatprep.subr.mxu0 0.0
      %5841 = vmatpush1.msra.mxu0 %v449
      %5842 = vmatprep.subr.mxu0 0.0
      %5843 = vmatpush1.msra.mxu0 %v450
      %5844 = vmatprep.subr.mxu0 0.0
      %5845 = vmatpush1.msra.mxu0 %v451
      %5846 = vmatprep.subr.mxu0 0.0
      %5847 = vmatpush1.msra.mxu0 %v452
      %5848 = vmatprep.subr.mxu0 0.0
      %5849 = vmatpush1.msra.mxu0 %v453
      %5850 = vmatprep.subr.mxu0 0.0
      %5851 = vmatpush1.msra.mxu0 0.0
      %5852 = vmatprep.subr.mxu0 0.0
      %5853 = vmatpush1.msra.mxu0 0.0
      %5854 = vmatprep.subr.mxu0 0.0
      %5855 = vmatpush1.msra.mxu0 0.0
      %5856 = vmatprep.subr.mxu0 0.0
      %5857 = vmatpush1.msra.mxu0 0.0
      %5858 = vmatprep.subr.mxu0 0.0
      %5859 = vmatpush1.msra.mxu0 0.0
      %5860 = vmatprep.subr.mxu0 0.0
      %5861 = vmatpush1.msra.mxu0 0.0
      %5862 = vmatprep.subr.mxu0 0.0
      %5863 = vmatpush1.msra.mxu0 0.0
      %5864 = vmatprep.subr.mxu0 0.0
      %5865 = vmatpush1.msra.mxu0 0.0
      %5866 = vmatprep.subr.mxu0 0.0
      %5867 = vmatpush1.msra.mxu0 0.0
      %5868 = vmatprep.subr.mxu0 0.0
      %5869 = vmatpush1.msra.mxu0 0.0
      %5870 = vmatprep.subr.mxu0 0.0
      %5871 = vmatpush1.msra.mxu0 0.0
      %5872 = vmatprep.subr.mxu0 0.0
      %5873 = vmatpush1.msra.mxu0 0.0
      %5874 = vmatprep.subr.mxu0 0.0
      %5875 = vmatpush1.msra.mxu0 0.0
      %5876 = vmatprep.subr.mxu0 0.0
      %5877 = vmatpush1.msra.mxu0 0.0
      %5878 = vmatprep.subr.mxu0 0.0
      %5879 = vmatpush1.msra.mxu0 0.0
      %5880 = vmatprep.subr.mxu0 0.0
      %5881 = vmatpush1.msra.mxu0 0.0
      %5882 = vmatprep.subr.mxu0 0.0
      %5883 = vmatpush1.msra.mxu0 0.0
      %5884 = vmatprep.subr.mxu0 0.0
      %5885 = vmatpush1.msra.mxu0 0.0
      %5886 = vmatprep.subr.mxu0 0.0
      %5887 = vmatpush1.msra.mxu0 0.0
      %5888 = vmatprep.subr.mxu0 0.0
      %5889 = vmatpush1.msra.mxu0 0.0
      %5890 = vmatprep.subr.mxu0 0.0
      %5891 = vmatpush1.msra.mxu0 0.0
      %5892 = vmatprep.subr.mxu0 0.0
      %5893 = vmatpush1.msra.mxu0 0.0
      %5894 = vmatprep.subr.mxu0 0.0
      %5895 = vmatpush1.msra.mxu0 0.0
      %5896 = vmatprep.subr.mxu0 0.0
      %5897 = vmatpush1.msra.mxu0 0.0
      %5898 = vmatprep.mubr.f32.mxu0 0.0
      %5899 = vmatmul.mubr.f32.gmra.mrb[0].mxu0 %v5832
      %v5900 = vpop.f32.mrb[0].mxu0
      %v5901 = vadd.f32 0.0, %v5900
      %v5902 = vpop.f32.mrb[0].mxu0
      %5903 = vdwg.mxu0
      %s5904 = scalar_lea.vmem %s5, 1
      %v5905 = vld [vmem:[%s5904] sm:$0x1]
      %v5907 = vlaneseq
      %v5908 = vshrl.u32 %v5907, 7
      %v5909 = vsub.s32 0, %v5908
      %v5910 = vrot.slane %v5905, %v5909
      %v5912 = vmul.f32 %v5901, %v5910
      %s5913 = scalar_lea.vmem %s6, 1
      %v5914 = vld [vmem:[%s5913] sm:$0x1]
      %v5916 = vrot.slane %v5912, 4
      %v5918 = vmul.f32 %v5901, %v5916
      %v5920 = vlaneseq
      %v5921 = vshrl.u32 %v5920, 7
      %v5922 = vsub.s32 0, %v5921
      %v5923 = vrot.slane %v5914, %v5922
      %v5925 = vsub.f32 %v5923, %v5918
      %v5926 = vcombine.high %v5912, %v5912
      %v5928 = vunpack.c.l.s4 1966171168
      %v5929 = vunpack.c.0.s8 %v5928
      %v5930 = vlaneseq
      %v5931 = vshrl.u32 %v5930, 7
      %v5932 = vsub.s32 %v5929, %v5931
      %v5933 = vrot.slane %v5926, %v5932
      %v5934 = vcombine.high %v5933, %v5933
      %v5936 = vunpack.c.l.s4 1966171168
      %v5937 = vunpack.c.0.s8 %v5936
      %v5938 = vlaneseq
      %v5939 = vshrl.u32 %v5938, 7
      %v5940 = vsub.s32 %v5937, %v5939
      %v5941 = vrot.slane %v5933, %v5940
      %v5943 = vunpack.c.l.s4 1966171168
      %v5944 = vunpack.c.0.s8 %v5943
      %v5945 = vlaneseq
      %v5946 = vshrl.u32 %v5945, 7
      %v5947 = vsub.s32 %v5944, %v5946
      %v5948 = vrot.slane %v5934, %v5947
      %v5949 = vcombine.high %v5941, %v5941
      %v5950 = vcombine.high %v5948, %v5948
      %v5951 = vlaneseq
      %v5952 = vshrl.u32 %v5951, 7
      %v5953 = vsub.s32 0, %v5952
      %v5954 = vrot.slane %v5941, %v5953
      %v5955 = vlaneseq
      %v5956 = vshrl.u32 %v5955, 7
      %v5957 = vsub.s32 0, %v5956
      %v5958 = vrot.slane %v5948, %v5957
      %v5959 = vlaneseq
      %v5960 = vshrl.u32 %v5959, 7
      %v5961 = vsub.s32 0, %v5960
      %v5962 = vrot.slane %v5949, %v5961
      %v5963 = vlaneseq
      %v5964 = vshrl.u32 %v5963, 7
      %v5965 = vsub.s32 0, %v5964
      %v5966 = vrot.slane %v5950, %v5965
      %v5971 = vmul.f32 %v5473, %v5954
      %v5972 = vmul.f32 %v5476, %v5954
      %v5973 = vmul.f32 %v5481, %v5954
      %v5974 = vmul.f32 %v5484, %v5954
      %v5975 = vmul.f32 %v5489, %v5954
      %v5976 = vmul.f32 %v5492, %v5954
      %v5977 = vmul.f32 %v5497, %v5954
      %v5978 = vmul.f32 %v5500, %v5954
      %v5979 = vmul.f32 %v5505, %v5958
      %v5980 = vmul.f32 %v5508, %v5958
      %v5981 = vmul.f32 %v5513, %v5958
      %v5982 = vmul.f32 %v5516, %v5958
      %v5983 = vmul.f32 %v5521, %v5958
      %v5984 = vmul.f32 %v5524, %v5958
      %v5985 = vmul.f32 %v5529, %v5958
      %v5986 = vmul.f32 %v5532, %v5958
      %v5987 = vmul.f32 %v5537, %v5962
      %v5988 = vmul.f32 %v5540, %v5962
      %v5989 = vmul.f32 %v5545, %v5962
      %v5990 = vmul.f32 %v5548, %v5962
      %v5991 = vmul.f32 %v5553, %v5962
      %v5992 = vmul.f32 %v5556, %v5962
      %v5993 = vmul.f32 %v5561, %v5962
      %v5994 = vmul.f32 %v5564, %v5962
      %v5995 = vmul.f32 %v5569, %v5966
      %v5996 = vmul.f32 %v5572, %v5966
      %v5997 = vmul.f32 %v5577, %v5966
      %v5998 = vmul.f32 %v5580, %v5966
      %v5999 = vmul.f32 %v5585, %v5966
      %v6000 = vmul.f32 %v5588, %v5966
      %v6001 = vmul.f32 %v5593, %v5966
      %v6002 = vmul.f32 %v5596, %v5966
      %v6005 = vunpack.c.l.s4 1966171168
      %v6006 = vunpack.c.0.s8 %v6005
      %v6007 = vlaneseq
      %v6008 = vshrl.u32 %v6007, 7
      %v6009 = vsub.s32 %v6006, %v6008
      %v6010 = vrot.slane %v5925, %v6009
      %v6011 = vcombine.high %v6010, %v6010
      %v6013 = vunpack.c.l.s4 1966171168
      %v6014 = vunpack.c.0.s8 %v6013
      %v6015 = vlaneseq
      %v6016 = vshrl.u32 %v6015, 7
      %v6017 = vsub.s32 %v6014, %v6016
      %v6018 = vrot.slane %v6010, %v6017
      %v6020 = vunpack.c.l.s4 1966171168
      %v6021 = vunpack.c.0.s8 %v6020
      %v6022 = vlaneseq
      %v6023 = vshrl.u32 %v6022, 7
      %v6024 = vsub.s32 %v6021, %v6023
      %v6025 = vrot.slane %v6011, %v6024
      %v6026 = vcombine.high %v6018, %v6018
      %v6027 = vcombine.high %v6025, %v6025
      %v6028 = vlaneseq
      %v6029 = vshrl.u32 %v6028, 7
      %v6030 = vsub.s32 0, %v6029
      %v6031 = vrot.slane %v6018, %v6030
      %v6032 = vlaneseq
      %v6033 = vshrl.u32 %v6032, 7
      %v6034 = vsub.s32 0, %v6033
      %v6035 = vrot.slane %v6025, %v6034
      %v6036 = vlaneseq
      %v6037 = vshrl.u32 %v6036, 7
      %v6038 = vsub.s32 0, %v6037
      %v6039 = vrot.slane %v6026, %v6038
      %v6040 = vlaneseq
      %v6041 = vshrl.u32 %v6040, 7
      %v6042 = vsub.s32 0, %v6041
      %v6043 = vrot.slane %v6027, %v6042
      %v6048 = vadd.f32 %v5971, %v6031
      %v6049 = vadd.f32 %v5972, %v6031
      %v6050 = vadd.f32 %v5973, %v6031
      %v6051 = vadd.f32 %v5974, %v6031
      %v6052 = vadd.f32 %v5975, %v6031
      %v6053 = vadd.f32 %v5976, %v6031
      %v6054 = vadd.f32 %v5977, %v6031
      %v6055 = vadd.f32 %v5978, %v6031
      %v6056 = vadd.f32 %v5979, %v6035
      %v6057 = vadd.f32 %v5980, %v6035
      %v6058 = vadd.f32 %v5981, %v6035
      %v6059 = vadd.f32 %v5982, %v6035
      %v6060 = vadd.f32 %v5983, %v6035
      %v6061 = vadd.f32 %v5984, %v6035
      %v6062 = vadd.f32 %v5985, %v6035
      %v6063 = vadd.f32 %v5986, %v6035
      %v6064 = vadd.f32 %v5987, %v6039
      %v6065 = vadd.f32 %v5988, %v6039
      %v6066 = vadd.f32 %v5989, %v6039
      %v6067 = vadd.f32 %v5990, %v6039
      %v6068 = vadd.f32 %v5991, %v6039
      %v6069 = vadd.f32 %v5992, %v6039
      %v6070 = vadd.f32 %v5993, %v6039
      %v6071 = vadd.f32 %v5994, %v6039
      %v6072 = vadd.f32 %v5995, %v6043
      %v6073 = vadd.f32 %v5996, %v6043
      %v6074 = vadd.f32 %v5997, %v6043
      %v6075 = vadd.f32 %v5998, %v6043
      %v6076 = vadd.f32 %v5999, %v6043
      %v6077 = vadd.f32 %v6000, %v6043
      %v6078 = vadd.f32 %v6001, %v6043
      %v6079 = vadd.f32 %v6002, %v6043
      %v6080 = vmax.f32 %v6048, 0.0
      %v6081 = vmax.f32 %v6049, 0.0
      %v6082 = vmax.f32 %v6050, 0.0
      %v6083 = vmax.f32 %v6051, 0.0
      %v6084 = vmax.f32 %v6052, 0.0
      %v6085 = vmax.f32 %v6053, 0.0
      %v6086 = vmax.f32 %v6054, 0.0
      %v6087 = vmax.f32 %v6055, 0.0
      %v6088 = vmax.f32 %v6056, 0.0
      %v6089 = vmax.f32 %v6057, 0.0
      %v6090 = vmax.f32 %v6058, 0.0
      %v6091 = vmax.f32 %v6059, 0.0
      %v6092 = vmax.f32 %v6060, 0.0
      %v6093 = vmax.f32 %v6061, 0.0
      %v6094 = vmax.f32 %v6062, 0.0
      %v6095 = vmax.f32 %v6063, 0.0
      %v6096 = vmax.f32 %v6064, 0.0
      %v6097 = vmax.f32 %v6065, 0.0
      %v6098 = vmax.f32 %v6066, 0.0
      %v6099 = vmax.f32 %v6067, 0.0
      %v6100 = vmax.f32 %v6068, 0.0
      %v6101 = vmax.f32 %v6069, 0.0
      %v6102 = vmax.f32 %v6070, 0.0
      %v6103 = vmax.f32 %v6071, 0.0
      %v6104 = vmax.f32 %v6072, 0.0
      %v6105 = vmax.f32 %v6073, 0.0
      %v6106 = vmax.f32 %v6074, 0.0
      %v6107 = vmax.f32 %v6075, 0.0
      %v6108 = vmax.f32 %v6076, 0.0
      %v6109 = vmax.f32 %v6077, 0.0
      %v6110 = vmax.f32 %v6078, 0.0
      %v6111 = vmax.f32 %v6079, 0.0
      %v6112 = vadd.f32 %v6080, %v6081
      %v6113 = vadd.f32 %v6112, %v6082
      %v6114 = vadd.f32 %v6113, %v6083
      %v6115 = vadd.f32 %v6114, %v6084
      %v6116 = vadd.f32 %v6115, %v6085
      %v6117 = vadd.f32 %v6116, %v6086
      %v6118 = vadd.f32 %v6117, %v6087
      %v6119 = vrot.slane %v6118, 4
      %v6120 = vadd.f32 %v6118, %v6119
      %v6121 = vrot.slane %v6120, 2
      %v6122 = vadd.f32 %v6120, %v6121
      %v6123 = vrot.slane %v6122, 1
      %v6124 = vadd.f32 %v6122, %v6123
      %v6125 = vadd.f32 %v6088, %v6089
      %v6126 = vadd.f32 %v6125, %v6090
      %v6127 = vadd.f32 %v6126, %v6091
      %v6128 = vadd.f32 %v6127, %v6092
      %v6129 = vadd.f32 %v6128, %v6093
      %v6130 = vadd.f32 %v6129, %v6094
      %v6131 = vadd.f32 %v6130, %v6095
      %v6132 = vrot.slane %v6131, 4
      %v6133 = vadd.f32 %v6131, %v6132
      %v6134 = vrot.slane %v6133, 2
      %v6135 = vadd.f32 %v6133, %v6134
      %v6136 = vrot.slane %v6135, 1
      %v6137 = vadd.f32 %v6135, %v6136
      %v6138 = vadd.f32 %v6096, %v6097
      %v6139 = vadd.f32 %v6138, %v6098
      %v6140 = vadd.f32 %v6139, %v6099
      %v6141 = vadd.f32 %v6140, %v6100
      %v6142 = vadd.f32 %v6141, %v6101
      %v6143 = vadd.f32 %v6142, %v6102
      %v6144 = vadd.f32 %v6143, %v6103
      %v6145 = vrot.slane %v6144, 4
      %v6146 = vadd.f32 %v6144, %v6145
      %v6147 = vrot.slane %v6146, 2
      %v6148 = vadd.f32 %v6146, %v6147
      %v6149 = vrot.slane %v6148, 1
      %v6150 = vadd.f32 %v6148, %v6149
      %v6151 = vadd.f32 %v6104, %v6105
      %v6152 = vadd.f32 %v6151, %v6106
      %v6153 = vadd.f32 %v6152, %v6107
      %v6154 = vadd.f32 %v6153, %v6108
      %v6155 = vadd.f32 %v6154, %v6109
      %v6156 = vadd.f32 %v6155, %v6110
      %v6157 = vadd.f32 %v6156, %v6111
      %v6158 = vrot.slane %v6157, 4
      %v6159 = vadd.f32 %v6157, %v6158
      %v6160 = vrot.slane %v6159, 2
      %v6161 = vadd.f32 %v6159, %v6160
      %v6162 = vrot.slane %v6161, 1
      %v6163 = vadd.f32 %v6161, %v6162
      %v6164 = vrcp.pop 64.0
      %v6165 = vmul.f32 %v6124, %v6164
      %v6166 = vmul.f32 %v6137, %v6164
      %v6167 = vmul.f32 %v6150, %v6164
      %v6168 = vmul.f32 %v6163, %v6164
      %v6169 = vpack.c.bf16 %v6165, %v6165
      %v6170 = vpack.c.bf16 %v6166, %v6166
      %v6171 = vpack.c.bf16 %v6167, %v6167
      %v6172 = vpack.c.bf16 %v6168, %v6168
      %v6173 = vld [vmem:[%s9] sm:$0xf]
      %v6174 = vld [vmem:[%s9 + $0x4] sm:$0xf]
      %v6175 = vld [vmem:[%s9 + $0x8] sm:$0xf]
      %v6176 = vld [vmem:[%s9 + $0xc] sm:$0xf]
      %v6177 = vld [vmem:[%s9 + $0x10] sm:$0xf]
      %v6178 = vld [vmem:[%s9 + $0x14] sm:$0xf]
      %v6179 = vld [vmem:[%s9 + $0x18] sm:$0xf]
      %v6180 = vld [vmem:[%s9 + $0x1c] sm:$0xf]
      %v6181 = vld [vmem:[%s9 + $0x20] sm:$0xf]
      %v6182 = vld [vmem:[%s9 + $0x24] sm:$0xf]
      %v6183 = vld [vmem:[%s9 + $0x28] sm:$0xf]
      %v6184 = vld [vmem:[%s9 + $0x2c] sm:$0xf]
      %v6185 = vld [vmem:[%s9 + $0x30] sm:$0xf]
      %v6186 = vld [vmem:[%s9 + $0x34] sm:$0xf]
      %v6187 = vld [vmem:[%s9 + $0x38] sm:$0xf]
      %v6188 = vld [vmem:[%s9 + $0x3c] sm:$0xf]
      %v6189 = vld [vmem:[%s10] sm:$0x1]
      %v6191 = vlaneseq
      %v6192 = vshrl.u32 %v6191, 7
      %v6193 = vsub.s32 0, %v6192
      %v6194 = vrot.slane %v6189, %v6193
      %v6200 = vunpack.c.l.b16 %v6169
      %v6201 = vunpack.c.l.b16 %v6170
      %v6202 = vunpack.c.l.b16 %v6171
      %v6203 = vunpack.c.l.b16 %v6172
      %v6204 = vsel %vm2878, %v6201, %v6200
      %v6205 = vsel %vm2880, %v6202, %v6204
      %v6206 = vsel %vm2882, %v6203, %v6205
      %v6207 = vpack.c.b16 %v6206, %v6206
      %v6225 = vunpack.c.l.b16 %v6173
      %v6226 = vunpack.c.l.b16 %v6174
      %v6227 = vunpack.c.l.b16 %v6175
      %v6228 = vunpack.c.l.b16 %v6176
      %v6229 = vunpack.c.l.b16 %v6177
      %v6230 = vunpack.c.l.b16 %v6178
      %v6231 = vunpack.c.l.b16 %v6179
      %v6232 = vunpack.c.l.b16 %v6180
      %v6233 = vunpack.c.l.b16 %v6181
      %v6234 = vunpack.c.l.b16 %v6182
      %v6235 = vunpack.c.l.b16 %v6183
      %v6236 = vunpack.c.l.b16 %v6184
      %v6237 = vunpack.c.l.b16 %v6185
      %v6238 = vunpack.c.l.b16 %v6186
      %v6239 = vunpack.c.l.b16 %v6187
      %v6240 = vunpack.c.l.b16 %v6188
      %v6241 = vpack.c.b16 %v6226, %v6225
      %v6242 = vpack.c.b16 %v6228, %v6227
      %v6243 = vpack.c.b16 %v6230, %v6229
      %v6244 = vpack.c.b16 %v6232, %v6231
      %v6245 = vpack.c.b16 %v6234, %v6233
      %v6246 = vpack.c.b16 %v6236, %v6235
      %v6247 = vpack.c.b16 %v6238, %v6237
      %v6248 = vpack.c.b16 %v6240, %v6239
      %6257 = vmatprep.subr.bf16.mxu0 0
      %6258 = vmatpush1.bf16.msra.mxu0 %v6241
      %6259 = vmatprep.subr.bf16.mxu0 0
      %6260 = vmatpush1.bf16.msra.mxu0 %v6242
      %6261 = vmatprep.subr.bf16.mxu0 0
      %6262 = vmatpush1.bf16.msra.mxu0 %v6243
      %6263 = vmatprep.subr.bf16.mxu0 0
      %6264 = vmatpush1.bf16.msra.mxu0 %v6244
      %6265 = vmatprep.subr.bf16.mxu0 0
      %6266 = vmatpush1.bf16.msra.mxu0 %v6245
      %6267 = vmatprep.subr.bf16.mxu0 0
      %6268 = vmatpush1.bf16.msra.mxu0 %v6246
      %6269 = vmatprep.subr.bf16.mxu0 0
      %6270 = vmatpush1.bf16.msra.mxu0 %v6247
      %6271 = vmatprep.subr.bf16.mxu0 0
      %6272 = vmatpush1.bf16.msra.mxu0 %v6248
      %6273 = vmatprep.subr.bf16.mxu0 0
      %6274 = vmatpush1.bf16.msra.mxu0 0
      %6275 = vmatprep.subr.bf16.mxu0 0
      %6276 = vmatpush1.bf16.msra.mxu0 0
      %6277 = vmatprep.subr.bf16.mxu0 0
      %6278 = vmatpush1.bf16.msra.mxu0 0
      %6279 = vmatprep.subr.bf16.mxu0 0
      %6280 = vmatpush1.bf16.msra.mxu0 0
      %6281 = vmatprep.subr.bf16.mxu0 0
      %6282 = vmatpush1.bf16.msra.mxu0 0
      %6283 = vmatprep.subr.bf16.mxu0 0
      %6284 = vmatpush1.bf16.msra.mxu0 0
      %6285 = vmatprep.subr.bf16.mxu0 0
      %6286 = vmatpush1.bf16.msra.mxu0 0
      %6287 = vmatprep.subr.bf16.mxu0 0
      %6288 = vmatpush1.bf16.msra.mxu0 0
      %6289 = vmatprep.mubr.bf16.mxu0 0
      %6290 = vmatmul.mubr.bf16.gmra.mrb[0].mxu0 %v6207
      %v6291 = vpop.f32.mrb[0].mxu0
      %v6292 = vadd.f32 %v6194, %v6291
      %v6293 = vpop.f32.mrb[0].mxu0
      %v6294 = vpop.f32.mrb[0].mxu0
      %v6295 = vpop.f32.mrb[0].mxu0
      %6296 = vdwg.mxu0
      %v6297 = vld [vmem:[%s11] sm:$0x1]
      %v6298 = vld [vmem:[%s424] sm:$0xf]
      %v6300 = vlaneseq
      %v6301 = vshrl.u32 %v6300, 7
      %v6302 = vsub.s32 0, %v6301
      %v6303 = vrot.slane %v6297, %v6302
      %6306 = vset.pattern.permute.xlu0 0
      %6307 = vperm.xlu0 %6306, %v6298
      %v6308 = vpop.permute.xlu0 %6307
      %v6310 = vmul.f32 %v6303, %v6308
      %v6311 = vmul.f32 %v6292, %v6310
      %v6312 = vmul.f32 %v6311, 1.442695
      %v6313 = vpow.pop %v6312
      %v6314 = vmul.f32 %v6303, %v6313
      %v6315 = vsub.f32 1.0, %v6297
      %v6317 = vlaneseq
      %v6318 = vshrl.u32 %v6317, 7
      %v6319 = vsub.s32 0, %v6318
      %v6320 = vrot.slane %v6315, %v6319
      %v6322 = vmul.f32 %v6320, %v6292
      %v6323 = vadd.f32 %v6314, %v6322
      %6324 = vst [vmem:[%s428] sm:$0xf] %v6323
      %p6325 = scmp.lt.s32.totalorder %s23, 1
      %s6326 = scalar_select %p6325, %s23, 1
      %s6327 = smul.addr %s6326, 4
      %s6328 = scalar_lea.vmem %s12, %s6327
      // Predicated region
      $region69: #{_yooo_head_forward.3} parent=67 // pred_check
        %p6329 = pneg %p303
      $region70: #{_yooo_head_forward.3} parent=67 // pred_check_branch
        %6331 = sbr.rel (%p6329) target = $region72
      $region71: #{_yooo_head_forward.3} parent=67 // pred_region
        _
      $region72: #{_yooo_head_forward.3} parent=67 // pred_fallthru
        _
    $region68: #{_yooo_head_forward.3} parent=5 // pred_fallthru
      _
    %p6332 = scmp.le.s32.totalorder 2, %s18
    // Predicated region
    $region73: #{_yooo_head_forward.3} parent=5 // pred_check
      %p6333 = pneg %p6332
    $region74: #{_yooo_head_forward.3} parent=5 // pred_check_branch
      %6335 = sbr.rel (%p6333) target = $region76
    $region75: #{_yooo_head_forward.3} parent=5 // pred_region
      %s6336 = ssub.s32 %s18, 2
      // Predicated region
      $region77: #{_yooo_head_forward.3} parent=75 // pred_check
        %p6337 = pneg %p309
      $region78: #{_yooo_head_forward.3} parent=75 // pred_check_branch
        %6339 = sbr.rel (%p6337) target = $region80
      $region79: #{_yooo_head_forward.3} parent=75 // pred_region
        %p6340 = scmp.lt.s32.totalorder %s24, 1
        %s6341 = scalar_select %p6340, %s24, 1
        %s6342 = smul.addr %s6341, 4
        %s6343 = scalar_lea.vmem %s12, %s6342
      $region80: #{_yooo_head_forward.3} parent=75 // pred_fallthru
        _
    $region76: #{_yooo_head_forward.3} parent=5 // pred_fallthru
      _
  $region6: #{_yooo_head_forward.3} parent=0 // loop_footer
    %s22 = sadd.s32 1, %s18
  $region7: #{_yooo_head_forward.3} parent=0 // loop_footer_branch
    %17 = sbr.rel target = $region3
  $region8: #{_yooo_head_forward.3} parent=0 // loop_exit
    _

// kernel: _yooo_head_forward.2
$region0: #{_yooo_head_forward.2}
  #allocation0 [shape = 'u32[]', space=smem, size = 0x4, offset = 0x4, fixed_abs, tag = 'smem constant byte address 0x4 - core index']
  #allocation1 [shape = 'u32[144,128]{1,0:T(1,128)}', space=vmem, size = 0x12000, scoped, tag = 'internal scratch']
  %s0 = inlined_call_operand.vmem [shape: bf16[1,2,16,16,64], index: 0, kind: input, shape index: {}]
  %s1 = inlined_call_operand.vmem [shape: f32[1,2,1], index: 1, kind: input, shape index: {}]
  %s2 = inlined_call_operand.vmem [shape: bf16[576,128], index: 2, kind: input, shape index: {}]
  %s3 = inlined_call_operand.vmem [shape: bf16[1,1152,128], index: 3, kind: input, shape index: {}]
  %s4 = inlined_call_operand.vmem [shape: f32[2,1,128], index: 4, kind: input, shape index: {}]
  %s5 = inlined_call_operand.vmem [shape: f32[2,1,128], index: 5, kind: input, shape index: {}]
  %s6 = inlined_call_operand.vmem [shape: f32[2,1,128], index: 6, kind: input, shape index: {}]
  %s7 = inlined_call_operand.vmem [shape: f32[128,64], index: 7, kind: input, shape index: {}]
  %s8 = inlined_call_operand.vmem [shape: f32[64,128], index: 8, kind: input, shape index: {}]
  %s9 = inlined_call_operand.vmem [shape: bf16[128,128], index: 9, kind: input, shape index: {}]
  %s10 = inlined_call_operand.vmem [shape: f32[1,128], index: 10, kind: input, shape index: {}]
  %s11 = inlined_call_operand.vmem [shape: f32[1,128], index: 11, kind: input, shape index: {}]
  %s12 = inlined_call_operand.vmem [shape: f32[1,2,128], index: 12, kind: output, shape index: {}]
  %s13 = sld [smem:[#allocation0]]
  $region58: #{_yooo_head_forward.2} parent=0
    _
  %s15 = ssub.s32 1, %s13
  %s16 = scalar_select 0, %s15, %s13
  // Predicated region
  $region2: #{_yooo_head_forward.2} parent=0 // pred_check
    _
  $region3: #{_yooo_head_forward.2} parent=0 // pred_check_branch
    %18 = sbr.rel (0) target = $region5
  $region4: #{_yooo_head_forward.2} parent=0 // pred_region
    _
  $region5: #{_yooo_head_forward.2} parent=0 // pred_fallthru
    _
  // Predicated region
  $region6: #{_yooo_head_forward.2} parent=0 // pred_check
    _
  $region7: #{_yooo_head_forward.2} parent=0 // pred_check_branch
    %20 = sbr.rel (0) target = $region9
  $region8: #{_yooo_head_forward.2} parent=0 // pred_region
    _
  $region9: #{_yooo_head_forward.2} parent=0 // pred_fallthru
    _
  // Predicated region
  $region10: #{_yooo_head_forward.2} parent=0 // pred_check
    _
  $region11: #{_yooo_head_forward.2} parent=0 // pred_check_branch
    %22 = sbr.rel (0) target = $region13
  $region12: #{_yooo_head_forward.2} parent=0 // pred_region
    _
  $region13: #{_yooo_head_forward.2} parent=0 // pred_fallthru
    _
  // Predicated region
  $region14: #{_yooo_head_forward.2} parent=0 // pred_check
    _
  $region15: #{_yooo_head_forward.2} parent=0 // pred_check_branch
    %24 = sbr.rel (0) target = $region17
  $region16: #{_yooo_head_forward.2} parent=0 // pred_region
    _
  $region17: #{_yooo_head_forward.2} parent=0 // pred_fallthru
    _
  // Predicated region
  $region18: #{_yooo_head_forward.2} parent=0 // pred_check
    _
  $region19: #{_yooo_head_forward.2} parent=0 // pred_check_branch
    %26 = sbr.rel (0) target = $region21
  $region20: #{_yooo_head_forward.2} parent=0 // pred_region
    _
  $region21: #{_yooo_head_forward.2} parent=0 // pred_fallthru
    _
  // Predicated region
  $region22: #{_yooo_head_forward.2} parent=0 // pred_check
    _
  $region23: #{_yooo_head_forward.2} parent=0 // pred_check_branch
    %28 = sbr.rel (0) target = $region25
  $region24: #{_yooo_head_forward.2} parent=0 // pred_region
    _
  $region25: #{_yooo_head_forward.2} parent=0 // pred_fallthru
    _
  // Predicated region
  $region26: #{_yooo_head_forward.2} parent=0 // pred_check
    _
  $region27: #{_yooo_head_forward.2} parent=0 // pred_check_branch
    %30 = sbr.rel (0) target = $region29
  $region28: #{_yooo_head_forward.2} parent=0 // pred_region
    _
  $region29: #{_yooo_head_forward.2} parent=0 // pred_fallthru
    _
  // Predicated region
  $region30: #{_yooo_head_forward.2} parent=0 // pred_check
    _
  $region31: #{_yooo_head_forward.2} parent=0 // pred_check_branch
    %32 = sbr.rel (0) target = $region33
  $region32: #{_yooo_head_forward.2} parent=0 // pred_region
    _
  $region33: #{_yooo_head_forward.2} parent=0 // pred_fallthru
    _
  // Predicated region
  $region34: #{_yooo_head_forward.2} parent=0 // pred_check
    _
  $region35: #{_yooo_head_forward.2} parent=0 // pred_check_branch
    %34 = sbr.rel (0) target = $region37
  $region36: #{_yooo_head_forward.2} parent=0 // pred_region
    _
  $region37: #{_yooo_head_forward.2} parent=0 // pred_fallthru
    _
  // Predicated region
  $region38: #{_yooo_head_forward.2} parent=0 // pred_check
    _
  $region39: #{_yooo_head_forward.2} parent=0 // pred_check_branch
    %36 = sbr.rel (0) target = $region41
  $region40: #{_yooo_head_forward.2} parent=0 // pred_region
    _
  $region41: #{_yooo_head_forward.2} parent=0 // pred_fallthru
    _
  // Predicated region
  $region42: #{_yooo_head_forward.2} parent=0 // pred_check
    _
  $region43: #{_yooo_head_forward.2} parent=0 // pred_check_branch
    %38 = sbr.rel (0) target = $region45
  $region44: #{_yooo_head_forward.2} parent=0 // pred_region
    _
  $region45: #{_yooo_head_forward.2} parent=0 // pred_fallthru
    _
  // Predicated region
  $region46: #{_yooo_head_forward.2} parent=0 // pred_check
    _
  $region47: #{_yooo_head_forward.2} parent=0 // pred_check_branch
    %40 = sbr.rel (0) target = $region49
  $region48: #{_yooo_head_forward.2} parent=0 // pred_region
    _
  $region49: #{_yooo_head_forward.2} parent=0 // pred_fallthru
    _
  %v42 = vld [vmem:[%s7] sm:$0xff]
  %v43 = vld [vmem:[%s7 + $0x8] sm:$0xff]
  %v44 = vld [vmem:[%s7 + $0x10] sm:$0xff]
  %v45 = vld [vmem:[%s7 + $0x18] sm:$0xff]
  %v46 = vld [vmem:[%s7 + $0x20] sm:$0xff]
  %v47 = vld [vmem:[%s7 + $0x28] sm:$0xff]
  %v48 = vld [vmem:[%s7 + $0x30] sm:$0xff]
  %v49 = vld [vmem:[%s7 + $0x38] sm:$0xff]
  %v50 = vld [vmem:[%s7 + $0x40] sm:$0xff]
  %v51 = vld [vmem:[%s7 + $0x48] sm:$0xff]
  %v52 = vld [vmem:[%s7 + $0x50] sm:$0xff]
  %v53 = vld [vmem:[%s7 + $0x58] sm:$0xff]
  %v54 = vld [vmem:[%s7 + $0x60] sm:$0xff]
  %v55 = vld [vmem:[%s7 + $0x68] sm:$0xff]
  %v56 = vld [vmem:[%s7 + $0x70] sm:$0xff]
  %v57 = vld [vmem:[%s7 + $0x78] sm:$0xff]
  %v58 = vld [vmem:[%s8] sm:$0xff]
  %v59 = vld [vmem:[%s8 + $0x8] sm:$0xff]
  %v60 = vld [vmem:[%s8 + $0x10] sm:$0xff]
  %v61 = vld [vmem:[%s8 + $0x18] sm:$0xff]
  %v62 = vld [vmem:[%s8 + $0x20] sm:$0xff]
  %v63 = vld [vmem:[%s8 + $0x28] sm:$0xff]
  %v64 = vld [vmem:[%s8 + $0x30] sm:$0xff]
  %v65 = vld [vmem:[%s8 + $0x38] sm:$0xff]
  %v66 = vld [vmem:[%s0] sm:$0xf]
  %v67 = vld [vmem:[%s0 + $0x4] sm:$0xf]
  %v68 = vld [vmem:[%s0 + $0x8] sm:$0xf]
  %v69 = vld [vmem:[%s0 + $0xc] sm:$0xf]
  %v70 = vld [vmem:[%s0 + $0x10] sm:$0xf]
  %v71 = vld [vmem:[%s0 + $0x14] sm:$0xf]
  %v72 = vld [vmem:[%s0 + $0x18] sm:$0xf]
  %v73 = vld [vmem:[%s0 + $0x1c] sm:$0xf]
  %v74 = vld [vmem:[%s0 + $0x20] sm:$0xf]
  %v75 = vld [vmem:[%s0 + $0x24] sm:$0xf]
  %v76 = vld [vmem:[%s0 + $0x28] sm:$0xf]
  %v77 = vld [vmem:[%s0 + $0x2c] sm:$0xf]
  %v78 = vld [vmem:[%s0 + $0x30] sm:$0xf]
  %v79 = vld [vmem:[%s0 + $0x34] sm:$0xf]
  %v80 = vld [vmem:[%s0 + $0x38] sm:$0xf]
  %v81 = vld [vmem:[%s0 + $0x3c] sm:$0xf]
  %v82 = vld [vmem:[%s0 + $0x40] sm:$0xf]
  %v83 = vld [vmem:[%s0 + $0x44] sm:$0xf]
  %v84 = vld [vmem:[%s0 + $0x48] sm:$0xf]
  %v85 = vld [vmem:[%s0 + $0x4c] sm:$0xf]
  %v86 = vld [vmem:[%s0 + $0x50] sm:$0xf]
  %v87 = vld [vmem:[%s0 + $0x54] sm:$0xf]
  %v88 = vld [vmem:[%s0 + $0x58] sm:$0xf]
  %v89 = vld [vmem:[%s0 + $0x5c] sm:$0xf]
  %v90 = vld [vmem:[%s0 + $0x60] sm:$0xf]
  %v91 = vld [vmem:[%s0 + $0x64] sm:$0xf]
  %v92 = vld [vmem:[%s0 + $0x68] sm:$0xf]
  %v93 = vld [vmem:[%s0 + $0x6c] sm:$0xf]
  %v94 = vld [vmem:[%s0 + $0x70] sm:$0xf]
  %v95 = vld [vmem:[%s0 + $0x74] sm:$0xf]
  %v96 = vld [vmem:[%s0 + $0x78] sm:$0xf]
  %v97 = vld [vmem:[%s0 + $0x7c] sm:$0xf]
  %v98 = vld [vmem:[%s0 + $0x80] sm:$0xf]
  %v99 = vld [vmem:[%s0 + $0x84] sm:$0xf]
  %v100 = vld [vmem:[%s0 + $0x88] sm:$0xf]
  %v101 = vld [vmem:[%s0 + $0x8c] sm:$0xf]
  %v102 = vld [vmem:[%s0 + $0x90] sm:$0xf]
  %v103 = vld [vmem:[%s0 + $0x94] sm:$0xf]
  %v104 = vld [vmem:[%s0 + $0x98] sm:$0xf]
  %v105 = vld [vmem:[%s0 + $0x9c] sm:$0xf]
  %v106 = vld [vmem:[%s0 + $0xa0] sm:$0xf]
  %v107 = vld [vmem:[%s0 + $0xa4] sm:$0xf]
  %v108 = vld [vmem:[%s0 + $0xa8] sm:$0xf]
  %v109 = vld [vmem:[%s0 + $0xac] sm:$0xf]
  %v110 = vld [vmem:[%s0 + $0xb0] sm:$0xf]
  %v111 = vld [vmem:[%s0 + $0xb4] sm:$0xf]
  %v112 = vld [vmem:[%s0 + $0xb8] sm:$0xf]
  %v113 = vld [vmem:[%s0 + $0xbc] sm:$0xf]
  %v114 = vld [vmem:[%s0 + $0xc0] sm:$0xf]
  %v115 = vld [vmem:[%s0 + $0xc4] sm:$0xf]
  %v116 = vld [vmem:[%s0 + $0xc8] sm:$0xf]
  %v117 = vld [vmem:[%s0 + $0xcc] sm:$0xf]
  %v118 = vld [vmem:[%s0 + $0xd0] sm:$0xf]
  %v119 = vld [vmem:[%s0 + $0xd4] sm:$0xf]
  %v120 = vld [vmem:[%s0 + $0xd8] sm:$0xf]
  %v121 = vld [vmem:[%s0 + $0xdc] sm:$0xf]
  %v122 = vld [vmem:[%s0 + $0xe0] sm:$0xf]
  %v123 = vld [vmem:[%s0 + $0xe4] sm:$0xf]
  %v124 = vld [vmem:[%s0 + $0xe8] sm:$0xf]
  %v125 = vld [vmem:[%s0 + $0xec] sm:$0xf]
  %v126 = vld [vmem:[%s0 + $0xf0] sm:$0xf]
  %v127 = vld [vmem:[%s0 + $0xf4] sm:$0xf]
  %v128 = vld [vmem:[%s0 + $0xf8] sm:$0xf]
  %v129 = vld [vmem:[%s0 + $0xfc] sm:$0xf]
  %v194 = vunpack.c.l.b16 %v66
  %v195 = vunpack.c.l.b16 %v67
  %v196 = vunpack.c.l.b16 %v68
  %v197 = vunpack.c.l.b16 %v69
  %v198 = vunpack.c.l.b16 %v70
  %v199 = vunpack.c.l.b16 %v71
  %v200 = vunpack.c.l.b16 %v72
  %v201 = vunpack.c.l.b16 %v73
  %v202 = vunpack.c.l.b16 %v74
  %v203 = vunpack.c.l.b16 %v75
  %v204 = vunpack.c.l.b16 %v76
  %v205 = vunpack.c.l.b16 %v77
  %v206 = vunpack.c.l.b16 %v78
  %v207 = vunpack.c.l.b16 %v79
  %v208 = vunpack.c.l.b16 %v80
  %v209 = vunpack.c.l.b16 %v81
  %v210 = vunpack.c.l.b16 %v82
  %v211 = vunpack.c.l.b16 %v83
  %v212 = vunpack.c.l.b16 %v84
  %v213 = vunpack.c.l.b16 %v85
  %v214 = vunpack.c.l.b16 %v86
  %v215 = vunpack.c.l.b16 %v87
  %v216 = vunpack.c.l.b16 %v88
  %v217 = vunpack.c.l.b16 %v89
  %v218 = vunpack.c.l.b16 %v90
  %v219 = vunpack.c.l.b16 %v91
  %v220 = vunpack.c.l.b16 %v92
  %v221 = vunpack.c.l.b16 %v93
  %v222 = vunpack.c.l.b16 %v94
  %v223 = vunpack.c.l.b16 %v95
  %v224 = vunpack.c.l.b16 %v96
  %v225 = vunpack.c.l.b16 %v97
  %v226 = vunpack.c.l.b16 %v98
  %v227 = vunpack.c.l.b16 %v99
  %v228 = vunpack.c.l.b16 %v100
  %v229 = vunpack.c.l.b16 %v101
  %v230 = vunpack.c.l.b16 %v102
  %v231 = vunpack.c.l.b16 %v103
  %v232 = vunpack.c.l.b16 %v104
  %v233 = vunpack.c.l.b16 %v105
  %v234 = vunpack.c.l.b16 %v106
  %v235 = vunpack.c.l.b16 %v107
  %v236 = vunpack.c.l.b16 %v108
  %v237 = vunpack.c.l.b16 %v109
  %v238 = vunpack.c.l.b16 %v110
  %v239 = vunpack.c.l.b16 %v111
  %v240 = vunpack.c.l.b16 %v112
  %v241 = vunpack.c.l.b16 %v113
  %v242 = vunpack.c.l.b16 %v114
  %v243 = vunpack.c.l.b16 %v115
  %v244 = vunpack.c.l.b16 %v116
  %v245 = vunpack.c.l.b16 %v117
  %v246 = vunpack.c.l.b16 %v118
  %v247 = vunpack.c.l.b16 %v119
  %v248 = vunpack.c.l.b16 %v120
  %v249 = vunpack.c.l.b16 %v121
  %v250 = vunpack.c.l.b16 %v122
  %v251 = vunpack.c.l.b16 %v123
  %v252 = vunpack.c.l.b16 %v124
  %v253 = vunpack.c.l.b16 %v125
  %v254 = vunpack.c.l.b16 %v126
  %v255 = vunpack.c.l.b16 %v127
  %v256 = vunpack.c.l.b16 %v128
  %v257 = vunpack.c.l.b16 %v129
  %v258 = vpack.c.b16 %v195, %v194
  %v259 = vpack.c.b16 %v197, %v196
  %v260 = vpack.c.b16 %v199, %v198
  %v261 = vpack.c.b16 %v201, %v200
  %v262 = vpack.c.b16 %v203, %v202
  %v263 = vpack.c.b16 %v205, %v204
  %v264 = vpack.c.b16 %v207, %v206
  %v265 = vpack.c.b16 %v209, %v208
  %v266 = vpack.c.b16 %v211, %v210
  %v267 = vpack.c.b16 %v213, %v212
  %v268 = vpack.c.b16 %v215, %v214
  %v269 = vpack.c.b16 %v217, %v216
  %v270 = vpack.c.b16 %v219, %v218
  %v271 = vpack.c.b16 %v221, %v220
  %v272 = vpack.c.b16 %v223, %v222
  %v273 = vpack.c.b16 %v225, %v224
  %v274 = vpack.c.b16 %v227, %v226
  %v275 = vpack.c.b16 %v229, %v228
  %v276 = vpack.c.b16 %v231, %v230
  %v277 = vpack.c.b16 %v233, %v232
  %v278 = vpack.c.b16 %v235, %v234
  %v279 = vpack.c.b16 %v237, %v236
  %v280 = vpack.c.b16 %v239, %v238
  %v281 = vpack.c.b16 %v241, %v240
  %v282 = vpack.c.b16 %v243, %v242
  %v283 = vpack.c.b16 %v245, %v244
  %v284 = vpack.c.b16 %v247, %v246
  %v285 = vpack.c.b16 %v249, %v248
  %v286 = vpack.c.b16 %v251, %v250
  %v287 = vpack.c.b16 %v253, %v252
  %v288 = vpack.c.b16 %v255, %v254
  %v289 = vpack.c.b16 %v257, %v256
  %v291 = vshrl.u32 0, 16
  %v293 = vrot.slane %v291, 7
  %v294 = vshll.u32 0, 16
  %v296 = vor.u32 %v293, %v294
  %v298 = vshrl.u32 %v258, 16
  %v300 = vrot.slane %v298, 7
  %v301 = vshll.u32 %v258, 16
  %v303 = vor.u32 %v300, %v301
  %v305 = vshrl.u32 %v259, 16
  %v307 = vrot.slane %v305, 7
  %v308 = vshll.u32 %v259, 16
  %v310 = vor.u32 %v307, %v308
  %v312 = vshrl.u32 %v260, 16
  %v314 = vrot.slane %v312, 7
  %v315 = vshll.u32 %v260, 16
  %v317 = vor.u32 %v314, %v315
  %v319 = vshrl.u32 %v261, 16
  %v321 = vrot.slane %v319, 7
  %v322 = vshll.u32 %v261, 16
  %v324 = vor.u32 %v321, %v322
  %v326 = vshrl.u32 %v262, 16
  %v328 = vrot.slane %v326, 7
  %v329 = vshll.u32 %v262, 16
  %v331 = vor.u32 %v328, %v329
  %v333 = vshrl.u32 %v263, 16
  %v335 = vrot.slane %v333, 7
  %v336 = vshll.u32 %v263, 16
  %v338 = vor.u32 %v335, %v336
  %v340 = vshrl.u32 %v264, 16
  %v342 = vrot.slane %v340, 7
  %v343 = vshll.u32 %v264, 16
  %v345 = vor.u32 %v342, %v343
  %v347 = vshrl.u32 %v265, 16
  %v349 = vrot.slane %v347, 7
  %v350 = vshll.u32 %v265, 16
  %v352 = vor.u32 %v349, %v350
  %v354 = vshrl.u32 %v266, 16
  %v356 = vrot.slane %v354, 7
  %v357 = vshll.u32 %v266, 16
  %v359 = vor.u32 %v356, %v357
  %v361 = vshrl.u32 %v267, 16
  %v363 = vrot.slane %v361, 7
  %v364 = vshll.u32 %v267, 16
  %v366 = vor.u32 %v363, %v364
  %v368 = vshrl.u32 %v268, 16
  %v370 = vrot.slane %v368, 7
  %v371 = vshll.u32 %v268, 16
  %v373 = vor.u32 %v370, %v371
  %v375 = vshrl.u32 %v269, 16
  %v377 = vrot.slane %v375, 7
  %v378 = vshll.u32 %v269, 16
  %v380 = vor.u32 %v377, %v378
  %v382 = vshrl.u32 %v270, 16
  %v384 = vrot.slane %v382, 7
  %v385 = vshll.u32 %v270, 16
  %v387 = vor.u32 %v384, %v385
  %v389 = vshrl.u32 %v271, 16
  %v391 = vrot.slane %v389, 7
  %v392 = vshll.u32 %v271, 16
  %v394 = vor.u32 %v391, %v392
  %v396 = vshrl.u32 %v272, 16
  %v398 = vrot.slane %v396, 7
  %v399 = vshll.u32 %v272, 16
  %v401 = vor.u32 %v398, %v399
  %v403 = vshrl.u32 %v273, 16
  %v405 = vrot.slane %v403, 7
  %v406 = vshll.u32 %v273, 16
  %v408 = vor.u32 %v405, %v406
  %v410 = vshrl.u32 %v274, 16
  %v412 = vrot.slane %v410, 7
  %v413 = vshll.u32 %v274, 16
  %v415 = vor.u32 %v412, %v413
  %v417 = vshrl.u32 %v275, 16
  %v419 = vrot.slane %v417, 7
  %v420 = vshll.u32 %v275, 16
  %v422 = vor.u32 %v419, %v420
  %v424 = vshrl.u32 %v276, 16
  %v426 = vrot.slane %v424, 7
  %v427 = vshll.u32 %v276, 16
  %v429 = vor.u32 %v426, %v427
  %v431 = vshrl.u32 %v277, 16
  %v433 = vrot.slane %v431, 7
  %v434 = vshll.u32 %v277, 16
  %v436 = vor.u32 %v433, %v434
  %v438 = vshrl.u32 %v278, 16
  %v440 = vrot.slane %v438, 7
  %v441 = vshll.u32 %v278, 16
  %v443 = vor.u32 %v440, %v441
  %v445 = vshrl.u32 %v279, 16
  %v447 = vrot.slane %v445, 7
  %v448 = vshll.u32 %v279, 16
  %v450 = vor.u32 %v447, %v448
  %v452 = vshrl.u32 %v280, 16
  %v454 = vrot.slane %v452, 7
  %v455 = vshll.u32 %v280, 16
  %v457 = vor.u32 %v454, %v455
  %v459 = vshrl.u32 %v281, 16
  %v461 = vrot.slane %v459, 7
  %v462 = vshll.u32 %v281, 16
  %v464 = vor.u32 %v461, %v462
  %v466 = vshrl.u32 %v282, 16
  %v468 = vrot.slane %v466, 7
  %v469 = vshll.u32 %v282, 16
  %v471 = vor.u32 %v468, %v469
  %v473 = vshrl.u32 %v283, 16
  %v475 = vrot.slane %v473, 7
  %v476 = vshll.u32 %v283, 16
  %v478 = vor.u32 %v475, %v476
  %v480 = vshrl.u32 %v284, 16
  %v482 = vrot.slane %v480, 7
  %v483 = vshll.u32 %v284, 16
  %v485 = vor.u32 %v482, %v483
  %v487 = vshrl.u32 %v285, 16
  %v489 = vrot.slane %v487, 7
  %v490 = vshll.u32 %v285, 16
  %v492 = vor.u32 %v489, %v490
  %v494 = vshrl.u32 %v286, 16
  %v496 = vrot.slane %v494, 7
  %v497 = vshll.u32 %v286, 16
  %v499 = vor.u32 %v496, %v497
  %v501 = vshrl.u32 %v287, 16
  %v503 = vrot.slane %v501, 7
  %v504 = vshll.u32 %v287, 16
  %v506 = vor.u32 %v503, %v504
  %v508 = vshrl.u32 %v288, 16
  %v510 = vrot.slane %v508, 7
  %v511 = vshll.u32 %v288, 16
  %v513 = vor.u32 %v510, %v511
  %v515 = vshrl.u32 %v289, 16
  %v517 = vrot.slane %v515, 7
  %v518 = vshll.u32 %v289, 16
  %v520 = vor.u32 %v517, %v518
  %vm587 = vcmask 1040384
  %vm588 = vsmask.f32 256
  %vm589 = vmand %vm587, %vm588
  %v590 = vsel %vm589, 0, %v296
  %v591 = vsel %vm589, 0, %v303
  %v592 = vsel %vm589, 0, %v310
  %v593 = vsel %vm589, 0, %v317
  %v594 = vsel %vm589, 0, %v324
  %v595 = vsel %vm589, 0, %v331
  %v596 = vsel %vm589, 0, %v338
  %v597 = vsel %vm589, 0, %v345
  %v598 = vsel %vm589, 0, %v352
  %v599 = vsel %vm589, 0, %v359
  %v600 = vsel %vm589, 0, %v366
  %v601 = vsel %vm589, 0, %v373
  %v602 = vsel %vm589, 0, %v380
  %v603 = vsel %vm589, 0, %v387
  %v604 = vsel %vm589, 0, %v394
  %v605 = vsel %vm589, 0, %v401
  %v606 = vsel %vm589, 0, %v408
  %v607 = vsel %vm589, 0, %v415
  %v608 = vsel %vm589, 0, %v422
  %v609 = vsel %vm589, 0, %v429
  %v610 = vsel %vm589, 0, %v436
  %v611 = vsel %vm589, 0, %v443
  %v612 = vsel %vm589, 0, %v450
  %v613 = vsel %vm589, 0, %v457
  %v614 = vsel %vm589, 0, %v464
  %v615 = vsel %vm589, 0, %v471
  %v616 = vsel %vm589, 0, %v478
  %v617 = vsel %vm589, 0, %v485
  %v618 = vsel %vm589, 0, %v492
  %v619 = vsel %vm589, 0, %v499
  %v620 = vsel %vm589, 0, %v506
  %v621 = vsel %vm589, 0, %v513
  %v622 = vsel %vm589, 0, %v520
  %v623 = vsel %vm589, %v293, 0
  %v624 = vsel %vm589, %v300, 0
  %v625 = vsel %vm589, %v307, 0
  %v626 = vsel %vm589, %v314, 0
  %v627 = vsel %vm589, %v321, 0
  %v628 = vsel %vm589, %v328, 0
  %v629 = vsel %vm589, %v335, 0
  %v630 = vsel %vm589, %v342, 0
  %v631 = vsel %vm589, %v349, 0
  %v632 = vsel %vm589, %v356, 0
  %v633 = vsel %vm589, %v363, 0
  %v634 = vsel %vm589, %v370, 0
  %v635 = vsel %vm589, %v377, 0
  %v636 = vsel %vm589, %v384, 0
  %v637 = vsel %vm589, %v391, 0
  %v638 = vsel %vm589, %v398, 0
  %v639 = vsel %vm589, %v405, 0
  %v640 = vsel %vm589, %v412, 0
  %v641 = vsel %vm589, %v419, 0
  %v642 = vsel %vm589, %v426, 0
  %v643 = vsel %vm589, %v433, 0
  %v644 = vsel %vm589, %v440, 0
  %v645 = vsel %vm589, %v447, 0
  %v646 = vsel %vm589, %v454, 0
  %v647 = vsel %vm589, %v461, 0
  %v648 = vsel %vm589, %v468, 0
  %v649 = vsel %vm589, %v475, 0
  %v650 = vsel %vm589, %v482, 0
  %v651 = vsel %vm589, %v489, 0
  %v652 = vsel %vm589, %v496, 0
  %v653 = vsel %vm589, %v503, 0
  %v654 = vsel %vm589, %v510, 0
  %v655 = vsel %vm589, %v517, 0
  %vm656 = vsmask.f32 7424
  %v658 = vshrl.u32 %v590, 16
  %v660 = vshll.u32 %v590, 16
  %v662 = vrot.slane %v660, 1
  %v663 = vor.u32 %v658, %v662
  %v665 = vshll.u32 %v623, 16
  %v667 = vrot.slane %v665, 1
  %v668 = vsel %vm656, %v663, %v667
  %v670 = vshrl.u32 %v591, 16
  %v672 = vshll.u32 %v591, 16
  %v674 = vrot.slane %v672, 1
  %v675 = vor.u32 %v670, %v674
  %v677 = vshll.u32 %v624, 16
  %v679 = vrot.slane %v677, 1
  %v680 = vsel %vm656, %v675, %v679
  %v682 = vshrl.u32 %v592, 16
  %v684 = vshll.u32 %v592, 16
  %v686 = vrot.slane %v684, 1
  %v687 = vor.u32 %v682, %v686
  %v689 = vshll.u32 %v625, 16
  %v691 = vrot.slane %v689, 1
  %v692 = vsel %vm656, %v687, %v691
  %v694 = vshrl.u32 %v593, 16
  %v696 = vshll.u32 %v593, 16
  %v698 = vrot.slane %v696, 1
  %v699 = vor.u32 %v694, %v698
  %v701 = vshll.u32 %v626, 16
  %v703 = vrot.slane %v701, 1
  %v704 = vsel %vm656, %v699, %v703
  %v706 = vshrl.u32 %v594, 16
  %v708 = vshll.u32 %v594, 16
  %v710 = vrot.slane %v708, 1
  %v711 = vor.u32 %v706, %v710
  %v713 = vshll.u32 %v627, 16
  %v715 = vrot.slane %v713, 1
  %v716 = vsel %vm656, %v711, %v715
  %v718 = vshrl.u32 %v595, 16
  %v720 = vshll.u32 %v595, 16
  %v722 = vrot.slane %v720, 1
  %v723 = vor.u32 %v718, %v722
  %v725 = vshll.u32 %v628, 16
  %v727 = vrot.slane %v725, 1
  %v728 = vsel %vm656, %v723, %v727
  %v730 = vshrl.u32 %v596, 16
  %v732 = vshll.u32 %v596, 16
  %v734 = vrot.slane %v732, 1
  %v735 = vor.u32 %v730, %v734
  %v737 = vshll.u32 %v629, 16
  %v739 = vrot.slane %v737, 1
  %v740 = vsel %vm656, %v735, %v739
  %v742 = vshrl.u32 %v597, 16
  %v744 = vshll.u32 %v597, 16
  %v746 = vrot.slane %v744, 1
  %v747 = vor.u32 %v742, %v746
  %v749 = vshll.u32 %v630, 16
  %v751 = vrot.slane %v749, 1
  %v752 = vsel %vm656, %v747, %v751
  %v754 = vshrl.u32 %v598, 16
  %v756 = vshll.u32 %v598, 16
  %v758 = vrot.slane %v756, 1
  %v759 = vor.u32 %v754, %v758
  %v761 = vshll.u32 %v631, 16
  %v763 = vrot.slane %v761, 1
  %v764 = vsel %vm656, %v759, %v763
  %v766 = vshrl.u32 %v599, 16
  %v768 = vshll.u32 %v599, 16
  %v770 = vrot.slane %v768, 1
  %v771 = vor.u32 %v766, %v770
  %v773 = vshll.u32 %v632, 16
  %v775 = vrot.slane %v773, 1
  %v776 = vsel %vm656, %v771, %v775
  %v778 = vshrl.u32 %v600, 16
  %v780 = vshll.u32 %v600, 16
  %v782 = vrot.slane %v780, 1
  %v783 = vor.u32 %v778, %v782
  %v785 = vshll.u32 %v633, 16
  %v787 = vrot.slane %v785, 1
  %v788 = vsel %vm656, %v783, %v787
  %v790 = vshrl.u32 %v601, 16
  %v792 = vshll.u32 %v601, 16
  %v794 = vrot.slane %v792, 1
  %v795 = vor.u32 %v790, %v794
  %v797 = vshll.u32 %v634, 16
  %v799 = vrot.slane %v797, 1
  %v800 = vsel %vm656, %v795, %v799
  %v802 = vshrl.u32 %v602, 16
  %v804 = vshll.u32 %v602, 16
  %v806 = vrot.slane %v804, 1
  %v807 = vor.u32 %v802, %v806
  %v809 = vshll.u32 %v635, 16
  %v811 = vrot.slane %v809, 1
  %v812 = vsel %vm656, %v807, %v811
  %v814 = vshrl.u32 %v603, 16
  %v816 = vshll.u32 %v603, 16
  %v818 = vrot.slane %v816, 1
  %v819 = vor.u32 %v814, %v818
  %v821 = vshll.u32 %v636, 16
  %v823 = vrot.slane %v821, 1
  %v824 = vsel %vm656, %v819, %v823
  %v826 = vshrl.u32 %v604, 16
  %v828 = vshll.u32 %v604, 16
  %v830 = vrot.slane %v828, 1
  %v831 = vor.u32 %v826, %v830
  %v833 = vshll.u32 %v637, 16
  %v835 = vrot.slane %v833, 1
  %v836 = vsel %vm656, %v831, %v835
  %v838 = vshrl.u32 %v605, 16
  %v840 = vshll.u32 %v605, 16
  %v842 = vrot.slane %v840, 1
  %v843 = vor.u32 %v838, %v842
  %v845 = vshll.u32 %v638, 16
  %v847 = vrot.slane %v845, 1
  %v848 = vsel %vm656, %v843, %v847
  %v850 = vshrl.u32 %v607, 16
  %v852 = vshll.u32 %v607, 16
  %v854 = vrot.slane %v852, 1
  %v855 = vor.u32 %v850, %v854
  %v857 = vshll.u32 %v640, 16
  %v859 = vrot.slane %v857, 1
  %v860 = vsel %vm656, %v855, %v859
  %v862 = vshrl.u32 %v608, 16
  %v864 = vshll.u32 %v608, 16
  %v866 = vrot.slane %v864, 1
  %v867 = vor.u32 %v862, %v866
  %v869 = vshll.u32 %v641, 16
  %v871 = vrot.slane %v869, 1
  %v872 = vsel %vm656, %v867, %v871
  %v874 = vshrl.u32 %v609, 16
  %v876 = vshll.u32 %v609, 16
  %v878 = vrot.slane %v876, 1
  %v879 = vor.u32 %v874, %v878
  %v881 = vshll.u32 %v642, 16
  %v883 = vrot.slane %v881, 1
  %v884 = vsel %vm656, %v879, %v883
  %v886 = vshrl.u32 %v610, 16
  %v888 = vshll.u32 %v610, 16
  %v890 = vrot.slane %v888, 1
  %v891 = vor.u32 %v886, %v890
  %v893 = vshll.u32 %v643, 16
  %v895 = vrot.slane %v893, 1
  %v896 = vsel %vm656, %v891, %v895
  %v898 = vshrl.u32 %v611, 16
  %v900 = vshll.u32 %v611, 16
  %v902 = vrot.slane %v900, 1
  %v903 = vor.u32 %v898, %v902
  %v905 = vshll.u32 %v644, 16
  %v907 = vrot.slane %v905, 1
  %v908 = vsel %vm656, %v903, %v907
  %v910 = vshrl.u32 %v612, 16
  %v912 = vshll.u32 %v612, 16
  %v914 = vrot.slane %v912, 1
  %v915 = vor.u32 %v910, %v914
  %v917 = vshll.u32 %v645, 16
  %v919 = vrot.slane %v917, 1
  %v920 = vsel %vm656, %v915, %v919
  %v922 = vshrl.u32 %v613, 16
  %v924 = vshll.u32 %v613, 16
  %v926 = vrot.slane %v924, 1
  %v927 = vor.u32 %v922, %v926
  %v929 = vshll.u32 %v646, 16
  %v931 = vrot.slane %v929, 1
  %v932 = vsel %vm656, %v927, %v931
  %v934 = vshrl.u32 %v614, 16
  %v936 = vshll.u32 %v614, 16
  %v938 = vrot.slane %v936, 1
  %v939 = vor.u32 %v934, %v938
  %v941 = vshll.u32 %v647, 16
  %v943 = vrot.slane %v941, 1
  %v944 = vsel %vm656, %v939, %v943
  %v946 = vshrl.u32 %v615, 16
  %v948 = vshll.u32 %v615, 16
  %v950 = vrot.slane %v948, 1
  %v951 = vor.u32 %v946, %v950
  %v953 = vshll.u32 %v648, 16
  %v955 = vrot.slane %v953, 1
  %v956 = vsel %vm656, %v951, %v955
  %v958 = vshrl.u32 %v616, 16
  %v960 = vshll.u32 %v616, 16
  %v962 = vrot.slane %v960, 1
  %v963 = vor.u32 %v958, %v962
  %v965 = vshll.u32 %v649, 16
  %v967 = vrot.slane %v965, 1
  %v968 = vsel %vm656, %v963, %v967
  %v970 = vshrl.u32 %v617, 16
  %v972 = vshll.u32 %v617, 16
  %v974 = vrot.slane %v972, 1
  %v975 = vor.u32 %v970, %v974
  %v977 = vshll.u32 %v650, 16
  %v979 = vrot.slane %v977, 1
  %v980 = vsel %vm656, %v975, %v979
  %v982 = vshrl.u32 %v618, 16
  %v984 = vshll.u32 %v618, 16
  %v986 = vrot.slane %v984, 1
  %v987 = vor.u32 %v982, %v986
  %v989 = vshll.u32 %v651, 16
  %v991 = vrot.slane %v989, 1
  %v992 = vsel %vm656, %v987, %v991
  %v994 = vshrl.u32 %v619, 16
  %v996 = vshll.u32 %v619, 16
  %v998 = vrot.slane %v996, 1
  %v999 = vor.u32 %v994, %v998
  %v1001 = vshll.u32 %v652, 16
  %v1003 = vrot.slane %v1001, 1
  %v1004 = vsel %vm656, %v999, %v1003
  %v1006 = vshrl.u32 %v620, 16
  %v1008 = vshll.u32 %v620, 16
  %v1010 = vrot.slane %v1008, 1
  %v1011 = vor.u32 %v1006, %v1010
  %v1013 = vshll.u32 %v653, 16
  %v1015 = vrot.slane %v1013, 1
  %v1016 = vsel %vm656, %v1011, %v1015
  %v1018 = vshrl.u32 %v621, 16
  %v1020 = vshll.u32 %v621, 16
  %v1022 = vrot.slane %v1020, 1
  %v1023 = vor.u32 %v1018, %v1022
  %v1025 = vshll.u32 %v654, 16
  %v1027 = vrot.slane %v1025, 1
  %v1028 = vsel %vm656, %v1023, %v1027
  %1029 = vrot.lane.b32.xlu0 %v668, 64
  %v1030 = vpop.permute.xlu0 %1029
  %1031 = vrot.lane.b32.xlu0 %v680, 64
  %v1032 = vpop.permute.xlu0 %1031
  %1033 = vrot.lane.b32.xlu0 %v692, 64
  %v1034 = vpop.permute.xlu0 %1033
  %1035 = vrot.lane.b32.xlu0 %v704, 64
  %v1036 = vpop.permute.xlu0 %1035
  %1037 = vrot.lane.b32.xlu0 %v716, 64
  %v1038 = vpop.permute.xlu0 %1037
  %1039 = vrot.lane.b32.xlu0 %v728, 64
  %v1040 = vpop.permute.xlu0 %1039
  %1041 = vrot.lane.b32.xlu0 %v740, 64
  %v1042 = vpop.permute.xlu0 %1041
  %1043 = vrot.lane.b32.xlu0 %v752, 64
  %v1044 = vpop.permute.xlu0 %1043
  %1045 = vrot.lane.b32.xlu0 %v764, 64
  %v1046 = vpop.permute.xlu0 %1045
  %1047 = vrot.lane.b32.xlu0 %v776, 64
  %v1048 = vpop.permute.xlu0 %1047
  %1049 = vrot.lane.b32.xlu0 %v788, 64
  %v1050 = vpop.permute.xlu0 %1049
  %1051 = vrot.lane.b32.xlu0 %v800, 64
  %v1052 = vpop.permute.xlu0 %1051
  %1053 = vrot.lane.b32.xlu0 %v812, 64
  %v1054 = vpop.permute.xlu0 %1053
  %1055 = vrot.lane.b32.xlu0 %v824, 64
  %v1056 = vpop.permute.xlu0 %1055
  %1057 = vrot.lane.b32.xlu0 %v836, 64
  %v1058 = vpop.permute.xlu0 %1057
  %1059 = vrot.lane.b32.xlu0 %v848, 64
  %v1060 = vpop.permute.xlu0 %1059
  %1061 = vrot.lane.b32.xlu0 %v860, 64
  %v1062 = vpop.permute.xlu0 %1061
  %1063 = vrot.lane.b32.xlu0 %v872, 64
  %v1064 = vpop.permute.xlu0 %1063
  %1065 = vrot.lane.b32.xlu0 %v884, 64
  %v1066 = vpop.permute.xlu0 %1065
  %1067 = vrot.lane.b32.xlu0 %v896, 64
  %v1068 = vpop.permute.xlu0 %1067
  %1069 = vrot.lane.b32.xlu0 %v908, 64
  %v1070 = vpop.permute.xlu0 %1069
  %1071 = vrot.lane.b32.xlu0 %v920, 64
  %v1072 = vpop.permute.xlu0 %1071
  %1073 = vrot.lane.b32.xlu0 %v932, 64
  %v1074 = vpop.permute.xlu0 %1073
  %1075 = vrot.lane.b32.xlu0 %v944, 64
  %v1076 = vpop.permute.xlu0 %1075
  %1077 = vrot.lane.b32.xlu0 %v956, 64
  %v1078 = vpop.permute.xlu0 %1077
  %1079 = vrot.lane.b32.xlu0 %v968, 64
  %v1080 = vpop.permute.xlu0 %1079
  %1081 = vrot.lane.b32.xlu0 %v980, 64
  %v1082 = vpop.permute.xlu0 %1081
  %1083 = vrot.lane.b32.xlu0 %v992, 64
  %v1084 = vpop.permute.xlu0 %1083
  %1085 = vrot.lane.b32.xlu0 %v1004, 64
  %v1086 = vpop.permute.xlu0 %1085
  %1087 = vrot.lane.b32.xlu0 %v1016, 64
  %v1088 = vpop.permute.xlu0 %1087
  %1089 = vrot.lane.b32.xlu0 %v1028, 64
  %v1090 = vpop.permute.xlu0 %1089
  %vm1153 = vcmask 1046528
  %v1154 = vrot.slane %v590, 1
  %v1155 = vrot.slane %v623, 1
  %v1156 = vsel %vm1153, %v1154, %v1155
  %v1157 = vrot.slane %v591, 1
  %v1158 = vrot.slane %v624, 1
  %v1159 = vsel %vm1153, %v1157, %v1158
  %v1160 = vrot.slane %v592, 1
  %v1161 = vrot.slane %v625, 1
  %v1162 = vsel %vm1153, %v1160, %v1161
  %v1163 = vrot.slane %v593, 1
  %v1164 = vrot.slane %v626, 1
  %v1165 = vsel %vm1153, %v1163, %v1164
  %v1166 = vrot.slane %v594, 1
  %v1167 = vrot.slane %v627, 1
  %v1168 = vsel %vm1153, %v1166, %v1167
  %v1169 = vrot.slane %v595, 1
  %v1170 = vrot.slane %v628, 1
  %v1171 = vsel %vm1153, %v1169, %v1170
  %v1172 = vrot.slane %v596, 1
  %v1173 = vrot.slane %v629, 1
  %v1174 = vsel %vm1153, %v1172, %v1173
  %v1175 = vrot.slane %v597, 1
  %v1176 = vrot.slane %v630, 1
  %v1177 = vsel %vm1153, %v1175, %v1176
  %v1178 = vrot.slane %v598, 1
  %v1179 = vrot.slane %v631, 1
  %v1180 = vsel %vm1153, %v1178, %v1179
  %v1181 = vrot.slane %v599, 1
  %v1182 = vrot.slane %v632, 1
  %v1183 = vsel %vm1153, %v1181, %v1182
  %v1184 = vrot.slane %v600, 1
  %v1185 = vrot.slane %v633, 1
  %v1186 = vsel %vm1153, %v1184, %v1185
  %v1187 = vrot.slane %v601, 1
  %v1188 = vrot.slane %v634, 1
  %v1189 = vsel %vm1153, %v1187, %v1188
  %v1190 = vrot.slane %v602, 1
  %v1191 = vrot.slane %v635, 1
  %v1192 = vsel %vm1153, %v1190, %v1191
  %v1193 = vrot.slane %v603, 1
  %v1194 = vrot.slane %v636, 1
  %v1195 = vsel %vm1153, %v1193, %v1194
  %v1196 = vrot.slane %v604, 1
  %v1197 = vrot.slane %v637, 1
  %v1198 = vsel %vm1153, %v1196, %v1197
  %v1199 = vrot.slane %v605, 1
  %v1200 = vrot.slane %v638, 1
  %v1201 = vsel %vm1153, %v1199, %v1200
  %v1202 = vrot.slane %v607, 1
  %v1203 = vrot.slane %v640, 1
  %v1204 = vsel %vm1153, %v1202, %v1203
  %v1205 = vrot.slane %v608, 1
  %v1206 = vrot.slane %v641, 1
  %v1207 = vsel %vm1153, %v1205, %v1206
  %v1208 = vrot.slane %v609, 1
  %v1209 = vrot.slane %v642, 1
  %v1210 = vsel %vm1153, %v1208, %v1209
  %v1211 = vrot.slane %v610, 1
  %v1212 = vrot.slane %v643, 1
  %v1213 = vsel %vm1153, %v1211, %v1212
  %v1214 = vrot.slane %v611, 1
  %v1215 = vrot.slane %v644, 1
  %v1216 = vsel %vm1153, %v1214, %v1215
  %v1217 = vrot.slane %v612, 1
  %v1218 = vrot.slane %v645, 1
  %v1219 = vsel %vm1153, %v1217, %v1218
  %v1220 = vrot.slane %v613, 1
  %v1221 = vrot.slane %v646, 1
  %v1222 = vsel %vm1153, %v1220, %v1221
  %v1223 = vrot.slane %v614, 1
  %v1224 = vrot.slane %v647, 1
  %v1225 = vsel %vm1153, %v1223, %v1224
  %v1226 = vrot.slane %v615, 1
  %v1227 = vrot.slane %v648, 1
  %v1228 = vsel %vm1153, %v1226, %v1227
  %v1229 = vrot.slane %v616, 1
  %v1230 = vrot.slane %v649, 1
  %v1231 = vsel %vm1153, %v1229, %v1230
  %v1232 = vrot.slane %v617, 1
  %v1233 = vrot.slane %v650, 1
  %v1234 = vsel %vm1153, %v1232, %v1233
  %v1235 = vrot.slane %v618, 1
  %v1236 = vrot.slane %v651, 1
  %v1237 = vsel %vm1153, %v1235, %v1236
  %v1238 = vrot.slane %v619, 1
  %v1239 = vrot.slane %v652, 1
  %v1240 = vsel %vm1153, %v1238, %v1239
  %v1241 = vrot.slane %v620, 1
  %v1242 = vrot.slane %v653, 1
  %v1243 = vsel %vm1153, %v1241, %v1242
  %v1244 = vrot.slane %v621, 1
  %v1245 = vrot.slane %v654, 1
  %v1246 = vsel %vm1153, %v1244, %v1245
  %1249 = vrot.lane.b32.xlu0 %v591, 64
  %v1250 = vpop.permute.xlu0 %1249
  %1251 = vrot.lane.b32.xlu0 %v592, 64
  %v1252 = vpop.permute.xlu0 %1251
  %1253 = vrot.lane.b32.xlu0 %v593, 64
  %v1254 = vpop.permute.xlu0 %1253
  %1255 = vrot.lane.b32.xlu0 %v594, 64
  %v1256 = vpop.permute.xlu0 %1255
  %1257 = vrot.lane.b32.xlu0 %v595, 64
  %v1258 = vpop.permute.xlu0 %1257
  %1259 = vrot.lane.b32.xlu0 %v596, 64
  %v1260 = vpop.permute.xlu0 %1259
  %1261 = vrot.lane.b32.xlu0 %v597, 64
  %v1262 = vpop.permute.xlu0 %1261
  %1263 = vrot.lane.b32.xlu0 %v598, 64
  %v1264 = vpop.permute.xlu0 %1263
  %1265 = vrot.lane.b32.xlu0 %v599, 64
  %v1266 = vpop.permute.xlu0 %1265
  %1267 = vrot.lane.b32.xlu0 %v600, 64
  %v1268 = vpop.permute.xlu0 %1267
  %1269 = vrot.lane.b32.xlu0 %v601, 64
  %v1270 = vpop.permute.xlu0 %1269
  %1271 = vrot.lane.b32.xlu0 %v602, 64
  %v1272 = vpop.permute.xlu0 %1271
  %1273 = vrot.lane.b32.xlu0 %v603, 64
  %v1274 = vpop.permute.xlu0 %1273
  %1275 = vrot.lane.b32.xlu0 %v604, 64
  %v1276 = vpop.permute.xlu0 %1275
  %1277 = vrot.lane.b32.xlu0 %v605, 64
  %v1278 = vpop.permute.xlu0 %1277
  %1279 = vrot.lane.b32.xlu0 %v606, 64
  %v1280 = vpop.permute.xlu0 %1279
  %1281 = vrot.lane.b32.xlu0 %v607, 64
  %v1282 = vpop.permute.xlu0 %1281
  %1283 = vrot.lane.b32.xlu0 %v608, 64
  %v1284 = vpop.permute.xlu0 %1283
  %1285 = vrot.lane.b32.xlu0 %v609, 64
  %v1286 = vpop.permute.xlu0 %1285
  %1287 = vrot.lane.b32.xlu0 %v610, 64
  %v1288 = vpop.permute.xlu0 %1287
  %1289 = vrot.lane.b32.xlu0 %v611, 64
  %v1290 = vpop.permute.xlu0 %1289
  %1291 = vrot.lane.b32.xlu0 %v612, 64
  %v1292 = vpop.permute.xlu0 %1291
  %1293 = vrot.lane.b32.xlu0 %v613, 64
  %v1294 = vpop.permute.xlu0 %1293
  %1295 = vrot.lane.b32.xlu0 %v614, 64
  %v1296 = vpop.permute.xlu0 %1295
  %1297 = vrot.lane.b32.xlu0 %v615, 64
  %v1298 = vpop.permute.xlu0 %1297
  %1299 = vrot.lane.b32.xlu0 %v616, 64
  %v1300 = vpop.permute.xlu0 %1299
  %1301 = vrot.lane.b32.xlu0 %v617, 64
  %v1302 = vpop.permute.xlu0 %1301
  %1303 = vrot.lane.b32.xlu0 %v618, 64
  %v1304 = vpop.permute.xlu0 %1303
  %1305 = vrot.lane.b32.xlu0 %v619, 64
  %v1306 = vpop.permute.xlu0 %1305
  %1307 = vrot.lane.b32.xlu0 %v620, 64
  %v1308 = vpop.permute.xlu0 %1307
  %1309 = vrot.lane.b32.xlu0 %v621, 64
  %v1310 = vpop.permute.xlu0 %1309
  %1311 = vrot.lane.b32.xlu0 %v622, 64
  %v1312 = vpop.permute.xlu0 %1311
  %v1314 = vshrl.u32 %v606, 16
  %v1316 = vshll.u32 %v606, 16
  %v1318 = vrot.slane %v1316, 1
  %v1319 = vor.u32 %v1314, %v1318
  %v1321 = vshll.u32 %v639, 16
  %v1323 = vrot.slane %v1321, 1
  %v1324 = vsel %vm656, %v1319, %v1323
  %v1326 = vshrl.u32 %v622, 16
  %v1328 = vshll.u32 %v622, 16
  %v1330 = vrot.slane %v1328, 1
  %v1331 = vor.u32 %v1326, %v1330
  %v1333 = vshll.u32 %v655, 16
  %v1335 = vrot.slane %v1333, 1
  %v1336 = vsel %vm656, %v1331, %v1335
  %v1339 = vrot.slane %v606, 1
  %v1340 = vrot.slane %v639, 1
  %v1341 = vsel %vm1153, %v1339, %v1340
  %v1342 = vrot.slane %v622, 1
  %v1343 = vrot.slane %v655, 1
  %v1344 = vsel %vm1153, %v1342, %v1343
  %1345 = vrot.lane.b32.xlu0 %v1159, 64
  %v1346 = vpop.permute.xlu0 %1345
  %1347 = vrot.lane.b32.xlu0 %v1162, 64
  %v1348 = vpop.permute.xlu0 %1347
  %1349 = vrot.lane.b32.xlu0 %v1165, 64
  %v1350 = vpop.permute.xlu0 %1349
  %1351 = vrot.lane.b32.xlu0 %v1168, 64
  %v1352 = vpop.permute.xlu0 %1351
  %1353 = vrot.lane.b32.xlu0 %v1171, 64
  %v1354 = vpop.permute.xlu0 %1353
  %1355 = vrot.lane.b32.xlu0 %v1174, 64
  %v1356 = vpop.permute.xlu0 %1355
  %1357 = vrot.lane.b32.xlu0 %v1177, 64
  %v1358 = vpop.permute.xlu0 %1357
  %1359 = vrot.lane.b32.xlu0 %v1180, 64
  %v1360 = vpop.permute.xlu0 %1359
  %1361 = vrot.lane.b32.xlu0 %v1183, 64
  %v1362 = vpop.permute.xlu0 %1361
  %1363 = vrot.lane.b32.xlu0 %v1186, 64
  %v1364 = vpop.permute.xlu0 %1363
  %1365 = vrot.lane.b32.xlu0 %v1189, 64
  %v1366 = vpop.permute.xlu0 %1365
  %1367 = vrot.lane.b32.xlu0 %v1192, 64
  %v1368 = vpop.permute.xlu0 %1367
  %1369 = vrot.lane.b32.xlu0 %v1195, 64
  %v1370 = vpop.permute.xlu0 %1369
  %1371 = vrot.lane.b32.xlu0 %v1198, 64
  %v1372 = vpop.permute.xlu0 %1371
  %1373 = vrot.lane.b32.xlu0 %v1201, 64
  %v1374 = vpop.permute.xlu0 %1373
  %1375 = vrot.lane.b32.xlu0 %v1341, 64
  %v1376 = vpop.permute.xlu0 %1375
  %1377 = vrot.lane.b32.xlu0 %v1204, 64
  %v1378 = vpop.permute.xlu0 %1377
  %1379 = vrot.lane.b32.xlu0 %v1207, 64
  %v1380 = vpop.permute.xlu0 %1379
  %1381 = vrot.lane.b32.xlu0 %v1210, 64
  %v1382 = vpop.permute.xlu0 %1381
  %1383 = vrot.lane.b32.xlu0 %v1213, 64
  %v1384 = vpop.permute.xlu0 %1383
  %1385 = vrot.lane.b32.xlu0 %v1216, 64
  %v1386 = vpop.permute.xlu0 %1385
  %1387 = vrot.lane.b32.xlu0 %v1219, 64
  %v1388 = vpop.permute.xlu0 %1387
  %1389 = vrot.lane.b32.xlu0 %v1222, 64
  %v1390 = vpop.permute.xlu0 %1389
  %1391 = vrot.lane.b32.xlu0 %v1225, 64
  %v1392 = vpop.permute.xlu0 %1391
  %1393 = vrot.lane.b32.xlu0 %v1228, 64
  %v1394 = vpop.permute.xlu0 %1393
  %1395 = vrot.lane.b32.xlu0 %v1231, 64
  %v1396 = vpop.permute.xlu0 %1395
  %1397 = vrot.lane.b32.xlu0 %v1234, 64
  %v1398 = vpop.permute.xlu0 %1397
  %1399 = vrot.lane.b32.xlu0 %v1237, 64
  %v1400 = vpop.permute.xlu0 %1399
  %1401 = vrot.lane.b32.xlu0 %v1240, 64
  %v1402 = vpop.permute.xlu0 %1401
  %1403 = vrot.lane.b32.xlu0 %v1243, 64
  %v1404 = vpop.permute.xlu0 %1403
  %1405 = vrot.lane.b32.xlu0 %v1246, 64
  %v1406 = vpop.permute.xlu0 %1405
  %1407 = vrot.lane.b32.xlu0 %v1344, 64
  %v1408 = vpop.permute.xlu0 %1407
  %1409 = vrot.lane.b32.xlu0 %v1324, 64
  %v1410 = vpop.permute.xlu0 %1409
  %1411 = vrot.lane.b32.xlu0 %v1336, 64
  %v1412 = vpop.permute.xlu0 %1411
  %vm1413 = vcmask 523264
  %v1415 = vsel %vm1413, %v590, %v1030
  %v1418 = vsel %vm1413, %v591, %v1032
  %v1421 = vsel %vm1413, %v592, %v1034
  %v1424 = vsel %vm1413, %v593, %v1036
  %v1427 = vsel %vm1413, %v594, %v1038
  %v1430 = vsel %vm1413, %v595, %v1040
  %v1433 = vsel %vm1413, %v596, %v1042
  %v1436 = vsel %vm1413, %v597, %v1044
  %v1439 = vsel %vm1413, %v598, %v1046
  %v1442 = vsel %vm1413, %v599, %v1048
  %v1445 = vsel %vm1413, %v600, %v1050
  %v1448 = vsel %vm1413, %v601, %v1052
  %v1451 = vsel %vm1413, %v602, %v1054
  %v1454 = vsel %vm1413, %v603, %v1056
  %v1457 = vsel %vm1413, %v604, %v1058
  %v1460 = vsel %vm1413, %v605, %v1060
  %v1463 = vsel %vm1413, %v607, %v1062
  %v1466 = vsel %vm1413, %v608, %v1064
  %v1469 = vsel %vm1413, %v609, %v1066
  %v1472 = vsel %vm1413, %v610, %v1068
  %v1475 = vsel %vm1413, %v611, %v1070
  %v1478 = vsel %vm1413, %v612, %v1072
  %v1481 = vsel %vm1413, %v613, %v1074
  %v1484 = vsel %vm1413, %v614, %v1076
  %v1487 = vsel %vm1413, %v615, %v1078
  %v1490 = vsel %vm1413, %v616, %v1080
  %v1493 = vsel %vm1413, %v617, %v1082
  %v1496 = vsel %vm1413, %v618, %v1084
  %v1499 = vsel %vm1413, %v619, %v1086
  %v1502 = vsel %vm1413, %v620, %v1088
  %v1505 = vsel %vm1413, %v621, %v1090
  %v1509 = vsel %vm1413, %v1156, %v1250
  %v1513 = vsel %vm1413, %v1159, %v1252
  %v1517 = vsel %vm1413, %v1162, %v1254
  %v1521 = vsel %vm1413, %v1165, %v1256
  %v1525 = vsel %vm1413, %v1168, %v1258
  %v1529 = vsel %vm1413, %v1171, %v1260
  %v1533 = vsel %vm1413, %v1174, %v1262
  %v1537 = vsel %vm1413, %v1177, %v1264
  %v1541 = vsel %vm1413, %v1180, %v1266
  %v1545 = vsel %vm1413, %v1183, %v1268
  %v1549 = vsel %vm1413, %v1186, %v1270
  %v1553 = vsel %vm1413, %v1189, %v1272
  %v1557 = vsel %vm1413, %v1192, %v1274
  %v1561 = vsel %vm1413, %v1195, %v1276
  %v1565 = vsel %vm1413, %v1198, %v1278
  %v1569 = vsel %vm1413, %v1201, %v1280
  %v1572 = vsel %vm1413, %v1156, %v1282
  %v1576 = vsel %vm1413, %v1204, %v1284
  %v1580 = vsel %vm1413, %v1207, %v1286
  %v1584 = vsel %vm1413, %v1210, %v1288
  %v1588 = vsel %vm1413, %v1213, %v1290
  %v1592 = vsel %vm1413, %v1216, %v1292
  %v1596 = vsel %vm1413, %v1219, %v1294
  %v1600 = vsel %vm1413, %v1222, %v1296
  %v1604 = vsel %vm1413, %v1225, %v1298
  %v1608 = vsel %vm1413, %v1228, %v1300
  %v1612 = vsel %vm1413, %v1231, %v1302
  %v1616 = vsel %vm1413, %v1234, %v1304
  %v1620 = vsel %vm1413, %v1237, %v1306
  %v1624 = vsel %vm1413, %v1240, %v1308
  %v1628 = vsel %vm1413, %v1243, %v1310
  %v1632 = vsel %vm1413, %v1246, %v1312
  %v1636 = vsel %vm1413, %v680, %v1346
  %v1640 = vsel %vm1413, %v692, %v1348
  %v1644 = vsel %vm1413, %v704, %v1350
  %v1648 = vsel %vm1413, %v716, %v1352
  %v1652 = vsel %vm1413, %v728, %v1354
  %v1656 = vsel %vm1413, %v740, %v1356
  %v1660 = vsel %vm1413, %v752, %v1358
  %v1664 = vsel %vm1413, %v764, %v1360
  %v1668 = vsel %vm1413, %v776, %v1362
  %v1672 = vsel %vm1413, %v788, %v1364
  %v1676 = vsel %vm1413, %v800, %v1366
  %v1680 = vsel %vm1413, %v812, %v1368
  %v1684 = vsel %vm1413, %v824, %v1370
  %v1688 = vsel %vm1413, %v836, %v1372
  %v1692 = vsel %vm1413, %v848, %v1374
  %v1696 = vsel %vm1413, %v1324, %v1376
  %v1700 = vsel %vm1413, %v860, %v1378
  %v1704 = vsel %vm1413, %v872, %v1380
  %v1708 = vsel %vm1413, %v884, %v1382
  %v1712 = vsel %vm1413, %v896, %v1384
  %v1716 = vsel %vm1413, %v908, %v1386
  %v1720 = vsel %vm1413, %v920, %v1388
  %v1724 = vsel %vm1413, %v932, %v1390
  %v1728 = vsel %vm1413, %v944, %v1392
  %v1732 = vsel %vm1413, %v956, %v1394
  %v1736 = vsel %vm1413, %v968, %v1396
  %v1740 = vsel %vm1413, %v980, %v1398
  %v1744 = vsel %vm1413, %v992, %v1400
  %v1748 = vsel %vm1413, %v1004, %v1402
  %v1752 = vsel %vm1413, %v1016, %v1404
  %v1756 = vsel %vm1413, %v1028, %v1406
  %v1760 = vsel %vm1413, %v1336, %v1408
  %v1763 = vsel %vm1413, %v606, %v1410
  %v1766 = vsel %vm1413, %v622, %v1412
  %v1768 = vld [vmem:[%s2] sm:$0xf]
  %v1769 = vld [vmem:[%s2 + $0x4] sm:$0xf]
  %v1770 = vld [vmem:[%s2 + $0x8] sm:$0xf]
  %v1771 = vld [vmem:[%s2 + $0xc] sm:$0xf]
  %v1772 = vld [vmem:[%s2 + $0x10] sm:$0xf]
  %v1773 = vld [vmem:[%s2 + $0x14] sm:$0xf]
  %v1774 = vld [vmem:[%s2 + $0x18] sm:$0xf]
  %v1775 = vld [vmem:[%s2 + $0x1c] sm:$0xf]
  %v1776 = vld [vmem:[%s2 + $0x20] sm:$0xf]
  %v1777 = vld [vmem:[%s2 + $0x24] sm:$0xf]
  %v1778 = vld [vmem:[%s2 + $0x28] sm:$0xf]
  %v1779 = vld [vmem:[%s2 + $0x2c] sm:$0xf]
  %v1780 = vld [vmem:[%s2 + $0x30] sm:$0xf]
  %v1781 = vld [vmem:[%s2 + $0x34] sm:$0xf]
  %v1782 = vld [vmem:[%s2 + $0x38] sm:$0xf]
  %v1783 = vld [vmem:[%s2 + $0x3c] sm:$0xf]
  %v1784 = vld [vmem:[%s2 + $0x40] sm:$0xf]
  %v1785 = vld [vmem:[%s2 + $0x44] sm:$0xf]
  %v1786 = vld [vmem:[%s2 + $0x48] sm:$0xf]
  %v1787 = vld [vmem:[%s2 + $0x4c] sm:$0xf]
  %v1788 = vld [vmem:[%s2 + $0x50] sm:$0xf]
  %v1789 = vld [vmem:[%s2 + $0x54] sm:$0xf]
  %v1790 = vld [vmem:[%s2 + $0x58] sm:$0xf]
  %v1791 = vld [vmem:[%s2 + $0x5c] sm:$0xf]
  %v1792 = vld [vmem:[%s2 + $0x60] sm:$0xf]
  %v1793 = vld [vmem:[%s2 + $0x64] sm:$0xf]
  %v1794 = vld [vmem:[%s2 + $0x68] sm:$0xf]
  %v1795 = vld [vmem:[%s2 + $0x6c] sm:$0xf]
  %v1796 = vld [vmem:[%s2 + $0x70] sm:$0xf]
  %v1797 = vld [vmem:[%s2 + $0x74] sm:$0xf]
  %v1798 = vld [vmem:[%s2 + $0x78] sm:$0xf]
  %v1799 = vld [vmem:[%s2 + $0x7c] sm:$0xf]
  %v1800 = vld [vmem:[%s2 + $0x80] sm:$0xf]
  %v1801 = vld [vmem:[%s2 + $0x84] sm:$0xf]
  %v1802 = vld [vmem:[%s2 + $0x88] sm:$0xf]
  %v1803 = vld [vmem:[%s2 + $0x8c] sm:$0xf]
  %v1804 = vld [vmem:[%s2 + $0x90] sm:$0xf]
  %v1805 = vld [vmem:[%s2 + $0x94] sm:$0xf]
  %v1806 = vld [vmem:[%s2 + $0x98] sm:$0xf]
  %v1807 = vld [vmem:[%s2 + $0x9c] sm:$0xf]
  %v1808 = vld [vmem:[%s2 + $0xa0] sm:$0xf]
  %v1809 = vld [vmem:[%s2 + $0xa4] sm:$0xf]
  %v1810 = vld [vmem:[%s2 + $0xa8] sm:$0xf]
  %v1811 = vld [vmem:[%s2 + $0xac] sm:$0xf]
  %v1812 = vld [vmem:[%s2 + $0xb0] sm:$0xf]
  %v1813 = vld [vmem:[%s2 + $0xb4] sm:$0xf]
  %v1814 = vld [vmem:[%s2 + $0xb8] sm:$0xf]
  %v1815 = vld [vmem:[%s2 + $0xbc] sm:$0xf]
  %v1816 = vld [vmem:[%s2 + $0xc0] sm:$0xf]
  %v1817 = vld [vmem:[%s2 + $0xc4] sm:$0xf]
  %v1818 = vld [vmem:[%s2 + $0xc8] sm:$0xf]
  %v1819 = vld [vmem:[%s2 + $0xcc] sm:$0xf]
  %v1820 = vld [vmem:[%s2 + $0xd0] sm:$0xf]
  %v1821 = vld [vmem:[%s2 + $0xd4] sm:$0xf]
  %v1822 = vld [vmem:[%s2 + $0xd8] sm:$0xf]
  %v1823 = vld [vmem:[%s2 + $0xdc] sm:$0xf]
  %v1824 = vld [vmem:[%s2 + $0xe0] sm:$0xf]
  %v1825 = vld [vmem:[%s2 + $0xe4] sm:$0xf]
  %v1826 = vld [vmem:[%s2 + $0xe8] sm:$0xf]
  %v1827 = vld [vmem:[%s2 + $0xec] sm:$0xf]
  %v1828 = vld [vmem:[%s2 + $0xf0] sm:$0xf]
  %v1829 = vld [vmem:[%s2 + $0xf4] sm:$0xf]
  %v1830 = vld [vmem:[%s2 + $0xf8] sm:$0xf]
  %v1831 = vld [vmem:[%s2 + $0xfc] sm:$0xf]
  %v1832 = vld [vmem:[%s2 + $0x100] sm:$0xf]
  %v1833 = vld [vmem:[%s2 + $0x104] sm:$0xf]
  %v1834 = vld [vmem:[%s2 + $0x108] sm:$0xf]
  %v1835 = vld [vmem:[%s2 + $0x10c] sm:$0xf]
  %v1836 = vld [vmem:[%s2 + $0x110] sm:$0xf]
  %v1837 = vld [vmem:[%s2 + $0x114] sm:$0xf]
  %v1838 = vld [vmem:[%s2 + $0x118] sm:$0xf]
  %v1839 = vld [vmem:[%s2 + $0x11c] sm:$0xf]
  %v1840 = vld [vmem:[%s4] sm:$0x1]
  %v1842 = vlaneseq
  %v1843 = vshrl.u32 %v1842, 7
  %v1844 = vsub.s32 0, %v1843
  %v1845 = vrot.slane %v1840, %v1844
  %v1919 = vunpack.c.l.b16 %v1768
  %v1920 = vunpack.c.l.b16 %v1769
  %v1921 = vunpack.c.l.b16 %v1770
  %v1922 = vunpack.c.l.b16 %v1771
  %v1923 = vunpack.c.l.b16 %v1772
  %v1924 = vunpack.c.l.b16 %v1773
  %v1925 = vunpack.c.l.b16 %v1774
  %v1926 = vunpack.c.l.b16 %v1775
  %v1927 = vunpack.c.l.b16 %v1776
  %v1928 = vunpack.c.l.b16 %v1777
  %v1929 = vunpack.c.l.b16 %v1778
  %v1930 = vunpack.c.l.b16 %v1779
  %v1931 = vunpack.c.l.b16 %v1780
  %v1932 = vunpack.c.l.b16 %v1781
  %v1933 = vunpack.c.l.b16 %v1782
  %v1934 = vunpack.c.l.b16 %v1783
  %v1935 = vunpack.c.l.b16 %v1784
  %v1936 = vunpack.c.l.b16 %v1785
  %v1937 = vunpack.c.l.b16 %v1786
  %v1938 = vunpack.c.l.b16 %v1787
  %v1939 = vunpack.c.l.b16 %v1788
  %v1940 = vunpack.c.l.b16 %v1789
  %v1941 = vunpack.c.l.b16 %v1790
  %v1942 = vunpack.c.l.b16 %v1791
  %v1943 = vunpack.c.l.b16 %v1792
  %v1944 = vunpack.c.l.b16 %v1793
  %v1945 = vunpack.c.l.b16 %v1794
  %v1946 = vunpack.c.l.b16 %v1795
  %v1947 = vunpack.c.l.b16 %v1796
  %v1948 = vunpack.c.l.b16 %v1797
  %v1949 = vunpack.c.l.b16 %v1798
  %v1950 = vunpack.c.l.b16 %v1799
  %v1951 = vunpack.c.l.b16 %v1800
  %v1952 = vunpack.c.l.b16 %v1801
  %v1953 = vunpack.c.l.b16 %v1802
  %v1954 = vunpack.c.l.b16 %v1803
  %v1955 = vunpack.c.l.b16 %v1804
  %v1956 = vunpack.c.l.b16 %v1805
  %v1957 = vunpack.c.l.b16 %v1806
  %v1958 = vunpack.c.l.b16 %v1807
  %v1959 = vunpack.c.l.b16 %v1808
  %v1960 = vunpack.c.l.b16 %v1809
  %v1961 = vunpack.c.l.b16 %v1810
  %v1962 = vunpack.c.l.b16 %v1811
  %v1963 = vunpack.c.l.b16 %v1812
  %v1964 = vunpack.c.l.b16 %v1813
  %v1965 = vunpack.c.l.b16 %v1814
  %v1966 = vunpack.c.l.b16 %v1815
  %v1967 = vunpack.c.l.b16 %v1816
  %v1968 = vunpack.c.l.b16 %v1817
  %v1969 = vunpack.c.l.b16 %v1818
  %v1970 = vunpack.c.l.b16 %v1819
  %v1971 = vunpack.c.l.b16 %v1820
  %v1972 = vunpack.c.l.b16 %v1821
  %v1973 = vunpack.c.l.b16 %v1822
  %v1974 = vunpack.c.l.b16 %v1823
  %v1975 = vunpack.c.l.b16 %v1824
  %v1976 = vunpack.c.l.b16 %v1825
  %v1977 = vunpack.c.l.b16 %v1826
  %v1978 = vunpack.c.l.b16 %v1827
  %v1979 = vunpack.c.l.b16 %v1828
  %v1980 = vunpack.c.l.b16 %v1829
  %v1981 = vunpack.c.l.b16 %v1830
  %v1982 = vunpack.c.l.b16 %v1831
  %v1983 = vunpack.c.l.b16 %v1832
  %v1984 = vunpack.c.l.b16 %v1833
  %v1985 = vunpack.c.l.b16 %v1834
  %v1986 = vunpack.c.l.b16 %v1835
  %v1987 = vunpack.c.l.b16 %v1836
  %v1988 = vunpack.c.l.b16 %v1837
  %v1989 = vunpack.c.l.b16 %v1838
  %v1990 = vunpack.c.l.b16 %v1839
  %v1991 = vpack.c.b16 %v1920, %v1919
  %v1992 = vpack.c.b16 %v1922, %v1921
  %v1993 = vpack.c.b16 %v1924, %v1923
  %v1994 = vpack.c.b16 %v1926, %v1925
  %v1995 = vpack.c.b16 %v1928, %v1927
  %v1996 = vpack.c.b16 %v1930, %v1929
  %v1997 = vpack.c.b16 %v1932, %v1931
  %v1998 = vpack.c.b16 %v1934, %v1933
  %v1999 = vpack.c.b16 %v1936, %v1935
  %v2000 = vpack.c.b16 %v1938, %v1937
  %v2001 = vpack.c.b16 %v1940, %v1939
  %v2002 = vpack.c.b16 %v1942, %v1941
  %v2003 = vpack.c.b16 %v1944, %v1943
  %v2004 = vpack.c.b16 %v1946, %v1945
  %v2005 = vpack.c.b16 %v1948, %v1947
  %v2006 = vpack.c.b16 %v1950, %v1949
  %v2007 = vpack.c.b16 %v1952, %v1951
  %v2008 = vpack.c.b16 %v1954, %v1953
  %v2009 = vpack.c.b16 %v1956, %v1955
  %v2010 = vpack.c.b16 %v1958, %v1957
  %v2011 = vpack.c.b16 %v1960, %v1959
  %v2012 = vpack.c.b16 %v1962, %v1961
  %v2013 = vpack.c.b16 %v1964, %v1963
  %v2014 = vpack.c.b16 %v1966, %v1965
  %v2015 = vpack.c.b16 %v1968, %v1967
  %v2016 = vpack.c.b16 %v1970, %v1969
  %v2017 = vpack.c.b16 %v1972, %v1971
  %v2018 = vpack.c.b16 %v1974, %v1973
  %v2019 = vpack.c.b16 %v1976, %v1975
  %v2020 = vpack.c.b16 %v1978, %v1977
  %v2021 = vpack.c.b16 %v1980, %v1979
  %v2022 = vpack.c.b16 %v1982, %v1981
  %v2023 = vpack.c.b16 %v1984, %v1983
  %v2024 = vpack.c.b16 %v1986, %v1985
  %v2025 = vpack.c.b16 %v1988, %v1987
  %v2026 = vpack.c.b16 %v1990, %v1989
  %v2063 = vsel %vm1413, %v1162, 0
  %v2065 = vsel %vm1413, %v1165, 0
  %v2067 = vsel %vm1413, %v1168, 0
  %v2069 = vsel %vm1413, %v1171, 0
  %v2071 = vsel %vm1413, %v1174, 0
  %v2073 = vsel %vm1413, %v1177, 0
  %v2075 = vsel %vm1413, %v1180, 0
  %v2077 = vsel %vm1413, %v1183, 0
  %v2079 = vsel %vm1413, %v1186, 0
  %v2081 = vsel %vm1413, %v1189, 0
  %v2083 = vsel %vm1413, %v1192, 0
  %v2085 = vsel %vm1413, %v1195, 0
  %v2087 = vsel %vm1413, %v1198, 0
  %v2089 = vsel %vm1413, %v1201, 0
  %v2092 = vsel %vm1413, %v1341, 0
  %v2094 = vsel %vm1413, %v1156, 0
  %v2096 = vsel %vm1413, %v1207, 0
  %v2098 = vsel %vm1413, %v1210, 0
  %v2100 = vsel %vm1413, %v1213, 0
  %v2102 = vsel %vm1413, %v1216, 0
  %v2104 = vsel %vm1413, %v1219, 0
  %v2106 = vsel %vm1413, %v1222, 0
  %v2108 = vsel %vm1413, %v1225, 0
  %v2110 = vsel %vm1413, %v1228, 0
  %v2112 = vsel %vm1413, %v1231, 0
  %v2114 = vsel %vm1413, %v1234, 0
  %v2116 = vsel %vm1413, %v1237, 0
  %v2118 = vsel %vm1413, %v1240, 0
  %v2120 = vsel %vm1413, %v1243, 0
  %v2122 = vsel %vm1413, %v1246, 0
  %v2125 = vsel %vm1413, %v1344, 0
  %2127 = vmatprep.subr.bf16.mxu0 0
  %2128 = vmatpush1.bf16.msra.mxu0 %v1991
  %2129 = vmatprep.subr.bf16.mxu0 0
  %2130 = vmatpush1.bf16.msra.mxu0 %v1992
  %2131 = vmatprep.subr.bf16.mxu0 0
  %2132 = vmatpush1.bf16.msra.mxu0 %v1993
  %2133 = vmatprep.subr.bf16.mxu0 0
  %2134 = vmatpush1.bf16.msra.mxu0 %v1994
  %2135 = vmatprep.subr.bf16.mxu0 0
  %2136 = vmatpush1.bf16.msra.mxu0 %v1995
  %2137 = vmatprep.subr.bf16.mxu0 0
  %2138 = vmatpush1.bf16.msra.mxu0 %v1996
  %2139 = vmatprep.subr.bf16.mxu0 0
  %2140 = vmatpush1.bf16.msra.mxu0 %v1997
  %2141 = vmatprep.subr.bf16.mxu0 0
  %2142 = vmatpush1.bf16.msra.mxu0 %v1998
  %2143 = vmatprep.subr.bf16.mxu0 0
  %2144 = vmatpush1.bf16.msra.mxu0 %v1999
  %2145 = vmatprep.subr.bf16.mxu0 0
  %2146 = vmatpush1.bf16.msra.mxu0 %v2000
  %2147 = vmatprep.subr.bf16.mxu0 0
  %2148 = vmatpush1.bf16.msra.mxu0 %v2001
  %2149 = vmatprep.subr.bf16.mxu0 0
  %2150 = vmatpush1.bf16.msra.mxu0 %v2002
  %2151 = vmatprep.subr.bf16.mxu0 0
  %2152 = vmatpush1.bf16.msra.mxu0 %v2003
  %2153 = vmatprep.subr.bf16.mxu0 0
  %2154 = vmatpush1.bf16.msra.mxu0 %v2004
  %2155 = vmatprep.subr.bf16.mxu0 0
  %2156 = vmatpush1.bf16.msra.mxu0 %v2005
  %2157 = vmatprep.subr.bf16.mxu0 0
  %2158 = vmatpush1.bf16.msra.mxu0 %v2006
  %2159 = vmatprep.mubr.bf16.mxu0 %v1509
  %2160 = vmatmul.mubr.bf16.gmra.mrb[0].mxu0 %v1415
  %v2161 = vpop.f32.mrb[0].mxu0
  %v2162 = vadd.f32 %v1845, %v2161
  %v2163 = vpop.f32.mrb[0].mxu0
  %v2164 = vpop.f32.mrb[0].mxu0
  %v2165 = vadd.f32 %v1845, %v2164
  %v2166 = vpop.f32.mrb[0].mxu0
  %2167 = vmatprep.mubr.bf16.mxu0 %v1513
  %2168 = vmatmul.mubr.bf16.gmra.mrb[0].mxu0 %v1418
  %v2169 = vpop.f32.mrb[0].mxu0
  %v2170 = vadd.f32 %v1845, %v2169
  %v2171 = vpop.f32.mrb[0].mxu0
  %v2172 = vpop.f32.mrb[0].mxu0
  %v2173 = vadd.f32 %v1845, %v2172
  %v2174 = vpop.f32.mrb[0].mxu0
  %2175 = vmatprep.mubr.bf16.mxu0 %v1517
  %2176 = vmatmul.mubr.bf16.gmra.mrb[0].mxu0 %v1421
  %v2177 = vpop.f32.mrb[0].mxu0
  %v2178 = vadd.f32 %v1845, %v2177
  %v2179 = vpop.f32.mrb[0].mxu0
  %v2180 = vpop.f32.mrb[0].mxu0
  %v2181 = vadd.f32 %v1845, %v2180
  %v2182 = vpop.f32.mrb[0].mxu0
  %2183 = vmatprep.mubr.bf16.mxu0 %v1521
  %2184 = vmatmul.mubr.bf16.gmra.mrb[0].mxu0 %v1424
  %v2185 = vpop.f32.mrb[0].mxu0
  %v2186 = vadd.f32 %v1845, %v2185
  %v2187 = vpop.f32.mrb[0].mxu0
  %v2188 = vpop.f32.mrb[0].mxu0
  %v2189 = vadd.f32 %v1845, %v2188
  %v2190 = vpop.f32.mrb[0].mxu0
  %2191 = vmatprep.mubr.bf16.mxu0 %v1525
  %2192 = vmatmul.mubr.bf16.gmra.mrb[0].mxu0 %v1427
  %v2193 = vpop.f32.mrb[0].mxu0
  %v2194 = vadd.f32 %v1845, %v2193
  %v2195 = vpop.f32.mrb[0].mxu0
  %v2196 = vpop.f32.mrb[0].mxu0
  %v2197 = vadd.f32 %v1845, %v2196
  %v2198 = vpop.f32.mrb[0].mxu0
  %2199 = vmatprep.mubr.bf16.mxu0 %v1529
  %2200 = vmatmul.mubr.bf16.gmra.mrb[0].mxu0 %v1430
  %v2201 = vpop.f32.mrb[0].mxu0
  %v2202 = vadd.f32 %v1845, %v2201
  %v2203 = vpop.f32.mrb[0].mxu0
  %v2204 = vpop.f32.mrb[0].mxu0
  %v2205 = vadd.f32 %v1845, %v2204
  %v2206 = vpop.f32.mrb[0].mxu0
  %2207 = vmatprep.mubr.bf16.mxu0 %v1533
  %2208 = vmatmul.mubr.bf16.gmra.mrb[0].mxu0 %v1433
  %v2209 = vpop.f32.mrb[0].mxu0
  %v2210 = vadd.f32 %v1845, %v2209
  %v2211 = vpop.f32.mrb[0].mxu0
  %v2212 = vpop.f32.mrb[0].mxu0
  %v2213 = vadd.f32 %v1845, %v2212
  %v2214 = vpop.f32.mrb[0].mxu0
  %2215 = vmatprep.mubr.bf16.mxu0 %v1537
  %2216 = vmatmul.mubr.bf16.gmra.mrb[0].mxu0 %v1436
  %v2217 = vpop.f32.mrb[0].mxu0
  %v2218 = vadd.f32 %v1845, %v2217
  %v2219 = vpop.f32.mrb[0].mxu0
  %v2220 = vpop.f32.mrb[0].mxu0
  %v2221 = vadd.f32 %v1845, %v2220
  %v2222 = vpop.f32.mrb[0].mxu0
  %2223 = vmatprep.mubr.bf16.mxu0 %v1541
  %2224 = vmatmul.mubr.bf16.gmra.mrb[0].mxu0 %v1439
  %v2225 = vpop.f32.mrb[0].mxu0
  %v2226 = vadd.f32 %v1845, %v2225
  %v2227 = vpop.f32.mrb[0].mxu0
  %v2228 = vpop.f32.mrb[0].mxu0
  %v2229 = vadd.f32 %v1845, %v2228
  %v2230 = vpop.f32.mrb[0].mxu0
  %2231 = vmatprep.mubr.bf16.mxu0 %v1545
  %2232 = vmatmul.mubr.bf16.gmra.mrb[0].mxu0 %v1442
  %v2233 = vpop.f32.mrb[0].mxu0
  %v2234 = vadd.f32 %v1845, %v2233
  %v2235 = vpop.f32.mrb[0].mxu0
  %v2236 = vpop.f32.mrb[0].mxu0
  %v2237 = vadd.f32 %v1845, %v2236
  %v2238 = vpop.f32.mrb[0].mxu0
  %2239 = vmatprep.mubr.bf16.mxu0 %v1549
  %2240 = vmatmul.mubr.bf16.gmra.mrb[0].mxu0 %v1445
  %v2241 = vpop.f32.mrb[0].mxu0
  %v2242 = vadd.f32 %v1845, %v2241
  %v2243 = vpop.f32.mrb[0].mxu0
  %v2244 = vpop.f32.mrb[0].mxu0
  %v2245 = vadd.f32 %v1845, %v2244
  %v2246 = vpop.f32.mrb[0].mxu0
  %2247 = vmatprep.mubr.bf16.mxu0 %v1553
  %2248 = vmatmul.mubr.bf16.gmra.mrb[0].mxu0 %v1448
  %v2249 = vpop.f32.mrb[0].mxu0
  %v2250 = vadd.f32 %v1845, %v2249
  %v2251 = vpop.f32.mrb[0].mxu0
  %v2252 = vpop.f32.mrb[0].mxu0
  %v2253 = vadd.f32 %v1845, %v2252
  %v2254 = vpop.f32.mrb[0].mxu0
  %2255 = vmatprep.mubr.bf16.mxu0 %v1557
  %2256 = vmatmul.mubr.bf16.gmra.mrb[0].mxu0 %v1451
  %v2257 = vpop.f32.mrb[0].mxu0
  %v2258 = vadd.f32 %v1845, %v2257
  %v2259 = vpop.f32.mrb[0].mxu0
  %v2260 = vpop.f32.mrb[0].mxu0
  %v2261 = vadd.f32 %v1845, %v2260
  %v2262 = vpop.f32.mrb[0].mxu0
  %2263 = vmatprep.mubr.bf16.mxu0 %v1561
  %2264 = vmatmul.mubr.bf16.gmra.mrb[0].mxu0 %v1454
  %v2265 = vpop.f32.mrb[0].mxu0
  %v2266 = vadd.f32 %v1845, %v2265
  %v2267 = vpop.f32.mrb[0].mxu0
  %v2268 = vpop.f32.mrb[0].mxu0
  %v2269 = vadd.f32 %v1845, %v2268
  %v2270 = vpop.f32.mrb[0].mxu0
  %2271 = vmatprep.mubr.bf16.mxu0 %v1565
  %2272 = vmatmul.mubr.bf16.gmra.mrb[0].mxu0 %v1457
  %v2273 = vpop.f32.mrb[0].mxu0
  %v2274 = vadd.f32 %v1845, %v2273
  %v2275 = vpop.f32.mrb[0].mxu0
  %v2276 = vpop.f32.mrb[0].mxu0
  %v2277 = vadd.f32 %v1845, %v2276
  %v2278 = vpop.f32.mrb[0].mxu0
  %2279 = vmatprep.mubr.bf16.mxu0 %v1569
  %2280 = vmatmul.mubr.bf16.gmra.mrb[0].mxu0 %v1460
  %v2281 = vpop.f32.mrb[0].mxu0
  %v2282 = vadd.f32 %v1845, %v2281
  %v2283 = vpop.f32.mrb[0].mxu0
  %v2284 = vpop.f32.mrb[0].mxu0
  %v2285 = vadd.f32 %v1845, %v2284
  %v2286 = vpop.f32.mrb[0].mxu0
  %2287 = vmatprep.mubr.bf16.mxu0 %v1572
  %2288 = vmatmul.mubr.bf16.gmra.mrb[0].mxu0 %v1415
  %v2289 = vpop.f32.mrb[0].mxu0
  %v2290 = vadd.f32 %v1845, %v2289
  %v2291 = vpop.f32.mrb[0].mxu0
  %v2292 = vpop.f32.mrb[0].mxu0
  %v2293 = vadd.f32 %v1845, %v2292
  %v2294 = vpop.f32.mrb[0].mxu0
  %2295 = vmatprep.mubr.bf16.mxu0 %v1576
  %2296 = vmatmul.mubr.bf16.gmra.mrb[0].mxu0 %v1463
  %v2297 = vpop.f32.mrb[0].mxu0
  %v2298 = vadd.f32 %v1845, %v2297
  %v2299 = vpop.f32.mrb[0].mxu0
  %v2300 = vpop.f32.mrb[0].mxu0
  %v2301 = vadd.f32 %v1845, %v2300
  %v2302 = vpop.f32.mrb[0].mxu0
  %2303 = vmatprep.mubr.bf16.mxu0 %v1580
  %2304 = vmatmul.mubr.bf16.gmra.mrb[0].mxu0 %v1466
  %v2305 = vpop.f32.mrb[0].mxu0
  %v2306 = vadd.f32 %v1845, %v2305
  %v2307 = vpop.f32.mrb[0].mxu0
  %v2308 = vpop.f32.mrb[0].mxu0
  %v2309 = vadd.f32 %v1845, %v2308
  %v2310 = vpop.f32.mrb[0].mxu0
  %2311 = vmatprep.mubr.bf16.mxu0 %v1584
  %2312 = vmatmul.mubr.bf16.gmra.mrb[0].mxu0 %v1469
  %v2313 = vpop.f32.mrb[0].mxu0
  %v2314 = vadd.f32 %v1845, %v2313
  %v2315 = vpop.f32.mrb[0].mxu0
  %v2316 = vpop.f32.mrb[0].mxu0
  %v2317 = vadd.f32 %v1845, %v2316
  %v2318 = vpop.f32.mrb[0].mxu0
  %2319 = vmatprep.mubr.bf16.mxu0 %v1588
  %2320 = vmatmul.mubr.bf16.gmra.mrb[0].mxu0 %v1472
  %v2321 = vpop.f32.mrb[0].mxu0
  %v2322 = vadd.f32 %v1845, %v2321
  %v2323 = vpop.f32.mrb[0].mxu0
  %v2324 = vpop.f32.mrb[0].mxu0
  %v2325 = vadd.f32 %v1845, %v2324
  %v2326 = vpop.f32.mrb[0].mxu0
  %2327 = vmatprep.mubr.bf16.mxu0 %v1592
  %2328 = vmatmul.mubr.bf16.gmra.mrb[0].mxu0 %v1475
  %v2329 = vpop.f32.mrb[0].mxu0
  %v2330 = vadd.f32 %v1845, %v2329
  %v2331 = vpop.f32.mrb[0].mxu0
  %v2332 = vpop.f32.mrb[0].mxu0
  %v2333 = vadd.f32 %v1845, %v2332
  %v2334 = vpop.f32.mrb[0].mxu0
  %2335 = vmatprep.mubr.bf16.mxu0 %v1596
  %2336 = vmatmul.mubr.bf16.gmra.mrb[0].mxu0 %v1478
  %v2337 = vpop.f32.mrb[0].mxu0
  %v2338 = vadd.f32 %v1845, %v2337
  %v2339 = vpop.f32.mrb[0].mxu0
  %v2340 = vpop.f32.mrb[0].mxu0
  %v2341 = vadd.f32 %v1845, %v2340
  %v2342 = vpop.f32.mrb[0].mxu0
  %2343 = vmatprep.mubr.bf16.mxu0 %v1600
  %2344 = vmatmul.mubr.bf16.gmra.mrb[0].mxu0 %v1481
  %v2345 = vpop.f32.mrb[0].mxu0
  %v2346 = vadd.f32 %v1845, %v2345
  %v2347 = vpop.f32.mrb[0].mxu0
  %v2348 = vpop.f32.mrb[0].mxu0
  %v2349 = vadd.f32 %v1845, %v2348
  %v2350 = vpop.f32.mrb[0].mxu0
  %2351 = vmatprep.mubr.bf16.mxu0 %v1604
  %2352 = vmatmul.mubr.bf16.gmra.mrb[0].mxu0 %v1484
  %v2353 = vpop.f32.mrb[0].mxu0
  %v2354 = vadd.f32 %v1845, %v2353
  %v2355 = vpop.f32.mrb[0].mxu0
  %v2356 = vpop.f32.mrb[0].mxu0
  %v2357 = vadd.f32 %v1845, %v2356
  %v2358 = vpop.f32.mrb[0].mxu0
  %2359 = vmatprep.mubr.bf16.mxu0 %v1608
  %2360 = vmatmul.mubr.bf16.gmra.mrb[0].mxu0 %v1487
  %v2361 = vpop.f32.mrb[0].mxu0
  %v2362 = vadd.f32 %v1845, %v2361
  %v2363 = vpop.f32.mrb[0].mxu0
  %v2364 = vpop.f32.mrb[0].mxu0
  %v2365 = vadd.f32 %v1845, %v2364
  %v2366 = vpop.f32.mrb[0].mxu0
  %2367 = vmatprep.mubr.bf16.mxu0 %v1612
  %2368 = vmatmul.mubr.bf16.gmra.mrb[0].mxu0 %v1490
  %v2369 = vpop.f32.mrb[0].mxu0
  %v2370 = vadd.f32 %v1845, %v2369
  %v2371 = vpop.f32.mrb[0].mxu0
  %v2372 = vpop.f32.mrb[0].mxu0
  %v2373 = vadd.f32 %v1845, %v2372
  %v2374 = vpop.f32.mrb[0].mxu0
  %2375 = vmatprep.mubr.bf16.mxu0 %v1616
  %2376 = vmatmul.mubr.bf16.gmra.mrb[0].mxu0 %v1493
  %v2377 = vpop.f32.mrb[0].mxu0
  %v2378 = vadd.f32 %v1845, %v2377
  %v2379 = vpop.f32.mrb[0].mxu0
  %v2380 = vpop.f32.mrb[0].mxu0
  %v2381 = vadd.f32 %v1845, %v2380
  %v2382 = vpop.f32.mrb[0].mxu0
  %2383 = vmatprep.mubr.bf16.mxu0 %v1620
  %2384 = vmatmul.mubr.bf16.gmra.mrb[0].mxu0 %v1496
  %v2385 = vpop.f32.mrb[0].mxu0
  %v2386 = vadd.f32 %v1845, %v2385
  %v2387 = vpop.f32.mrb[0].mxu0
  %v2388 = vpop.f32.mrb[0].mxu0
  %v2389 = vadd.f32 %v1845, %v2388
  %v2390 = vpop.f32.mrb[0].mxu0
  %2391 = vmatprep.mubr.bf16.mxu0 %v1624
  %2392 = vmatmul.mubr.bf16.gmra.mrb[0].mxu0 %v1499
  %v2393 = vpop.f32.mrb[0].mxu0
  %v2394 = vadd.f32 %v1845, %v2393
  %v2395 = vpop.f32.mrb[0].mxu0
  %v2396 = vpop.f32.mrb[0].mxu0
  %v2397 = vadd.f32 %v1845, %v2396
  %v2398 = vpop.f32.mrb[0].mxu0
  %2399 = vmatprep.mubr.bf16.mxu0 %v1628
  %2400 = vmatmul.mubr.bf16.gmra.mrb[0].mxu0 %v1502
  %v2401 = vpop.f32.mrb[0].mxu0
  %v2402 = vadd.f32 %v1845, %v2401
  %v2403 = vpop.f32.mrb[0].mxu0
  %v2404 = vpop.f32.mrb[0].mxu0
  %v2405 = vadd.f32 %v1845, %v2404
  %v2406 = vpop.f32.mrb[0].mxu0
  %2407 = vmatprep.mubr.bf16.mxu0 %v1632
  %2408 = vmatmul.mubr.bf16.gmra.mrb[0].mxu0 %v1505
  %v2409 = vpop.f32.mrb[0].mxu0
  %v2410 = vadd.f32 %v1845, %v2409
  %v2411 = vpop.f32.mrb[0].mxu0
  %v2412 = vpop.f32.mrb[0].mxu0
  %v2413 = vadd.f32 %v1845, %v2412
  %v2414 = vpop.f32.mrb[0].mxu0
  %2415 = vdwg.mxu0
  %2416 = vmatprep.subr.bf16.mxu0 0
  %2417 = vmatpush1.bf16.msra.mxu0 %v2007
  %2418 = vmatprep.subr.bf16.mxu0 0
  %2419 = vmatpush1.bf16.msra.mxu0 %v2008
  %2420 = vmatprep.subr.bf16.mxu0 0
  %2421 = vmatpush1.bf16.msra.mxu0 %v2009
  %2422 = vmatprep.subr.bf16.mxu0 0
  %2423 = vmatpush1.bf16.msra.mxu0 %v2010
  %2424 = vmatprep.subr.bf16.mxu0 0
  %2425 = vmatpush1.bf16.msra.mxu0 %v2011
  %2426 = vmatprep.subr.bf16.mxu0 0
  %2427 = vmatpush1.bf16.msra.mxu0 %v2012
  %2428 = vmatprep.subr.bf16.mxu0 0
  %2429 = vmatpush1.bf16.msra.mxu0 %v2013
  %2430 = vmatprep.subr.bf16.mxu0 0
  %2431 = vmatpush1.bf16.msra.mxu0 %v2014
  %2432 = vmatprep.subr.bf16.mxu0 0
  %2433 = vmatpush1.bf16.msra.mxu0 %v2015
  %2434 = vmatprep.subr.bf16.mxu0 0
  %2435 = vmatpush1.bf16.msra.mxu0 %v2016
  %2436 = vmatprep.subr.bf16.mxu0 0
  %2437 = vmatpush1.bf16.msra.mxu0 %v2017
  %2438 = vmatprep.subr.bf16.mxu0 0
  %2439 = vmatpush1.bf16.msra.mxu0 %v2018
  %2440 = vmatprep.subr.bf16.mxu0 0
  %2441 = vmatpush1.bf16.msra.mxu0 %v2019
  %2442 = vmatprep.subr.bf16.mxu0 0
  %2443 = vmatpush1.bf16.msra.mxu0 %v2020
  %2444 = vmatprep.subr.bf16.mxu0 0
  %2445 = vmatpush1.bf16.msra.mxu0 %v2021
  %2446 = vmatprep.subr.bf16.mxu0 0
  %2447 = vmatpush1.bf16.msra.mxu0 %v2022
  %2448 = vmatprep.mubr.bf16.mxu0 %v1421
  %2449 = vmatmul.mubr.bf16.gmra.mrb[0].mxu0 %v1636
  %v2450 = vpop.f32.mrb[0].mxu0
  %v2451 = vadd.f32 %v2162, %v2450
  %v2452 = vpop.f32.mrb[0].mxu0
  %v2453 = vpop.f32.mrb[0].mxu0
  %v2454 = vadd.f32 %v2165, %v2453
  %v2455 = vpop.f32.mrb[0].mxu0
  %2456 = vmatprep.mubr.bf16.mxu0 %v1424
  %2457 = vmatmul.mubr.bf16.gmra.mrb[0].mxu0 %v1640
  %v2458 = vpop.f32.mrb[0].mxu0
  %v2459 = vadd.f32 %v2170, %v2458
  %v2460 = vpop.f32.mrb[0].mxu0
  %v2461 = vpop.f32.mrb[0].mxu0
  %v2462 = vadd.f32 %v2173, %v2461
  %v2463 = vpop.f32.mrb[0].mxu0
  %2464 = vmatprep.mubr.bf16.mxu0 %v1427
  %2465 = vmatmul.mubr.bf16.gmra.mrb[0].mxu0 %v1644
  %v2466 = vpop.f32.mrb[0].mxu0
  %v2467 = vadd.f32 %v2178, %v2466
  %v2468 = vpop.f32.mrb[0].mxu0
  %v2469 = vpop.f32.mrb[0].mxu0
  %v2470 = vadd.f32 %v2181, %v2469
  %v2471 = vpop.f32.mrb[0].mxu0
  %2472 = vmatprep.mubr.bf16.mxu0 %v1430
  %2473 = vmatmul.mubr.bf16.gmra.mrb[0].mxu0 %v1648
  %v2474 = vpop.f32.mrb[0].mxu0
  %v2475 = vadd.f32 %v2186, %v2474
  %v2476 = vpop.f32.mrb[0].mxu0
  %v2477 = vpop.f32.mrb[0].mxu0
  %v2478 = vadd.f32 %v2189, %v2477
  %v2479 = vpop.f32.mrb[0].mxu0
  %2480 = vmatprep.mubr.bf16.mxu0 %v1433
  %2481 = vmatmul.mubr.bf16.gmra.mrb[0].mxu0 %v1652
  %v2482 = vpop.f32.mrb[0].mxu0
  %v2483 = vadd.f32 %v2194, %v2482
  %v2484 = vpop.f32.mrb[0].mxu0
  %v2485 = vpop.f32.mrb[0].mxu0
  %v2486 = vadd.f32 %v2197, %v2485
  %v2487 = vpop.f32.mrb[0].mxu0
  %2488 = vmatprep.mubr.bf16.mxu0 %v1436
  %2489 = vmatmul.mubr.bf16.gmra.mrb[0].mxu0 %v1656
  %v2490 = vpop.f32.mrb[0].mxu0
  %v2491 = vadd.f32 %v2202, %v2490
  %v2492 = vpop.f32.mrb[0].mxu0
  %v2493 = vpop.f32.mrb[0].mxu0
  %v2494 = vadd.f32 %v2205, %v2493
  %v2495 = vpop.f32.mrb[0].mxu0
  %2496 = vmatprep.mubr.bf16.mxu0 %v1439
  %2497 = vmatmul.mubr.bf16.gmra.mrb[0].mxu0 %v1660
  %v2498 = vpop.f32.mrb[0].mxu0
  %v2499 = vadd.f32 %v2210, %v2498
  %v2500 = vpop.f32.mrb[0].mxu0
  %v2501 = vpop.f32.mrb[0].mxu0
  %v2502 = vadd.f32 %v2213, %v2501
  %v2503 = vpop.f32.mrb[0].mxu0
  %2504 = vmatprep.mubr.bf16.mxu0 %v1442
  %2505 = vmatmul.mubr.bf16.gmra.mrb[0].mxu0 %v1664
  %v2506 = vpop.f32.mrb[0].mxu0
  %v2507 = vadd.f32 %v2218, %v2506
  %v2508 = vpop.f32.mrb[0].mxu0
  %v2509 = vpop.f32.mrb[0].mxu0
  %v2510 = vadd.f32 %v2221, %v2509
  %v2511 = vpop.f32.mrb[0].mxu0
  %2512 = vmatprep.mubr.bf16.mxu0 %v1445
  %2513 = vmatmul.mubr.bf16.gmra.mrb[0].mxu0 %v1668
  %v2514 = vpop.f32.mrb[0].mxu0
  %v2515 = vadd.f32 %v2226, %v2514
  %v2516 = vpop.f32.mrb[0].mxu0
  %v2517 = vpop.f32.mrb[0].mxu0
  %v2518 = vadd.f32 %v2229, %v2517
  %v2519 = vpop.f32.mrb[0].mxu0
  %2520 = vmatprep.mubr.bf16.mxu0 %v1448
  %2521 = vmatmul.mubr.bf16.gmra.mrb[0].mxu0 %v1672
  %v2522 = vpop.f32.mrb[0].mxu0
  %v2523 = vadd.f32 %v2234, %v2522
  %v2524 = vpop.f32.mrb[0].mxu0
  %v2525 = vpop.f32.mrb[0].mxu0
  %v2526 = vadd.f32 %v2237, %v2525
  %v2527 = vpop.f32.mrb[0].mxu0
  %2528 = vmatprep.mubr.bf16.mxu0 %v1451
  %2529 = vmatmul.mubr.bf16.gmra.mrb[0].mxu0 %v1676
  %v2530 = vpop.f32.mrb[0].mxu0
  %v2531 = vadd.f32 %v2242, %v2530
  %v2532 = vpop.f32.mrb[0].mxu0
  %v2533 = vpop.f32.mrb[0].mxu0
  %v2534 = vadd.f32 %v2245, %v2533
  %v2535 = vpop.f32.mrb[0].mxu0
  %2536 = vmatprep.mubr.bf16.mxu0 %v1454
  %2537 = vmatmul.mubr.bf16.gmra.mrb[0].mxu0 %v1680
  %v2538 = vpop.f32.mrb[0].mxu0
  %v2539 = vadd.f32 %v2250, %v2538
  %v2540 = vpop.f32.mrb[0].mxu0
  %v2541 = vpop.f32.mrb[0].mxu0
  %v2542 = vadd.f32 %v2253, %v2541
  %v2543 = vpop.f32.mrb[0].mxu0
  %2544 = vmatprep.mubr.bf16.mxu0 %v1457
  %2545 = vmatmul.mubr.bf16.gmra.mrb[0].mxu0 %v1684
  %v2546 = vpop.f32.mrb[0].mxu0
  %v2547 = vadd.f32 %v2258, %v2546
  %v2548 = vpop.f32.mrb[0].mxu0
  %v2549 = vpop.f32.mrb[0].mxu0
  %v2550 = vadd.f32 %v2261, %v2549
  %v2551 = vpop.f32.mrb[0].mxu0
  %2552 = vmatprep.mubr.bf16.mxu0 %v1460
  %2553 = vmatmul.mubr.bf16.gmra.mrb[0].mxu0 %v1688
  %v2554 = vpop.f32.mrb[0].mxu0
  %v2555 = vadd.f32 %v2266, %v2554
  %v2556 = vpop.f32.mrb[0].mxu0
  %v2557 = vpop.f32.mrb[0].mxu0
  %v2558 = vadd.f32 %v2269, %v2557
  %v2559 = vpop.f32.mrb[0].mxu0
  %2560 = vmatprep.mubr.bf16.mxu0 %v1763
  %2561 = vmatmul.mubr.bf16.gmra.mrb[0].mxu0 %v1692
  %v2562 = vpop.f32.mrb[0].mxu0
  %v2563 = vadd.f32 %v2274, %v2562
  %v2564 = vpop.f32.mrb[0].mxu0
  %v2565 = vpop.f32.mrb[0].mxu0
  %v2566 = vadd.f32 %v2277, %v2565
  %v2567 = vpop.f32.mrb[0].mxu0
  %2568 = vmatprep.mubr.bf16.mxu0 %v1415
  %2569 = vmatmul.mubr.bf16.gmra.mrb[0].mxu0 %v1696
  %v2570 = vpop.f32.mrb[0].mxu0
  %v2571 = vadd.f32 %v2282, %v2570
  %v2572 = vpop.f32.mrb[0].mxu0
  %v2573 = vpop.f32.mrb[0].mxu0
  %v2574 = vadd.f32 %v2285, %v2573
  %v2575 = vpop.f32.mrb[0].mxu0
  %2576 = vmatprep.mubr.bf16.mxu0 %v1466
  %2577 = vmatmul.mubr.bf16.gmra.mrb[0].mxu0 %v1700
  %v2578 = vpop.f32.mrb[0].mxu0
  %v2579 = vadd.f32 %v2290, %v2578
  %v2580 = vpop.f32.mrb[0].mxu0
  %v2581 = vpop.f32.mrb[0].mxu0
  %v2582 = vadd.f32 %v2293, %v2581
  %v2583 = vpop.f32.mrb[0].mxu0
  %2584 = vmatprep.mubr.bf16.mxu0 %v1469
  %2585 = vmatmul.mubr.bf16.gmra.mrb[0].mxu0 %v1704
  %v2586 = vpop.f32.mrb[0].mxu0
  %v2587 = vadd.f32 %v2298, %v2586
  %v2588 = vpop.f32.mrb[0].mxu0
  %v2589 = vpop.f32.mrb[0].mxu0
  %v2590 = vadd.f32 %v2301, %v2589
  %v2591 = vpop.f32.mrb[0].mxu0
  %2592 = vmatprep.mubr.bf16.mxu0 %v1472
  %2593 = vmatmul.mubr.bf16.gmra.mrb[0].mxu0 %v1708
  %v2594 = vpop.f32.mrb[0].mxu0
  %v2595 = vadd.f32 %v2306, %v2594
  %v2596 = vpop.f32.mrb[0].mxu0
  %v2597 = vpop.f32.mrb[0].mxu0
  %v2598 = vadd.f32 %v2309, %v2597
  %v2599 = vpop.f32.mrb[0].mxu0
  %2600 = vmatprep.mubr.bf16.mxu0 %v1475
  %2601 = vmatmul.mubr.bf16.gmra.mrb[0].mxu0 %v1712
  %v2602 = vpop.f32.mrb[0].mxu0
  %v2603 = vadd.f32 %v2314, %v2602
  %v2604 = vpop.f32.mrb[0].mxu0
  %v2605 = vpop.f32.mrb[0].mxu0
  %v2606 = vadd.f32 %v2317, %v2605
  %v2607 = vpop.f32.mrb[0].mxu0
  %2608 = vmatprep.mubr.bf16.mxu0 %v1478
  %2609 = vmatmul.mubr.bf16.gmra.mrb[0].mxu0 %v1716
  %v2610 = vpop.f32.mrb[0].mxu0
  %v2611 = vadd.f32 %v2322, %v2610
  %v2612 = vpop.f32.mrb[0].mxu0
  %v2613 = vpop.f32.mrb[0].mxu0
  %v2614 = vadd.f32 %v2325, %v2613
  %v2615 = vpop.f32.mrb[0].mxu0
  %2616 = vmatprep.mubr.bf16.mxu0 %v1481
  %2617 = vmatmul.mubr.bf16.gmra.mrb[0].mxu0 %v1720
  %v2618 = vpop.f32.mrb[0].mxu0
  %v2619 = vadd.f32 %v2330, %v2618
  %v2620 = vpop.f32.mrb[0].mxu0
  %v2621 = vpop.f32.mrb[0].mxu0
  %v2622 = vadd.f32 %v2333, %v2621
  %v2623 = vpop.f32.mrb[0].mxu0
  %2624 = vmatprep.mubr.bf16.mxu0 %v1484
  %2625 = vmatmul.mubr.bf16.gmra.mrb[0].mxu0 %v1724
  %v2626 = vpop.f32.mrb[0].mxu0
  %v2627 = vadd.f32 %v2338, %v2626
  %v2628 = vpop.f32.mrb[0].mxu0
  %v2629 = vpop.f32.mrb[0].mxu0
  %v2630 = vadd.f32 %v2341, %v2629
  %v2631 = vpop.f32.mrb[0].mxu0
  %2632 = vmatprep.mubr.bf16.mxu0 %v1487
  %2633 = vmatmul.mubr.bf16.gmra.mrb[0].mxu0 %v1728
  %v2634 = vpop.f32.mrb[0].mxu0
  %v2635 = vadd.f32 %v2346, %v2634
  %v2636 = vpop.f32.mrb[0].mxu0
  %v2637 = vpop.f32.mrb[0].mxu0
  %v2638 = vadd.f32 %v2349, %v2637
  %v2639 = vpop.f32.mrb[0].mxu0
  %2640 = vmatprep.mubr.bf16.mxu0 %v1490
  %2641 = vmatmul.mubr.bf16.gmra.mrb[0].mxu0 %v1732
  %v2642 = vpop.f32.mrb[0].mxu0
  %v2643 = vadd.f32 %v2354, %v2642
  %v2644 = vpop.f32.mrb[0].mxu0
  %v2645 = vpop.f32.mrb[0].mxu0
  %v2646 = vadd.f32 %v2357, %v2645
  %v2647 = vpop.f32.mrb[0].mxu0
  %2648 = vmatprep.mubr.bf16.mxu0 %v1493
  %2649 = vmatmul.mubr.bf16.gmra.mrb[0].mxu0 %v1736
  %v2650 = vpop.f32.mrb[0].mxu0
  %v2651 = vadd.f32 %v2362, %v2650
  %v2652 = vpop.f32.mrb[0].mxu0
  %v2653 = vpop.f32.mrb[0].mxu0
  %v2654 = vadd.f32 %v2365, %v2653
  %v2655 = vpop.f32.mrb[0].mxu0
  %2656 = vmatprep.mubr.bf16.mxu0 %v1496
  %2657 = vmatmul.mubr.bf16.gmra.mrb[0].mxu0 %v1740
  %v2658 = vpop.f32.mrb[0].mxu0
  %v2659 = vadd.f32 %v2370, %v2658
  %v2660 = vpop.f32.mrb[0].mxu0
  %v2661 = vpop.f32.mrb[0].mxu0
  %v2662 = vadd.f32 %v2373, %v2661
  %v2663 = vpop.f32.mrb[0].mxu0
  %2664 = vmatprep.mubr.bf16.mxu0 %v1499
  %2665 = vmatmul.mubr.bf16.gmra.mrb[0].mxu0 %v1744
  %v2666 = vpop.f32.mrb[0].mxu0
  %v2667 = vadd.f32 %v2378, %v2666
  %v2668 = vpop.f32.mrb[0].mxu0
  %v2669 = vpop.f32.mrb[0].mxu0
  %v2670 = vadd.f32 %v2381, %v2669
  %v2671 = vpop.f32.mrb[0].mxu0
  %2672 = vmatprep.mubr.bf16.mxu0 %v1502
  %2673 = vmatmul.mubr.bf16.gmra.mrb[0].mxu0 %v1748
  %v2674 = vpop.f32.mrb[0].mxu0
  %v2675 = vadd.f32 %v2386, %v2674
  %v2676 = vpop.f32.mrb[0].mxu0
  %v2677 = vpop.f32.mrb[0].mxu0
  %v2678 = vadd.f32 %v2389, %v2677
  %v2679 = vpop.f32.mrb[0].mxu0
  %2680 = vmatprep.mubr.bf16.mxu0 %v1505
  %2681 = vmatmul.mubr.bf16.gmra.mrb[0].mxu0 %v1752
  %v2682 = vpop.f32.mrb[0].mxu0
  %v2683 = vadd.f32 %v2394, %v2682
  %v2684 = vpop.f32.mrb[0].mxu0
  %v2685 = vpop.f32.mrb[0].mxu0
  %v2686 = vadd.f32 %v2397, %v2685
  %v2687 = vpop.f32.mrb[0].mxu0
  %2688 = vmatprep.mubr.bf16.mxu0 %v1766
  %2689 = vmatmul.mubr.bf16.gmra.mrb[0].mxu0 %v1756
  %v2690 = vpop.f32.mrb[0].mxu0
  %v2691 = vadd.f32 %v2402, %v2690
  %v2692 = vpop.f32.mrb[0].mxu0
  %v2693 = vpop.f32.mrb[0].mxu0
  %v2694 = vadd.f32 %v2405, %v2693
  %v2695 = vpop.f32.mrb[0].mxu0
  %2696 = vmatprep.mubr.bf16.mxu0 %v1415
  %2697 = vmatmul.mubr.bf16.gmra.mrb[0].mxu0 %v1760
  %v2698 = vpop.f32.mrb[0].mxu0
  %v2699 = vadd.f32 %v2410, %v2698
  %v2700 = vpop.f32.mrb[0].mxu0
  %v2701 = vpop.f32.mrb[0].mxu0
  %v2702 = vadd.f32 %v2413, %v2701
  %v2703 = vpop.f32.mrb[0].mxu0
  %2704 = vdwg.mxu0
  %2705 = vmatprep.subr.bf16.mxu0 0
  %2706 = vmatpush1.bf16.msra.mxu0 %v2023
  %2707 = vmatprep.subr.bf16.mxu0 0
  %2708 = vmatpush1.bf16.msra.mxu0 %v2024
  %2709 = vmatprep.subr.bf16.mxu0 0
  %2710 = vmatpush1.bf16.msra.mxu0 %v2025
  %2711 = vmatprep.subr.bf16.mxu0 0
  %2712 = vmatpush1.bf16.msra.mxu0 %v2026
  %2713 = vmatprep.subr.bf16.mxu0 0
  %2714 = vmatpush1.bf16.msra.mxu0 0
  %2715 = vmatprep.subr.bf16.mxu0 0
  %2716 = vmatpush1.bf16.msra.mxu0 0
  %2717 = vmatprep.subr.bf16.mxu0 0
  %2718 = vmatpush1.bf16.msra.mxu0 0
  %2719 = vmatprep.subr.bf16.mxu0 0
  %2720 = vmatpush1.bf16.msra.mxu0 0
  %2721 = vmatprep.subr.bf16.mxu0 0
  %2722 = vmatpush1.bf16.msra.mxu0 0
  %2723 = vmatprep.subr.bf16.mxu0 0
  %2724 = vmatpush1.bf16.msra.mxu0 0
  %2725 = vmatprep.subr.bf16.mxu0 0
  %2726 = vmatpush1.bf16.msra.mxu0 0
  %2727 = vmatprep.subr.bf16.mxu0 0
  %2728 = vmatpush1.bf16.msra.mxu0 0
  %2729 = vmatprep.subr.bf16.mxu0 0
  %2730 = vmatpush1.bf16.msra.mxu0 0
  %2731 = vmatprep.subr.bf16.mxu0 0
  %2732 = vmatpush1.bf16.msra.mxu0 0
  %2733 = vmatprep.subr.bf16.mxu0 0
  %2734 = vmatpush1.bf16.msra.mxu0 0
  %2735 = vmatprep.subr.bf16.mxu0 0
  %2736 = vmatpush1.bf16.msra.mxu0 0
  %2737 = vmatprep.mubr.bf16.mxu0 0
  %2738 = vmatmul.mubr.bf16.gmra.mrb[0].mxu0 %v2063
  %v2739 = vpop.f32.mrb[0].mxu0
  %v2740 = vadd.f32 %v2451, %v2739
  %v2741 = vpop.f32.mrb[0].mxu0
  %v2742 = vpop.f32.mrb[0].mxu0
  %v2743 = vadd.f32 %v2454, %v2742
  %v2744 = vpop.f32.mrb[0].mxu0
  %2745 = vmatprep.mubr.bf16.mxu0 0
  %2746 = vmatmul.mubr.bf16.gmra.mrb[0].mxu0 %v2065
  %v2747 = vpop.f32.mrb[0].mxu0
  %v2748 = vadd.f32 %v2459, %v2747
  %v2749 = vpop.f32.mrb[0].mxu0
  %v2750 = vpop.f32.mrb[0].mxu0
  %v2751 = vadd.f32 %v2462, %v2750
  %v2752 = vpop.f32.mrb[0].mxu0
  %2753 = vmatprep.mubr.bf16.mxu0 0
  %2754 = vmatmul.mubr.bf16.gmra.mrb[0].mxu0 %v2067
  %v2755 = vpop.f32.mrb[0].mxu0
  %v2756 = vadd.f32 %v2467, %v2755
  %v2757 = vpop.f32.mrb[0].mxu0
  %v2758 = vpop.f32.mrb[0].mxu0
  %v2759 = vadd.f32 %v2470, %v2758
  %v2760 = vpop.f32.mrb[0].mxu0
  %2761 = vmatprep.mubr.bf16.mxu0 0
  %2762 = vmatmul.mubr.bf16.gmra.mrb[0].mxu0 %v2069
  %v2763 = vpop.f32.mrb[0].mxu0
  %v2764 = vadd.f32 %v2475, %v2763
  %v2765 = vpop.f32.mrb[0].mxu0
  %v2766 = vpop.f32.mrb[0].mxu0
  %v2767 = vadd.f32 %v2478, %v2766
  %v2768 = vpop.f32.mrb[0].mxu0
  %2769 = vmatprep.mubr.bf16.mxu0 0
  %2770 = vmatmul.mubr.bf16.gmra.mrb[0].mxu0 %v2071
  %v2771 = vpop.f32.mrb[0].mxu0
  %v2772 = vadd.f32 %v2483, %v2771
  %v2773 = vpop.f32.mrb[0].mxu0
  %v2774 = vpop.f32.mrb[0].mxu0
  %v2775 = vadd.f32 %v2486, %v2774
  %v2776 = vpop.f32.mrb[0].mxu0
  %2777 = vmatprep.mubr.bf16.mxu0 0
  %2778 = vmatmul.mubr.bf16.gmra.mrb[0].mxu0 %v2073
  %v2779 = vpop.f32.mrb[0].mxu0
  %v2780 = vadd.f32 %v2491, %v2779
  %v2781 = vpop.f32.mrb[0].mxu0
  %v2782 = vpop.f32.mrb[0].mxu0
  %v2783 = vadd.f32 %v2494, %v2782
  %v2784 = vpop.f32.mrb[0].mxu0
  %2785 = vmatprep.mubr.bf16.mxu0 0
  %2786 = vmatmul.mubr.bf16.gmra.mrb[0].mxu0 %v2075
  %v2787 = vpop.f32.mrb[0].mxu0
  %v2788 = vadd.f32 %v2499, %v2787
  %v2789 = vpop.f32.mrb[0].mxu0
  %v2790 = vpop.f32.mrb[0].mxu0
  %v2791 = vadd.f32 %v2502, %v2790
  %v2792 = vpop.f32.mrb[0].mxu0
  %2793 = vmatprep.mubr.bf16.mxu0 0
  %2794 = vmatmul.mubr.bf16.gmra.mrb[0].mxu0 %v2077
  %v2795 = vpop.f32.mrb[0].mxu0
  %v2796 = vadd.f32 %v2507, %v2795
  %v2797 = vpop.f32.mrb[0].mxu0
  %v2798 = vpop.f32.mrb[0].mxu0
  %v2799 = vadd.f32 %v2510, %v2798
  %v2800 = vpop.f32.mrb[0].mxu0
  %2801 = vmatprep.mubr.bf16.mxu0 0
  %2802 = vmatmul.mubr.bf16.gmra.mrb[0].mxu0 %v2079
  %v2803 = vpop.f32.mrb[0].mxu0
  %v2804 = vadd.f32 %v2515, %v2803
  %v2805 = vpop.f32.mrb[0].mxu0
  %v2806 = vpop.f32.mrb[0].mxu0
  %v2807 = vadd.f32 %v2518, %v2806
  %v2808 = vpop.f32.mrb[0].mxu0
  %2809 = vmatprep.mubr.bf16.mxu0 0
  %2810 = vmatmul.mubr.bf16.gmra.mrb[0].mxu0 %v2081
  %v2811 = vpop.f32.mrb[0].mxu0
  %v2812 = vadd.f32 %v2523, %v2811
  %v2813 = vpop.f32.mrb[0].mxu0
  %v2814 = vpop.f32.mrb[0].mxu0
  %v2815 = vadd.f32 %v2526, %v2814
  %v2816 = vpop.f32.mrb[0].mxu0
  %2817 = vmatprep.mubr.bf16.mxu0 0
  %2818 = vmatmul.mubr.bf16.gmra.mrb[0].mxu0 %v2083
  %v2819 = vpop.f32.mrb[0].mxu0
  %v2820 = vadd.f32 %v2531, %v2819
  %v2821 = vpop.f32.mrb[0].mxu0
  %v2822 = vpop.f32.mrb[0].mxu0
  %v2823 = vadd.f32 %v2534, %v2822
  %v2824 = vpop.f32.mrb[0].mxu0
  %2825 = vmatprep.mubr.bf16.mxu0 0
  %2826 = vmatmul.mubr.bf16.gmra.mrb[0].mxu0 %v2085
  %v2827 = vpop.f32.mrb[0].mxu0
  %v2828 = vadd.f32 %v2539, %v2827
  %v2829 = vpop.f32.mrb[0].mxu0
  %v2830 = vpop.f32.mrb[0].mxu0
  %v2831 = vadd.f32 %v2542, %v2830
  %v2832 = vpop.f32.mrb[0].mxu0
  %2833 = vmatprep.mubr.bf16.mxu0 0
  %2834 = vmatmul.mubr.bf16.gmra.mrb[0].mxu0 %v2087
  %v2835 = vpop.f32.mrb[0].mxu0
  %v2836 = vadd.f32 %v2547, %v2835
  %v2837 = vpop.f32.mrb[0].mxu0
  %v2838 = vpop.f32.mrb[0].mxu0
  %v2839 = vadd.f32 %v2550, %v2838
  %v2840 = vpop.f32.mrb[0].mxu0
  %2841 = vmatprep.mubr.bf16.mxu0 0
  %2842 = vmatmul.mubr.bf16.gmra.mrb[0].mxu0 %v2089
  %v2843 = vpop.f32.mrb[0].mxu0
  %v2844 = vadd.f32 %v2555, %v2843
  %v2845 = vpop.f32.mrb[0].mxu0
  %v2846 = vpop.f32.mrb[0].mxu0
  %v2847 = vadd.f32 %v2558, %v2846
  %v2848 = vpop.f32.mrb[0].mxu0
  %2849 = vmatprep.mubr.bf16.mxu0 0
  %2850 = vmatmul.mubr.bf16.gmra.mrb[0].mxu0 %v2092
  %v2851 = vpop.f32.mrb[0].mxu0
  %v2852 = vadd.f32 %v2563, %v2851
  %v2853 = vpop.f32.mrb[0].mxu0
  %v2854 = vpop.f32.mrb[0].mxu0
  %v2855 = vadd.f32 %v2566, %v2854
  %v2856 = vpop.f32.mrb[0].mxu0
  %2857 = vmatprep.mubr.bf16.mxu0 0
  %2858 = vmatmul.mubr.bf16.gmra.mrb[0].mxu0 %v2094
  %v2859 = vpop.f32.mrb[0].mxu0
  %v2860 = vadd.f32 %v2571, %v2859
  %v2861 = vpop.f32.mrb[0].mxu0
  %v2862 = vpop.f32.mrb[0].mxu0
  %v2863 = vadd.f32 %v2574, %v2862
  %v2864 = vpop.f32.mrb[0].mxu0
  %2865 = vmatprep.mubr.bf16.mxu0 0
  %2866 = vmatmul.mubr.bf16.gmra.mrb[0].mxu0 %v2096
  %v2867 = vpop.f32.mrb[0].mxu0
  %v2868 = vadd.f32 %v2579, %v2867
  %v2869 = vpop.f32.mrb[0].mxu0
  %v2870 = vpop.f32.mrb[0].mxu0
  %v2871 = vadd.f32 %v2582, %v2870
  %v2872 = vpop.f32.mrb[0].mxu0
  %2873 = vmatprep.mubr.bf16.mxu0 0
  %2874 = vmatmul.mubr.bf16.gmra.mrb[0].mxu0 %v2098
  %v2875 = vpop.f32.mrb[0].mxu0
  %v2876 = vadd.f32 %v2587, %v2875
  %v2877 = vpop.f32.mrb[0].mxu0
  %v2878 = vpop.f32.mrb[0].mxu0
  %v2879 = vadd.f32 %v2590, %v2878
  %v2880 = vpop.f32.mrb[0].mxu0
  %2881 = vmatprep.mubr.bf16.mxu0 0
  %2882 = vmatmul.mubr.bf16.gmra.mrb[0].mxu0 %v2100
  %v2883 = vpop.f32.mrb[0].mxu0
  %v2884 = vadd.f32 %v2595, %v2883
  %v2885 = vpop.f32.mrb[0].mxu0
  %v2886 = vpop.f32.mrb[0].mxu0
  %v2887 = vadd.f32 %v2598, %v2886
  %v2888 = vpop.f32.mrb[0].mxu0
  %2889 = vmatprep.mubr.bf16.mxu0 0
  %2890 = vmatmul.mubr.bf16.gmra.mrb[0].mxu0 %v2102
  %v2891 = vpop.f32.mrb[0].mxu0
  %v2892 = vadd.f32 %v2603, %v2891
  %v2893 = vpop.f32.mrb[0].mxu0
  %v2894 = vpop.f32.mrb[0].mxu0
  %v2895 = vadd.f32 %v2606, %v2894
  %v2896 = vpop.f32.mrb[0].mxu0
  %2897 = vmatprep.mubr.bf16.mxu0 0
  %2898 = vmatmul.mubr.bf16.gmra.mrb[0].mxu0 %v2104
  %v2899 = vpop.f32.mrb[0].mxu0
  %v2900 = vadd.f32 %v2611, %v2899
  %v2901 = vpop.f32.mrb[0].mxu0
  %v2902 = vpop.f32.mrb[0].mxu0
  %v2903 = vadd.f32 %v2614, %v2902
  %v2904 = vpop.f32.mrb[0].mxu0
  %2905 = vmatprep.mubr.bf16.mxu0 0
  %2906 = vmatmul.mubr.bf16.gmra.mrb[0].mxu0 %v2106
  %v2907 = vpop.f32.mrb[0].mxu0
  %v2908 = vadd.f32 %v2619, %v2907
  %v2909 = vpop.f32.mrb[0].mxu0
  %v2910 = vpop.f32.mrb[0].mxu0
  %v2911 = vadd.f32 %v2622, %v2910
  %v2912 = vpop.f32.mrb[0].mxu0
  %2913 = vmatprep.mubr.bf16.mxu0 0
  %2914 = vmatmul.mubr.bf16.gmra.mrb[0].mxu0 %v2108
  %v2915 = vpop.f32.mrb[0].mxu0
  %v2916 = vadd.f32 %v2627, %v2915
  %v2917 = vpop.f32.mrb[0].mxu0
  %v2918 = vpop.f32.mrb[0].mxu0
  %v2919 = vadd.f32 %v2630, %v2918
  %v2920 = vpop.f32.mrb[0].mxu0
  %2921 = vmatprep.mubr.bf16.mxu0 0
  %2922 = vmatmul.mubr.bf16.gmra.mrb[0].mxu0 %v2110
  %v2923 = vpop.f32.mrb[0].mxu0
  %v2924 = vadd.f32 %v2635, %v2923
  %v2925 = vpop.f32.mrb[0].mxu0
  %v2926 = vpop.f32.mrb[0].mxu0
  %v2927 = vadd.f32 %v2638, %v2926
  %v2928 = vpop.f32.mrb[0].mxu0
  %2929 = vmatprep.mubr.bf16.mxu0 0
  %2930 = vmatmul.mubr.bf16.gmra.mrb[0].mxu0 %v2112
  %v2931 = vpop.f32.mrb[0].mxu0
  %v2932 = vadd.f32 %v2643, %v2931
  %v2933 = vpop.f32.mrb[0].mxu0
  %v2934 = vpop.f32.mrb[0].mxu0
  %v2935 = vadd.f32 %v2646, %v2934
  %v2936 = vpop.f32.mrb[0].mxu0
  %2937 = vmatprep.mubr.bf16.mxu0 0
  %2938 = vmatmul.mubr.bf16.gmra.mrb[0].mxu0 %v2114
  %v2939 = vpop.f32.mrb[0].mxu0
  %v2940 = vadd.f32 %v2651, %v2939
  %v2941 = vpop.f32.mrb[0].mxu0
  %v2942 = vpop.f32.mrb[0].mxu0
  %v2943 = vadd.f32 %v2654, %v2942
  %v2944 = vpop.f32.mrb[0].mxu0
  %2945 = vmatprep.mubr.bf16.mxu0 0
  %2946 = vmatmul.mubr.bf16.gmra.mrb[0].mxu0 %v2116
  %v2947 = vpop.f32.mrb[0].mxu0
  %v2948 = vadd.f32 %v2659, %v2947
  %v2949 = vpop.f32.mrb[0].mxu0
  %v2950 = vpop.f32.mrb[0].mxu0
  %v2951 = vadd.f32 %v2662, %v2950
  %v2952 = vpop.f32.mrb[0].mxu0
  %2953 = vmatprep.mubr.bf16.mxu0 0
  %2954 = vmatmul.mubr.bf16.gmra.mrb[0].mxu0 %v2118
  %v2955 = vpop.f32.mrb[0].mxu0
  %v2956 = vadd.f32 %v2667, %v2955
  %v2957 = vpop.f32.mrb[0].mxu0
  %v2958 = vpop.f32.mrb[0].mxu0
  %v2959 = vadd.f32 %v2670, %v2958
  %v2960 = vpop.f32.mrb[0].mxu0
  %2961 = vmatprep.mubr.bf16.mxu0 0
  %2962 = vmatmul.mubr.bf16.gmra.mrb[0].mxu0 %v2120
  %v2963 = vpop.f32.mrb[0].mxu0
  %v2964 = vadd.f32 %v2675, %v2963
  %v2965 = vpop.f32.mrb[0].mxu0
  %v2966 = vpop.f32.mrb[0].mxu0
  %v2967 = vadd.f32 %v2678, %v2966
  %v2968 = vpop.f32.mrb[0].mxu0
  %2969 = vmatprep.mubr.bf16.mxu0 0
  %2970 = vmatmul.mubr.bf16.gmra.mrb[0].mxu0 %v2122
  %v2971 = vpop.f32.mrb[0].mxu0
  %v2972 = vadd.f32 %v2683, %v2971
  %v2973 = vpop.f32.mrb[0].mxu0
  %v2974 = vpop.f32.mrb[0].mxu0
  %v2975 = vadd.f32 %v2686, %v2974
  %v2976 = vpop.f32.mrb[0].mxu0
  %2977 = vmatprep.mubr.bf16.mxu0 0
  %2978 = vmatmul.mubr.bf16.gmra.mrb[0].mxu0 %v2125
  %v2979 = vpop.f32.mrb[0].mxu0
  %v2980 = vadd.f32 %v2691, %v2979
  %v2981 = vpop.f32.mrb[0].mxu0
  %v2982 = vpop.f32.mrb[0].mxu0
  %v2983 = vadd.f32 %v2694, %v2982
  %v2984 = vpop.f32.mrb[0].mxu0
  %2985 = vmatprep.mubr.bf16.mxu0 0
  %2986 = vmatmul.mubr.bf16.gmra.mrb[0].mxu0 %v2094
  %v2987 = vpop.f32.mrb[0].mxu0
  %v2988 = vadd.f32 %v2699, %v2987
  %v2989 = vpop.f32.mrb[0].mxu0
  %v2990 = vpop.f32.mrb[0].mxu0
  %v2991 = vadd.f32 %v2702, %v2990
  %v2992 = vpop.f32.mrb[0].mxu0
  %2993 = vdwg.mxu0
  %v2994 = vadd.f32 %v2740, %v2743
  %v2995 = vadd.f32 %v2994, %v2748
  %v2996 = vadd.f32 %v2995, %v2751
  %v2997 = vadd.f32 %v2996, %v2756
  %v2998 = vadd.f32 %v2997, %v2759
  %v2999 = vadd.f32 %v2998, %v2764
  %v3000 = vadd.f32 %v2999, %v2767
  %v3001 = vadd.f32 %v3000, %v2772
  %v3002 = vadd.f32 %v3001, %v2775
  %v3003 = vadd.f32 %v3002, %v2780
  %v3004 = vadd.f32 %v3003, %v2783
  %v3005 = vadd.f32 %v3004, %v2788
  %v3006 = vadd.f32 %v3005, %v2791
  %v3007 = vadd.f32 %v3006, %v2796
  %v3008 = vadd.f32 %v3007, %v2799
  %v3009 = vadd.f32 %v3008, %v2804
  %v3010 = vadd.f32 %v3009, %v2807
  %v3011 = vadd.f32 %v3010, %v2812
  %v3012 = vadd.f32 %v3011, %v2815
  %v3013 = vadd.f32 %v3012, %v2820
  %v3014 = vadd.f32 %v3013, %v2823
  %v3015 = vadd.f32 %v3014, %v2828
  %v3016 = vadd.f32 %v3015, %v2831
  %v3017 = vadd.f32 %v3016, %v2836
  %v3018 = vadd.f32 %v3017, %v2839
  %v3019 = vadd.f32 %v3018, %v2844
  %v3020 = vadd.f32 %v3019, %v2847
  %v3021 = vadd.f32 %v3020, %v2852
  %v3022 = vadd.f32 %v3021, %v2855
  %v3023 = vadd.f32 %v3022, %v2860
  %v3024 = vadd.f32 %v3023, %v2863
  %v3025 = vrot.slane %v3024, 4
  %v3026 = vadd.f32 %v3024, %v3025
  %v3027 = vrot.slane %v3026, 2
  %v3028 = vadd.f32 %v3026, %v3027
  %v3029 = vrot.slane %v3028, 1
  %v3030 = vadd.f32 %v3028, %v3029
  %v3031 = vadd.f32 %v2868, %v2871
  %v3032 = vadd.f32 %v3031, %v2876
  %v3033 = vadd.f32 %v3032, %v2879
  %v3034 = vadd.f32 %v3033, %v2884
  %v3035 = vadd.f32 %v3034, %v2887
  %v3036 = vadd.f32 %v3035, %v2892
  %v3037 = vadd.f32 %v3036, %v2895
  %v3038 = vadd.f32 %v3037, %v2900
  %v3039 = vadd.f32 %v3038, %v2903
  %v3040 = vadd.f32 %v3039, %v2908
  %v3041 = vadd.f32 %v3040, %v2911
  %v3042 = vadd.f32 %v3041, %v2916
  %v3043 = vadd.f32 %v3042, %v2919
  %v3044 = vadd.f32 %v3043, %v2924
  %v3045 = vadd.f32 %v3044, %v2927
  %v3046 = vadd.f32 %v3045, %v2932
  %v3047 = vadd.f32 %v3046, %v2935
  %v3048 = vadd.f32 %v3047, %v2940
  %v3049 = vadd.f32 %v3048, %v2943
  %v3050 = vadd.f32 %v3049, %v2948
  %v3051 = vadd.f32 %v3050, %v2951
  %v3052 = vadd.f32 %v3051, %v2956
  %v3053 = vadd.f32 %v3052, %v2959
  %v3054 = vadd.f32 %v3053, %v2964
  %v3055 = vadd.f32 %v3054, %v2967
  %v3056 = vadd.f32 %v3055, %v2972
  %v3057 = vadd.f32 %v3056, %v2975
  %v3058 = vadd.f32 %v3057, %v2980
  %v3059 = vadd.f32 %v3058, %v2983
  %v3060 = vadd.f32 %v3059, %v2988
  %v3061 = vadd.f32 %v3060, %v2991
  %v3062 = vrot.slane %v3061, 4
  %v3063 = vadd.f32 %v3061, %v3062
  %v3064 = vrot.slane %v3063, 2
  %v3065 = vadd.f32 %v3063, %v3064
  %v3066 = vrot.slane %v3065, 1
  %v3067 = vadd.f32 %v3065, %v3066
  %v3068 = vmul.f32 %v2740, %v2740
  %v3069 = vmul.f32 %v2743, %v2743
  %v3070 = vmul.f32 %v2748, %v2748
  %v3071 = vmul.f32 %v2751, %v2751
  %v3072 = vmul.f32 %v2756, %v2756
  %v3073 = vmul.f32 %v2759, %v2759
  %v3074 = vmul.f32 %v2764, %v2764
  %v3075 = vmul.f32 %v2767, %v2767
  %v3076 = vmul.f32 %v2772, %v2772
  %v3077 = vmul.f32 %v2775, %v2775
  %v3078 = vmul.f32 %v2780, %v2780
  %v3079 = vmul.f32 %v2783, %v2783
  %v3080 = vmul.f32 %v2788, %v2788
  %v3081 = vmul.f32 %v2791, %v2791
  %v3082 = vmul.f32 %v2796, %v2796
  %v3083 = vmul.f32 %v2799, %v2799
  %v3084 = vmul.f32 %v2804, %v2804
  %v3085 = vmul.f32 %v2807, %v2807
  %v3086 = vmul.f32 %v2812, %v2812
  %v3087 = vmul.f32 %v2815, %v2815
  %v3088 = vmul.f32 %v2820, %v2820
  %v3089 = vmul.f32 %v2823, %v2823
  %v3090 = vmul.f32 %v2828, %v2828
  %v3091 = vmul.f32 %v2831, %v2831
  %v3092 = vmul.f32 %v2836, %v2836
  %v3093 = vmul.f32 %v2839, %v2839
  %v3094 = vmul.f32 %v2844, %v2844
  %v3095 = vmul.f32 %v2847, %v2847
  %v3096 = vmul.f32 %v2852, %v2852
  %v3097 = vmul.f32 %v2855, %v2855
  %v3098 = vmul.f32 %v2860, %v2860
  %v3099 = vmul.f32 %v2863, %v2863
  %v3100 = vmul.f32 %v2868, %v2868
  %v3101 = vmul.f32 %v2871, %v2871
  %v3102 = vmul.f32 %v2876, %v2876
  %v3103 = vmul.f32 %v2879, %v2879
  %v3104 = vmul.f32 %v2884, %v2884
  %v3105 = vmul.f32 %v2887, %v2887
  %v3106 = vmul.f32 %v2892, %v2892
  %v3107 = vmul.f32 %v2895, %v2895
  %v3108 = vmul.f32 %v2900, %v2900
  %v3109 = vmul.f32 %v2903, %v2903
  %v3110 = vmul.f32 %v2908, %v2908
  %v3111 = vmul.f32 %v2911, %v2911
  %v3112 = vmul.f32 %v2916, %v2916
  %v3113 = vmul.f32 %v2919, %v2919
  %v3114 = vmul.f32 %v2924, %v2924
  %v3115 = vmul.f32 %v2927, %v2927
  %v3116 = vmul.f32 %v2932, %v2932
  %v3117 = vmul.f32 %v2935, %v2935
  %v3118 = vmul.f32 %v2940, %v2940
  %v3119 = vmul.f32 %v2943, %v2943
  %v3120 = vmul.f32 %v2948, %v2948
  %v3121 = vmul.f32 %v2951, %v2951
  %v3122 = vmul.f32 %v2956, %v2956
  %v3123 = vmul.f32 %v2959, %v2959
  %v3124 = vmul.f32 %v2964, %v2964
  %v3125 = vmul.f32 %v2967, %v2967
  %v3126 = vmul.f32 %v2972, %v2972
  %v3127 = vmul.f32 %v2975, %v2975
  %v3128 = vmul.f32 %v2980, %v2980
  %v3129 = vmul.f32 %v2983, %v2983
  %v3130 = vmul.f32 %v2988, %v2988
  %v3131 = vmul.f32 %v2991, %v2991
  %v3132 = vadd.f32 %v3068, %v3069
  %v3133 = vadd.f32 %v3132, %v3070
  %v3134 = vadd.f32 %v3133, %v3071
  %v3135 = vadd.f32 %v3134, %v3072
  %v3136 = vadd.f32 %v3135, %v3073
  %v3137 = vadd.f32 %v3136, %v3074
  %v3138 = vadd.f32 %v3137, %v3075
  %v3139 = vadd.f32 %v3138, %v3076
  %v3140 = vadd.f32 %v3139, %v3077
  %v3141 = vadd.f32 %v3140, %v3078
  %v3142 = vadd.f32 %v3141, %v3079
  %v3143 = vadd.f32 %v3142, %v3080
  %v3144 = vadd.f32 %v3143, %v3081
  %v3145 = vadd.f32 %v3144, %v3082
  %v3146 = vadd.f32 %v3145, %v3083
  %v3147 = vadd.f32 %v3146, %v3084
  %v3148 = vadd.f32 %v3147, %v3085
  %v3149 = vadd.f32 %v3148, %v3086
  %v3150 = vadd.f32 %v3149, %v3087
  %v3151 = vadd.f32 %v3150, %v3088
  %v3152 = vadd.f32 %v3151, %v3089
  %v3153 = vadd.f32 %v3152, %v3090
  %v3154 = vadd.f32 %v3153, %v3091
  %v3155 = vadd.f32 %v3154, %v3092
  %v3156 = vadd.f32 %v3155, %v3093
  %v3157 = vadd.f32 %v3156, %v3094
  %v3158 = vadd.f32 %v3157, %v3095
  %v3159 = vadd.f32 %v3158, %v3096
  %v3160 = vadd.f32 %v3159, %v3097
  %v3161 = vadd.f32 %v3160, %v3098
  %v3162 = vadd.f32 %v3161, %v3099
  %v3163 = vrot.slane %v3162, 4
  %v3164 = vadd.f32 %v3162, %v3163
  %v3165 = vrot.slane %v3164, 2
  %v3166 = vadd.f32 %v3164, %v3165
  %v3167 = vrot.slane %v3166, 1
  %v3168 = vadd.f32 %v3166, %v3167
  %v3169 = vadd.f32 %v3100, %v3101
  %v3170 = vadd.f32 %v3169, %v3102
  %v3171 = vadd.f32 %v3170, %v3103
  %v3172 = vadd.f32 %v3171, %v3104
  %v3173 = vadd.f32 %v3172, %v3105
  %v3174 = vadd.f32 %v3173, %v3106
  %v3175 = vadd.f32 %v3174, %v3107
  %v3176 = vadd.f32 %v3175, %v3108
  %v3177 = vadd.f32 %v3176, %v3109
  %v3178 = vadd.f32 %v3177, %v3110
  %v3179 = vadd.f32 %v3178, %v3111
  %v3180 = vadd.f32 %v3179, %v3112
  %v3181 = vadd.f32 %v3180, %v3113
  %v3182 = vadd.f32 %v3181, %v3114
  %v3183 = vadd.f32 %v3182, %v3115
  %v3184 = vadd.f32 %v3183, %v3116
  %v3185 = vadd.f32 %v3184, %v3117
  %v3186 = vadd.f32 %v3185, %v3118
  %v3187 = vadd.f32 %v3186, %v3119
  %v3188 = vadd.f32 %v3187, %v3120
  %v3189 = vadd.f32 %v3188, %v3121
  %v3190 = vadd.f32 %v3189, %v3122
  %v3191 = vadd.f32 %v3190, %v3123
  %v3192 = vadd.f32 %v3191, %v3124
  %v3193 = vadd.f32 %v3192, %v3125
  %v3194 = vadd.f32 %v3193, %v3126
  %v3195 = vadd.f32 %v3194, %v3127
  %v3196 = vadd.f32 %v3195, %v3128
  %v3197 = vadd.f32 %v3196, %v3129
  %v3198 = vadd.f32 %v3197, %v3130
  %v3199 = vadd.f32 %v3198, %v3131
  %v3200 = vrot.slane %v3199, 4
  %v3201 = vadd.f32 %v3199, %v3200
  %v3202 = vrot.slane %v3201, 2
  %v3203 = vadd.f32 %v3201, %v3202
  %v3204 = vrot.slane %v3203, 1
  %v3205 = vadd.f32 %v3203, %v3204
  %vm3208 = vcmask 1041409
  %v3209 = vsel %vm3208, %v3067, %v3030
  %vm3213 = vcmask 1043459
  %v3214 = vsel %vm3213, %v3205, %v3168
  %vm3216 = vcmask 1041408
  %v3217 = vsel %vm3216, %v3209, %v3214
  %3218 = vmatprep.subr.mxu0 0.0
  %3219 = vmatpush1.msra.mxu0 %v42
  %3220 = vmatprep.subr.mxu0 0.0
  %3221 = vmatpush1.msra.mxu0 %v43
  %3222 = vmatprep.subr.mxu0 0.0
  %3223 = vmatpush1.msra.mxu0 %v44
  %3224 = vmatprep.subr.mxu0 0.0
  %3225 = vmatpush1.msra.mxu0 %v45
  %3226 = vmatprep.subr.mxu0 0.0
  %3227 = vmatpush1.msra.mxu0 %v46
  %3228 = vmatprep.subr.mxu0 0.0
  %3229 = vmatpush1.msra.mxu0 %v47
  %3230 = vmatprep.subr.mxu0 0.0
  %3231 = vmatpush1.msra.mxu0 %v48
  %3232 = vmatprep.subr.mxu0 0.0
  %3233 = vmatpush1.msra.mxu0 %v49
  %3234 = vmatprep.subr.mxu0 0.0
  %3235 = vmatpush1.msra.mxu0 %v50
  %3236 = vmatprep.subr.mxu0 0.0
  %3237 = vmatpush1.msra.mxu0 %v51
  %3238 = vmatprep.subr.mxu0 0.0
  %3239 = vmatpush1.msra.mxu0 %v52
  %3240 = vmatprep.subr.mxu0 0.0
  %3241 = vmatpush1.msra.mxu0 %v53
  %3242 = vmatprep.subr.mxu0 0.0
  %3243 = vmatpush1.msra.mxu0 %v54
  %3244 = vmatprep.subr.mxu0 0.0
  %3245 = vmatpush1.msra.mxu0 %v55
  %3246 = vmatprep.subr.mxu0 0.0
  %3247 = vmatpush1.msra.mxu0 %v56
  %3248 = vmatprep.subr.mxu0 0.0
  %3249 = vmatpush1.msra.mxu0 %v57
  %3250 = vmatprep.subr.mxu0 0.0
  %3251 = vmatpush1.msra.mxu0 0.0
  %3252 = vmatprep.subr.mxu0 0.0
  %3253 = vmatpush1.msra.mxu0 0.0
  %3254 = vmatprep.subr.mxu0 0.0
  %3255 = vmatpush1.msra.mxu0 0.0
  %3256 = vmatprep.subr.mxu0 0.0
  %3257 = vmatpush1.msra.mxu0 0.0
  %3258 = vmatprep.subr.mxu0 0.0
  %3259 = vmatpush1.msra.mxu0 0.0
  %3260 = vmatprep.subr.mxu0 0.0
  %3261 = vmatpush1.msra.mxu0 0.0
  %3262 = vmatprep.subr.mxu0 0.0
  %3263 = vmatpush1.msra.mxu0 0.0
  %3264 = vmatprep.subr.mxu0 0.0
  %3265 = vmatpush1.msra.mxu0 0.0
  %3266 = vmatprep.subr.mxu0 0.0
  %3267 = vmatpush1.msra.mxu0 0.0
  %3268 = vmatprep.subr.mxu0 0.0
  %3269 = vmatpush1.msra.mxu0 0.0
  %3270 = vmatprep.subr.mxu0 0.0
  %3271 = vmatpush1.msra.mxu0 0.0
  %3272 = vmatprep.subr.mxu0 0.0
  %3273 = vmatpush1.msra.mxu0 0.0
  %3274 = vmatprep.subr.mxu0 0.0
  %3275 = vmatpush1.msra.mxu0 0.0
  %3276 = vmatprep.subr.mxu0 0.0
  %3277 = vmatpush1.msra.mxu0 0.0
  %3278 = vmatprep.subr.mxu0 0.0
  %3279 = vmatpush1.msra.mxu0 0.0
  %3280 = vmatprep.subr.mxu0 0.0
  %3281 = vmatpush1.msra.mxu0 0.0
  %3282 = vmatprep.mubr.f32.mxu0 0.0
  %3283 = vmatmul.mubr.f32.gmra.mrb[0].mxu0 %v3217
  %v3284 = vpop.f32.mrb[0].mxu0
  %v3285 = vadd.f32 0.0, %v3284
  %v3286 = vpop.f32.mrb[0].mxu0
  %3287 = vdwg.mxu0
  %v3288 = vmul.f32 %v3285, 0.001953125
  %v3289 = vmul.f32 %v3288, %v3288
  %v3291 = vrot.slane %v3289, 6
  %v3293 = vsub.f32 %v3288, %v3291
  %v3294 = vadd.f32 %v3293, 1e-05
  %v3295 = vrsqrt.pop %v3294
  %v3296 = vsel %vm3216, %v3288, %v3295
  %v3298 = vsel %vm1413, %v3296, 0
  %3300 = vmatprep.subr.mxu0 0.0
  %3301 = vmatpush1.msra.mxu0 %v58
  %3302 = vmatprep.subr.mxu0 0.0
  %3303 = vmatpush1.msra.mxu0 %v59
  %3304 = vmatprep.subr.mxu0 0.0
  %3305 = vmatpush1.msra.mxu0 %v60
  %3306 = vmatprep.subr.mxu0 0.0
  %3307 = vmatpush1.msra.mxu0 %v61
  %3308 = vmatprep.subr.mxu0 0.0
  %3309 = vmatpush1.msra.mxu0 %v62
  %3310 = vmatprep.subr.mxu0 0.0
  %3311 = vmatpush1.msra.mxu0 %v63
  %3312 = vmatprep.subr.mxu0 0.0
  %3313 = vmatpush1.msra.mxu0 %v64
  %3314 = vmatprep.subr.mxu0 0.0
  %3315 = vmatpush1.msra.mxu0 %v65
  %3316 = vmatprep.subr.mxu0 0.0
  %3317 = vmatpush1.msra.mxu0 0.0
  %3318 = vmatprep.subr.mxu0 0.0
  %3319 = vmatpush1.msra.mxu0 0.0
  %3320 = vmatprep.subr.mxu0 0.0
  %3321 = vmatpush1.msra.mxu0 0.0
  %3322 = vmatprep.subr.mxu0 0.0
  %3323 = vmatpush1.msra.mxu0 0.0
  %3324 = vmatprep.subr.mxu0 0.0
  %3325 = vmatpush1.msra.mxu0 0.0
  %3326 = vmatprep.subr.mxu0 0.0
  %3327 = vmatpush1.msra.mxu0 0.0
  %3328 = vmatprep.subr.mxu0 0.0
  %3329 = vmatpush1.msra.mxu0 0.0
  %3330 = vmatprep.subr.mxu0 0.0
  %3331 = vmatpush1.msra.mxu0 0.0
  %3332 = vmatprep.subr.mxu0 0.0
  %3333 = vmatpush1.msra.mxu0 0.0
  %3334 = vmatprep.subr.mxu0 0.0
  %3335 = vmatpush1.msra.mxu0 0.0
  %3336 = vmatprep.subr.mxu0 0.0
  %3337 = vmatpush1.msra.mxu0 0.0
  %3338 = vmatprep.subr.mxu0 0.0
  %3339 = vmatpush1.msra.mxu0 0.0
  %3340 = vmatprep.subr.mxu0 0.0
  %3341 = vmatpush1.msra.mxu0 0.0
  %3342 = vmatprep.subr.mxu0 0.0
  %3343 = vmatpush1.msra.mxu0 0.0
  %3344 = vmatprep.subr.mxu0 0.0
  %3345 = vmatpush1.msra.mxu0 0.0
  %3346 = vmatprep.subr.mxu0 0.0
  %3347 = vmatpush1.msra.mxu0 0.0
  %3348 = vmatprep.subr.mxu0 0.0
  %3349 = vmatpush1.msra.mxu0 0.0
  %3350 = vmatprep.subr.mxu0 0.0
  %3351 = vmatpush1.msra.mxu0 0.0
  %3352 = vmatprep.subr.mxu0 0.0
  %3353 = vmatpush1.msra.mxu0 0.0
  %3354 = vmatprep.subr.mxu0 0.0
  %3355 = vmatpush1.msra.mxu0 0.0
  %3356 = vmatprep.subr.mxu0 0.0
  %3357 = vmatpush1.msra.mxu0 0.0
  %3358 = vmatprep.subr.mxu0 0.0
  %3359 = vmatpush1.msra.mxu0 0.0
  %3360 = vmatprep.subr.mxu0 0.0
  %3361 = vmatpush1.msra.mxu0 0.0
  %3362 = vmatprep.subr.mxu0 0.0
  %3363 = vmatpush1.msra.mxu0 0.0
  %3364 = vmatprep.mubr.f32.mxu0 0.0
  %3365 = vmatmul.mubr.f32.gmra.mrb[0].mxu0 %v3298
  %v3366 = vpop.f32.mrb[0].mxu0
  %v3367 = vadd.f32 0.0, %v3366
  %v3368 = vpop.f32.mrb[0].mxu0
  %3369 = vdwg.mxu0
  %v3370 = vld [vmem:[%s5] sm:$0x1]
  %v3372 = vlaneseq
  %v3373 = vshrl.u32 %v3372, 7
  %v3374 = vsub.s32 0, %v3373
  %v3375 = vrot.slane %v3370, %v3374
  %v3377 = vmul.f32 %v3367, %v3375
  %v3378 = vld [vmem:[%s6] sm:$0x1]
  %v3380 = vrot.slane %v3377, 2
  %v3382 = vmul.f32 %v3367, %v3380
  %v3384 = vlaneseq
  %v3385 = vshrl.u32 %v3384, 7
  %v3386 = vsub.s32 0, %v3385
  %v3387 = vrot.slane %v3378, %v3386
  %v3389 = vsub.f32 %v3387, %v3382
  %v3391 = vunpack.c.l.s4 1966171168
  %v3392 = vunpack.c.0.s8 %v3391
  %v3393 = vlaneseq
  %v3394 = vshrl.u32 %v3393, 7
  %v3395 = vsub.s32 %v3392, %v3394
  %v3396 = vrot.slane %v3377, %v3395
  %v3397 = vcombine.high %v3396, %v3396
  %v3399 = vunpack.c.l.s4 1966171168
  %v3400 = vunpack.c.0.s8 %v3399
  %v3401 = vlaneseq
  %v3402 = vshrl.u32 %v3401, 7
  %v3403 = vsub.s32 %v3400, %v3402
  %v3404 = vrot.slane %v3396, %v3403
  %v3406 = vunpack.c.l.s4 1966171168
  %v3407 = vunpack.c.0.s8 %v3406
  %v3408 = vlaneseq
  %v3409 = vshrl.u32 %v3408, 7
  %v3410 = vsub.s32 %v3407, %v3409
  %v3411 = vrot.slane %v3397, %v3410
  %v3412 = vcombine.high %v3404, %v3404
  %v3413 = vcombine.high %v3411, %v3411
  %v3414 = vlaneseq
  %v3415 = vshrl.u32 %v3414, 7
  %v3416 = vsub.s32 0, %v3415
  %v3417 = vrot.slane %v3412, %v3416
  %v3418 = vlaneseq
  %v3419 = vshrl.u32 %v3418, 7
  %v3420 = vsub.s32 0, %v3419
  %v3421 = vrot.slane %v3413, %v3420
  %v3424 = vmul.f32 %v2740, %v3417
  %v3425 = vmul.f32 %v2743, %v3417
  %v3426 = vmul.f32 %v2748, %v3417
  %v3427 = vmul.f32 %v2751, %v3417
  %v3428 = vmul.f32 %v2756, %v3417
  %v3429 = vmul.f32 %v2759, %v3417
  %v3430 = vmul.f32 %v2764, %v3417
  %v3431 = vmul.f32 %v2767, %v3417
  %v3432 = vmul.f32 %v2772, %v3417
  %v3433 = vmul.f32 %v2775, %v3417
  %v3434 = vmul.f32 %v2780, %v3417
  %v3435 = vmul.f32 %v2783, %v3417
  %v3436 = vmul.f32 %v2788, %v3417
  %v3437 = vmul.f32 %v2791, %v3417
  %v3438 = vmul.f32 %v2796, %v3417
  %v3439 = vmul.f32 %v2799, %v3417
  %v3440 = vmul.f32 %v2804, %v3417
  %v3441 = vmul.f32 %v2807, %v3417
  %v3442 = vmul.f32 %v2812, %v3417
  %v3443 = vmul.f32 %v2815, %v3417
  %v3444 = vmul.f32 %v2820, %v3417
  %v3445 = vmul.f32 %v2823, %v3417
  %v3446 = vmul.f32 %v2828, %v3417
  %v3447 = vmul.f32 %v2831, %v3417
  %v3448 = vmul.f32 %v2836, %v3417
  %v3449 = vmul.f32 %v2839, %v3417
  %v3450 = vmul.f32 %v2844, %v3417
  %v3451 = vmul.f32 %v2847, %v3417
  %v3452 = vmul.f32 %v2852, %v3417
  %v3453 = vmul.f32 %v2855, %v3417
  %v3454 = vmul.f32 %v2860, %v3417
  %v3455 = vmul.f32 %v2863, %v3417
  %v3456 = vmul.f32 %v2868, %v3421
  %v3457 = vmul.f32 %v2871, %v3421
  %v3458 = vmul.f32 %v2876, %v3421
  %v3459 = vmul.f32 %v2879, %v3421
  %v3460 = vmul.f32 %v2884, %v3421
  %v3461 = vmul.f32 %v2887, %v3421
  %v3462 = vmul.f32 %v2892, %v3421
  %v3463 = vmul.f32 %v2895, %v3421
  %v3464 = vmul.f32 %v2900, %v3421
  %v3465 = vmul.f32 %v2903, %v3421
  %v3466 = vmul.f32 %v2908, %v3421
  %v3467 = vmul.f32 %v2911, %v3421
  %v3468 = vmul.f32 %v2916, %v3421
  %v3469 = vmul.f32 %v2919, %v3421
  %v3470 = vmul.f32 %v2924, %v3421
  %v3471 = vmul.f32 %v2927, %v3421
  %v3472 = vmul.f32 %v2932, %v3421
  %v3473 = vmul.f32 %v2935, %v3421
  %v3474 = vmul.f32 %v2940, %v3421
  %v3475 = vmul.f32 %v2943, %v3421
  %v3476 = vmul.f32 %v2948, %v3421
  %v3477 = vmul.f32 %v2951, %v3421
  %v3478 = vmul.f32 %v2956, %v3421
  %v3479 = vmul.f32 %v2959, %v3421
  %v3480 = vmul.f32 %v2964, %v3421
  %v3481 = vmul.f32 %v2967, %v3421
  %v3482 = vmul.f32 %v2972, %v3421
  %v3483 = vmul.f32 %v2975, %v3421
  %v3484 = vmul.f32 %v2980, %v3421
  %v3485 = vmul.f32 %v2983, %v3421
  %v3486 = vmul.f32 %v2988, %v3421
  %v3487 = vmul.f32 %v2991, %v3421
  %v3490 = vunpack.c.l.s4 1966171168
  %v3491 = vunpack.c.0.s8 %v3490
  %v3492 = vlaneseq
  %v3493 = vshrl.u32 %v3492, 7
  %v3494 = vsub.s32 %v3491, %v3493
  %v3495 = vrot.slane %v3389, %v3494
  %v3496 = vcombine.high %v3495, %v3495
  %v3498 = vunpack.c.l.s4 1966171168
  %v3499 = vunpack.c.0.s8 %v3498
  %v3500 = vlaneseq
  %v3501 = vshrl.u32 %v3500, 7
  %v3502 = vsub.s32 %v3499, %v3501
  %v3503 = vrot.slane %v3495, %v3502
  %v3505 = vunpack.c.l.s4 1966171168
  %v3506 = vunpack.c.0.s8 %v3505
  %v3507 = vlaneseq
  %v3508 = vshrl.u32 %v3507, 7
  %v3509 = vsub.s32 %v3506, %v3508
  %v3510 = vrot.slane %v3496, %v3509
  %v3511 = vlaneseq
  %v3512 = vshrl.u32 %v3511, 7
  %v3513 = vsub.s32 0, %v3512
  %v3514 = vrot.slane %v3503, %v3513
  %v3515 = vlaneseq
  %v3516 = vshrl.u32 %v3515, 7
  %v3517 = vsub.s32 0, %v3516
  %v3518 = vrot.slane %v3510, %v3517
  %v3521 = vadd.f32 %v3424, %v3514
  %v3522 = vadd.f32 %v3425, %v3514
  %v3523 = vadd.f32 %v3426, %v3514
  %v3524 = vadd.f32 %v3427, %v3514
  %v3525 = vadd.f32 %v3428, %v3514
  %v3526 = vadd.f32 %v3429, %v3514
  %v3527 = vadd.f32 %v3430, %v3514
  %v3528 = vadd.f32 %v3431, %v3514
  %v3529 = vadd.f32 %v3432, %v3514
  %v3530 = vadd.f32 %v3433, %v3514
  %v3531 = vadd.f32 %v3434, %v3514
  %v3532 = vadd.f32 %v3435, %v3514
  %v3533 = vadd.f32 %v3436, %v3514
  %v3534 = vadd.f32 %v3437, %v3514
  %v3535 = vadd.f32 %v3438, %v3514
  %v3536 = vadd.f32 %v3439, %v3514
  %v3537 = vadd.f32 %v3440, %v3514
  %v3538 = vadd.f32 %v3441, %v3514
  %v3539 = vadd.f32 %v3442, %v3514
  %v3540 = vadd.f32 %v3443, %v3514
  %v3541 = vadd.f32 %v3444, %v3514
  %v3542 = vadd.f32 %v3445, %v3514
  %v3543 = vadd.f32 %v3446, %v3514
  %v3544 = vadd.f32 %v3447, %v3514
  %v3545 = vadd.f32 %v3448, %v3514
  %v3546 = vadd.f32 %v3449, %v3514
  %v3547 = vadd.f32 %v3450, %v3514
  %v3548 = vadd.f32 %v3451, %v3514
  %v3549 = vadd.f32 %v3452, %v3514
  %v3550 = vadd.f32 %v3453, %v3514
  %v3551 = vadd.f32 %v3454, %v3514
  %v3552 = vadd.f32 %v3455, %v3514
  %v3553 = vadd.f32 %v3456, %v3518
  %v3554 = vadd.f32 %v3457, %v3518
  %v3555 = vadd.f32 %v3458, %v3518
  %v3556 = vadd.f32 %v3459, %v3518
  %v3557 = vadd.f32 %v3460, %v3518
  %v3558 = vadd.f32 %v3461, %v3518
  %v3559 = vadd.f32 %v3462, %v3518
  %v3560 = vadd.f32 %v3463, %v3518
  %v3561 = vadd.f32 %v3464, %v3518
  %v3562 = vadd.f32 %v3465, %v3518
  %v3563 = vadd.f32 %v3466, %v3518
  %v3564 = vadd.f32 %v3467, %v3518
  %v3565 = vadd.f32 %v3468, %v3518
  %v3566 = vadd.f32 %v3469, %v3518
  %v3567 = vadd.f32 %v3470, %v3518
  %v3568 = vadd.f32 %v3471, %v3518
  %v3569 = vadd.f32 %v3472, %v3518
  %v3570 = vadd.f32 %v3473, %v3518
  %v3571 = vadd.f32 %v3474, %v3518
  %v3572 = vadd.f32 %v3475, %v3518
  %v3573 = vadd.f32 %v3476, %v3518
  %v3574 = vadd.f32 %v3477, %v3518
  %v3575 = vadd.f32 %v3478, %v3518
  %v3576 = vadd.f32 %v3479, %v3518
  %v3577 = vadd.f32 %v3480, %v3518
  %v3578 = vadd.f32 %v3481, %v3518
  %v3579 = vadd.f32 %v3482, %v3518
  %v3580 = vadd.f32 %v3483, %v3518
  %v3581 = vadd.f32 %v3484, %v3518
  %v3582 = vadd.f32 %v3485, %v3518
  %v3583 = vadd.f32 %v3486, %v3518
  %v3584 = vadd.f32 %v3487, %v3518
  %v3585 = vmax.f32 %v3521, 0.0
  %v3586 = vmax.f32 %v3522, 0.0
  %v3587 = vmax.f32 %v3523, 0.0
  %v3588 = vmax.f32 %v3524, 0.0
  %v3589 = vmax.f32 %v3525, 0.0
  %v3590 = vmax.f32 %v3526, 0.0
  %v3591 = vmax.f32 %v3527, 0.0
  %v3592 = vmax.f32 %v3528, 0.0
  %v3593 = vmax.f32 %v3529, 0.0
  %v3594 = vmax.f32 %v3530, 0.0
  %v3595 = vmax.f32 %v3531, 0.0
  %v3596 = vmax.f32 %v3532, 0.0
  %v3597 = vmax.f32 %v3533, 0.0
  %v3598 = vmax.f32 %v3534, 0.0
  %v3599 = vmax.f32 %v3535, 0.0
  %v3600 = vmax.f32 %v3536, 0.0
  %v3601 = vmax.f32 %v3537, 0.0
  %v3602 = vmax.f32 %v3538, 0.0
  %v3603 = vmax.f32 %v3539, 0.0
  %v3604 = vmax.f32 %v3540, 0.0
  %v3605 = vmax.f32 %v3541, 0.0
  %v3606 = vmax.f32 %v3542, 0.0
  %v3607 = vmax.f32 %v3543, 0.0
  %v3608 = vmax.f32 %v3544, 0.0
  %v3609 = vmax.f32 %v3545, 0.0
  %v3610 = vmax.f32 %v3546, 0.0
  %v3611 = vmax.f32 %v3547, 0.0
  %v3612 = vmax.f32 %v3548, 0.0
  %v3613 = vmax.f32 %v3549, 0.0
  %v3614 = vmax.f32 %v3550, 0.0
  %v3615 = vmax.f32 %v3551, 0.0
  %v3616 = vmax.f32 %v3552, 0.0
  %v3617 = vmax.f32 %v3553, 0.0
  %v3618 = vmax.f32 %v3554, 0.0
  %v3619 = vmax.f32 %v3555, 0.0
  %v3620 = vmax.f32 %v3556, 0.0
  %v3621 = vmax.f32 %v3557, 0.0
  %v3622 = vmax.f32 %v3558, 0.0
  %v3623 = vmax.f32 %v3559, 0.0
  %v3624 = vmax.f32 %v3560, 0.0
  %v3625 = vmax.f32 %v3561, 0.0
  %v3626 = vmax.f32 %v3562, 0.0
  %v3627 = vmax.f32 %v3563, 0.0
  %v3628 = vmax.f32 %v3564, 0.0
  %v3629 = vmax.f32 %v3565, 0.0
  %v3630 = vmax.f32 %v3566, 0.0
  %v3631 = vmax.f32 %v3567, 0.0
  %v3632 = vmax.f32 %v3568, 0.0
  %v3633 = vmax.f32 %v3569, 0.0
  %v3634 = vmax.f32 %v3570, 0.0
  %v3635 = vmax.f32 %v3571, 0.0
  %v3636 = vmax.f32 %v3572, 0.0
  %v3637 = vmax.f32 %v3573, 0.0
  %v3638 = vmax.f32 %v3574, 0.0
  %v3639 = vmax.f32 %v3575, 0.0
  %v3640 = vmax.f32 %v3576, 0.0
  %v3641 = vmax.f32 %v3577, 0.0
  %v3642 = vmax.f32 %v3578, 0.0
  %v3643 = vmax.f32 %v3579, 0.0
  %v3644 = vmax.f32 %v3580, 0.0
  %v3645 = vmax.f32 %v3581, 0.0
  %v3646 = vmax.f32 %v3582, 0.0
  %v3647 = vmax.f32 %v3583, 0.0
  %v3648 = vmax.f32 %v3584, 0.0
  %v3649 = vpack.c.bf16 %v3586, %v3585
  %v3650 = vpack.c.bf16 %v3588, %v3587
  %v3651 = vpack.c.bf16 %v3590, %v3589
  %v3652 = vpack.c.bf16 %v3592, %v3591
  %v3653 = vpack.c.bf16 %v3594, %v3593
  %v3654 = vpack.c.bf16 %v3596, %v3595
  %v3655 = vpack.c.bf16 %v3598, %v3597
  %v3656 = vpack.c.bf16 %v3600, %v3599
  %v3657 = vpack.c.bf16 %v3602, %v3601
  %v3658 = vpack.c.bf16 %v3604, %v3603
  %v3659 = vpack.c.bf16 %v3606, %v3605
  %v3660 = vpack.c.bf16 %v3608, %v3607
  %v3661 = vpack.c.bf16 %v3610, %v3609
  %v3662 = vpack.c.bf16 %v3612, %v3611
  %v3663 = vpack.c.bf16 %v3614, %v3613
  %v3664 = vpack.c.bf16 %v3616, %v3615
  %v3665 = vpack.c.bf16 %v3618, %v3617
  %v3666 = vpack.c.bf16 %v3620, %v3619
  %v3667 = vpack.c.bf16 %v3622, %v3621
  %v3668 = vpack.c.bf16 %v3624, %v3623
  %v3669 = vpack.c.bf16 %v3626, %v3625
  %v3670 = vpack.c.bf16 %v3628, %v3627
  %v3671 = vpack.c.bf16 %v3630, %v3629
  %v3672 = vpack.c.bf16 %v3632, %v3631
  %v3673 = vpack.c.bf16 %v3634, %v3633
  %v3674 = vpack.c.bf16 %v3636, %v3635
  %v3675 = vpack.c.bf16 %v3638, %v3637
  %v3676 = vpack.c.bf16 %v3640, %v3639
  %v3677 = vpack.c.bf16 %v3642, %v3641
  %v3678 = vpack.c.bf16 %v3644, %v3643
  %v3679 = vpack.c.bf16 %v3646, %v3645
  %v3680 = vpack.c.bf16 %v3648, %v3647
  %v3682 = vshrl.u32 %v3649, 16
  %v3684 = vrot.slane %v3682, 7
  %v3685 = vshll.u32 %v3649, 16
  %v3687 = vor.u32 %v3684, %v3685
  %v3689 = vshrl.u32 %v3650, 16
  %v3691 = vrot.slane %v3689, 7
  %v3692 = vshll.u32 %v3650, 16
  %v3694 = vor.u32 %v3691, %v3692
  %v3696 = vshrl.u32 %v3651, 16
  %v3698 = vrot.slane %v3696, 7
  %v3699 = vshll.u32 %v3651, 16
  %v3701 = vor.u32 %v3698, %v3699
  %v3703 = vshrl.u32 %v3652, 16
  %v3705 = vrot.slane %v3703, 7
  %v3706 = vshll.u32 %v3652, 16
  %v3708 = vor.u32 %v3705, %v3706
  %v3710 = vshrl.u32 %v3653, 16
  %v3712 = vrot.slane %v3710, 7
  %v3713 = vshll.u32 %v3653, 16
  %v3715 = vor.u32 %v3712, %v3713
  %v3717 = vshrl.u32 %v3654, 16
  %v3719 = vrot.slane %v3717, 7
  %v3720 = vshll.u32 %v3654, 16
  %v3722 = vor.u32 %v3719, %v3720
  %v3724 = vshrl.u32 %v3655, 16
  %v3726 = vrot.slane %v3724, 7
  %v3727 = vshll.u32 %v3655, 16
  %v3729 = vor.u32 %v3726, %v3727
  %v3731 = vshrl.u32 %v3656, 16
  %v3733 = vrot.slane %v3731, 7
  %v3734 = vshll.u32 %v3656, 16
  %v3736 = vor.u32 %v3733, %v3734
  %v3738 = vshrl.u32 %v3657, 16
  %v3740 = vrot.slane %v3738, 7
  %v3741 = vshll.u32 %v3657, 16
  %v3743 = vor.u32 %v3740, %v3741
  %v3745 = vshrl.u32 %v3658, 16
  %v3747 = vrot.slane %v3745, 7
  %v3748 = vshll.u32 %v3658, 16
  %v3750 = vor.u32 %v3747, %v3748
  %v3752 = vshrl.u32 %v3659, 16
  %v3754 = vrot.slane %v3752, 7
  %v3755 = vshll.u32 %v3659, 16
  %v3757 = vor.u32 %v3754, %v3755
  %v3759 = vshrl.u32 %v3660, 16
  %v3761 = vrot.slane %v3759, 7
  %v3762 = vshll.u32 %v3660, 16
  %v3764 = vor.u32 %v3761, %v3762
  %v3766 = vshrl.u32 %v3661, 16
  %v3768 = vrot.slane %v3766, 7
  %v3769 = vshll.u32 %v3661, 16
  %v3771 = vor.u32 %v3768, %v3769
  %v3773 = vshrl.u32 %v3662, 16
  %v3775 = vrot.slane %v3773, 7
  %v3776 = vshll.u32 %v3662, 16
  %v3778 = vor.u32 %v3775, %v3776
  %v3780 = vshrl.u32 %v3663, 16
  %v3782 = vrot.slane %v3780, 7
  %v3783 = vshll.u32 %v3663, 16
  %v3785 = vor.u32 %v3782, %v3783
  %v3787 = vshrl.u32 %v3664, 16
  %v3789 = vrot.slane %v3787, 7
  %v3790 = vshll.u32 %v3664, 16
  %v3792 = vor.u32 %v3789, %v3790
  %v3794 = vshrl.u32 %v3665, 16
  %v3796 = vrot.slane %v3794, 7
  %v3797 = vshll.u32 %v3665, 16
  %v3799 = vor.u32 %v3796, %v3797
  %v3801 = vshrl.u32 %v3666, 16
  %v3803 = vrot.slane %v3801, 7
  %v3804 = vshll.u32 %v3666, 16
  %v3806 = vor.u32 %v3803, %v3804
  %v3808 = vshrl.u32 %v3667, 16
  %v3810 = vrot.slane %v3808, 7
  %v3811 = vshll.u32 %v3667, 16
  %v3813 = vor.u32 %v3810, %v3811
  %v3815 = vshrl.u32 %v3668, 16
  %v3817 = vrot.slane %v3815, 7
  %v3818 = vshll.u32 %v3668, 16
  %v3820 = vor.u32 %v3817, %v3818
  %v3822 = vshrl.u32 %v3669, 16
  %v3824 = vrot.slane %v3822, 7
  %v3825 = vshll.u32 %v3669, 16
  %v3827 = vor.u32 %v3824, %v3825
  %v3829 = vshrl.u32 %v3670, 16
  %v3831 = vrot.slane %v3829, 7
  %v3832 = vshll.u32 %v3670, 16
  %v3834 = vor.u32 %v3831, %v3832
  %v3836 = vshrl.u32 %v3671, 16
  %v3838 = vrot.slane %v3836, 7
  %v3839 = vshll.u32 %v3671, 16
  %v3841 = vor.u32 %v3838, %v3839
  %v3843 = vshrl.u32 %v3672, 16
  %v3845 = vrot.slane %v3843, 7
  %v3846 = vshll.u32 %v3672, 16
  %v3848 = vor.u32 %v3845, %v3846
  %v3850 = vshrl.u32 %v3673, 16
  %v3852 = vrot.slane %v3850, 7
  %v3853 = vshll.u32 %v3673, 16
  %v3855 = vor.u32 %v3852, %v3853
  %v3857 = vshrl.u32 %v3674, 16
  %v3859 = vrot.slane %v3857, 7
  %v3860 = vshll.u32 %v3674, 16
  %v3862 = vor.u32 %v3859, %v3860
  %v3864 = vshrl.u32 %v3675, 16
  %v3866 = vrot.slane %v3864, 7
  %v3867 = vshll.u32 %v3675, 16
  %v3869 = vor.u32 %v3866, %v3867
  %v3871 = vshrl.u32 %v3676, 16
  %v3873 = vrot.slane %v3871, 7
  %v3874 = vshll.u32 %v3676, 16
  %v3876 = vor.u32 %v3873, %v3874
  %v3878 = vshrl.u32 %v3677, 16
  %v3880 = vrot.slane %v3878, 7
  %v3881 = vshll.u32 %v3677, 16
  %v3883 = vor.u32 %v3880, %v3881
  %v3885 = vshrl.u32 %v3678, 16
  %v3887 = vrot.slane %v3885, 7
  %v3888 = vshll.u32 %v3678, 16
  %v3890 = vor.u32 %v3887, %v3888
  %v3892 = vshrl.u32 %v3679, 16
  %v3894 = vrot.slane %v3892, 7
  %v3895 = vshll.u32 %v3679, 16
  %v3897 = vor.u32 %v3894, %v3895
  %v3899 = vshrl.u32 %v3680, 16
  %v3901 = vrot.slane %v3899, 7
  %v3902 = vshll.u32 %v3680, 16
  %v3904 = vor.u32 %v3901, %v3902
  %v3969 = vsel %vm589, 0, %v3687
  %v3970 = vsel %vm589, 0, %v3694
  %v3971 = vsel %vm589, 0, %v3701
  %v3972 = vsel %vm589, 0, %v3708
  %v3973 = vsel %vm589, 0, %v3715
  %v3974 = vsel %vm589, 0, %v3722
  %v3975 = vsel %vm589, 0, %v3729
  %v3976 = vsel %vm589, 0, %v3736
  %v3977 = vsel %vm589, 0, %v3743
  %v3978 = vsel %vm589, 0, %v3750
  %v3979 = vsel %vm589, 0, %v3757
  %v3980 = vsel %vm589, 0, %v3764
  %v3981 = vsel %vm589, 0, %v3771
  %v3982 = vsel %vm589, 0, %v3778
  %v3983 = vsel %vm589, 0, %v3785
  %v3984 = vsel %vm589, 0, %v3792
  %v3985 = vsel %vm589, 0, %v3799
  %v3986 = vsel %vm589, 0, %v3806
  %v3987 = vsel %vm589, 0, %v3813
  %v3988 = vsel %vm589, 0, %v3820
  %v3989 = vsel %vm589, 0, %v3827
  %v3990 = vsel %vm589, 0, %v3834
  %v3991 = vsel %vm589, 0, %v3841
  %v3992 = vsel %vm589, 0, %v3848
  %v3993 = vsel %vm589, 0, %v3855
  %v3994 = vsel %vm589, 0, %v3862
  %v3995 = vsel %vm589, 0, %v3869
  %v3996 = vsel %vm589, 0, %v3876
  %v3997 = vsel %vm589, 0, %v3883
  %v3998 = vsel %vm589, 0, %v3890
  %v3999 = vsel %vm589, 0, %v3897
  %v4000 = vsel %vm589, 0, %v3904
  %v4001 = vsel %vm589, %v3684, 0
  %v4002 = vsel %vm589, %v3691, 0
  %v4003 = vsel %vm589, %v3698, 0
  %v4004 = vsel %vm589, %v3705, 0
  %v4005 = vsel %vm589, %v3712, 0
  %v4006 = vsel %vm589, %v3719, 0
  %v4007 = vsel %vm589, %v3726, 0
  %v4008 = vsel %vm589, %v3733, 0
  %v4009 = vsel %vm589, %v3740, 0
  %v4010 = vsel %vm589, %v3747, 0
  %v4011 = vsel %vm589, %v3754, 0
  %v4012 = vsel %vm589, %v3761, 0
  %v4013 = vsel %vm589, %v3768, 0
  %v4014 = vsel %vm589, %v3775, 0
  %v4015 = vsel %vm589, %v3782, 0
  %v4016 = vsel %vm589, %v3789, 0
  %v4017 = vsel %vm589, %v3796, 0
  %v4018 = vsel %vm589, %v3803, 0
  %v4019 = vsel %vm589, %v3810, 0
  %v4020 = vsel %vm589, %v3817, 0
  %v4021 = vsel %vm589, %v3824, 0
  %v4022 = vsel %vm589, %v3831, 0
  %v4023 = vsel %vm589, %v3838, 0
  %v4024 = vsel %vm589, %v3845, 0
  %v4025 = vsel %vm589, %v3852, 0
  %v4026 = vsel %vm589, %v3859, 0
  %v4027 = vsel %vm589, %v3866, 0
  %v4028 = vsel %vm589, %v3873, 0
  %v4029 = vsel %vm589, %v3880, 0
  %v4030 = vsel %vm589, %v3887, 0
  %v4031 = vsel %vm589, %v3894, 0
  %v4032 = vsel %vm589, %v3901, 0
  %v4034 = vshrl.u32 %v3969, 16
  %v4036 = vshll.u32 %v3969, 16
  %v4038 = vrot.slane %v4036, 1
  %v4039 = vor.u32 %v4034, %v4038
  %v4041 = vshll.u32 %v4001, 16
  %v4043 = vrot.slane %v4041, 1
  %v4044 = vsel %vm656, %v4039, %v4043
  %v4046 = vshrl.u32 %v3970, 16
  %v4048 = vshll.u32 %v3970, 16
  %v4050 = vrot.slane %v4048, 1
  %v4051 = vor.u32 %v4046, %v4050
  %v4053 = vshll.u32 %v4002, 16
  %v4055 = vrot.slane %v4053, 1
  %v4056 = vsel %vm656, %v4051, %v4055
  %v4058 = vshrl.u32 %v3971, 16
  %v4060 = vshll.u32 %v3971, 16
  %v4062 = vrot.slane %v4060, 1
  %v4063 = vor.u32 %v4058, %v4062
  %v4065 = vshll.u32 %v4003, 16
  %v4067 = vrot.slane %v4065, 1
  %v4068 = vsel %vm656, %v4063, %v4067
  %v4070 = vshrl.u32 %v3972, 16
  %v4072 = vshll.u32 %v3972, 16
  %v4074 = vrot.slane %v4072, 1
  %v4075 = vor.u32 %v4070, %v4074
  %v4077 = vshll.u32 %v4004, 16
  %v4079 = vrot.slane %v4077, 1
  %v4080 = vsel %vm656, %v4075, %v4079
  %v4082 = vshrl.u32 %v3973, 16
  %v4084 = vshll.u32 %v3973, 16
  %v4086 = vrot.slane %v4084, 1
  %v4087 = vor.u32 %v4082, %v4086
  %v4089 = vshll.u32 %v4005, 16
  %v4091 = vrot.slane %v4089, 1
  %v4092 = vsel %vm656, %v4087, %v4091
  %v4094 = vshrl.u32 %v3974, 16
  %v4096 = vshll.u32 %v3974, 16
  %v4098 = vrot.slane %v4096, 1
  %v4099 = vor.u32 %v4094, %v4098
  %v4101 = vshll.u32 %v4006, 16
  %v4103 = vrot.slane %v4101, 1
  %v4104 = vsel %vm656, %v4099, %v4103
  %v4106 = vshrl.u32 %v3975, 16
  %v4108 = vshll.u32 %v3975, 16
  %v4110 = vrot.slane %v4108, 1
  %v4111 = vor.u32 %v4106, %v4110
  %v4113 = vshll.u32 %v4007, 16
  %v4115 = vrot.slane %v4113, 1
  %v4116 = vsel %vm656, %v4111, %v4115
  %v4118 = vshrl.u32 %v3976, 16
  %v4120 = vshll.u32 %v3976, 16
  %v4122 = vrot.slane %v4120, 1
  %v4123 = vor.u32 %v4118, %v4122
  %v4125 = vshll.u32 %v4008, 16
  %v4127 = vrot.slane %v4125, 1
  %v4128 = vsel %vm656, %v4123, %v4127
  %v4130 = vshrl.u32 %v3977, 16
  %v4132 = vshll.u32 %v3977, 16
  %v4134 = vrot.slane %v4132, 1
  %v4135 = vor.u32 %v4130, %v4134
  %v4137 = vshll.u32 %v4009, 16
  %v4139 = vrot.slane %v4137, 1
  %v4140 = vsel %vm656, %v4135, %v4139
  %v4142 = vshrl.u32 %v3978, 16
  %v4144 = vshll.u32 %v3978, 16
  %v4146 = vrot.slane %v4144, 1
  %v4147 = vor.u32 %v4142, %v4146
  %v4149 = vshll.u32 %v4010, 16
  %v4151 = vrot.slane %v4149, 1
  %v4152 = vsel %vm656, %v4147, %v4151
  %v4154 = vshrl.u32 %v3979, 16
  %v4156 = vshll.u32 %v3979, 16
  %v4158 = vrot.slane %v4156, 1
  %v4159 = vor.u32 %v4154, %v4158
  %v4161 = vshll.u32 %v4011, 16
  %v4163 = vrot.slane %v4161, 1
  %v4164 = vsel %vm656, %v4159, %v4163
  %v4166 = vshrl.u32 %v3980, 16
  %v4168 = vshll.u32 %v3980, 16
  %v4170 = vrot.slane %v4168, 1
  %v4171 = vor.u32 %v4166, %v4170
  %v4173 = vshll.u32 %v4012, 16
  %v4175 = vrot.slane %v4173, 1
  %v4176 = vsel %vm656, %v4171, %v4175
  %v4178 = vshrl.u32 %v3981, 16
  %v4180 = vshll.u32 %v3981, 16
  %v4182 = vrot.slane %v4180, 1
  %v4183 = vor.u32 %v4178, %v4182
  %v4185 = vshll.u32 %v4013, 16
  %v4187 = vrot.slane %v4185, 1
  %v4188 = vsel %vm656, %v4183, %v4187
  %v4190 = vshrl.u32 %v3982, 16
  %v4192 = vshll.u32 %v3982, 16
  %v4194 = vrot.slane %v4192, 1
  %v4195 = vor.u32 %v4190, %v4194
  %v4197 = vshll.u32 %v4014, 16
  %v4199 = vrot.slane %v4197, 1
  %v4200 = vsel %vm656, %v4195, %v4199
  %v4202 = vshrl.u32 %v3983, 16
  %v4204 = vshll.u32 %v3983, 16
  %v4206 = vrot.slane %v4204, 1
  %v4207 = vor.u32 %v4202, %v4206
  %v4209 = vshll.u32 %v4015, 16
  %v4211 = vrot.slane %v4209, 1
  %v4212 = vsel %vm656, %v4207, %v4211
  %v4214 = vshrl.u32 %v3985, 16
  %v4216 = vshll.u32 %v3985, 16
  %v4218 = vrot.slane %v4216, 1
  %v4219 = vor.u32 %v4214, %v4218
  %v4221 = vshll.u32 %v4017, 16
  %v4223 = vrot.slane %v4221, 1
  %v4224 = vsel %vm656, %v4219, %v4223
  %v4226 = vshrl.u32 %v3986, 16
  %v4228 = vshll.u32 %v3986, 16
  %v4230 = vrot.slane %v4228, 1
  %v4231 = vor.u32 %v4226, %v4230
  %v4233 = vshll.u32 %v4018, 16
  %v4235 = vrot.slane %v4233, 1
  %v4236 = vsel %vm656, %v4231, %v4235
  %v4238 = vshrl.u32 %v3987, 16
  %v4240 = vshll.u32 %v3987, 16
  %v4242 = vrot.slane %v4240, 1
  %v4243 = vor.u32 %v4238, %v4242
  %v4245 = vshll.u32 %v4019, 16
  %v4247 = vrot.slane %v4245, 1
  %v4248 = vsel %vm656, %v4243, %v4247
  %v4250 = vshrl.u32 %v3988, 16
  %v4252 = vshll.u32 %v3988, 16
  %v4254 = vrot.slane %v4252, 1
  %v4255 = vor.u32 %v4250, %v4254
  %v4257 = vshll.u32 %v4020, 16
  %v4259 = vrot.slane %v4257, 1
  %v4260 = vsel %vm656, %v4255, %v4259
  %v4262 = vshrl.u32 %v3989, 16
  %v4264 = vshll.u32 %v3989, 16
  %v4266 = vrot.slane %v4264, 1
  %v4267 = vor.u32 %v4262, %v4266
  %v4269 = vshll.u32 %v4021, 16
  %v4271 = vrot.slane %v4269, 1
  %v4272 = vsel %vm656, %v4267, %v4271
  %v4274 = vshrl.u32 %v3990, 16
  %v4276 = vshll.u32 %v3990, 16
  %v4278 = vrot.slane %v4276, 1
  %v4279 = vor.u32 %v4274, %v4278
  %v4281 = vshll.u32 %v4022, 16
  %v4283 = vrot.slane %v4281, 1
  %v4284 = vsel %vm656, %v4279, %v4283
  %v4286 = vshrl.u32 %v3991, 16
  %v4288 = vshll.u32 %v3991, 16
  %v4290 = vrot.slane %v4288, 1
  %v4291 = vor.u32 %v4286, %v4290
  %v4293 = vshll.u32 %v4023, 16
  %v4295 = vrot.slane %v4293, 1
  %v4296 = vsel %vm656, %v4291, %v4295
  %v4298 = vshrl.u32 %v3992, 16
  %v4300 = vshll.u32 %v3992, 16
  %v4302 = vrot.slane %v4300, 1
  %v4303 = vor.u32 %v4298, %v4302
  %v4305 = vshll.u32 %v4024, 16
  %v4307 = vrot.slane %v4305, 1
  %v4308 = vsel %vm656, %v4303, %v4307
  %v4310 = vshrl.u32 %v3993, 16
  %v4312 = vshll.u32 %v3993, 16
  %v4314 = vrot.slane %v4312, 1
  %v4315 = vor.u32 %v4310, %v4314
  %v4317 = vshll.u32 %v4025, 16
  %v4319 = vrot.slane %v4317, 1
  %v4320 = vsel %vm656, %v4315, %v4319
  %v4322 = vshrl.u32 %v3994, 16
  %v4324 = vshll.u32 %v3994, 16
  %v4326 = vrot.slane %v4324, 1
  %v4327 = vor.u32 %v4322, %v4326
  %v4329 = vshll.u32 %v4026, 16
  %v4331 = vrot.slane %v4329, 1
  %v4332 = vsel %vm656, %v4327, %v4331
  %v4334 = vshrl.u32 %v3995, 16
  %v4336 = vshll.u32 %v3995, 16
  %v4338 = vrot.slane %v4336, 1
  %v4339 = vor.u32 %v4334, %v4338
  %v4341 = vshll.u32 %v4027, 16
  %v4343 = vrot.slane %v4341, 1
  %v4344 = vsel %vm656, %v4339, %v4343
  %v4346 = vshrl.u32 %v3996, 16
  %v4348 = vshll.u32 %v3996, 16
  %v4350 = vrot.slane %v4348, 1
  %v4351 = vor.u32 %v4346, %v4350
  %v4353 = vshll.u32 %v4028, 16
  %v4355 = vrot.slane %v4353, 1
  %v4356 = vsel %vm656, %v4351, %v4355
  %v4358 = vshrl.u32 %v3997, 16
  %v4360 = vshll.u32 %v3997, 16
  %v4362 = vrot.slane %v4360, 1
  %v4363 = vor.u32 %v4358, %v4362
  %v4365 = vshll.u32 %v4029, 16
  %v4367 = vrot.slane %v4365, 1
  %v4368 = vsel %vm656, %v4363, %v4367
  %v4370 = vshrl.u32 %v3998, 16
  %v4372 = vshll.u32 %v3998, 16
  %v4374 = vrot.slane %v4372, 1
  %v4375 = vor.u32 %v4370, %v4374
  %v4377 = vshll.u32 %v4030, 16
  %v4379 = vrot.slane %v4377, 1
  %v4380 = vsel %vm656, %v4375, %v4379
  %v4382 = vshrl.u32 %v3999, 16
  %v4384 = vshll.u32 %v3999, 16
  %v4386 = vrot.slane %v4384, 1
  %v4387 = vor.u32 %v4382, %v4386
  %v4389 = vshll.u32 %v4031, 16
  %v4391 = vrot.slane %v4389, 1
  %v4392 = vsel %vm656, %v4387, %v4391
  %v4484 = vrot.slane %v3969, 1
  %v4485 = vrot.slane %v4001, 1
  %v4486 = vsel %vm1153, %v4484, %v4485
  %v4487 = vrot.slane %v3970, 1
  %v4488 = vrot.slane %v4002, 1
  %v4489 = vsel %vm1153, %v4487, %v4488
  %v4490 = vrot.slane %v3971, 1
  %v4491 = vrot.slane %v4003, 1
  %v4492 = vsel %vm1153, %v4490, %v4491
  %v4493 = vrot.slane %v3972, 1
  %v4494 = vrot.slane %v4004, 1
  %v4495 = vsel %vm1153, %v4493, %v4494
  %v4496 = vrot.slane %v3973, 1
  %v4497 = vrot.slane %v4005, 1
  %v4498 = vsel %vm1153, %v4496, %v4497
  %v4499 = vrot.slane %v3974, 1
  %v4500 = vrot.slane %v4006, 1
  %v4501 = vsel %vm1153, %v4499, %v4500
  %v4502 = vrot.slane %v3975, 1
  %v4503 = vrot.slane %v4007, 1
  %v4504 = vsel %vm1153, %v4502, %v4503
  %v4505 = vrot.slane %v3976, 1
  %v4506 = vrot.slane %v4008, 1
  %v4507 = vsel %vm1153, %v4505, %v4506
  %v4508 = vrot.slane %v3977, 1
  %v4509 = vrot.slane %v4009, 1
  %v4510 = vsel %vm1153, %v4508, %v4509
  %v4511 = vrot.slane %v3978, 1
  %v4512 = vrot.slane %v4010, 1
  %v4513 = vsel %vm1153, %v4511, %v4512
  %v4514 = vrot.slane %v3979, 1
  %v4515 = vrot.slane %v4011, 1
  %v4516 = vsel %vm1153, %v4514, %v4515
  %v4517 = vrot.slane %v3980, 1
  %v4518 = vrot.slane %v4012, 1
  %v4519 = vsel %vm1153, %v4517, %v4518
  %v4520 = vrot.slane %v3981, 1
  %v4521 = vrot.slane %v4013, 1
  %v4522 = vsel %vm1153, %v4520, %v4521
  %v4523 = vrot.slane %v3982, 1
  %v4524 = vrot.slane %v4014, 1
  %v4525 = vsel %vm1153, %v4523, %v4524
  %v4526 = vrot.slane %v3983, 1
  %v4527 = vrot.slane %v4015, 1
  %v4528 = vsel %vm1153, %v4526, %v4527
  %v4529 = vrot.slane %v3985, 1
  %v4530 = vrot.slane %v4017, 1
  %v4531 = vsel %vm1153, %v4529, %v4530
  %v4532 = vrot.slane %v3986, 1
  %v4533 = vrot.slane %v4018, 1
  %v4534 = vsel %vm1153, %v4532, %v4533
  %v4535 = vrot.slane %v3987, 1
  %v4536 = vrot.slane %v4019, 1
  %v4537 = vsel %vm1153, %v4535, %v4536
  %v4538 = vrot.slane %v3988, 1
  %v4539 = vrot.slane %v4020, 1
  %v4540 = vsel %vm1153, %v4538, %v4539
  %v4541 = vrot.slane %v3989, 1
  %v4542 = vrot.slane %v4021, 1
  %v4543 = vsel %vm1153, %v4541, %v4542
  %v4544 = vrot.slane %v3990, 1
  %v4545 = vrot.slane %v4022, 1
  %v4546 = vsel %vm1153, %v4544, %v4545
  %v4547 = vrot.slane %v3991, 1
  %v4548 = vrot.slane %v4023, 1
  %v4549 = vsel %vm1153, %v4547, %v4548
  %v4550 = vrot.slane %v3992, 1
  %v4551 = vrot.slane %v4024, 1
  %v4552 = vsel %vm1153, %v4550, %v4551
  %v4553 = vrot.slane %v3993, 1
  %v4554 = vrot.slane %v4025, 1
  %v4555 = vsel %vm1153, %v4553, %v4554
  %v4556 = vrot.slane %v3994, 1
  %v4557 = vrot.slane %v4026, 1
  %v4558 = vsel %vm1153, %v4556, %v4557
  %v4559 = vrot.slane %v3995, 1
  %v4560 = vrot.slane %v4027, 1
  %v4561 = vsel %vm1153, %v4559, %v4560
  %v4562 = vrot.slane %v3996, 1
  %v4563 = vrot.slane %v4028, 1
  %v4564 = vsel %vm1153, %v4562, %v4563
  %v4565 = vrot.slane %v3997, 1
  %v4566 = vrot.slane %v4029, 1
  %v4567 = vsel %vm1153, %v4565, %v4566
  %v4568 = vrot.slane %v3998, 1
  %v4569 = vrot.slane %v4030, 1
  %v4570 = vsel %vm1153, %v4568, %v4569
  %v4571 = vrot.slane %v3999, 1
  %v4572 = vrot.slane %v4031, 1
  %v4573 = vsel %vm1153, %v4571, %v4572
  %v4606 = vshrl.u32 %v3984, 16
  %v4608 = vshll.u32 %v3984, 16
  %v4610 = vrot.slane %v4608, 1
  %v4611 = vor.u32 %v4606, %v4610
  %v4613 = vshll.u32 %v4016, 16
  %v4615 = vrot.slane %v4613, 1
  %v4616 = vsel %vm656, %v4611, %v4615
  %v4618 = vshrl.u32 %v4000, 16
  %v4620 = vshll.u32 %v4000, 16
  %v4622 = vrot.slane %v4620, 1
  %v4623 = vor.u32 %v4618, %v4622
  %v4625 = vshll.u32 %v4032, 16
  %v4627 = vrot.slane %v4625, 1
  %v4628 = vsel %vm656, %v4623, %v4627
  %v4635 = vrot.slane %v3984, 1
  %v4636 = vrot.slane %v4016, 1
  %v4637 = vsel %vm1153, %v4635, %v4636
  %v4638 = vrot.slane %v4000, 1
  %v4639 = vrot.slane %v4032, 1
  %v4640 = vsel %vm1153, %v4638, %v4639
  %v4643 = vld [vmem:[%s3] sm:$0xf]
  %v4644 = vld [vmem:[%s3 + $0x4] sm:$0xf]
  %v4645 = vld [vmem:[%s3 + $0x8] sm:$0xf]
  %v4646 = vld [vmem:[%s3 + $0xc] sm:$0xf]
  %v4647 = vld [vmem:[%s3 + $0x10] sm:$0xf]
  %v4648 = vld [vmem:[%s3 + $0x14] sm:$0xf]
  %v4649 = vld [vmem:[%s3 + $0x18] sm:$0xf]
  %v4650 = vld [vmem:[%s3 + $0x1c] sm:$0xf]
  %v4651 = vld [vmem:[%s3 + $0x20] sm:$0xf]
  %v4652 = vld [vmem:[%s3 + $0x24] sm:$0xf]
  %v4653 = vld [vmem:[%s3 + $0x28] sm:$0xf]
  %v4654 = vld [vmem:[%s3 + $0x2c] sm:$0xf]
  %v4655 = vld [vmem:[%s3 + $0x30] sm:$0xf]
  %v4656 = vld [vmem:[%s3 + $0x34] sm:$0xf]
  %v4657 = vld [vmem:[%s3 + $0x38] sm:$0xf]
  %v4658 = vld [vmem:[%s3 + $0x3c] sm:$0xf]
  %v4659 = vld [vmem:[%s3 + $0x40] sm:$0xf]
  %v4660 = vld [vmem:[%s3 + $0x44] sm:$0xf]
  %v4661 = vld [vmem:[%s3 + $0x48] sm:$0xf]
  %v4662 = vld [vmem:[%s3 + $0x4c] sm:$0xf]
  %v4663 = vld [vmem:[%s3 + $0x50] sm:$0xf]
  %v4664 = vld [vmem:[%s3 + $0x54] sm:$0xf]
  %v4665 = vld [vmem:[%s3 + $0x58] sm:$0xf]
  %v4666 = vld [vmem:[%s3 + $0x5c] sm:$0xf]
  %v4667 = vld [vmem:[%s3 + $0x60] sm:$0xf]
  %v4668 = vld [vmem:[%s3 + $0x64] sm:$0xf]
  %v4669 = vld [vmem:[%s3 + $0x68] sm:$0xf]
  %v4670 = vld [vmem:[%s3 + $0x6c] sm:$0xf]
  %v4671 = vld [vmem:[%s3 + $0x70] sm:$0xf]
  %v4672 = vld [vmem:[%s3 + $0x74] sm:$0xf]
  %v4673 = vld [vmem:[%s3 + $0x78] sm:$0xf]
  %v4674 = vld [vmem:[%s3 + $0x7c] sm:$0xf]
  %v4675 = vld [vmem:[%s3 + $0x80] sm:$0xf]
  %v4676 = vld [vmem:[%s3 + $0x84] sm:$0xf]
  %v4677 = vld [vmem:[%s3 + $0x88] sm:$0xf]
  %v4678 = vld [vmem:[%s3 + $0x8c] sm:$0xf]
  %v4679 = vld [vmem:[%s3 + $0x90] sm:$0xf]
  %v4680 = vld [vmem:[%s3 + $0x94] sm:$0xf]
  %v4681 = vld [vmem:[%s3 + $0x98] sm:$0xf]
  %v4682 = vld [vmem:[%s3 + $0x9c] sm:$0xf]
  %v4683 = vld [vmem:[%s3 + $0xa0] sm:$0xf]
  %v4684 = vld [vmem:[%s3 + $0xa4] sm:$0xf]
  %v4685 = vld [vmem:[%s3 + $0xa8] sm:$0xf]
  %v4686 = vld [vmem:[%s3 + $0xac] sm:$0xf]
  %v4687 = vld [vmem:[%s3 + $0xb0] sm:$0xf]
  %v4688 = vld [vmem:[%s3 + $0xb4] sm:$0xf]
  %v4689 = vld [vmem:[%s3 + $0xb8] sm:$0xf]
  %v4690 = vld [vmem:[%s3 + $0xbc] sm:$0xf]
  %v4691 = vld [vmem:[%s3 + $0xc0] sm:$0xf]
  %v4692 = vld [vmem:[%s3 + $0xc4] sm:$0xf]
  %v4693 = vld [vmem:[%s3 + $0xc8] sm:$0xf]
  %v4694 = vld [vmem:[%s3 + $0xcc] sm:$0xf]
  %v4695 = vld [vmem:[%s3 + $0xd0] sm:$0xf]
  %v4696 = vld [vmem:[%s3 + $0xd4] sm:$0xf]
  %v4697 = vld [vmem:[%s3 + $0xd8] sm:$0xf]
  %v4698 = vld [vmem:[%s3 + $0xdc] sm:$0xf]
  %v4699 = vld [vmem:[%s3 + $0xe0] sm:$0xf]
  %v4700 = vld [vmem:[%s3 + $0xe4] sm:$0xf]
  %v4701 = vld [vmem:[%s3 + $0xe8] sm:$0xf]
  %v4702 = vld [vmem:[%s3 + $0xec] sm:$0xf]
  %v4703 = vld [vmem:[%s3 + $0xf0] sm:$0xf]
  %v4704 = vld [vmem:[%s3 + $0xf4] sm:$0xf]
  %v4705 = vld [vmem:[%s3 + $0xf8] sm:$0xf]
  %v4706 = vld [vmem:[%s3 + $0xfc] sm:$0xf]
  %v4707 = vld [vmem:[%s3 + $0x100] sm:$0xf]
  %v4708 = vld [vmem:[%s3 + $0x104] sm:$0xf]
  %v4709 = vld [vmem:[%s3 + $0x108] sm:$0xf]
  %v4710 = vld [vmem:[%s3 + $0x10c] sm:$0xf]
  %v4711 = vld [vmem:[%s3 + $0x110] sm:$0xf]
  %v4712 = vld [vmem:[%s3 + $0x114] sm:$0xf]
  %v4713 = vld [vmem:[%s3 + $0x118] sm:$0xf]
  %v4714 = vld [vmem:[%s3 + $0x11c] sm:$0xf]
  %v4715 = vld [vmem:[%s3 + $0x120] sm:$0xf]
  %v4716 = vld [vmem:[%s3 + $0x124] sm:$0xf]
  %v4717 = vld [vmem:[%s3 + $0x128] sm:$0xf]
  %v4718 = vld [vmem:[%s3 + $0x12c] sm:$0xf]
  %v4719 = vld [vmem:[%s3 + $0x130] sm:$0xf]
  %v4720 = vld [vmem:[%s3 + $0x134] sm:$0xf]
  %v4721 = vld [vmem:[%s3 + $0x138] sm:$0xf]
  %v4722 = vld [vmem:[%s3 + $0x13c] sm:$0xf]
  %v4723 = vld [vmem:[%s3 + $0x140] sm:$0xf]
  %v4724 = vld [vmem:[%s3 + $0x144] sm:$0xf]
  %v4725 = vld [vmem:[%s3 + $0x148] sm:$0xf]
  %v4726 = vld [vmem:[%s3 + $0x14c] sm:$0xf]
  %v4727 = vld [vmem:[%s3 + $0x150] sm:$0xf]
  %v4728 = vld [vmem:[%s3 + $0x154] sm:$0xf]
  %v4729 = vld [vmem:[%s3 + $0x158] sm:$0xf]
  %v4730 = vld [vmem:[%s3 + $0x15c] sm:$0xf]
  %v4731 = vld [vmem:[%s3 + $0x160] sm:$0xf]
  %v4732 = vld [vmem:[%s3 + $0x164] sm:$0xf]
  %v4733 = vld [vmem:[%s3 + $0x168] sm:$0xf]
  %v4734 = vld [vmem:[%s3 + $0x16c] sm:$0xf]
  %v4735 = vld [vmem:[%s3 + $0x170] sm:$0xf]
  %v4736 = vld [vmem:[%s3 + $0x174] sm:$0xf]
  %v4737 = vld [vmem:[%s3 + $0x178] sm:$0xf]
  %v4738 = vld [vmem:[%s3 + $0x17c] sm:$0xf]
  %v4739 = vld [vmem:[%s3 + $0x180] sm:$0xf]
  %v4740 = vld [vmem:[%s3 + $0x184] sm:$0xf]
  %v4741 = vld [vmem:[%s3 + $0x188] sm:$0xf]
  %v4742 = vld [vmem:[%s3 + $0x18c] sm:$0xf]
  %v4743 = vld [vmem:[%s3 + $0x190] sm:$0xf]
  %v4744 = vld [vmem:[%s3 + $0x194] sm:$0xf]
  %v4745 = vld [vmem:[%s3 + $0x198] sm:$0xf]
  %v4746 = vld [vmem:[%s3 + $0x19c] sm:$0xf]
  %v4747 = vld [vmem:[%s3 + $0x1a0] sm:$0xf]
  %v4748 = vld [vmem:[%s3 + $0x1a4] sm:$0xf]
  %v4749 = vld [vmem:[%s3 + $0x1a8] sm:$0xf]
  %v4750 = vld [vmem:[%s3 + $0x1ac] sm:$0xf]
  %v4751 = vld [vmem:[%s3 + $0x1b0] sm:$0xf]
  %v4752 = vld [vmem:[%s3 + $0x1b4] sm:$0xf]
  %v4753 = vld [vmem:[%s3 + $0x1b8] sm:$0xf]
  %v4754 = vld [vmem:[%s3 + $0x1bc] sm:$0xf]
  %v4755 = vld [vmem:[%s3 + $0x1c0] sm:$0xf]
  %v4756 = vld [vmem:[%s3 + $0x1c4] sm:$0xf]
  %v4757 = vld [vmem:[%s3 + $0x1c8] sm:$0xf]
  %v4758 = vld [vmem:[%s3 + $0x1cc] sm:$0xf]
  %v4759 = vld [vmem:[%s3 + $0x1d0] sm:$0xf]
  %v4760 = vld [vmem:[%s3 + $0x1d4] sm:$0xf]
  %v4761 = vld [vmem:[%s3 + $0x1d8] sm:$0xf]
  %v4762 = vld [vmem:[%s3 + $0x1dc] sm:$0xf]
  %v4763 = vld [vmem:[%s3 + $0x1e0] sm:$0xf]
  %v4764 = vld [vmem:[%s3 + $0x1e4] sm:$0xf]
  %v4765 = vld [vmem:[%s3 + $0x1e8] sm:$0xf]
  %v4766 = vld [vmem:[%s3 + $0x1ec] sm:$0xf]
  %v4767 = vld [vmem:[%s3 + $0x1f0] sm:$0xf]
  %v4768 = vld [vmem:[%s3 + $0x1f4] sm:$0xf]
  %v4769 = vld [vmem:[%s3 + $0x1f8] sm:$0xf]
  %v4770 = vld [vmem:[%s3 + $0x1fc] sm:$0xf]
  %v4771 = vld [vmem:[%s3 + $0x200] sm:$0xf]
  %v4772 = vld [vmem:[%s3 + $0x204] sm:$0xf]
  %v4773 = vld [vmem:[%s3 + $0x208] sm:$0xf]
  %v4774 = vld [vmem:[%s3 + $0x20c] sm:$0xf]
  %v4775 = vld [vmem:[%s3 + $0x210] sm:$0xf]
  %v4776 = vld [vmem:[%s3 + $0x214] sm:$0xf]
  %v4777 = vld [vmem:[%s3 + $0x218] sm:$0xf]
  %v4778 = vld [vmem:[%s3 + $0x21c] sm:$0xf]
  %v4779 = vld [vmem:[%s3 + $0x220] sm:$0xf]
  %v4780 = vld [vmem:[%s3 + $0x224] sm:$0xf]
  %v4781 = vld [vmem:[%s3 + $0x228] sm:$0xf]
  %v4782 = vld [vmem:[%s3 + $0x22c] sm:$0xf]
  %v4783 = vld [vmem:[%s3 + $0x230] sm:$0xf]
  %v4784 = vld [vmem:[%s3 + $0x234] sm:$0xf]
  %v4785 = vld [vmem:[%s3 + $0x238] sm:$0xf]
  %v4786 = vld [vmem:[%s3 + $0x23c] sm:$0xf]
  %s4787 = scalar_lea.vmem %s4, 1
  %v4788 = vld [vmem:[%s4787] sm:$0x1]
  %v4790 = vlaneseq
  %v4791 = vshrl.u32 %v4790, 7
  %v4792 = vsub.s32 0, %v4791
  %v4793 = vrot.slane %v4788, %v4792
  %v4939 = vunpack.c.l.b16 %v4643
  %v4940 = vunpack.c.l.b16 %v4644
  %v4941 = vunpack.c.l.b16 %v4645
  %v4942 = vunpack.c.l.b16 %v4646
  %v4943 = vunpack.c.l.b16 %v4647
  %v4944 = vunpack.c.l.b16 %v4648
  %v4945 = vunpack.c.l.b16 %v4649
  %v4946 = vunpack.c.l.b16 %v4650
  %v4947 = vunpack.c.l.b16 %v4651
  %v4948 = vunpack.c.l.b16 %v4652
  %v4949 = vunpack.c.l.b16 %v4653
  %v4950 = vunpack.c.l.b16 %v4654
  %v4951 = vunpack.c.l.b16 %v4655
  %v4952 = vunpack.c.l.b16 %v4656
  %v4953 = vunpack.c.l.b16 %v4657
  %v4954 = vunpack.c.l.b16 %v4658
  %v4955 = vunpack.c.l.b16 %v4659
  %v4956 = vunpack.c.l.b16 %v4660
  %v4957 = vunpack.c.l.b16 %v4661
  %v4958 = vunpack.c.l.b16 %v4662
  %v4959 = vunpack.c.l.b16 %v4663
  %v4960 = vunpack.c.l.b16 %v4664
  %v4961 = vunpack.c.l.b16 %v4665
  %v4962 = vunpack.c.l.b16 %v4666
  %v4963 = vunpack.c.l.b16 %v4667
  %v4964 = vunpack.c.l.b16 %v4668
  %v4965 = vunpack.c.l.b16 %v4669
  %v4966 = vunpack.c.l.b16 %v4670
  %v4967 = vunpack.c.l.b16 %v4671
  %v4968 = vunpack.c.l.b16 %v4672
  %v4969 = vunpack.c.l.b16 %v4673
  %v4970 = vunpack.c.l.b16 %v4674
  %v4971 = vunpack.c.l.b16 %v4675
  %v4972 = vunpack.c.l.b16 %v4676
  %v4973 = vunpack.c.l.b16 %v4677
  %v4974 = vunpack.c.l.b16 %v4678
  %v4975 = vunpack.c.l.b16 %v4679
  %v4976 = vunpack.c.l.b16 %v4680
  %v4977 = vunpack.c.l.b16 %v4681
  %v4978 = vunpack.c.l.b16 %v4682
  %v4979 = vunpack.c.l.b16 %v4683
  %v4980 = vunpack.c.l.b16 %v4684
  %v4981 = vunpack.c.l.b16 %v4685
  %v4982 = vunpack.c.l.b16 %v4686
  %v4983 = vunpack.c.l.b16 %v4687
  %v4984 = vunpack.c.l.b16 %v4688
  %v4985 = vunpack.c.l.b16 %v4689
  %v4986 = vunpack.c.l.b16 %v4690
  %v4987 = vunpack.c.l.b16 %v4691
  %v4988 = vunpack.c.l.b16 %v4692
  %v4989 = vunpack.c.l.b16 %v4693
  %v4990 = vunpack.c.l.b16 %v4694
  %v4991 = vunpack.c.l.b16 %v4695
  %v4992 = vunpack.c.l.b16 %v4696
  %v4993 = vunpack.c.l.b16 %v4697
  %v4994 = vunpack.c.l.b16 %v4698
  %v4995 = vunpack.c.l.b16 %v4699
  %v4996 = vunpack.c.l.b16 %v4700
  %v4997 = vunpack.c.l.b16 %v4701
  %v4998 = vunpack.c.l.b16 %v4702
  %v4999 = vunpack.c.l.b16 %v4703
  %v5000 = vunpack.c.l.b16 %v4704
  %v5001 = vunpack.c.l.b16 %v4705
  %v5002 = vunpack.c.l.b16 %v4706
  %v5003 = vunpack.c.l.b16 %v4707
  %v5004 = vunpack.c.l.b16 %v4708
  %v5005 = vunpack.c.l.b16 %v4709
  %v5006 = vunpack.c.l.b16 %v4710
  %v5007 = vunpack.c.l.b16 %v4711
  %v5008 = vunpack.c.l.b16 %v4712
  %v5009 = vunpack.c.l.b16 %v4713
  %v5010 = vunpack.c.l.b16 %v4714
  %v5011 = vunpack.c.l.b16 %v4715
  %v5012 = vunpack.c.l.b16 %v4716
  %v5013 = vunpack.c.l.b16 %v4717
  %v5014 = vunpack.c.l.b16 %v4718
  %v5015 = vunpack.c.l.b16 %v4719
  %v5016 = vunpack.c.l.b16 %v4720
  %v5017 = vunpack.c.l.b16 %v4721
  %v5018 = vunpack.c.l.b16 %v4722
  %v5019 = vunpack.c.l.b16 %v4723
  %v5020 = vunpack.c.l.b16 %v4724
  %v5021 = vunpack.c.l.b16 %v4725
  %v5022 = vunpack.c.l.b16 %v4726
  %v5023 = vunpack.c.l.b16 %v4727
  %v5024 = vunpack.c.l.b16 %v4728
  %v5025 = vunpack.c.l.b16 %v4729
  %v5026 = vunpack.c.l.b16 %v4730
  %v5027 = vunpack.c.l.b16 %v4731
  %v5028 = vunpack.c.l.b16 %v4732
  %v5029 = vunpack.c.l.b16 %v4733
  %v5030 = vunpack.c.l.b16 %v4734
  %v5031 = vunpack.c.l.b16 %v4735
  %v5032 = vunpack.c.l.b16 %v4736
  %v5033 = vunpack.c.l.b16 %v4737
  %v5034 = vunpack.c.l.b16 %v4738
  %v5035 = vunpack.c.l.b16 %v4739
  %v5036 = vunpack.c.l.b16 %v4740
  %v5037 = vunpack.c.l.b16 %v4741
  %v5038 = vunpack.c.l.b16 %v4742
  %v5039 = vunpack.c.l.b16 %v4743
  %v5040 = vunpack.c.l.b16 %v4744
  %v5041 = vunpack.c.l.b16 %v4745
  %v5042 = vunpack.c.l.b16 %v4746
  %v5043 = vunpack.c.l.b16 %v4747
  %v5044 = vunpack.c.l.b16 %v4748
  %v5045 = vunpack.c.l.b16 %v4749
  %v5046 = vunpack.c.l.b16 %v4750
  %v5047 = vunpack.c.l.b16 %v4751
  %v5048 = vunpack.c.l.b16 %v4752
  %v5049 = vunpack.c.l.b16 %v4753
  %v5050 = vunpack.c.l.b16 %v4754
  %v5051 = vunpack.c.l.b16 %v4755
  %v5052 = vunpack.c.l.b16 %v4756
  %v5053 = vunpack.c.l.b16 %v4757
  %v5054 = vunpack.c.l.b16 %v4758
  %v5055 = vunpack.c.l.b16 %v4759
  %v5056 = vunpack.c.l.b16 %v4760
  %v5057 = vunpack.c.l.b16 %v4761
  %v5058 = vunpack.c.l.b16 %v4762
  %v5059 = vunpack.c.l.b16 %v4763
  %v5060 = vunpack.c.l.b16 %v4764
  %v5061 = vunpack.c.l.b16 %v4765
  %v5062 = vunpack.c.l.b16 %v4766
  %v5063 = vunpack.c.l.b16 %v4767
  %v5064 = vunpack.c.l.b16 %v4768
  %v5065 = vunpack.c.l.b16 %v4769
  %v5066 = vunpack.c.l.b16 %v4770
  %v5067 = vunpack.c.l.b16 %v4771
  %v5068 = vunpack.c.l.b16 %v4772
  %v5069 = vunpack.c.l.b16 %v4773
  %v5070 = vunpack.c.l.b16 %v4774
  %v5071 = vunpack.c.l.b16 %v4775
  %v5072 = vunpack.c.l.b16 %v4776
  %v5073 = vunpack.c.l.b16 %v4777
  %v5074 = vunpack.c.l.b16 %v4778
  %v5075 = vunpack.c.l.b16 %v4779
  %v5076 = vunpack.c.l.b16 %v4780
  %v5077 = vunpack.c.l.b16 %v4781
  %v5078 = vunpack.c.l.b16 %v4782
  %v5079 = vunpack.c.l.b16 %v4783
  %v5080 = vunpack.c.l.b16 %v4784
  %v5081 = vunpack.c.l.b16 %v4785
  %v5082 = vunpack.c.l.b16 %v4786
  %v5083 = vpack.c.b16 %v4940, %v4939
  %v5084 = vpack.c.b16 %v4942, %v4941
  %v5085 = vpack.c.b16 %v4944, %v4943
  %v5086 = vpack.c.b16 %v4946, %v4945
  %v5087 = vpack.c.b16 %v4948, %v4947
  %v5088 = vpack.c.b16 %v4950, %v4949
  %v5089 = vpack.c.b16 %v4952, %v4951
  %v5090 = vpack.c.b16 %v4954, %v4953
  %v5091 = vpack.c.b16 %v4956, %v4955
  %v5092 = vpack.c.b16 %v4958, %v4957
  %v5093 = vpack.c.b16 %v4960, %v4959
  %v5094 = vpack.c.b16 %v4962, %v4961
  %v5095 = vpack.c.b16 %v4964, %v4963
  %v5096 = vpack.c.b16 %v4966, %v4965
  %v5097 = vpack.c.b16 %v4968, %v4967
  %v5098 = vpack.c.b16 %v4970, %v4969
  %v5099 = vpack.c.b16 %v4972, %v4971
  %v5100 = vpack.c.b16 %v4974, %v4973
  %v5101 = vpack.c.b16 %v4976, %v4975
  %v5102 = vpack.c.b16 %v4978, %v4977
  %v5103 = vpack.c.b16 %v4980, %v4979
  %v5104 = vpack.c.b16 %v4982, %v4981
  %v5105 = vpack.c.b16 %v4984, %v4983
  %v5106 = vpack.c.b16 %v4986, %v4985
  %v5107 = vpack.c.b16 %v4988, %v4987
  %v5108 = vpack.c.b16 %v4990, %v4989
  %v5109 = vpack.c.b16 %v4992, %v4991
  %v5110 = vpack.c.b16 %v4994, %v4993
  %v5111 = vpack.c.b16 %v4996, %v4995
  %v5112 = vpack.c.b16 %v4998, %v4997
  %v5113 = vpack.c.b16 %v5000, %v4999
  %v5114 = vpack.c.b16 %v5002, %v5001
  %v5115 = vpack.c.b16 %v5004, %v5003
  %v5116 = vpack.c.b16 %v5006, %v5005
  %v5117 = vpack.c.b16 %v5008, %v5007
  %v5118 = vpack.c.b16 %v5010, %v5009
  %v5119 = vpack.c.b16 %v5012, %v5011
  %v5120 = vpack.c.b16 %v5014, %v5013
  %v5121 = vpack.c.b16 %v5016, %v5015
  %v5122 = vpack.c.b16 %v5018, %v5017
  %v5123 = vpack.c.b16 %v5020, %v5019
  %v5124 = vpack.c.b16 %v5022, %v5021
  %v5125 = vpack.c.b16 %v5024, %v5023
  %v5126 = vpack.c.b16 %v5026, %v5025
  %v5127 = vpack.c.b16 %v5028, %v5027
  %v5128 = vpack.c.b16 %v5030, %v5029
  %v5129 = vpack.c.b16 %v5032, %v5031
  %v5130 = vpack.c.b16 %v5034, %v5033
  %v5131 = vpack.c.b16 %v5036, %v5035
  %v5132 = vpack.c.b16 %v5038, %v5037
  %v5133 = vpack.c.b16 %v5040, %v5039
  %v5134 = vpack.c.b16 %v5042, %v5041
  %v5135 = vpack.c.b16 %v5044, %v5043
  %v5136 = vpack.c.b16 %v5046, %v5045
  %v5137 = vpack.c.b16 %v5048, %v5047
  %v5138 = vpack.c.b16 %v5050, %v5049
  %v5139 = vpack.c.b16 %v5052, %v5051
  %v5140 = vpack.c.b16 %v5054, %v5053
  %v5141 = vpack.c.b16 %v5056, %v5055
  %v5142 = vpack.c.b16 %v5058, %v5057
  %v5143 = vpack.c.b16 %v5060, %v5059
  %v5144 = vpack.c.b16 %v5062, %v5061
  %v5145 = vpack.c.b16 %v5064, %v5063
  %v5146 = vpack.c.b16 %v5066, %v5065
  %v5147 = vpack.c.b16 %v5068, %v5067
  %v5148 = vpack.c.b16 %v5070, %v5069
  %v5149 = vpack.c.b16 %v5072, %v5071
  %v5150 = vpack.c.b16 %v5074, %v5073
  %v5151 = vpack.c.b16 %v5076, %v5075
  %v5152 = vpack.c.b16 %v5078, %v5077
  %v5153 = vpack.c.b16 %v5080, %v5079
  %v5154 = vpack.c.b16 %v5082, %v5081
  %5227 = vmatprep.subr.bf16.mxu0 0
  %5228 = vmatpush1.bf16.msra.mxu0 %v5083
  %5229 = vmatprep.subr.bf16.mxu0 0
  %5230 = vmatpush1.bf16.msra.mxu0 %v5084
  %5231 = vmatprep.subr.bf16.mxu0 0
  %5232 = vmatpush1.bf16.msra.mxu0 %v5085
  %5233 = vmatprep.subr.bf16.mxu0 0
  %5234 = vmatpush1.bf16.msra.mxu0 %v5086
  %5235 = vmatprep.subr.bf16.mxu0 0
  %5236 = vmatpush1.bf16.msra.mxu0 %v5087
  %5237 = vmatprep.subr.bf16.mxu0 0
  %5238 = vmatpush1.bf16.msra.mxu0 %v5088
  %5239 = vmatprep.subr.bf16.mxu0 0
  %5240 = vmatpush1.bf16.msra.mxu0 %v5089
  %5241 = vmatprep.subr.bf16.mxu0 0
  %5242 = vmatpush1.bf16.msra.mxu0 %v5090
  %5243 = vmatprep.subr.bf16.mxu0 0
  %5244 = vmatpush1.bf16.msra.mxu0 %v5091
  %5245 = vmatprep.subr.bf16.mxu0 0
  %5246 = vmatpush1.bf16.msra.mxu0 %v5092
  %5247 = vmatprep.subr.bf16.mxu0 0
  %5248 = vmatpush1.bf16.msra.mxu0 %v5093
  %5249 = vmatprep.subr.bf16.mxu0 0
  %5250 = vmatpush1.bf16.msra.mxu0 %v5094
  %5251 = vmatprep.subr.bf16.mxu0 0
  %5252 = vmatpush1.bf16.msra.mxu0 %v5095
  %5253 = vmatprep.subr.bf16.mxu0 0
  %5254 = vmatpush1.bf16.msra.mxu0 %v5096
  %5255 = vmatprep.subr.bf16.mxu0 0
  %5256 = vmatpush1.bf16.msra.mxu0 %v5097
  %5257 = vmatprep.subr.bf16.mxu0 0
  %5258 = vmatpush1.bf16.msra.mxu0 %v5098
  %5259 = vmatprep.mubr.bf16.mxu0 %v668
  %5260 = vmatmul.mubr.bf16.gmra.mrb[0].mxu0 %v590
  %v5261 = vpop.f32.mrb[0].mxu0
  %v5262 = vadd.f32 %v4793, %v5261
  %v5263 = vpop.f32.mrb[0].mxu0
  %v5264 = vpop.f32.mrb[0].mxu0
  %v5265 = vadd.f32 %v4793, %v5264
  %v5266 = vpop.f32.mrb[0].mxu0
  %5267 = vmatprep.mubr.bf16.mxu0 %v4044
  %5268 = vmatmul.mubr.bf16.gmra.mrb[0].mxu0 %v3969
  %v5269 = vpop.f32.mrb[0].mxu0
  %v5270 = vadd.f32 %v4793, %v5269
  %v5271 = vpop.f32.mrb[0].mxu0
  %v5272 = vpop.f32.mrb[0].mxu0
  %v5273 = vadd.f32 %v4793, %v5272
  %v5274 = vpop.f32.mrb[0].mxu0
  %5275 = vmatprep.mubr.bf16.mxu0 %v4056
  %5276 = vmatmul.mubr.bf16.gmra.mrb[0].mxu0 %v3970
  %v5277 = vpop.f32.mrb[0].mxu0
  %v5278 = vadd.f32 %v4793, %v5277
  %v5279 = vpop.f32.mrb[0].mxu0
  %v5280 = vpop.f32.mrb[0].mxu0
  %v5281 = vadd.f32 %v4793, %v5280
  %v5282 = vpop.f32.mrb[0].mxu0
  %5283 = vmatprep.mubr.bf16.mxu0 %v4068
  %5284 = vmatmul.mubr.bf16.gmra.mrb[0].mxu0 %v3971
  %v5285 = vpop.f32.mrb[0].mxu0
  %v5286 = vadd.f32 %v4793, %v5285
  %v5287 = vpop.f32.mrb[0].mxu0
  %v5288 = vpop.f32.mrb[0].mxu0
  %v5289 = vadd.f32 %v4793, %v5288
  %v5290 = vpop.f32.mrb[0].mxu0
  %5291 = vmatprep.mubr.bf16.mxu0 %v4080
  %5292 = vmatmul.mubr.bf16.gmra.mrb[0].mxu0 %v3972
  %v5293 = vpop.f32.mrb[0].mxu0
  %v5294 = vadd.f32 %v4793, %v5293
  %v5295 = vpop.f32.mrb[0].mxu0
  %v5296 = vpop.f32.mrb[0].mxu0
  %v5297 = vadd.f32 %v4793, %v5296
  %v5298 = vpop.f32.mrb[0].mxu0
  %5299 = vmatprep.mubr.bf16.mxu0 %v4092
  %5300 = vmatmul.mubr.bf16.gmra.mrb[0].mxu0 %v3973
  %v5301 = vpop.f32.mrb[0].mxu0
  %v5302 = vadd.f32 %v4793, %v5301
  %v5303 = vpop.f32.mrb[0].mxu0
  %v5304 = vpop.f32.mrb[0].mxu0
  %v5305 = vadd.f32 %v4793, %v5304
  %v5306 = vpop.f32.mrb[0].mxu0
  %5307 = vmatprep.mubr.bf16.mxu0 %v4104
  %5308 = vmatmul.mubr.bf16.gmra.mrb[0].mxu0 %v3974
  %v5309 = vpop.f32.mrb[0].mxu0
  %v5310 = vadd.f32 %v4793, %v5309
  %v5311 = vpop.f32.mrb[0].mxu0
  %v5312 = vpop.f32.mrb[0].mxu0
  %v5313 = vadd.f32 %v4793, %v5312
  %v5314 = vpop.f32.mrb[0].mxu0
  %5315 = vmatprep.mubr.bf16.mxu0 %v4116
  %5316 = vmatmul.mubr.bf16.gmra.mrb[0].mxu0 %v3975
  %v5317 = vpop.f32.mrb[0].mxu0
  %v5318 = vadd.f32 %v4793, %v5317
  %v5319 = vpop.f32.mrb[0].mxu0
  %v5320 = vpop.f32.mrb[0].mxu0
  %v5321 = vadd.f32 %v4793, %v5320
  %v5322 = vpop.f32.mrb[0].mxu0
  %5323 = vmatprep.mubr.bf16.mxu0 %v4128
  %5324 = vmatmul.mubr.bf16.gmra.mrb[0].mxu0 %v3976
  %v5325 = vpop.f32.mrb[0].mxu0
  %v5326 = vadd.f32 %v4793, %v5325
  %v5327 = vpop.f32.mrb[0].mxu0
  %v5328 = vpop.f32.mrb[0].mxu0
  %v5329 = vadd.f32 %v4793, %v5328
  %v5330 = vpop.f32.mrb[0].mxu0
  %5331 = vmatprep.mubr.bf16.mxu0 %v4140
  %5332 = vmatmul.mubr.bf16.gmra.mrb[0].mxu0 %v3977
  %v5333 = vpop.f32.mrb[0].mxu0
  %v5334 = vadd.f32 %v4793, %v5333
  %v5335 = vpop.f32.mrb[0].mxu0
  %v5336 = vpop.f32.mrb[0].mxu0
  %v5337 = vadd.f32 %v4793, %v5336
  %v5338 = vpop.f32.mrb[0].mxu0
  %5339 = vmatprep.mubr.bf16.mxu0 %v4152
  %5340 = vmatmul.mubr.bf16.gmra.mrb[0].mxu0 %v3978
  %v5341 = vpop.f32.mrb[0].mxu0
  %v5342 = vadd.f32 %v4793, %v5341
  %v5343 = vpop.f32.mrb[0].mxu0
  %v5344 = vpop.f32.mrb[0].mxu0
  %v5345 = vadd.f32 %v4793, %v5344
  %v5346 = vpop.f32.mrb[0].mxu0
  %5347 = vmatprep.mubr.bf16.mxu0 %v4164
  %5348 = vmatmul.mubr.bf16.gmra.mrb[0].mxu0 %v3979
  %v5349 = vpop.f32.mrb[0].mxu0
  %v5350 = vadd.f32 %v4793, %v5349
  %v5351 = vpop.f32.mrb[0].mxu0
  %v5352 = vpop.f32.mrb[0].mxu0
  %v5353 = vadd.f32 %v4793, %v5352
  %v5354 = vpop.f32.mrb[0].mxu0
  %5355 = vmatprep.mubr.bf16.mxu0 %v4176
  %5356 = vmatmul.mubr.bf16.gmra.mrb[0].mxu0 %v3980
  %v5357 = vpop.f32.mrb[0].mxu0
  %v5358 = vadd.f32 %v4793, %v5357
  %v5359 = vpop.f32.mrb[0].mxu0
  %v5360 = vpop.f32.mrb[0].mxu0
  %v5361 = vadd.f32 %v4793, %v5360
  %v5362 = vpop.f32.mrb[0].mxu0
  %5363 = vmatprep.mubr.bf16.mxu0 %v4188
  %5364 = vmatmul.mubr.bf16.gmra.mrb[0].mxu0 %v3981
  %v5365 = vpop.f32.mrb[0].mxu0
  %v5366 = vadd.f32 %v4793, %v5365
  %v5367 = vpop.f32.mrb[0].mxu0
  %v5368 = vpop.f32.mrb[0].mxu0
  %v5369 = vadd.f32 %v4793, %v5368
  %v5370 = vpop.f32.mrb[0].mxu0
  %5371 = vmatprep.mubr.bf16.mxu0 %v4200
  %5372 = vmatmul.mubr.bf16.gmra.mrb[0].mxu0 %v3982
  %v5373 = vpop.f32.mrb[0].mxu0
  %v5374 = vadd.f32 %v4793, %v5373
  %v5375 = vpop.f32.mrb[0].mxu0
  %v5376 = vpop.f32.mrb[0].mxu0
  %v5377 = vadd.f32 %v4793, %v5376
  %v5378 = vpop.f32.mrb[0].mxu0
  %5379 = vmatprep.mubr.bf16.mxu0 %v4212
  %5380 = vmatmul.mubr.bf16.gmra.mrb[0].mxu0 %v3983
  %v5381 = vpop.f32.mrb[0].mxu0
  %v5382 = vadd.f32 %v4793, %v5381
  %v5383 = vpop.f32.mrb[0].mxu0
  %v5384 = vpop.f32.mrb[0].mxu0
  %v5385 = vadd.f32 %v4793, %v5384
  %v5386 = vpop.f32.mrb[0].mxu0
  %5387 = vmatprep.mubr.bf16.mxu0 %v668
  %5388 = vmatmul.mubr.bf16.gmra.mrb[0].mxu0 %v590
  %v5389 = vpop.f32.mrb[0].mxu0
  %v5390 = vadd.f32 %v4793, %v5389
  %v5391 = vpop.f32.mrb[0].mxu0
  %v5392 = vpop.f32.mrb[0].mxu0
  %v5393 = vadd.f32 %v4793, %v5392
  %v5394 = vpop.f32.mrb[0].mxu0
  %5395 = vmatprep.mubr.bf16.mxu0 %v4224
  %5396 = vmatmul.mubr.bf16.gmra.mrb[0].mxu0 %v3985
  %v5397 = vpop.f32.mrb[0].mxu0
  %v5398 = vadd.f32 %v4793, %v5397
  %v5399 = vpop.f32.mrb[0].mxu0
  %v5400 = vpop.f32.mrb[0].mxu0
  %v5401 = vadd.f32 %v4793, %v5400
  %v5402 = vpop.f32.mrb[0].mxu0
  %5403 = vmatprep.mubr.bf16.mxu0 %v4236
  %5404 = vmatmul.mubr.bf16.gmra.mrb[0].mxu0 %v3986
  %v5405 = vpop.f32.mrb[0].mxu0
  %v5406 = vadd.f32 %v4793, %v5405
  %v5407 = vpop.f32.mrb[0].mxu0
  %v5408 = vpop.f32.mrb[0].mxu0
  %v5409 = vadd.f32 %v4793, %v5408
  %v5410 = vpop.f32.mrb[0].mxu0
  %5411 = vmatprep.mubr.bf16.mxu0 %v4248
  %5412 = vmatmul.mubr.bf16.gmra.mrb[0].mxu0 %v3987
  %v5413 = vpop.f32.mrb[0].mxu0
  %v5414 = vadd.f32 %v4793, %v5413
  %v5415 = vpop.f32.mrb[0].mxu0
  %v5416 = vpop.f32.mrb[0].mxu0
  %v5417 = vadd.f32 %v4793, %v5416
  %v5418 = vpop.f32.mrb[0].mxu0
  %5419 = vmatprep.mubr.bf16.mxu0 %v4260
  %5420 = vmatmul.mubr.bf16.gmra.mrb[0].mxu0 %v3988
  %v5421 = vpop.f32.mrb[0].mxu0
  %v5422 = vadd.f32 %v4793, %v5421
  %v5423 = vpop.f32.mrb[0].mxu0
  %v5424 = vpop.f32.mrb[0].mxu0
  %v5425 = vadd.f32 %v4793, %v5424
  %v5426 = vpop.f32.mrb[0].mxu0
  %5427 = vmatprep.mubr.bf16.mxu0 %v4272
  %5428 = vmatmul.mubr.bf16.gmra.mrb[0].mxu0 %v3989
  %v5429 = vpop.f32.mrb[0].mxu0
  %v5430 = vadd.f32 %v4793, %v5429
  %v5431 = vpop.f32.mrb[0].mxu0
  %v5432 = vpop.f32.mrb[0].mxu0
  %v5433 = vadd.f32 %v4793, %v5432
  %v5434 = vpop.f32.mrb[0].mxu0
  %5435 = vmatprep.mubr.bf16.mxu0 %v4284
  %5436 = vmatmul.mubr.bf16.gmra.mrb[0].mxu0 %v3990
  %v5437 = vpop.f32.mrb[0].mxu0
  %v5438 = vadd.f32 %v4793, %v5437
  %v5439 = vpop.f32.mrb[0].mxu0
  %v5440 = vpop.f32.mrb[0].mxu0
  %v5441 = vadd.f32 %v4793, %v5440
  %v5442 = vpop.f32.mrb[0].mxu0
  %5443 = vmatprep.mubr.bf16.mxu0 %v4296
  %5444 = vmatmul.mubr.bf16.gmra.mrb[0].mxu0 %v3991
  %v5445 = vpop.f32.mrb[0].mxu0
  %v5446 = vadd.f32 %v4793, %v5445
  %v5447 = vpop.f32.mrb[0].mxu0
  %v5448 = vpop.f32.mrb[0].mxu0
  %v5449 = vadd.f32 %v4793, %v5448
  %v5450 = vpop.f32.mrb[0].mxu0
  %5451 = vmatprep.mubr.bf16.mxu0 %v4308
  %5452 = vmatmul.mubr.bf16.gmra.mrb[0].mxu0 %v3992
  %v5453 = vpop.f32.mrb[0].mxu0
  %v5454 = vadd.f32 %v4793, %v5453
  %v5455 = vpop.f32.mrb[0].mxu0
  %v5456 = vpop.f32.mrb[0].mxu0
  %v5457 = vadd.f32 %v4793, %v5456
  %v5458 = vpop.f32.mrb[0].mxu0
  %5459 = vmatprep.mubr.bf16.mxu0 %v4320
  %5460 = vmatmul.mubr.bf16.gmra.mrb[0].mxu0 %v3993
  %v5461 = vpop.f32.mrb[0].mxu0
  %v5462 = vadd.f32 %v4793, %v5461
  %v5463 = vpop.f32.mrb[0].mxu0
  %v5464 = vpop.f32.mrb[0].mxu0
  %v5465 = vadd.f32 %v4793, %v5464
  %v5466 = vpop.f32.mrb[0].mxu0
  %5467 = vmatprep.mubr.bf16.mxu0 %v4332
  %5468 = vmatmul.mubr.bf16.gmra.mrb[0].mxu0 %v3994
  %v5469 = vpop.f32.mrb[0].mxu0
  %v5470 = vadd.f32 %v4793, %v5469
  %v5471 = vpop.f32.mrb[0].mxu0
  %v5472 = vpop.f32.mrb[0].mxu0
  %v5473 = vadd.f32 %v4793, %v5472
  %v5474 = vpop.f32.mrb[0].mxu0
  %5475 = vmatprep.mubr.bf16.mxu0 %v4344
  %5476 = vmatmul.mubr.bf16.gmra.mrb[0].mxu0 %v3995
  %v5477 = vpop.f32.mrb[0].mxu0
  %v5478 = vadd.f32 %v4793, %v5477
  %v5479 = vpop.f32.mrb[0].mxu0
  %v5480 = vpop.f32.mrb[0].mxu0
  %v5481 = vadd.f32 %v4793, %v5480
  %v5482 = vpop.f32.mrb[0].mxu0
  %5483 = vmatprep.mubr.bf16.mxu0 %v4356
  %5484 = vmatmul.mubr.bf16.gmra.mrb[0].mxu0 %v3996
  %v5485 = vpop.f32.mrb[0].mxu0
  %v5486 = vadd.f32 %v4793, %v5485
  %v5487 = vpop.f32.mrb[0].mxu0
  %v5488 = vpop.f32.mrb[0].mxu0
  %v5489 = vadd.f32 %v4793, %v5488
  %v5490 = vpop.f32.mrb[0].mxu0
  %5491 = vmatprep.mubr.bf16.mxu0 %v4368
  %5492 = vmatmul.mubr.bf16.gmra.mrb[0].mxu0 %v3997
  %v5493 = vpop.f32.mrb[0].mxu0
  %v5494 = vadd.f32 %v4793, %v5493
  %v5495 = vpop.f32.mrb[0].mxu0
  %v5496 = vpop.f32.mrb[0].mxu0
  %v5497 = vadd.f32 %v4793, %v5496
  %v5498 = vpop.f32.mrb[0].mxu0
  %5499 = vmatprep.mubr.bf16.mxu0 %v4380
  %5500 = vmatmul.mubr.bf16.gmra.mrb[0].mxu0 %v3998
  %v5501 = vpop.f32.mrb[0].mxu0
  %v5502 = vadd.f32 %v4793, %v5501
  %v5503 = vpop.f32.mrb[0].mxu0
  %v5504 = vpop.f32.mrb[0].mxu0
  %v5505 = vadd.f32 %v4793, %v5504
  %v5506 = vpop.f32.mrb[0].mxu0
  %5507 = vmatprep.mubr.bf16.mxu0 %v4392
  %5508 = vmatmul.mubr.bf16.gmra.mrb[0].mxu0 %v3999
  %v5509 = vpop.f32.mrb[0].mxu0
  %v5510 = vadd.f32 %v4793, %v5509
  %v5511 = vpop.f32.mrb[0].mxu0
  %v5512 = vpop.f32.mrb[0].mxu0
  %v5513 = vadd.f32 %v4793, %v5512
  %v5514 = vpop.f32.mrb[0].mxu0
  %5515 = vdwg.mxu0
  %5516 = vmatprep.subr.bf16.mxu0 0
  %5517 = vmatpush1.bf16.msra.mxu0 %v5099
  %5518 = vmatprep.subr.bf16.mxu0 0
  %5519 = vmatpush1.bf16.msra.mxu0 %v5100
  %5520 = vmatprep.subr.bf16.mxu0 0
  %5521 = vmatpush1.bf16.msra.mxu0 %v5101
  %5522 = vmatprep.subr.bf16.mxu0 0
  %5523 = vmatpush1.bf16.msra.mxu0 %v5102
  %5524 = vmatprep.subr.bf16.mxu0 0
  %5525 = vmatpush1.bf16.msra.mxu0 %v5103
  %5526 = vmatprep.subr.bf16.mxu0 0
  %5527 = vmatpush1.bf16.msra.mxu0 %v5104
  %5528 = vmatprep.subr.bf16.mxu0 0
  %5529 = vmatpush1.bf16.msra.mxu0 %v5105
  %5530 = vmatprep.subr.bf16.mxu0 0
  %5531 = vmatpush1.bf16.msra.mxu0 %v5106
  %5532 = vmatprep.subr.bf16.mxu0 0
  %5533 = vmatpush1.bf16.msra.mxu0 %v5107
  %5534 = vmatprep.subr.bf16.mxu0 0
  %5535 = vmatpush1.bf16.msra.mxu0 %v5108
  %5536 = vmatprep.subr.bf16.mxu0 0
  %5537 = vmatpush1.bf16.msra.mxu0 %v5109
  %5538 = vmatprep.subr.bf16.mxu0 0
  %5539 = vmatpush1.bf16.msra.mxu0 %v5110
  %5540 = vmatprep.subr.bf16.mxu0 0
  %5541 = vmatpush1.bf16.msra.mxu0 %v5111
  %5542 = vmatprep.subr.bf16.mxu0 0
  %5543 = vmatpush1.bf16.msra.mxu0 %v5112
  %5544 = vmatprep.subr.bf16.mxu0 0
  %5545 = vmatpush1.bf16.msra.mxu0 %v5113
  %5546 = vmatprep.subr.bf16.mxu0 0
  %5547 = vmatpush1.bf16.msra.mxu0 %v5114
  %5548 = vmatprep.mubr.bf16.mxu0 %v3969
  %5549 = vmatmul.mubr.bf16.gmra.mrb[0].mxu0 %v1156
  %v5550 = vpop.f32.mrb[0].mxu0
  %v5551 = vadd.f32 %v5262, %v5550
  %v5552 = vpop.f32.mrb[0].mxu0
  %v5553 = vpop.f32.mrb[0].mxu0
  %v5554 = vadd.f32 %v5265, %v5553
  %v5555 = vpop.f32.mrb[0].mxu0
  %5556 = vmatprep.mubr.bf16.mxu0 %v3970
  %5557 = vmatmul.mubr.bf16.gmra.mrb[0].mxu0 %v4486
  %v5558 = vpop.f32.mrb[0].mxu0
  %v5559 = vadd.f32 %v5270, %v5558
  %v5560 = vpop.f32.mrb[0].mxu0
  %v5561 = vpop.f32.mrb[0].mxu0
  %v5562 = vadd.f32 %v5273, %v5561
  %v5563 = vpop.f32.mrb[0].mxu0
  %5564 = vmatprep.mubr.bf16.mxu0 %v3971
  %5565 = vmatmul.mubr.bf16.gmra.mrb[0].mxu0 %v4489
  %v5566 = vpop.f32.mrb[0].mxu0
  %v5567 = vadd.f32 %v5278, %v5566
  %v5568 = vpop.f32.mrb[0].mxu0
  %v5569 = vpop.f32.mrb[0].mxu0
  %v5570 = vadd.f32 %v5281, %v5569
  %v5571 = vpop.f32.mrb[0].mxu0
  %5572 = vmatprep.mubr.bf16.mxu0 %v3972
  %5573 = vmatmul.mubr.bf16.gmra.mrb[0].mxu0 %v4492
  %v5574 = vpop.f32.mrb[0].mxu0
  %v5575 = vadd.f32 %v5286, %v5574
  %v5576 = vpop.f32.mrb[0].mxu0
  %v5577 = vpop.f32.mrb[0].mxu0
  %v5578 = vadd.f32 %v5289, %v5577
  %v5579 = vpop.f32.mrb[0].mxu0
  %5580 = vmatprep.mubr.bf16.mxu0 %v3973
  %5581 = vmatmul.mubr.bf16.gmra.mrb[0].mxu0 %v4495
  %v5582 = vpop.f32.mrb[0].mxu0
  %v5583 = vadd.f32 %v5294, %v5582
  %v5584 = vpop.f32.mrb[0].mxu0
  %v5585 = vpop.f32.mrb[0].mxu0
  %v5586 = vadd.f32 %v5297, %v5585
  %v5587 = vpop.f32.mrb[0].mxu0
  %5588 = vmatprep.mubr.bf16.mxu0 %v3974
  %5589 = vmatmul.mubr.bf16.gmra.mrb[0].mxu0 %v4498
  %v5590 = vpop.f32.mrb[0].mxu0
  %v5591 = vadd.f32 %v5302, %v5590
  %v5592 = vpop.f32.mrb[0].mxu0
  %v5593 = vpop.f32.mrb[0].mxu0
  %v5594 = vadd.f32 %v5305, %v5593
  %v5595 = vpop.f32.mrb[0].mxu0
  %5596 = vmatprep.mubr.bf16.mxu0 %v3975
  %5597 = vmatmul.mubr.bf16.gmra.mrb[0].mxu0 %v4501
  %v5598 = vpop.f32.mrb[0].mxu0
  %v5599 = vadd.f32 %v5310, %v5598
  %v5600 = vpop.f32.mrb[0].mxu0
  %v5601 = vpop.f32.mrb[0].mxu0
  %v5602 = vadd.f32 %v5313, %v5601
  %v5603 = vpop.f32.mrb[0].mxu0
  %5604 = vmatprep.mubr.bf16.mxu0 %v3976
  %5605 = vmatmul.mubr.bf16.gmra.mrb[0].mxu0 %v4504
  %v5606 = vpop.f32.mrb[0].mxu0
  %v5607 = vadd.f32 %v5318, %v5606
  %v5608 = vpop.f32.mrb[0].mxu0
  %v5609 = vpop.f32.mrb[0].mxu0
  %v5610 = vadd.f32 %v5321, %v5609
  %v5611 = vpop.f32.mrb[0].mxu0
  %5612 = vmatprep.mubr.bf16.mxu0 %v3977
  %5613 = vmatmul.mubr.bf16.gmra.mrb[0].mxu0 %v4507
  %v5614 = vpop.f32.mrb[0].mxu0
  %v5615 = vadd.f32 %v5326, %v5614
  %v5616 = vpop.f32.mrb[0].mxu0
  %v5617 = vpop.f32.mrb[0].mxu0
  %v5618 = vadd.f32 %v5329, %v5617
  %v5619 = vpop.f32.mrb[0].mxu0
  %5620 = vmatprep.mubr.bf16.mxu0 %v3978
  %5621 = vmatmul.mubr.bf16.gmra.mrb[0].mxu0 %v4510
  %v5622 = vpop.f32.mrb[0].mxu0
  %v5623 = vadd.f32 %v5334, %v5622
  %v5624 = vpop.f32.mrb[0].mxu0
  %v5625 = vpop.f32.mrb[0].mxu0
  %v5626 = vadd.f32 %v5337, %v5625
  %v5627 = vpop.f32.mrb[0].mxu0
  %5628 = vmatprep.mubr.bf16.mxu0 %v3979
  %5629 = vmatmul.mubr.bf16.gmra.mrb[0].mxu0 %v4513
  %v5630 = vpop.f32.mrb[0].mxu0
  %v5631 = vadd.f32 %v5342, %v5630
  %v5632 = vpop.f32.mrb[0].mxu0
  %v5633 = vpop.f32.mrb[0].mxu0
  %v5634 = vadd.f32 %v5345, %v5633
  %v5635 = vpop.f32.mrb[0].mxu0
  %5636 = vmatprep.mubr.bf16.mxu0 %v3980
  %5637 = vmatmul.mubr.bf16.gmra.mrb[0].mxu0 %v4516
  %v5638 = vpop.f32.mrb[0].mxu0
  %v5639 = vadd.f32 %v5350, %v5638
  %v5640 = vpop.f32.mrb[0].mxu0
  %v5641 = vpop.f32.mrb[0].mxu0
  %v5642 = vadd.f32 %v5353, %v5641
  %v5643 = vpop.f32.mrb[0].mxu0
  %5644 = vmatprep.mubr.bf16.mxu0 %v3981
  %5645 = vmatmul.mubr.bf16.gmra.mrb[0].mxu0 %v4519
  %v5646 = vpop.f32.mrb[0].mxu0
  %v5647 = vadd.f32 %v5358, %v5646
  %v5648 = vpop.f32.mrb[0].mxu0
  %v5649 = vpop.f32.mrb[0].mxu0
  %v5650 = vadd.f32 %v5361, %v5649
  %v5651 = vpop.f32.mrb[0].mxu0
  %5652 = vmatprep.mubr.bf16.mxu0 %v3982
  %5653 = vmatmul.mubr.bf16.gmra.mrb[0].mxu0 %v4522
  %v5654 = vpop.f32.mrb[0].mxu0
  %v5655 = vadd.f32 %v5366, %v5654
  %v5656 = vpop.f32.mrb[0].mxu0
  %v5657 = vpop.f32.mrb[0].mxu0
  %v5658 = vadd.f32 %v5369, %v5657
  %v5659 = vpop.f32.mrb[0].mxu0
  %5660 = vmatprep.mubr.bf16.mxu0 %v3983
  %5661 = vmatmul.mubr.bf16.gmra.mrb[0].mxu0 %v4525
  %v5662 = vpop.f32.mrb[0].mxu0
  %v5663 = vadd.f32 %v5374, %v5662
  %v5664 = vpop.f32.mrb[0].mxu0
  %v5665 = vpop.f32.mrb[0].mxu0
  %v5666 = vadd.f32 %v5377, %v5665
  %v5667 = vpop.f32.mrb[0].mxu0
  %5668 = vmatprep.mubr.bf16.mxu0 %v3984
  %5669 = vmatmul.mubr.bf16.gmra.mrb[0].mxu0 %v4528
  %v5670 = vpop.f32.mrb[0].mxu0
  %v5671 = vadd.f32 %v5382, %v5670
  %v5672 = vpop.f32.mrb[0].mxu0
  %v5673 = vpop.f32.mrb[0].mxu0
  %v5674 = vadd.f32 %v5385, %v5673
  %v5675 = vpop.f32.mrb[0].mxu0
  %5676 = vmatprep.mubr.bf16.mxu0 %v3985
  %5677 = vmatmul.mubr.bf16.gmra.mrb[0].mxu0 %v1156
  %v5678 = vpop.f32.mrb[0].mxu0
  %v5679 = vadd.f32 %v5390, %v5678
  %v5680 = vpop.f32.mrb[0].mxu0
  %v5681 = vpop.f32.mrb[0].mxu0
  %v5682 = vadd.f32 %v5393, %v5681
  %v5683 = vpop.f32.mrb[0].mxu0
  %5684 = vmatprep.mubr.bf16.mxu0 %v3986
  %5685 = vmatmul.mubr.bf16.gmra.mrb[0].mxu0 %v4531
  %v5686 = vpop.f32.mrb[0].mxu0
  %v5687 = vadd.f32 %v5398, %v5686
  %v5688 = vpop.f32.mrb[0].mxu0
  %v5689 = vpop.f32.mrb[0].mxu0
  %v5690 = vadd.f32 %v5401, %v5689
  %v5691 = vpop.f32.mrb[0].mxu0
  %5692 = vmatprep.mubr.bf16.mxu0 %v3987
  %5693 = vmatmul.mubr.bf16.gmra.mrb[0].mxu0 %v4534
  %v5694 = vpop.f32.mrb[0].mxu0
  %v5695 = vadd.f32 %v5406, %v5694
  %v5696 = vpop.f32.mrb[0].mxu0
  %v5697 = vpop.f32.mrb[0].mxu0
  %v5698 = vadd.f32 %v5409, %v5697
  %v5699 = vpop.f32.mrb[0].mxu0
  %5700 = vmatprep.mubr.bf16.mxu0 %v3988
  %5701 = vmatmul.mubr.bf16.gmra.mrb[0].mxu0 %v4537
  %v5702 = vpop.f32.mrb[0].mxu0
  %v5703 = vadd.f32 %v5414, %v5702
  %v5704 = vpop.f32.mrb[0].mxu0
  %v5705 = vpop.f32.mrb[0].mxu0
  %v5706 = vadd.f32 %v5417, %v5705
  %v5707 = vpop.f32.mrb[0].mxu0
  %5708 = vmatprep.mubr.bf16.mxu0 %v3989
  %5709 = vmatmul.mubr.bf16.gmra.mrb[0].mxu0 %v4540
  %v5710 = vpop.f32.mrb[0].mxu0
  %v5711 = vadd.f32 %v5422, %v5710
  %v5712 = vpop.f32.mrb[0].mxu0
  %v5713 = vpop.f32.mrb[0].mxu0
  %v5714 = vadd.f32 %v5425, %v5713
  %v5715 = vpop.f32.mrb[0].mxu0
  %5716 = vmatprep.mubr.bf16.mxu0 %v3990
  %5717 = vmatmul.mubr.bf16.gmra.mrb[0].mxu0 %v4543
  %v5718 = vpop.f32.mrb[0].mxu0
  %v5719 = vadd.f32 %v5430, %v5718
  %v5720 = vpop.f32.mrb[0].mxu0
  %v5721 = vpop.f32.mrb[0].mxu0
  %v5722 = vadd.f32 %v5433, %v5721
  %v5723 = vpop.f32.mrb[0].mxu0
  %5724 = vmatprep.mubr.bf16.mxu0 %v3991
  %5725 = vmatmul.mubr.bf16.gmra.mrb[0].mxu0 %v4546
  %v5726 = vpop.f32.mrb[0].mxu0
  %v5727 = vadd.f32 %v5438, %v5726
  %v5728 = vpop.f32.mrb[0].mxu0
  %v5729 = vpop.f32.mrb[0].mxu0
  %v5730 = vadd.f32 %v5441, %v5729
  %v5731 = vpop.f32.mrb[0].mxu0
  %5732 = vmatprep.mubr.bf16.mxu0 %v3992
  %5733 = vmatmul.mubr.bf16.gmra.mrb[0].mxu0 %v4549
  %v5734 = vpop.f32.mrb[0].mxu0
  %v5735 = vadd.f32 %v5446, %v5734
  %v5736 = vpop.f32.mrb[0].mxu0
  %v5737 = vpop.f32.mrb[0].mxu0
  %v5738 = vadd.f32 %v5449, %v5737
  %v5739 = vpop.f32.mrb[0].mxu0
  %5740 = vmatprep.mubr.bf16.mxu0 %v3993
  %5741 = vmatmul.mubr.bf16.gmra.mrb[0].mxu0 %v4552
  %v5742 = vpop.f32.mrb[0].mxu0
  %v5743 = vadd.f32 %v5454, %v5742
  %v5744 = vpop.f32.mrb[0].mxu0
  %v5745 = vpop.f32.mrb[0].mxu0
  %v5746 = vadd.f32 %v5457, %v5745
  %v5747 = vpop.f32.mrb[0].mxu0
  %5748 = vmatprep.mubr.bf16.mxu0 %v3994
  %5749 = vmatmul.mubr.bf16.gmra.mrb[0].mxu0 %v4555
  %v5750 = vpop.f32.mrb[0].mxu0
  %v5751 = vadd.f32 %v5462, %v5750
  %v5752 = vpop.f32.mrb[0].mxu0
  %v5753 = vpop.f32.mrb[0].mxu0
  %v5754 = vadd.f32 %v5465, %v5753
  %v5755 = vpop.f32.mrb[0].mxu0
  %5756 = vmatprep.mubr.bf16.mxu0 %v3995
  %5757 = vmatmul.mubr.bf16.gmra.mrb[0].mxu0 %v4558
  %v5758 = vpop.f32.mrb[0].mxu0
  %v5759 = vadd.f32 %v5470, %v5758
  %v5760 = vpop.f32.mrb[0].mxu0
  %v5761 = vpop.f32.mrb[0].mxu0
  %v5762 = vadd.f32 %v5473, %v5761
  %v5763 = vpop.f32.mrb[0].mxu0
  %5764 = vmatprep.mubr.bf16.mxu0 %v3996
  %5765 = vmatmul.mubr.bf16.gmra.mrb[0].mxu0 %v4561
  %v5766 = vpop.f32.mrb[0].mxu0
  %v5767 = vadd.f32 %v5478, %v5766
  %v5768 = vpop.f32.mrb[0].mxu0
  %v5769 = vpop.f32.mrb[0].mxu0
  %v5770 = vadd.f32 %v5481, %v5769
  %v5771 = vpop.f32.mrb[0].mxu0
  %5772 = vmatprep.mubr.bf16.mxu0 %v3997
  %5773 = vmatmul.mubr.bf16.gmra.mrb[0].mxu0 %v4564
  %v5774 = vpop.f32.mrb[0].mxu0
  %v5775 = vadd.f32 %v5486, %v5774
  %v5776 = vpop.f32.mrb[0].mxu0
  %v5777 = vpop.f32.mrb[0].mxu0
  %v5778 = vadd.f32 %v5489, %v5777
  %v5779 = vpop.f32.mrb[0].mxu0
  %5780 = vmatprep.mubr.bf16.mxu0 %v3998
  %5781 = vmatmul.mubr.bf16.gmra.mrb[0].mxu0 %v4567
  %v5782 = vpop.f32.mrb[0].mxu0
  %v5783 = vadd.f32 %v5494, %v5782
  %v5784 = vpop.f32.mrb[0].mxu0
  %v5785 = vpop.f32.mrb[0].mxu0
  %v5786 = vadd.f32 %v5497, %v5785
  %v5787 = vpop.f32.mrb[0].mxu0
  %5788 = vmatprep.mubr.bf16.mxu0 %v3999
  %5789 = vmatmul.mubr.bf16.gmra.mrb[0].mxu0 %v4570
  %v5790 = vpop.f32.mrb[0].mxu0
  %v5791 = vadd.f32 %v5502, %v5790
  %v5792 = vpop.f32.mrb[0].mxu0
  %v5793 = vpop.f32.mrb[0].mxu0
  %v5794 = vadd.f32 %v5505, %v5793
  %v5795 = vpop.f32.mrb[0].mxu0
  %5796 = vmatprep.mubr.bf16.mxu0 %v4000
  %5797 = vmatmul.mubr.bf16.gmra.mrb[0].mxu0 %v4573
  %v5798 = vpop.f32.mrb[0].mxu0
  %v5799 = vadd.f32 %v5510, %v5798
  %v5800 = vpop.f32.mrb[0].mxu0
  %v5801 = vpop.f32.mrb[0].mxu0
  %v5802 = vadd.f32 %v5513, %v5801
  %v5803 = vpop.f32.mrb[0].mxu0
  %5804 = vdwg.mxu0
  %5805 = vmatprep.subr.bf16.mxu0 0
  %5806 = vmatpush1.bf16.msra.mxu0 %v5115
  %5807 = vmatprep.subr.bf16.mxu0 0
  %5808 = vmatpush1.bf16.msra.mxu0 %v5116
  %5809 = vmatprep.subr.bf16.mxu0 0
  %5810 = vmatpush1.bf16.msra.mxu0 %v5117
  %5811 = vmatprep.subr.bf16.mxu0 0
  %5812 = vmatpush1.bf16.msra.mxu0 %v5118
  %5813 = vmatprep.subr.bf16.mxu0 0
  %5814 = vmatpush1.bf16.msra.mxu0 %v5119
  %5815 = vmatprep.subr.bf16.mxu0 0
  %5816 = vmatpush1.bf16.msra.mxu0 %v5120
  %5817 = vmatprep.subr.bf16.mxu0 0
  %5818 = vmatpush1.bf16.msra.mxu0 %v5121
  %5819 = vmatprep.subr.bf16.mxu0 0
  %5820 = vmatpush1.bf16.msra.mxu0 %v5122
  %5821 = vmatprep.subr.bf16.mxu0 0
  %5822 = vmatpush1.bf16.msra.mxu0 %v5123
  %5823 = vmatprep.subr.bf16.mxu0 0
  %5824 = vmatpush1.bf16.msra.mxu0 %v5124
  %5825 = vmatprep.subr.bf16.mxu0 0
  %5826 = vmatpush1.bf16.msra.mxu0 %v5125
  %5827 = vmatprep.subr.bf16.mxu0 0
  %5828 = vmatpush1.bf16.msra.mxu0 %v5126
  %5829 = vmatprep.subr.bf16.mxu0 0
  %5830 = vmatpush1.bf16.msra.mxu0 %v5127
  %5831 = vmatprep.subr.bf16.mxu0 0
  %5832 = vmatpush1.bf16.msra.mxu0 %v5128
  %5833 = vmatprep.subr.bf16.mxu0 0
  %5834 = vmatpush1.bf16.msra.mxu0 %v5129
  %5835 = vmatprep.subr.bf16.mxu0 0
  %5836 = vmatpush1.bf16.msra.mxu0 %v5130
  %5837 = vmatprep.mubr.bf16.mxu0 %v4486
  %5838 = vmatmul.mubr.bf16.gmra.mrb[0].mxu0 %v4044
  %v5839 = vpop.f32.mrb[0].mxu0
  %v5840 = vadd.f32 %v5551, %v5839
  %v5841 = vpop.f32.mrb[0].mxu0
  %v5842 = vpop.f32.mrb[0].mxu0
  %v5843 = vadd.f32 %v5554, %v5842
  %v5844 = vpop.f32.mrb[0].mxu0
  %5845 = vmatprep.mubr.bf16.mxu0 %v4489
  %5846 = vmatmul.mubr.bf16.gmra.mrb[0].mxu0 %v4056
  %v5847 = vpop.f32.mrb[0].mxu0
  %v5848 = vadd.f32 %v5559, %v5847
  %v5849 = vpop.f32.mrb[0].mxu0
  %v5850 = vpop.f32.mrb[0].mxu0
  %v5851 = vadd.f32 %v5562, %v5850
  %v5852 = vpop.f32.mrb[0].mxu0
  %5853 = vmatprep.mubr.bf16.mxu0 %v4492
  %5854 = vmatmul.mubr.bf16.gmra.mrb[0].mxu0 %v4068
  %v5855 = vpop.f32.mrb[0].mxu0
  %v5856 = vadd.f32 %v5567, %v5855
  %v5857 = vpop.f32.mrb[0].mxu0
  %v5858 = vpop.f32.mrb[0].mxu0
  %v5859 = vadd.f32 %v5570, %v5858
  %v5860 = vpop.f32.mrb[0].mxu0
  %5861 = vmatprep.mubr.bf16.mxu0 %v4495
  %5862 = vmatmul.mubr.bf16.gmra.mrb[0].mxu0 %v4080
  %v5863 = vpop.f32.mrb[0].mxu0
  %v5864 = vadd.f32 %v5575, %v5863
  %v5865 = vpop.f32.mrb[0].mxu0
  %v5866 = vpop.f32.mrb[0].mxu0
  %v5867 = vadd.f32 %v5578, %v5866
  %v5868 = vpop.f32.mrb[0].mxu0
  %5869 = vmatprep.mubr.bf16.mxu0 %v4498
  %5870 = vmatmul.mubr.bf16.gmra.mrb[0].mxu0 %v4092
  %v5871 = vpop.f32.mrb[0].mxu0
  %v5872 = vadd.f32 %v5583, %v5871
  %v5873 = vpop.f32.mrb[0].mxu0
  %v5874 = vpop.f32.mrb[0].mxu0
  %v5875 = vadd.f32 %v5586, %v5874
  %v5876 = vpop.f32.mrb[0].mxu0
  %5877 = vmatprep.mubr.bf16.mxu0 %v4501
  %5878 = vmatmul.mubr.bf16.gmra.mrb[0].mxu0 %v4104
  %v5879 = vpop.f32.mrb[0].mxu0
  %v5880 = vadd.f32 %v5591, %v5879
  %v5881 = vpop.f32.mrb[0].mxu0
  %v5882 = vpop.f32.mrb[0].mxu0
  %v5883 = vadd.f32 %v5594, %v5882
  %v5884 = vpop.f32.mrb[0].mxu0
  %5885 = vmatprep.mubr.bf16.mxu0 %v4504
  %5886 = vmatmul.mubr.bf16.gmra.mrb[0].mxu0 %v4116
  %v5887 = vpop.f32.mrb[0].mxu0
  %v5888 = vadd.f32 %v5599, %v5887
  %v5889 = vpop.f32.mrb[0].mxu0
  %v5890 = vpop.f32.mrb[0].mxu0
  %v5891 = vadd.f32 %v5602, %v5890
  %v5892 = vpop.f32.mrb[0].mxu0
  %5893 = vmatprep.mubr.bf16.mxu0 %v4507
  %5894 = vmatmul.mubr.bf16.gmra.mrb[0].mxu0 %v4128
  %v5895 = vpop.f32.mrb[0].mxu0
  %v5896 = vadd.f32 %v5607, %v5895
  %v5897 = vpop.f32.mrb[0].mxu0
  %v5898 = vpop.f32.mrb[0].mxu0
  %v5899 = vadd.f32 %v5610, %v5898
  %v5900 = vpop.f32.mrb[0].mxu0
  %5901 = vmatprep.mubr.bf16.mxu0 %v4510
  %5902 = vmatmul.mubr.bf16.gmra.mrb[0].mxu0 %v4140
  %v5903 = vpop.f32.mrb[0].mxu0
  %v5904 = vadd.f32 %v5615, %v5903
  %v5905 = vpop.f32.mrb[0].mxu0
  %v5906 = vpop.f32.mrb[0].mxu0
  %v5907 = vadd.f32 %v5618, %v5906
  %v5908 = vpop.f32.mrb[0].mxu0
  %5909 = vmatprep.mubr.bf16.mxu0 %v4513
  %5910 = vmatmul.mubr.bf16.gmra.mrb[0].mxu0 %v4152
  %v5911 = vpop.f32.mrb[0].mxu0
  %v5912 = vadd.f32 %v5623, %v5911
  %v5913 = vpop.f32.mrb[0].mxu0
  %v5914 = vpop.f32.mrb[0].mxu0
  %v5915 = vadd.f32 %v5626, %v5914
  %v5916 = vpop.f32.mrb[0].mxu0
  %5917 = vmatprep.mubr.bf16.mxu0 %v4516
  %5918 = vmatmul.mubr.bf16.gmra.mrb[0].mxu0 %v4164
  %v5919 = vpop.f32.mrb[0].mxu0
  %v5920 = vadd.f32 %v5631, %v5919
  %v5921 = vpop.f32.mrb[0].mxu0
  %v5922 = vpop.f32.mrb[0].mxu0
  %v5923 = vadd.f32 %v5634, %v5922
  %v5924 = vpop.f32.mrb[0].mxu0
  %5925 = vmatprep.mubr.bf16.mxu0 %v4519
  %5926 = vmatmul.mubr.bf16.gmra.mrb[0].mxu0 %v4176
  %v5927 = vpop.f32.mrb[0].mxu0
  %v5928 = vadd.f32 %v5639, %v5927
  %v5929 = vpop.f32.mrb[0].mxu0
  %v5930 = vpop.f32.mrb[0].mxu0
  %v5931 = vadd.f32 %v5642, %v5930
  %v5932 = vpop.f32.mrb[0].mxu0
  %5933 = vmatprep.mubr.bf16.mxu0 %v4522
  %5934 = vmatmul.mubr.bf16.gmra.mrb[0].mxu0 %v4188
  %v5935 = vpop.f32.mrb[0].mxu0
  %v5936 = vadd.f32 %v5647, %v5935
  %v5937 = vpop.f32.mrb[0].mxu0
  %v5938 = vpop.f32.mrb[0].mxu0
  %v5939 = vadd.f32 %v5650, %v5938
  %v5940 = vpop.f32.mrb[0].mxu0
  %5941 = vmatprep.mubr.bf16.mxu0 %v4525
  %5942 = vmatmul.mubr.bf16.gmra.mrb[0].mxu0 %v4200
  %v5943 = vpop.f32.mrb[0].mxu0
  %v5944 = vadd.f32 %v5655, %v5943
  %v5945 = vpop.f32.mrb[0].mxu0
  %v5946 = vpop.f32.mrb[0].mxu0
  %v5947 = vadd.f32 %v5658, %v5946
  %v5948 = vpop.f32.mrb[0].mxu0
  %5949 = vmatprep.mubr.bf16.mxu0 %v4528
  %5950 = vmatmul.mubr.bf16.gmra.mrb[0].mxu0 %v4212
  %v5951 = vpop.f32.mrb[0].mxu0
  %v5952 = vadd.f32 %v5663, %v5951
  %v5953 = vpop.f32.mrb[0].mxu0
  %v5954 = vpop.f32.mrb[0].mxu0
  %v5955 = vadd.f32 %v5666, %v5954
  %v5956 = vpop.f32.mrb[0].mxu0
  %5957 = vmatprep.mubr.bf16.mxu0 %v4637
  %5958 = vmatmul.mubr.bf16.gmra.mrb[0].mxu0 %v4616
  %v5959 = vpop.f32.mrb[0].mxu0
  %v5960 = vadd.f32 %v5671, %v5959
  %v5961 = vpop.f32.mrb[0].mxu0
  %v5962 = vpop.f32.mrb[0].mxu0
  %v5963 = vadd.f32 %v5674, %v5962
  %v5964 = vpop.f32.mrb[0].mxu0
  %5965 = vmatprep.mubr.bf16.mxu0 %v4531
  %5966 = vmatmul.mubr.bf16.gmra.mrb[0].mxu0 %v4224
  %v5967 = vpop.f32.mrb[0].mxu0
  %v5968 = vadd.f32 %v5679, %v5967
  %v5969 = vpop.f32.mrb[0].mxu0
  %v5970 = vpop.f32.mrb[0].mxu0
  %v5971 = vadd.f32 %v5682, %v5970
  %v5972 = vpop.f32.mrb[0].mxu0
  %5973 = vmatprep.mubr.bf16.mxu0 %v4534
  %5974 = vmatmul.mubr.bf16.gmra.mrb[0].mxu0 %v4236
  %v5975 = vpop.f32.mrb[0].mxu0
  %v5976 = vadd.f32 %v5687, %v5975
  %v5977 = vpop.f32.mrb[0].mxu0
  %v5978 = vpop.f32.mrb[0].mxu0
  %v5979 = vadd.f32 %v5690, %v5978
  %v5980 = vpop.f32.mrb[0].mxu0
  %5981 = vmatprep.mubr.bf16.mxu0 %v4537
  %5982 = vmatmul.mubr.bf16.gmra.mrb[0].mxu0 %v4248
  %v5983 = vpop.f32.mrb[0].mxu0
  %v5984 = vadd.f32 %v5695, %v5983
  %v5985 = vpop.f32.mrb[0].mxu0
  %v5986 = vpop.f32.mrb[0].mxu0
  %v5987 = vadd.f32 %v5698, %v5986
  %v5988 = vpop.f32.mrb[0].mxu0
  %5989 = vmatprep.mubr.bf16.mxu0 %v4540
  %5990 = vmatmul.mubr.bf16.gmra.mrb[0].mxu0 %v4260
  %v5991 = vpop.f32.mrb[0].mxu0
  %v5992 = vadd.f32 %v5703, %v5991
  %v5993 = vpop.f32.mrb[0].mxu0
  %v5994 = vpop.f32.mrb[0].mxu0
  %v5995 = vadd.f32 %v5706, %v5994
  %v5996 = vpop.f32.mrb[0].mxu0
  %5997 = vmatprep.mubr.bf16.mxu0 %v4543
  %5998 = vmatmul.mubr.bf16.gmra.mrb[0].mxu0 %v4272
  %v5999 = vpop.f32.mrb[0].mxu0
  %v6000 = vadd.f32 %v5711, %v5999
  %v6001 = vpop.f32.mrb[0].mxu0
  %v6002 = vpop.f32.mrb[0].mxu0
  %v6003 = vadd.f32 %v5714, %v6002
  %v6004 = vpop.f32.mrb[0].mxu0
  %6005 = vmatprep.mubr.bf16.mxu0 %v4546
  %6006 = vmatmul.mubr.bf16.gmra.mrb[0].mxu0 %v4284
  %v6007 = vpop.f32.mrb[0].mxu0
  %v6008 = vadd.f32 %v5719, %v6007
  %v6009 = vpop.f32.mrb[0].mxu0
  %v6010 = vpop.f32.mrb[0].mxu0
  %v6011 = vadd.f32 %v5722, %v6010
  %v6012 = vpop.f32.mrb[0].mxu0
  %6013 = vmatprep.mubr.bf16.mxu0 %v4549
  %6014 = vmatmul.mubr.bf16.gmra.mrb[0].mxu0 %v4296
  %v6015 = vpop.f32.mrb[0].mxu0
  %v6016 = vadd.f32 %v5727, %v6015
  %v6017 = vpop.f32.mrb[0].mxu0
  %v6018 = vpop.f32.mrb[0].mxu0
  %v6019 = vadd.f32 %v5730, %v6018
  %v6020 = vpop.f32.mrb[0].mxu0
  %6021 = vmatprep.mubr.bf16.mxu0 %v4552
  %6022 = vmatmul.mubr.bf16.gmra.mrb[0].mxu0 %v4308
  %v6023 = vpop.f32.mrb[0].mxu0
  %v6024 = vadd.f32 %v5735, %v6023
  %v6025 = vpop.f32.mrb[0].mxu0
  %v6026 = vpop.f32.mrb[0].mxu0
  %v6027 = vadd.f32 %v5738, %v6026
  %v6028 = vpop.f32.mrb[0].mxu0
  %6029 = vmatprep.mubr.bf16.mxu0 %v4555
  %6030 = vmatmul.mubr.bf16.gmra.mrb[0].mxu0 %v4320
  %v6031 = vpop.f32.mrb[0].mxu0
  %v6032 = vadd.f32 %v5743, %v6031
  %v6033 = vpop.f32.mrb[0].mxu0
  %v6034 = vpop.f32.mrb[0].mxu0
  %v6035 = vadd.f32 %v5746, %v6034
  %v6036 = vpop.f32.mrb[0].mxu0
  %6037 = vmatprep.mubr.bf16.mxu0 %v4558
  %6038 = vmatmul.mubr.bf16.gmra.mrb[0].mxu0 %v4332
  %v6039 = vpop.f32.mrb[0].mxu0
  %v6040 = vadd.f32 %v5751, %v6039
  %v6041 = vpop.f32.mrb[0].mxu0
  %v6042 = vpop.f32.mrb[0].mxu0
  %v6043 = vadd.f32 %v5754, %v6042
  %v6044 = vpop.f32.mrb[0].mxu0
  %6045 = vmatprep.mubr.bf16.mxu0 %v4561
  %6046 = vmatmul.mubr.bf16.gmra.mrb[0].mxu0 %v4344
  %v6047 = vpop.f32.mrb[0].mxu0
  %v6048 = vadd.f32 %v5759, %v6047
  %v6049 = vpop.f32.mrb[0].mxu0
  %v6050 = vpop.f32.mrb[0].mxu0
  %v6051 = vadd.f32 %v5762, %v6050
  %v6052 = vpop.f32.mrb[0].mxu0
  %6053 = vmatprep.mubr.bf16.mxu0 %v4564
  %6054 = vmatmul.mubr.bf16.gmra.mrb[0].mxu0 %v4356
  %v6055 = vpop.f32.mrb[0].mxu0
  %v6056 = vadd.f32 %v5767, %v6055
  %v6057 = vpop.f32.mrb[0].mxu0
  %v6058 = vpop.f32.mrb[0].mxu0
  %v6059 = vadd.f32 %v5770, %v6058
  %v6060 = vpop.f32.mrb[0].mxu0
  %6061 = vmatprep.mubr.bf16.mxu0 %v4567
  %6062 = vmatmul.mubr.bf16.gmra.mrb[0].mxu0 %v4368
  %v6063 = vpop.f32.mrb[0].mxu0
  %v6064 = vadd.f32 %v5775, %v6063
  %v6065 = vpop.f32.mrb[0].mxu0
  %v6066 = vpop.f32.mrb[0].mxu0
  %v6067 = vadd.f32 %v5778, %v6066
  %v6068 = vpop.f32.mrb[0].mxu0
  %6069 = vmatprep.mubr.bf16.mxu0 %v4570
  %6070 = vmatmul.mubr.bf16.gmra.mrb[0].mxu0 %v4380
  %v6071 = vpop.f32.mrb[0].mxu0
  %v6072 = vadd.f32 %v5783, %v6071
  %v6073 = vpop.f32.mrb[0].mxu0
  %v6074 = vpop.f32.mrb[0].mxu0
  %v6075 = vadd.f32 %v5786, %v6074
  %v6076 = vpop.f32.mrb[0].mxu0
  %6077 = vmatprep.mubr.bf16.mxu0 %v4573
  %6078 = vmatmul.mubr.bf16.gmra.mrb[0].mxu0 %v4392
  %v6079 = vpop.f32.mrb[0].mxu0
  %v6080 = vadd.f32 %v5791, %v6079
  %v6081 = vpop.f32.mrb[0].mxu0
  %v6082 = vpop.f32.mrb[0].mxu0
  %v6083 = vadd.f32 %v5794, %v6082
  %v6084 = vpop.f32.mrb[0].mxu0
  %6085 = vmatprep.mubr.bf16.mxu0 %v4640
  %6086 = vmatmul.mubr.bf16.gmra.mrb[0].mxu0 %v4628
  %v6087 = vpop.f32.mrb[0].mxu0
  %v6088 = vadd.f32 %v5799, %v6087
  %v6089 = vpop.f32.mrb[0].mxu0
  %v6090 = vpop.f32.mrb[0].mxu0
  %v6091 = vadd.f32 %v5802, %v6090
  %v6092 = vpop.f32.mrb[0].mxu0
  %6093 = vdwg.mxu0
  %6094 = vmatprep.subr.bf16.mxu0 0
  %6095 = vmatpush1.bf16.msra.mxu0 %v5131
  %6096 = vmatprep.subr.bf16.mxu0 0
  %6097 = vmatpush1.bf16.msra.mxu0 %v5132
  %6098 = vmatprep.subr.bf16.mxu0 0
  %6099 = vmatpush1.bf16.msra.mxu0 %v5133
  %6100 = vmatprep.subr.bf16.mxu0 0
  %6101 = vmatpush1.bf16.msra.mxu0 %v5134
  %6102 = vmatprep.subr.bf16.mxu0 0
  %6103 = vmatpush1.bf16.msra.mxu0 %v5135
  %6104 = vmatprep.subr.bf16.mxu0 0
  %6105 = vmatpush1.bf16.msra.mxu0 %v5136
  %6106 = vmatprep.subr.bf16.mxu0 0
  %6107 = vmatpush1.bf16.msra.mxu0 %v5137
  %6108 = vmatprep.subr.bf16.mxu0 0
  %6109 = vmatpush1.bf16.msra.mxu0 %v5138
  %6110 = vmatprep.subr.bf16.mxu0 0
  %6111 = vmatpush1.bf16.msra.mxu0 %v5139
  %6112 = vmatprep.subr.bf16.mxu0 0
  %6113 = vmatpush1.bf16.msra.mxu0 %v5140
  %6114 = vmatprep.subr.bf16.mxu0 0
  %6115 = vmatpush1.bf16.msra.mxu0 %v5141
  %6116 = vmatprep.subr.bf16.mxu0 0
  %6117 = vmatpush1.bf16.msra.mxu0 %v5142
  %6118 = vmatprep.subr.bf16.mxu0 0
  %6119 = vmatpush1.bf16.msra.mxu0 %v5143
  %6120 = vmatprep.subr.bf16.mxu0 0
  %6121 = vmatpush1.bf16.msra.mxu0 %v5144
  %6122 = vmatprep.subr.bf16.mxu0 0
  %6123 = vmatpush1.bf16.msra.mxu0 %v5145
  %6124 = vmatprep.subr.bf16.mxu0 0
  %6125 = vmatpush1.bf16.msra.mxu0 %v5146
  %6126 = vmatprep.mubr.bf16.mxu0 %v4056
  %6127 = vmatmul.mubr.bf16.gmra.mrb[0].mxu0 %v3970
  %v6128 = vpop.f32.mrb[0].mxu0
  %v6129 = vadd.f32 %v5840, %v6128
  %v6130 = vpop.f32.mrb[0].mxu0
  %v6131 = vpop.f32.mrb[0].mxu0
  %v6132 = vadd.f32 %v5843, %v6131
  %v6133 = vpop.f32.mrb[0].mxu0
  %6134 = vmatprep.mubr.bf16.mxu0 %v4068
  %6135 = vmatmul.mubr.bf16.gmra.mrb[0].mxu0 %v3971
  %v6136 = vpop.f32.mrb[0].mxu0
  %v6137 = vadd.f32 %v5848, %v6136
  %v6138 = vpop.f32.mrb[0].mxu0
  %v6139 = vpop.f32.mrb[0].mxu0
  %v6140 = vadd.f32 %v5851, %v6139
  %v6141 = vpop.f32.mrb[0].mxu0
  %6142 = vmatprep.mubr.bf16.mxu0 %v4080
  %6143 = vmatmul.mubr.bf16.gmra.mrb[0].mxu0 %v3972
  %v6144 = vpop.f32.mrb[0].mxu0
  %v6145 = vadd.f32 %v5856, %v6144
  %v6146 = vpop.f32.mrb[0].mxu0
  %v6147 = vpop.f32.mrb[0].mxu0
  %v6148 = vadd.f32 %v5859, %v6147
  %v6149 = vpop.f32.mrb[0].mxu0
  %6150 = vmatprep.mubr.bf16.mxu0 %v4092
  %6151 = vmatmul.mubr.bf16.gmra.mrb[0].mxu0 %v3973
  %v6152 = vpop.f32.mrb[0].mxu0
  %v6153 = vadd.f32 %v5864, %v6152
  %v6154 = vpop.f32.mrb[0].mxu0
  %v6155 = vpop.f32.mrb[0].mxu0
  %v6156 = vadd.f32 %v5867, %v6155
  %v6157 = vpop.f32.mrb[0].mxu0
  %6158 = vmatprep.mubr.bf16.mxu0 %v4104
  %6159 = vmatmul.mubr.bf16.gmra.mrb[0].mxu0 %v3974
  %v6160 = vpop.f32.mrb[0].mxu0
  %v6161 = vadd.f32 %v5872, %v6160
  %v6162 = vpop.f32.mrb[0].mxu0
  %v6163 = vpop.f32.mrb[0].mxu0
  %v6164 = vadd.f32 %v5875, %v6163
  %v6165 = vpop.f32.mrb[0].mxu0
  %6166 = vmatprep.mubr.bf16.mxu0 %v4116
  %6167 = vmatmul.mubr.bf16.gmra.mrb[0].mxu0 %v3975
  %v6168 = vpop.f32.mrb[0].mxu0
  %v6169 = vadd.f32 %v5880, %v6168
  %v6170 = vpop.f32.mrb[0].mxu0
  %v6171 = vpop.f32.mrb[0].mxu0
  %v6172 = vadd.f32 %v5883, %v6171
  %v6173 = vpop.f32.mrb[0].mxu0
  %6174 = vmatprep.mubr.bf16.mxu0 %v4128
  %6175 = vmatmul.mubr.bf16.gmra.mrb[0].mxu0 %v3976
  %v6176 = vpop.f32.mrb[0].mxu0
  %v6177 = vadd.f32 %v5888, %v6176
  %v6178 = vpop.f32.mrb[0].mxu0
  %v6179 = vpop.f32.mrb[0].mxu0
  %v6180 = vadd.f32 %v5891, %v6179
  %v6181 = vpop.f32.mrb[0].mxu0
  %6182 = vmatprep.mubr.bf16.mxu0 %v4140
  %6183 = vmatmul.mubr.bf16.gmra.mrb[0].mxu0 %v3977
  %v6184 = vpop.f32.mrb[0].mxu0
  %v6185 = vadd.f32 %v5896, %v6184
  %v6186 = vpop.f32.mrb[0].mxu0
  %v6187 = vpop.f32.mrb[0].mxu0
  %v6188 = vadd.f32 %v5899, %v6187
  %v6189 = vpop.f32.mrb[0].mxu0
  %6190 = vmatprep.mubr.bf16.mxu0 %v4152
  %6191 = vmatmul.mubr.bf16.gmra.mrb[0].mxu0 %v3978
  %v6192 = vpop.f32.mrb[0].mxu0
  %v6193 = vadd.f32 %v5904, %v6192
  %v6194 = vpop.f32.mrb[0].mxu0
  %v6195 = vpop.f32.mrb[0].mxu0
  %v6196 = vadd.f32 %v5907, %v6195
  %v6197 = vpop.f32.mrb[0].mxu0
  %6198 = vmatprep.mubr.bf16.mxu0 %v4164
  %6199 = vmatmul.mubr.bf16.gmra.mrb[0].mxu0 %v3979
  %v6200 = vpop.f32.mrb[0].mxu0
  %v6201 = vadd.f32 %v5912, %v6200
  %v6202 = vpop.f32.mrb[0].mxu0
  %v6203 = vpop.f32.mrb[0].mxu0
  %v6204 = vadd.f32 %v5915, %v6203
  %v6205 = vpop.f32.mrb[0].mxu0
  %6206 = vmatprep.mubr.bf16.mxu0 %v4176
  %6207 = vmatmul.mubr.bf16.gmra.mrb[0].mxu0 %v3980
  %v6208 = vpop.f32.mrb[0].mxu0
  %v6209 = vadd.f32 %v5920, %v6208
  %v6210 = vpop.f32.mrb[0].mxu0
  %v6211 = vpop.f32.mrb[0].mxu0
  %v6212 = vadd.f32 %v5923, %v6211
  %v6213 = vpop.f32.mrb[0].mxu0
  %6214 = vmatprep.mubr.bf16.mxu0 %v4188
  %6215 = vmatmul.mubr.bf16.gmra.mrb[0].mxu0 %v3981
  %v6216 = vpop.f32.mrb[0].mxu0
  %v6217 = vadd.f32 %v5928, %v6216
  %v6218 = vpop.f32.mrb[0].mxu0
  %v6219 = vpop.f32.mrb[0].mxu0
  %v6220 = vadd.f32 %v5931, %v6219
  %v6221 = vpop.f32.mrb[0].mxu0
  %6222 = vmatprep.mubr.bf16.mxu0 %v4200
  %6223 = vmatmul.mubr.bf16.gmra.mrb[0].mxu0 %v3982
  %v6224 = vpop.f32.mrb[0].mxu0
  %v6225 = vadd.f32 %v5936, %v6224
  %v6226 = vpop.f32.mrb[0].mxu0
  %v6227 = vpop.f32.mrb[0].mxu0
  %v6228 = vadd.f32 %v5939, %v6227
  %v6229 = vpop.f32.mrb[0].mxu0
  %6230 = vmatprep.mubr.bf16.mxu0 %v4212
  %6231 = vmatmul.mubr.bf16.gmra.mrb[0].mxu0 %v3983
  %v6232 = vpop.f32.mrb[0].mxu0
  %v6233 = vadd.f32 %v5944, %v6232
  %v6234 = vpop.f32.mrb[0].mxu0
  %v6235 = vpop.f32.mrb[0].mxu0
  %v6236 = vadd.f32 %v5947, %v6235
  %v6237 = vpop.f32.mrb[0].mxu0
  %6238 = vmatprep.mubr.bf16.mxu0 %v4616
  %6239 = vmatmul.mubr.bf16.gmra.mrb[0].mxu0 %v3984
  %v6240 = vpop.f32.mrb[0].mxu0
  %v6241 = vadd.f32 %v5952, %v6240
  %v6242 = vpop.f32.mrb[0].mxu0
  %v6243 = vpop.f32.mrb[0].mxu0
  %v6244 = vadd.f32 %v5955, %v6243
  %v6245 = vpop.f32.mrb[0].mxu0
  %6246 = vmatprep.mubr.bf16.mxu0 %v668
  %6247 = vmatmul.mubr.bf16.gmra.mrb[0].mxu0 %v590
  %v6248 = vpop.f32.mrb[0].mxu0
  %v6249 = vadd.f32 %v5960, %v6248
  %v6250 = vpop.f32.mrb[0].mxu0
  %v6251 = vpop.f32.mrb[0].mxu0
  %v6252 = vadd.f32 %v5963, %v6251
  %v6253 = vpop.f32.mrb[0].mxu0
  %6254 = vmatprep.mubr.bf16.mxu0 %v4236
  %6255 = vmatmul.mubr.bf16.gmra.mrb[0].mxu0 %v3986
  %v6256 = vpop.f32.mrb[0].mxu0
  %v6257 = vadd.f32 %v5968, %v6256
  %v6258 = vpop.f32.mrb[0].mxu0
  %v6259 = vpop.f32.mrb[0].mxu0
  %v6260 = vadd.f32 %v5971, %v6259
  %v6261 = vpop.f32.mrb[0].mxu0
  %6262 = vmatprep.mubr.bf16.mxu0 %v4248
  %6263 = vmatmul.mubr.bf16.gmra.mrb[0].mxu0 %v3987
  %v6264 = vpop.f32.mrb[0].mxu0
  %v6265 = vadd.f32 %v5976, %v6264
  %v6266 = vpop.f32.mrb[0].mxu0
  %v6267 = vpop.f32.mrb[0].mxu0
  %v6268 = vadd.f32 %v5979, %v6267
  %v6269 = vpop.f32.mrb[0].mxu0
  %6270 = vmatprep.mubr.bf16.mxu0 %v4260
  %6271 = vmatmul.mubr.bf16.gmra.mrb[0].mxu0 %v3988
  %v6272 = vpop.f32.mrb[0].mxu0
  %v6273 = vadd.f32 %v5984, %v6272
  %v6274 = vpop.f32.mrb[0].mxu0
  %v6275 = vpop.f32.mrb[0].mxu0
  %v6276 = vadd.f32 %v5987, %v6275
  %v6277 = vpop.f32.mrb[0].mxu0
  %6278 = vmatprep.mubr.bf16.mxu0 %v4272
  %6279 = vmatmul.mubr.bf16.gmra.mrb[0].mxu0 %v3989
  %v6280 = vpop.f32.mrb[0].mxu0
  %v6281 = vadd.f32 %v5992, %v6280
  %v6282 = vpop.f32.mrb[0].mxu0
  %v6283 = vpop.f32.mrb[0].mxu0
  %v6284 = vadd.f32 %v5995, %v6283
  %v6285 = vpop.f32.mrb[0].mxu0
  %6286 = vmatprep.mubr.bf16.mxu0 %v4284
  %6287 = vmatmul.mubr.bf16.gmra.mrb[0].mxu0 %v3990
  %v6288 = vpop.f32.mrb[0].mxu0
  %v6289 = vadd.f32 %v6000, %v6288
  %v6290 = vpop.f32.mrb[0].mxu0
  %v6291 = vpop.f32.mrb[0].mxu0
  %v6292 = vadd.f32 %v6003, %v6291
  %v6293 = vpop.f32.mrb[0].mxu0
  %6294 = vmatprep.mubr.bf16.mxu0 %v4296
  %6295 = vmatmul.mubr.bf16.gmra.mrb[0].mxu0 %v3991
  %v6296 = vpop.f32.mrb[0].mxu0
  %v6297 = vadd.f32 %v6008, %v6296
  %v6298 = vpop.f32.mrb[0].mxu0
  %v6299 = vpop.f32.mrb[0].mxu0
  %v6300 = vadd.f32 %v6011, %v6299
  %v6301 = vpop.f32.mrb[0].mxu0
  %6302 = vmatprep.mubr.bf16.mxu0 %v4308
  %6303 = vmatmul.mubr.bf16.gmra.mrb[0].mxu0 %v3992
  %v6304 = vpop.f32.mrb[0].mxu0
  %v6305 = vadd.f32 %v6016, %v6304
  %v6306 = vpop.f32.mrb[0].mxu0
  %v6307 = vpop.f32.mrb[0].mxu0
  %v6308 = vadd.f32 %v6019, %v6307
  %v6309 = vpop.f32.mrb[0].mxu0
  %6310 = vmatprep.mubr.bf16.mxu0 %v4320
  %6311 = vmatmul.mubr.bf16.gmra.mrb[0].mxu0 %v3993
  %v6312 = vpop.f32.mrb[0].mxu0
  %v6313 = vadd.f32 %v6024, %v6312
  %v6314 = vpop.f32.mrb[0].mxu0
  %v6315 = vpop.f32.mrb[0].mxu0
  %v6316 = vadd.f32 %v6027, %v6315
  %v6317 = vpop.f32.mrb[0].mxu0
  %6318 = vmatprep.mubr.bf16.mxu0 %v4332
  %6319 = vmatmul.mubr.bf16.gmra.mrb[0].mxu0 %v3994
  %v6320 = vpop.f32.mrb[0].mxu0
  %v6321 = vadd.f32 %v6032, %v6320
  %v6322 = vpop.f32.mrb[0].mxu0
  %v6323 = vpop.f32.mrb[0].mxu0
  %v6324 = vadd.f32 %v6035, %v6323
  %v6325 = vpop.f32.mrb[0].mxu0
  %6326 = vmatprep.mubr.bf16.mxu0 %v4344
  %6327 = vmatmul.mubr.bf16.gmra.mrb[0].mxu0 %v3995
  %v6328 = vpop.f32.mrb[0].mxu0
  %v6329 = vadd.f32 %v6040, %v6328
  %v6330 = vpop.f32.mrb[0].mxu0
  %v6331 = vpop.f32.mrb[0].mxu0
  %v6332 = vadd.f32 %v6043, %v6331
  %v6333 = vpop.f32.mrb[0].mxu0
  %6334 = vmatprep.mubr.bf16.mxu0 %v4356
  %6335 = vmatmul.mubr.bf16.gmra.mrb[0].mxu0 %v3996
  %v6336 = vpop.f32.mrb[0].mxu0
  %v6337 = vadd.f32 %v6048, %v6336
  %v6338 = vpop.f32.mrb[0].mxu0
  %v6339 = vpop.f32.mrb[0].mxu0
  %v6340 = vadd.f32 %v6051, %v6339
  %v6341 = vpop.f32.mrb[0].mxu0
  %6342 = vmatprep.mubr.bf16.mxu0 %v4368
  %6343 = vmatmul.mubr.bf16.gmra.mrb[0].mxu0 %v3997
  %v6344 = vpop.f32.mrb[0].mxu0
  %v6345 = vadd.f32 %v6056, %v6344
  %v6346 = vpop.f32.mrb[0].mxu0
  %v6347 = vpop.f32.mrb[0].mxu0
  %v6348 = vadd.f32 %v6059, %v6347
  %v6349 = vpop.f32.mrb[0].mxu0
  %6350 = vmatprep.mubr.bf16.mxu0 %v4380
  %6351 = vmatmul.mubr.bf16.gmra.mrb[0].mxu0 %v3998
  %v6352 = vpop.f32.mrb[0].mxu0
  %v6353 = vadd.f32 %v6064, %v6352
  %v6354 = vpop.f32.mrb[0].mxu0
  %v6355 = vpop.f32.mrb[0].mxu0
  %v6356 = vadd.f32 %v6067, %v6355
  %v6357 = vpop.f32.mrb[0].mxu0
  %6358 = vmatprep.mubr.bf16.mxu0 %v4392
  %6359 = vmatmul.mubr.bf16.gmra.mrb[0].mxu0 %v3999
  %v6360 = vpop.f32.mrb[0].mxu0
  %v6361 = vadd.f32 %v6072, %v6360
  %v6362 = vpop.f32.mrb[0].mxu0
  %v6363 = vpop.f32.mrb[0].mxu0
  %v6364 = vadd.f32 %v6075, %v6363
  %v6365 = vpop.f32.mrb[0].mxu0
  %6366 = vmatprep.mubr.bf16.mxu0 %v4628
  %6367 = vmatmul.mubr.bf16.gmra.mrb[0].mxu0 %v4000
  %v6368 = vpop.f32.mrb[0].mxu0
  %v6369 = vadd.f32 %v6080, %v6368
  %v6370 = vpop.f32.mrb[0].mxu0
  %v6371 = vpop.f32.mrb[0].mxu0
  %v6372 = vadd.f32 %v6083, %v6371
  %v6373 = vpop.f32.mrb[0].mxu0
  %6374 = vmatprep.mubr.bf16.mxu0 %v668
  %6375 = vmatmul.mubr.bf16.gmra.mrb[0].mxu0 %v590
  %v6376 = vpop.f32.mrb[0].mxu0
  %v6377 = vadd.f32 %v6088, %v6376
  %v6378 = vpop.f32.mrb[0].mxu0
  %v6379 = vpop.f32.mrb[0].mxu0
  %v6380 = vadd.f32 %v6091, %v6379
  %v6381 = vpop.f32.mrb[0].mxu0
  %6382 = vdwg.mxu0
  %6383 = vmatprep.subr.bf16.mxu0 0
  %6384 = vmatpush1.bf16.msra.mxu0 %v5147
  %6385 = vmatprep.subr.bf16.mxu0 0
  %6386 = vmatpush1.bf16.msra.mxu0 %v5148
  %6387 = vmatprep.subr.bf16.mxu0 0
  %6388 = vmatpush1.bf16.msra.mxu0 %v5149
  %6389 = vmatprep.subr.bf16.mxu0 0
  %6390 = vmatpush1.bf16.msra.mxu0 %v5150
  %6391 = vmatprep.subr.bf16.mxu0 0
  %6392 = vmatpush1.bf16.msra.mxu0 %v5151
  %6393 = vmatprep.subr.bf16.mxu0 0
  %6394 = vmatpush1.bf16.msra.mxu0 %v5152
  %6395 = vmatprep.subr.bf16.mxu0 0
  %6396 = vmatpush1.bf16.msra.mxu0 %v5153
  %6397 = vmatprep.subr.bf16.mxu0 0
  %6398 = vmatpush1.bf16.msra.mxu0 %v5154
  %6399 = vmatprep.subr.bf16.mxu0 0
  %6400 = vmatpush1.bf16.msra.mxu0 0
  %6401 = vmatprep.subr.bf16.mxu0 0
  %6402 = vmatpush1.bf16.msra.mxu0 0
  %6403 = vmatprep.subr.bf16.mxu0 0
  %6404 = vmatpush1.bf16.msra.mxu0 0
  %6405 = vmatprep.subr.bf16.mxu0 0
  %6406 = vmatpush1.bf16.msra.mxu0 0
  %6407 = vmatprep.subr.bf16.mxu0 0
  %6408 = vmatpush1.bf16.msra.mxu0 0
  %6409 = vmatprep.subr.bf16.mxu0 0
  %6410 = vmatpush1.bf16.msra.mxu0 0
  %6411 = vmatprep.subr.bf16.mxu0 0
  %6412 = vmatpush1.bf16.msra.mxu0 0
  %6413 = vmatprep.subr.bf16.mxu0 0
  %6414 = vmatpush1.bf16.msra.mxu0 0
  %6415 = vmatprep.mubr.bf16.mxu0 0
  %6416 = vmatmul.mubr.bf16.gmra.mrb[0].mxu0 %v4489
  %v6417 = vpop.f32.mrb[0].mxu0
  %v6418 = vadd.f32 %v6129, %v6417
  %v6419 = vpop.f32.mrb[0].mxu0
  %v6420 = vpop.f32.mrb[0].mxu0
  %v6421 = vadd.f32 %v6132, %v6420
  %v6422 = vpop.f32.mrb[0].mxu0
  %6423 = vmatprep.mubr.bf16.mxu0 0
  %6424 = vmatmul.mubr.bf16.gmra.mrb[0].mxu0 %v4492
  %v6425 = vpop.f32.mrb[0].mxu0
  %v6426 = vadd.f32 %v6137, %v6425
  %v6427 = vpop.f32.mrb[0].mxu0
  %v6428 = vpop.f32.mrb[0].mxu0
  %v6429 = vadd.f32 %v6140, %v6428
  %v6430 = vpop.f32.mrb[0].mxu0
  %6431 = vmatprep.mubr.bf16.mxu0 0
  %6432 = vmatmul.mubr.bf16.gmra.mrb[0].mxu0 %v4495
  %v6433 = vpop.f32.mrb[0].mxu0
  %v6434 = vadd.f32 %v6145, %v6433
  %v6435 = vpop.f32.mrb[0].mxu0
  %v6436 = vpop.f32.mrb[0].mxu0
  %v6437 = vadd.f32 %v6148, %v6436
  %v6438 = vpop.f32.mrb[0].mxu0
  %6439 = vmatprep.mubr.bf16.mxu0 0
  %6440 = vmatmul.mubr.bf16.gmra.mrb[0].mxu0 %v4498
  %v6441 = vpop.f32.mrb[0].mxu0
  %v6442 = vadd.f32 %v6153, %v6441
  %v6443 = vpop.f32.mrb[0].mxu0
  %v6444 = vpop.f32.mrb[0].mxu0
  %v6445 = vadd.f32 %v6156, %v6444
  %v6446 = vpop.f32.mrb[0].mxu0
  %6447 = vmatprep.mubr.bf16.mxu0 0
  %6448 = vmatmul.mubr.bf16.gmra.mrb[0].mxu0 %v4501
  %v6449 = vpop.f32.mrb[0].mxu0
  %v6450 = vadd.f32 %v6161, %v6449
  %v6451 = vpop.f32.mrb[0].mxu0
  %v6452 = vpop.f32.mrb[0].mxu0
  %v6453 = vadd.f32 %v6164, %v6452
  %v6454 = vpop.f32.mrb[0].mxu0
  %6455 = vmatprep.mubr.bf16.mxu0 0
  %6456 = vmatmul.mubr.bf16.gmra.mrb[0].mxu0 %v4504
  %v6457 = vpop.f32.mrb[0].mxu0
  %v6458 = vadd.f32 %v6169, %v6457
  %v6459 = vpop.f32.mrb[0].mxu0
  %v6460 = vpop.f32.mrb[0].mxu0
  %v6461 = vadd.f32 %v6172, %v6460
  %v6462 = vpop.f32.mrb[0].mxu0
  %6463 = vmatprep.mubr.bf16.mxu0 0
  %6464 = vmatmul.mubr.bf16.gmra.mrb[0].mxu0 %v4507
  %v6465 = vpop.f32.mrb[0].mxu0
  %v6466 = vadd.f32 %v6177, %v6465
  %v6467 = vpop.f32.mrb[0].mxu0
  %v6468 = vpop.f32.mrb[0].mxu0
  %v6469 = vadd.f32 %v6180, %v6468
  %v6470 = vpop.f32.mrb[0].mxu0
  %6471 = vmatprep.mubr.bf16.mxu0 0
  %6472 = vmatmul.mubr.bf16.gmra.mrb[0].mxu0 %v4510
  %v6473 = vpop.f32.mrb[0].mxu0
  %v6474 = vadd.f32 %v6185, %v6473
  %v6475 = vpop.f32.mrb[0].mxu0
  %v6476 = vpop.f32.mrb[0].mxu0
  %v6477 = vadd.f32 %v6188, %v6476
  %v6478 = vpop.f32.mrb[0].mxu0
  %6479 = vmatprep.mubr.bf16.mxu0 0
  %6480 = vmatmul.mubr.bf16.gmra.mrb[0].mxu0 %v4513
  %v6481 = vpop.f32.mrb[0].mxu0
  %v6482 = vadd.f32 %v6193, %v6481
  %v6483 = vpop.f32.mrb[0].mxu0
  %v6484 = vpop.f32.mrb[0].mxu0
  %v6485 = vadd.f32 %v6196, %v6484
  %v6486 = vpop.f32.mrb[0].mxu0
  %6487 = vmatprep.mubr.bf16.mxu0 0
  %6488 = vmatmul.mubr.bf16.gmra.mrb[0].mxu0 %v4516
  %v6489 = vpop.f32.mrb[0].mxu0
  %v6490 = vadd.f32 %v6201, %v6489
  %v6491 = vpop.f32.mrb[0].mxu0
  %v6492 = vpop.f32.mrb[0].mxu0
  %v6493 = vadd.f32 %v6204, %v6492
  %v6494 = vpop.f32.mrb[0].mxu0
  %6495 = vmatprep.mubr.bf16.mxu0 0
  %6496 = vmatmul.mubr.bf16.gmra.mrb[0].mxu0 %v4519
  %v6497 = vpop.f32.mrb[0].mxu0
  %v6498 = vadd.f32 %v6209, %v6497
  %v6499 = vpop.f32.mrb[0].mxu0
  %v6500 = vpop.f32.mrb[0].mxu0
  %v6501 = vadd.f32 %v6212, %v6500
  %v6502 = vpop.f32.mrb[0].mxu0
  %6503 = vmatprep.mubr.bf16.mxu0 0
  %6504 = vmatmul.mubr.bf16.gmra.mrb[0].mxu0 %v4522
  %v6505 = vpop.f32.mrb[0].mxu0
  %v6506 = vadd.f32 %v6217, %v6505
  %v6507 = vpop.f32.mrb[0].mxu0
  %v6508 = vpop.f32.mrb[0].mxu0
  %v6509 = vadd.f32 %v6220, %v6508
  %v6510 = vpop.f32.mrb[0].mxu0
  %6511 = vmatprep.mubr.bf16.mxu0 0
  %6512 = vmatmul.mubr.bf16.gmra.mrb[0].mxu0 %v4525
  %v6513 = vpop.f32.mrb[0].mxu0
  %v6514 = vadd.f32 %v6225, %v6513
  %v6515 = vpop.f32.mrb[0].mxu0
  %v6516 = vpop.f32.mrb[0].mxu0
  %v6517 = vadd.f32 %v6228, %v6516
  %v6518 = vpop.f32.mrb[0].mxu0
  %6519 = vmatprep.mubr.bf16.mxu0 0
  %6520 = vmatmul.mubr.bf16.gmra.mrb[0].mxu0 %v4528
  %v6521 = vpop.f32.mrb[0].mxu0
  %v6522 = vadd.f32 %v6233, %v6521
  %v6523 = vpop.f32.mrb[0].mxu0
  %v6524 = vpop.f32.mrb[0].mxu0
  %v6525 = vadd.f32 %v6236, %v6524
  %v6526 = vpop.f32.mrb[0].mxu0
  %6527 = vmatprep.mubr.bf16.mxu0 0
  %6528 = vmatmul.mubr.bf16.gmra.mrb[0].mxu0 %v4637
  %v6529 = vpop.f32.mrb[0].mxu0
  %v6530 = vadd.f32 %v6241, %v6529
  %v6531 = vpop.f32.mrb[0].mxu0
  %v6532 = vpop.f32.mrb[0].mxu0
  %v6533 = vadd.f32 %v6244, %v6532
  %v6534 = vpop.f32.mrb[0].mxu0
  %6535 = vmatprep.mubr.bf16.mxu0 0
  %6536 = vmatmul.mubr.bf16.gmra.mrb[0].mxu0 %v1156
  %v6537 = vpop.f32.mrb[0].mxu0
  %v6538 = vadd.f32 %v6249, %v6537
  %v6539 = vpop.f32.mrb[0].mxu0
  %v6540 = vpop.f32.mrb[0].mxu0
  %v6541 = vadd.f32 %v6252, %v6540
  %v6542 = vpop.f32.mrb[0].mxu0
  %6543 = vmatprep.mubr.bf16.mxu0 0
  %6544 = vmatmul.mubr.bf16.gmra.mrb[0].mxu0 %v4534
  %v6545 = vpop.f32.mrb[0].mxu0
  %v6546 = vadd.f32 %v6257, %v6545
  %v6547 = vpop.f32.mrb[0].mxu0
  %v6548 = vpop.f32.mrb[0].mxu0
  %v6549 = vadd.f32 %v6260, %v6548
  %v6550 = vpop.f32.mrb[0].mxu0
  %6551 = vmatprep.mubr.bf16.mxu0 0
  %6552 = vmatmul.mubr.bf16.gmra.mrb[0].mxu0 %v4537
  %v6553 = vpop.f32.mrb[0].mxu0
  %v6554 = vadd.f32 %v6265, %v6553
  %v6555 = vpop.f32.mrb[0].mxu0
  %v6556 = vpop.f32.mrb[0].mxu0
  %v6557 = vadd.f32 %v6268, %v6556
  %v6558 = vpop.f32.mrb[0].mxu0
  %6559 = vmatprep.mubr.bf16.mxu0 0
  %6560 = vmatmul.mubr.bf16.gmra.mrb[0].mxu0 %v4540
  %v6561 = vpop.f32.mrb[0].mxu0
  %v6562 = vadd.f32 %v6273, %v6561
  %v6563 = vpop.f32.mrb[0].mxu0
  %v6564 = vpop.f32.mrb[0].mxu0
  %v6565 = vadd.f32 %v6276, %v6564
  %v6566 = vpop.f32.mrb[0].mxu0
  %6567 = vmatprep.mubr.bf16.mxu0 0
  %6568 = vmatmul.mubr.bf16.gmra.mrb[0].mxu0 %v4543
  %v6569 = vpop.f32.mrb[0].mxu0
  %v6570 = vadd.f32 %v6281, %v6569
  %v6571 = vpop.f32.mrb[0].mxu0
  %v6572 = vpop.f32.mrb[0].mxu0
  %v6573 = vadd.f32 %v6284, %v6572
  %v6574 = vpop.f32.mrb[0].mxu0
  %6575 = vmatprep.mubr.bf16.mxu0 0
  %6576 = vmatmul.mubr.bf16.gmra.mrb[0].mxu0 %v4546
  %v6577 = vpop.f32.mrb[0].mxu0
  %v6578 = vadd.f32 %v6289, %v6577
  %v6579 = vpop.f32.mrb[0].mxu0
  %v6580 = vpop.f32.mrb[0].mxu0
  %v6581 = vadd.f32 %v6292, %v6580
  %v6582 = vpop.f32.mrb[0].mxu0
  %6583 = vmatprep.mubr.bf16.mxu0 0
  %6584 = vmatmul.mubr.bf16.gmra.mrb[0].mxu0 %v4549
  %v6585 = vpop.f32.mrb[0].mxu0
  %v6586 = vadd.f32 %v6297, %v6585
  %v6587 = vpop.f32.mrb[0].mxu0
  %v6588 = vpop.f32.mrb[0].mxu0
  %v6589 = vadd.f32 %v6300, %v6588
  %v6590 = vpop.f32.mrb[0].mxu0
  %6591 = vmatprep.mubr.bf16.mxu0 0
  %6592 = vmatmul.mubr.bf16.gmra.mrb[0].mxu0 %v4552
  %v6593 = vpop.f32.mrb[0].mxu0
  %v6594 = vadd.f32 %v6305, %v6593
  %v6595 = vpop.f32.mrb[0].mxu0
  %v6596 = vpop.f32.mrb[0].mxu0
  %v6597 = vadd.f32 %v6308, %v6596
  %v6598 = vpop.f32.mrb[0].mxu0
  %6599 = vmatprep.mubr.bf16.mxu0 0
  %6600 = vmatmul.mubr.bf16.gmra.mrb[0].mxu0 %v4555
  %v6601 = vpop.f32.mrb[0].mxu0
  %v6602 = vadd.f32 %v6313, %v6601
  %v6603 = vpop.f32.mrb[0].mxu0
  %v6604 = vpop.f32.mrb[0].mxu0
  %v6605 = vadd.f32 %v6316, %v6604
  %v6606 = vpop.f32.mrb[0].mxu0
  %6607 = vmatprep.mubr.bf16.mxu0 0
  %6608 = vmatmul.mubr.bf16.gmra.mrb[0].mxu0 %v4558
  %v6609 = vpop.f32.mrb[0].mxu0
  %v6610 = vadd.f32 %v6321, %v6609
  %v6611 = vpop.f32.mrb[0].mxu0
  %v6612 = vpop.f32.mrb[0].mxu0
  %v6613 = vadd.f32 %v6324, %v6612
  %v6614 = vpop.f32.mrb[0].mxu0
  %6615 = vmatprep.mubr.bf16.mxu0 0
  %6616 = vmatmul.mubr.bf16.gmra.mrb[0].mxu0 %v4561
  %v6617 = vpop.f32.mrb[0].mxu0
  %v6618 = vadd.f32 %v6329, %v6617
  %v6619 = vpop.f32.mrb[0].mxu0
  %v6620 = vpop.f32.mrb[0].mxu0
  %v6621 = vadd.f32 %v6332, %v6620
  %v6622 = vpop.f32.mrb[0].mxu0
  %6623 = vmatprep.mubr.bf16.mxu0 0
  %6624 = vmatmul.mubr.bf16.gmra.mrb[0].mxu0 %v4564
  %v6625 = vpop.f32.mrb[0].mxu0
  %v6626 = vadd.f32 %v6337, %v6625
  %v6627 = vpop.f32.mrb[0].mxu0
  %v6628 = vpop.f32.mrb[0].mxu0
  %v6629 = vadd.f32 %v6340, %v6628
  %v6630 = vpop.f32.mrb[0].mxu0
  %6631 = vmatprep.mubr.bf16.mxu0 0
  %6632 = vmatmul.mubr.bf16.gmra.mrb[0].mxu0 %v4567
  %v6633 = vpop.f32.mrb[0].mxu0
  %v6634 = vadd.f32 %v6345, %v6633
  %v6635 = vpop.f32.mrb[0].mxu0
  %v6636 = vpop.f32.mrb[0].mxu0
  %v6637 = vadd.f32 %v6348, %v6636
  %v6638 = vpop.f32.mrb[0].mxu0
  %6639 = vmatprep.mubr.bf16.mxu0 0
  %6640 = vmatmul.mubr.bf16.gmra.mrb[0].mxu0 %v4570
  %v6641 = vpop.f32.mrb[0].mxu0
  %v6642 = vadd.f32 %v6353, %v6641
  %v6643 = vpop.f32.mrb[0].mxu0
  %v6644 = vpop.f32.mrb[0].mxu0
  %v6645 = vadd.f32 %v6356, %v6644
  %v6646 = vpop.f32.mrb[0].mxu0
  %6647 = vmatprep.mubr.bf16.mxu0 0
  %6648 = vmatmul.mubr.bf16.gmra.mrb[0].mxu0 %v4573
  %v6649 = vpop.f32.mrb[0].mxu0
  %v6650 = vadd.f32 %v6361, %v6649
  %v6651 = vpop.f32.mrb[0].mxu0
  %v6652 = vpop.f32.mrb[0].mxu0
  %v6653 = vadd.f32 %v6364, %v6652
  %v6654 = vpop.f32.mrb[0].mxu0
  %6655 = vmatprep.mubr.bf16.mxu0 0
  %6656 = vmatmul.mubr.bf16.gmra.mrb[0].mxu0 %v4640
  %v6657 = vpop.f32.mrb[0].mxu0
  %v6658 = vadd.f32 %v6369, %v6657
  %v6659 = vpop.f32.mrb[0].mxu0
  %v6660 = vpop.f32.mrb[0].mxu0
  %v6661 = vadd.f32 %v6372, %v6660
  %v6662 = vpop.f32.mrb[0].mxu0
  %6663 = vmatprep.mubr.bf16.mxu0 0
  %6664 = vmatmul.mubr.bf16.gmra.mrb[0].mxu0 %v1156
  %v6665 = vpop.f32.mrb[0].mxu0
  %v6666 = vadd.f32 %v6377, %v6665
  %v6667 = vpop.f32.mrb[0].mxu0
  %v6668 = vpop.f32.mrb[0].mxu0
  %v6669 = vadd.f32 %v6380, %v6668
  %v6670 = vpop.f32.mrb[0].mxu0
  %6671 = vdwg.mxu0
  %v6672 = vadd.f32 %v6418, %v6421
  %v6673 = vadd.f32 %v6672, %v6426
  %v6674 = vadd.f32 %v6673, %v6429
  %v6675 = vadd.f32 %v6674, %v6434
  %v6676 = vadd.f32 %v6675, %v6437
  %v6677 = vadd.f32 %v6676, %v6442
  %v6678 = vadd.f32 %v6677, %v6445
  %v6679 = vadd.f32 %v6678, %v6450
  %v6680 = vadd.f32 %v6679, %v6453
  %v6681 = vadd.f32 %v6680, %v6458
  %v6682 = vadd.f32 %v6681, %v6461
  %v6683 = vadd.f32 %v6682, %v6466
  %v6684 = vadd.f32 %v6683, %v6469
  %v6685 = vadd.f32 %v6684, %v6474
  %v6686 = vadd.f32 %v6685, %v6477
  %v6687 = vadd.f32 %v6686, %v6482
  %v6688 = vadd.f32 %v6687, %v6485
  %v6689 = vadd.f32 %v6688, %v6490
  %v6690 = vadd.f32 %v6689, %v6493
  %v6691 = vadd.f32 %v6690, %v6498
  %v6692 = vadd.f32 %v6691, %v6501
  %v6693 = vadd.f32 %v6692, %v6506
  %v6694 = vadd.f32 %v6693, %v6509
  %v6695 = vadd.f32 %v6694, %v6514
  %v6696 = vadd.f32 %v6695, %v6517
  %v6697 = vadd.f32 %v6696, %v6522
  %v6698 = vadd.f32 %v6697, %v6525
  %v6699 = vadd.f32 %v6698, %v6530
  %v6700 = vadd.f32 %v6699, %v6533
  %v6701 = vadd.f32 %v6700, %v6538
  %v6702 = vadd.f32 %v6701, %v6541
  %v6703 = vrot.slane %v6702, 4
  %v6704 = vadd.f32 %v6702, %v6703
  %v6705 = vrot.slane %v6704, 2
  %v6706 = vadd.f32 %v6704, %v6705
  %v6707 = vrot.slane %v6706, 1
  %v6708 = vadd.f32 %v6706, %v6707
  %v6709 = vadd.f32 %v6546, %v6549
  %v6710 = vadd.f32 %v6709, %v6554
  %v6711 = vadd.f32 %v6710, %v6557
  %v6712 = vadd.f32 %v6711, %v6562
  %v6713 = vadd.f32 %v6712, %v6565
  %v6714 = vadd.f32 %v6713, %v6570
  %v6715 = vadd.f32 %v6714, %v6573
  %v6716 = vadd.f32 %v6715, %v6578
  %v6717 = vadd.f32 %v6716, %v6581
  %v6718 = vadd.f32 %v6717, %v6586
  %v6719 = vadd.f32 %v6718, %v6589
  %v6720 = vadd.f32 %v6719, %v6594
  %v6721 = vadd.f32 %v6720, %v6597
  %v6722 = vadd.f32 %v6721, %v6602
  %v6723 = vadd.f32 %v6722, %v6605
  %v6724 = vadd.f32 %v6723, %v6610
  %v6725 = vadd.f32 %v6724, %v6613
  %v6726 = vadd.f32 %v6725, %v6618
  %v6727 = vadd.f32 %v6726, %v6621
  %v6728 = vadd.f32 %v6727, %v6626
  %v6729 = vadd.f32 %v6728, %v6629
  %v6730 = vadd.f32 %v6729, %v6634
  %v6731 = vadd.f32 %v6730, %v6637
  %v6732 = vadd.f32 %v6731, %v6642
  %v6733 = vadd.f32 %v6732, %v6645
  %v6734 = vadd.f32 %v6733, %v6650
  %v6735 = vadd.f32 %v6734, %v6653
  %v6736 = vadd.f32 %v6735, %v6658
  %v6737 = vadd.f32 %v6736, %v6661
  %v6738 = vadd.f32 %v6737, %v6666
  %v6739 = vadd.f32 %v6738, %v6669
  %v6740 = vrot.slane %v6739, 4
  %v6741 = vadd.f32 %v6739, %v6740
  %v6742 = vrot.slane %v6741, 2
  %v6743 = vadd.f32 %v6741, %v6742
  %v6744 = vrot.slane %v6743, 1
  %v6745 = vadd.f32 %v6743, %v6744
  %v6746 = vmul.f32 %v6418, %v6418
  %v6747 = vmul.f32 %v6421, %v6421
  %v6748 = vmul.f32 %v6426, %v6426
  %v6749 = vmul.f32 %v6429, %v6429
  %v6750 = vmul.f32 %v6434, %v6434
  %v6751 = vmul.f32 %v6437, %v6437
  %v6752 = vmul.f32 %v6442, %v6442
  %v6753 = vmul.f32 %v6445, %v6445
  %v6754 = vmul.f32 %v6450, %v6450
  %v6755 = vmul.f32 %v6453, %v6453
  %v6756 = vmul.f32 %v6458, %v6458
  %v6757 = vmul.f32 %v6461, %v6461
  %v6758 = vmul.f32 %v6466, %v6466
  %v6759 = vmul.f32 %v6469, %v6469
  %v6760 = vmul.f32 %v6474, %v6474
  %v6761 = vmul.f32 %v6477, %v6477
  %v6762 = vmul.f32 %v6482, %v6482
  %v6763 = vmul.f32 %v6485, %v6485
  %v6764 = vmul.f32 %v6490, %v6490
  %v6765 = vmul.f32 %v6493, %v6493
  %v6766 = vmul.f32 %v6498, %v6498
  %v6767 = vmul.f32 %v6501, %v6501
  %v6768 = vmul.f32 %v6506, %v6506
  %v6769 = vmul.f32 %v6509, %v6509
  %v6770 = vmul.f32 %v6514, %v6514
  %v6771 = vmul.f32 %v6517, %v6517
  %v6772 = vmul.f32 %v6522, %v6522
  %v6773 = vmul.f32 %v6525, %v6525
  %v6774 = vmul.f32 %v6530, %v6530
  %v6775 = vmul.f32 %v6533, %v6533
  %v6776 = vmul.f32 %v6538, %v6538
  %v6777 = vmul.f32 %v6541, %v6541
  %v6778 = vmul.f32 %v6546, %v6546
  %v6779 = vmul.f32 %v6549, %v6549
  %v6780 = vmul.f32 %v6554, %v6554
  %v6781 = vmul.f32 %v6557, %v6557
  %v6782 = vmul.f32 %v6562, %v6562
  %v6783 = vmul.f32 %v6565, %v6565
  %v6784 = vmul.f32 %v6570, %v6570
  %v6785 = vmul.f32 %v6573, %v6573
  %v6786 = vmul.f32 %v6578, %v6578
  %v6787 = vmul.f32 %v6581, %v6581
  %v6788 = vmul.f32 %v6586, %v6586
  %v6789 = vmul.f32 %v6589, %v6589
  %v6790 = vmul.f32 %v6594, %v6594
  %v6791 = vmul.f32 %v6597, %v6597
  %v6792 = vmul.f32 %v6602, %v6602
  %v6793 = vmul.f32 %v6605, %v6605
  %v6794 = vmul.f32 %v6610, %v6610
  %v6795 = vmul.f32 %v6613, %v6613
  %v6796 = vmul.f32 %v6618, %v6618
  %v6797 = vmul.f32 %v6621, %v6621
  %v6798 = vmul.f32 %v6626, %v6626
  %v6799 = vmul.f32 %v6629, %v6629
  %v6800 = vmul.f32 %v6634, %v6634
  %v6801 = vmul.f32 %v6637, %v6637
  %v6802 = vmul.f32 %v6642, %v6642
  %v6803 = vmul.f32 %v6645, %v6645
  %v6804 = vmul.f32 %v6650, %v6650
  %v6805 = vmul.f32 %v6653, %v6653
  %v6806 = vmul.f32 %v6658, %v6658
  %v6807 = vmul.f32 %v6661, %v6661
  %v6808 = vmul.f32 %v6666, %v6666
  %v6809 = vmul.f32 %v6669, %v6669
  %v6810 = vadd.f32 %v6746, %v6747
  %v6811 = vadd.f32 %v6810, %v6748
  %v6812 = vadd.f32 %v6811, %v6749
  %v6813 = vadd.f32 %v6812, %v6750
  %v6814 = vadd.f32 %v6813, %v6751
  %v6815 = vadd.f32 %v6814, %v6752
  %v6816 = vadd.f32 %v6815, %v6753
  %v6817 = vadd.f32 %v6816, %v6754
  %v6818 = vadd.f32 %v6817, %v6755
  %v6819 = vadd.f32 %v6818, %v6756
  %v6820 = vadd.f32 %v6819, %v6757
  %v6821 = vadd.f32 %v6820, %v6758
  %v6822 = vadd.f32 %v6821, %v6759
  %v6823 = vadd.f32 %v6822, %v6760
  %v6824 = vadd.f32 %v6823, %v6761
  %v6825 = vadd.f32 %v6824, %v6762
  %v6826 = vadd.f32 %v6825, %v6763
  %v6827 = vadd.f32 %v6826, %v6764
  %v6828 = vadd.f32 %v6827, %v6765
  %v6829 = vadd.f32 %v6828, %v6766
  %v6830 = vadd.f32 %v6829, %v6767
  %v6831 = vadd.f32 %v6830, %v6768
  %v6832 = vadd.f32 %v6831, %v6769
  %v6833 = vadd.f32 %v6832, %v6770
  %v6834 = vadd.f32 %v6833, %v6771
  %v6835 = vadd.f32 %v6834, %v6772
  %v6836 = vadd.f32 %v6835, %v6773
  %v6837 = vadd.f32 %v6836, %v6774
  %v6838 = vadd.f32 %v6837, %v6775
  %v6839 = vadd.f32 %v6838, %v6776
  %v6840 = vadd.f32 %v6839, %v6777
  %v6841 = vrot.slane %v6840, 4
  %v6842 = vadd.f32 %v6840, %v6841
  %v6843 = vrot.slane %v6842, 2
  %v6844 = vadd.f32 %v6842, %v6843
  %v6845 = vrot.slane %v6844, 1
  %v6846 = vadd.f32 %v6844, %v6845
  %v6847 = vadd.f32 %v6778, %v6779
  %v6848 = vadd.f32 %v6847, %v6780
  %v6849 = vadd.f32 %v6848, %v6781
  %v6850 = vadd.f32 %v6849, %v6782
  %v6851 = vadd.f32 %v6850, %v6783
  %v6852 = vadd.f32 %v6851, %v6784
  %v6853 = vadd.f32 %v6852, %v6785
  %v6854 = vadd.f32 %v6853, %v6786
  %v6855 = vadd.f32 %v6854, %v6787
  %v6856 = vadd.f32 %v6855, %v6788
  %v6857 = vadd.f32 %v6856, %v6789
  %v6858 = vadd.f32 %v6857, %v6790
  %v6859 = vadd.f32 %v6858, %v6791
  %v6860 = vadd.f32 %v6859, %v6792
  %v6861 = vadd.f32 %v6860, %v6793
  %v6862 = vadd.f32 %v6861, %v6794
  %v6863 = vadd.f32 %v6862, %v6795
  %v6864 = vadd.f32 %v6863, %v6796
  %v6865 = vadd.f32 %v6864, %v6797
  %v6866 = vadd.f32 %v6865, %v6798
  %v6867 = vadd.f32 %v6866, %v6799
  %v6868 = vadd.f32 %v6867, %v6800
  %v6869 = vadd.f32 %v6868, %v6801
  %v6870 = vadd.f32 %v6869, %v6802
  %v6871 = vadd.f32 %v6870, %v6803
  %v6872 = vadd.f32 %v6871, %v6804
  %v6873 = vadd.f32 %v6872, %v6805
  %v6874 = vadd.f32 %v6873, %v6806
  %v6875 = vadd.f32 %v6874, %v6807
  %v6876 = vadd.f32 %v6875, %v6808
  %v6877 = vadd.f32 %v6876, %v6809
  %v6878 = vrot.slane %v6877, 4
  %v6879 = vadd.f32 %v6877, %v6878
  %v6880 = vrot.slane %v6879, 2
  %v6881 = vadd.f32 %v6879, %v6880
  %v6882 = vrot.slane %v6881, 1
  %v6883 = vadd.f32 %v6881, %v6882
  %v6886 = vsel %vm3208, %v6745, %v6708
  %v6890 = vsel %vm3213, %v6883, %v6846
  %v6892 = vsel %vm3216, %v6886, %v6890
  %6893 = vmatprep.subr.mxu0 0.0
  %6894 = vmatpush1.msra.mxu0 %v42
  %6895 = vmatprep.subr.mxu0 0.0
  %6896 = vmatpush1.msra.mxu0 %v43
  %6897 = vmatprep.subr.mxu0 0.0
  %6898 = vmatpush1.msra.mxu0 %v44
  %6899 = vmatprep.subr.mxu0 0.0
  %6900 = vmatpush1.msra.mxu0 %v45
  %6901 = vmatprep.subr.mxu0 0.0
  %6902 = vmatpush1.msra.mxu0 %v46
  %6903 = vmatprep.subr.mxu0 0.0
  %6904 = vmatpush1.msra.mxu0 %v47
  %6905 = vmatprep.subr.mxu0 0.0
  %6906 = vmatpush1.msra.mxu0 %v48
  %6907 = vmatprep.subr.mxu0 0.0
  %6908 = vmatpush1.msra.mxu0 %v49
  %6909 = vmatprep.subr.mxu0 0.0
  %6910 = vmatpush1.msra.mxu0 %v50
  %6911 = vmatprep.subr.mxu0 0.0
  %6912 = vmatpush1.msra.mxu0 %v51
  %6913 = vmatprep.subr.mxu0 0.0
  %6914 = vmatpush1.msra.mxu0 %v52
  %6915 = vmatprep.subr.mxu0 0.0
  %6916 = vmatpush1.msra.mxu0 %v53
  %6917 = vmatprep.subr.mxu0 0.0
  %6918 = vmatpush1.msra.mxu0 %v54
  %6919 = vmatprep.subr.mxu0 0.0
  %6920 = vmatpush1.msra.mxu0 %v55
  %6921 = vmatprep.subr.mxu0 0.0
  %6922 = vmatpush1.msra.mxu0 %v56
  %6923 = vmatprep.subr.mxu0 0.0
  %6924 = vmatpush1.msra.mxu0 %v57
  %6925 = vmatprep.subr.mxu0 0.0
  %6926 = vmatpush1.msra.mxu0 0.0
  %6927 = vmatprep.subr.mxu0 0.0
  %6928 = vmatpush1.msra.mxu0 0.0
  %6929 = vmatprep.subr.mxu0 0.0
  %6930 = vmatpush1.msra.mxu0 0.0
  %6931 = vmatprep.subr.mxu0 0.0
  %6932 = vmatpush1.msra.mxu0 0.0
  %6933 = vmatprep.subr.mxu0 0.0
  %6934 = vmatpush1.msra.mxu0 0.0
  %6935 = vmatprep.subr.mxu0 0.0
  %6936 = vmatpush1.msra.mxu0 0.0
  %6937 = vmatprep.subr.mxu0 0.0
  %6938 = vmatpush1.msra.mxu0 0.0
  %6939 = vmatprep.subr.mxu0 0.0
  %6940 = vmatpush1.msra.mxu0 0.0
  %6941 = vmatprep.subr.mxu0 0.0
  %6942 = vmatpush1.msra.mxu0 0.0
  %6943 = vmatprep.subr.mxu0 0.0
  %6944 = vmatpush1.msra.mxu0 0.0
  %6945 = vmatprep.subr.mxu0 0.0
  %6946 = vmatpush1.msra.mxu0 0.0
  %6947 = vmatprep.subr.mxu0 0.0
  %6948 = vmatpush1.msra.mxu0 0.0
  %6949 = vmatprep.subr.mxu0 0.0
  %6950 = vmatpush1.msra.mxu0 0.0
  %6951 = vmatprep.subr.mxu0 0.0
  %6952 = vmatpush1.msra.mxu0 0.0
  %6953 = vmatprep.subr.mxu0 0.0
  %6954 = vmatpush1.msra.mxu0 0.0
  %6955 = vmatprep.subr.mxu0 0.0
  %6956 = vmatpush1.msra.mxu0 0.0
  %6957 = vmatprep.mubr.f32.mxu0 0.0
  %6958 = vmatmul.mubr.f32.gmra.mrb[0].mxu0 %v6892
  %v6959 = vpop.f32.mrb[0].mxu0
  %v6960 = vadd.f32 0.0, %v6959
  %v6961 = vpop.f32.mrb[0].mxu0
  %6962 = vdwg.mxu0
  %v6963 = vmul.f32 %v6960, 0.001953125
  %v6964 = vmul.f32 %v6963, %v6963
  %v6966 = vrot.slane %v6964, 6
  %v6968 = vsub.f32 %v6963, %v6966
  %v6969 = vadd.f32 %v6968, 1e-05
  %v6970 = vrsqrt.pop %v6969
  %v6971 = vsel %vm3216, %v6963, %v6970
  %v6973 = vsel %vm1413, %v6971, 0
  %6975 = vmatprep.subr.mxu0 0.0
  %6976 = vmatpush1.msra.mxu0 %v58
  %6977 = vmatprep.subr.mxu0 0.0
  %6978 = vmatpush1.msra.mxu0 %v59
  %6979 = vmatprep.subr.mxu0 0.0
  %6980 = vmatpush1.msra.mxu0 %v60
  %6981 = vmatprep.subr.mxu0 0.0
  %6982 = vmatpush1.msra.mxu0 %v61
  %6983 = vmatprep.subr.mxu0 0.0
  %6984 = vmatpush1.msra.mxu0 %v62
  %6985 = vmatprep.subr.mxu0 0.0
  %6986 = vmatpush1.msra.mxu0 %v63
  %6987 = vmatprep.subr.mxu0 0.0
  %6988 = vmatpush1.msra.mxu0 %v64
  %6989 = vmatprep.subr.mxu0 0.0
  %6990 = vmatpush1.msra.mxu0 %v65
  %6991 = vmatprep.subr.mxu0 0.0
  %6992 = vmatpush1.msra.mxu0 0.0
  %6993 = vmatprep.subr.mxu0 0.0
  %6994 = vmatpush1.msra.mxu0 0.0
  %6995 = vmatprep.subr.mxu0 0.0
  %6996 = vmatpush1.msra.mxu0 0.0
  %6997 = vmatprep.subr.mxu0 0.0
  %6998 = vmatpush1.msra.mxu0 0.0
  %6999 = vmatprep.subr.mxu0 0.0
  %7000 = vmatpush1.msra.mxu0 0.0
  %7001 = vmatprep.subr.mxu0 0.0
  %7002 = vmatpush1.msra.mxu0 0.0
  %7003 = vmatprep.subr.mxu0 0.0
  %7004 = vmatpush1.msra.mxu0 0.0
  %7005 = vmatprep.subr.mxu0 0.0
  %7006 = vmatpush1.msra.mxu0 0.0
  %7007 = vmatprep.subr.mxu0 0.0
  %7008 = vmatpush1.msra.mxu0 0.0
  %7009 = vmatprep.subr.mxu0 0.0
  %7010 = vmatpush1.msra.mxu0 0.0
  %7011 = vmatprep.subr.mxu0 0.0
  %7012 = vmatpush1.msra.mxu0 0.0
  %7013 = vmatprep.subr.mxu0 0.0
  %7014 = vmatpush1.msra.mxu0 0.0
  %7015 = vmatprep.subr.mxu0 0.0
  %7016 = vmatpush1.msra.mxu0 0.0
  %7017 = vmatprep.subr.mxu0 0.0
  %7018 = vmatpush1.msra.mxu0 0.0
  %7019 = vmatprep.subr.mxu0 0.0
  %7020 = vmatpush1.msra.mxu0 0.0
  %7021 = vmatprep.subr.mxu0 0.0
  %7022 = vmatpush1.msra.mxu0 0.0
  %7023 = vmatprep.subr.mxu0 0.0
  %7024 = vmatpush1.msra.mxu0 0.0
  %7025 = vmatprep.subr.mxu0 0.0
  %7026 = vmatpush1.msra.mxu0 0.0
  %7027 = vmatprep.subr.mxu0 0.0
  %7028 = vmatpush1.msra.mxu0 0.0
  %7029 = vmatprep.subr.mxu0 0.0
  %7030 = vmatpush1.msra.mxu0 0.0
  %7031 = vmatprep.subr.mxu0 0.0
  %7032 = vmatpush1.msra.mxu0 0.0
  %7033 = vmatprep.subr.mxu0 0.0
  %7034 = vmatpush1.msra.mxu0 0.0
  %7035 = vmatprep.subr.mxu0 0.0
  %7036 = vmatpush1.msra.mxu0 0.0
  %7037 = vmatprep.subr.mxu0 0.0
  %7038 = vmatpush1.msra.mxu0 0.0
  %7039 = vmatprep.mubr.f32.mxu0 0.0
  %7040 = vmatmul.mubr.f32.gmra.mrb[0].mxu0 %v6973
  %v7041 = vpop.f32.mrb[0].mxu0
  %v7042 = vadd.f32 0.0, %v7041
  %v7043 = vpop.f32.mrb[0].mxu0
  %7044 = vdwg.mxu0
  %s7045 = scalar_lea.vmem %s5, 1
  %v7046 = vld [vmem:[%s7045] sm:$0x1]
  %v7048 = vlaneseq
  %v7049 = vshrl.u32 %v7048, 7
  %v7050 = vsub.s32 0, %v7049
  %v7051 = vrot.slane %v7046, %v7050
  %v7053 = vmul.f32 %v7042, %v7051
  %s7054 = scalar_lea.vmem %s6, 1
  %v7055 = vld [vmem:[%s7054] sm:$0x1]
  %v7057 = vrot.slane %v7053, 2
  %v7059 = vmul.f32 %v7042, %v7057
  %v7061 = vlaneseq
  %v7062 = vshrl.u32 %v7061, 7
  %v7063 = vsub.s32 0, %v7062
  %v7064 = vrot.slane %v7055, %v7063
  %v7066 = vsub.f32 %v7064, %v7059
  %v7068 = vunpack.c.l.s4 1966171168
  %v7069 = vunpack.c.0.s8 %v7068
  %v7070 = vlaneseq
  %v7071 = vshrl.u32 %v7070, 7
  %v7072 = vsub.s32 %v7069, %v7071
  %v7073 = vrot.slane %v7053, %v7072
  %v7074 = vcombine.high %v7073, %v7073
  %v7076 = vunpack.c.l.s4 1966171168
  %v7077 = vunpack.c.0.s8 %v7076
  %v7078 = vlaneseq
  %v7079 = vshrl.u32 %v7078, 7
  %v7080 = vsub.s32 %v7077, %v7079
  %v7081 = vrot.slane %v7073, %v7080
  %v7083 = vunpack.c.l.s4 1966171168
  %v7084 = vunpack.c.0.s8 %v7083
  %v7085 = vlaneseq
  %v7086 = vshrl.u32 %v7085, 7
  %v7087 = vsub.s32 %v7084, %v7086
  %v7088 = vrot.slane %v7074, %v7087
  %v7089 = vcombine.high %v7081, %v7081
  %v7090 = vcombine.high %v7088, %v7088
  %v7091 = vlaneseq
  %v7092 = vshrl.u32 %v7091, 7
  %v7093 = vsub.s32 0, %v7092
  %v7094 = vrot.slane %v7089, %v7093
  %v7095 = vlaneseq
  %v7096 = vshrl.u32 %v7095, 7
  %v7097 = vsub.s32 0, %v7096
  %v7098 = vrot.slane %v7090, %v7097
  %v7101 = vmul.f32 %v6418, %v7094
  %v7102 = vmul.f32 %v6421, %v7094
  %v7103 = vmul.f32 %v6426, %v7094
  %v7104 = vmul.f32 %v6429, %v7094
  %v7105 = vmul.f32 %v6434, %v7094
  %v7106 = vmul.f32 %v6437, %v7094
  %v7107 = vmul.f32 %v6442, %v7094
  %v7108 = vmul.f32 %v6445, %v7094
  %v7109 = vmul.f32 %v6450, %v7094
  %v7110 = vmul.f32 %v6453, %v7094
  %v7111 = vmul.f32 %v6458, %v7094
  %v7112 = vmul.f32 %v6461, %v7094
  %v7113 = vmul.f32 %v6466, %v7094
  %v7114 = vmul.f32 %v6469, %v7094
  %v7115 = vmul.f32 %v6474, %v7094
  %v7116 = vmul.f32 %v6477, %v7094
  %v7117 = vmul.f32 %v6482, %v7094
  %v7118 = vmul.f32 %v6485, %v7094
  %v7119 = vmul.f32 %v6490, %v7094
  %v7120 = vmul.f32 %v6493, %v7094
  %v7121 = vmul.f32 %v6498, %v7094
  %v7122 = vmul.f32 %v6501, %v7094
  %v7123 = vmul.f32 %v6506, %v7094
  %v7124 = vmul.f32 %v6509, %v7094
  %v7125 = vmul.f32 %v6514, %v7094
  %v7126 = vmul.f32 %v6517, %v7094
  %v7127 = vmul.f32 %v6522, %v7094
  %v7128 = vmul.f32 %v6525, %v7094
  %v7129 = vmul.f32 %v6530, %v7094
  %v7130 = vmul.f32 %v6533, %v7094
  %v7131 = vmul.f32 %v6538, %v7094
  %v7132 = vmul.f32 %v6541, %v7094
  %v7133 = vmul.f32 %v6546, %v7098
  %v7134 = vmul.f32 %v6549, %v7098
  %v7135 = vmul.f32 %v6554, %v7098
  %v7136 = vmul.f32 %v6557, %v7098
  %v7137 = vmul.f32 %v6562, %v7098
  %v7138 = vmul.f32 %v6565, %v7098
  %v7139 = vmul.f32 %v6570, %v7098
  %v7140 = vmul.f32 %v6573, %v7098
  %v7141 = vmul.f32 %v6578, %v7098
  %v7142 = vmul.f32 %v6581, %v7098
  %v7143 = vmul.f32 %v6586, %v7098
  %v7144 = vmul.f32 %v6589, %v7098
  %v7145 = vmul.f32 %v6594, %v7098
  %v7146 = vmul.f32 %v6597, %v7098
  %v7147 = vmul.f32 %v6602, %v7098
  %v7148 = vmul.f32 %v6605, %v7098
  %v7149 = vmul.f32 %v6610, %v7098
  %v7150 = vmul.f32 %v6613, %v7098
  %v7151 = vmul.f32 %v6618, %v7098
  %v7152 = vmul.f32 %v6621, %v7098
  %v7153 = vmul.f32 %v6626, %v7098
  %v7154 = vmul.f32 %v6629, %v7098
  %v7155 = vmul.f32 %v6634, %v7098
  %v7156 = vmul.f32 %v6637, %v7098
  %v7157 = vmul.f32 %v6642, %v7098
  %v7158 = vmul.f32 %v6645, %v7098
  %v7159 = vmul.f32 %v6650, %v7098
  %v7160 = vmul.f32 %v6653, %v7098
  %v7161 = vmul.f32 %v6658, %v7098
  %v7162 = vmul.f32 %v6661, %v7098
  %v7163 = vmul.f32 %v6666, %v7098
  %v7164 = vmul.f32 %v6669, %v7098
  %v7167 = vunpack.c.l.s4 1966171168
  %v7168 = vunpack.c.0.s8 %v7167
  %v7169 = vlaneseq
  %v7170 = vshrl.u32 %v7169, 7
  %v7171 = vsub.s32 %v7168, %v7170
  %v7172 = vrot.slane %v7066, %v7171
  %v7173 = vcombine.high %v7172, %v7172
  %v7175 = vunpack.c.l.s4 1966171168
  %v7176 = vunpack.c.0.s8 %v7175
  %v7177 = vlaneseq
  %v7178 = vshrl.u32 %v7177, 7
  %v7179 = vsub.s32 %v7176, %v7178
  %v7180 = vrot.slane %v7172, %v7179
  %v7182 = vunpack.c.l.s4 1966171168
  %v7183 = vunpack.c.0.s8 %v7182
  %v7184 = vlaneseq
  %v7185 = vshrl.u32 %v7184, 7
  %v7186 = vsub.s32 %v7183, %v7185
  %v7187 = vrot.slane %v7173, %v7186
  %v7188 = vlaneseq
  %v7189 = vshrl.u32 %v7188, 7
  %v7190 = vsub.s32 0, %v7189
  %v7191 = vrot.slane %v7180, %v7190
  %v7192 = vlaneseq
  %v7193 = vshrl.u32 %v7192, 7
  %v7194 = vsub.s32 0, %v7193
  %v7195 = vrot.slane %v7187, %v7194
  %v7198 = vadd.f32 %v7101, %v7191
  %v7199 = vadd.f32 %v7102, %v7191
  %v7200 = vadd.f32 %v7103, %v7191
  %v7201 = vadd.f32 %v7104, %v7191
  %v7202 = vadd.f32 %v7105, %v7191
  %v7203 = vadd.f32 %v7106, %v7191
  %v7204 = vadd.f32 %v7107, %v7191
  %v7205 = vadd.f32 %v7108, %v7191
  %v7206 = vadd.f32 %v7109, %v7191
  %v7207 = vadd.f32 %v7110, %v7191
  %v7208 = vadd.f32 %v7111, %v7191
  %v7209 = vadd.f32 %v7112, %v7191
  %v7210 = vadd.f32 %v7113, %v7191
  %v7211 = vadd.f32 %v7114, %v7191
  %v7212 = vadd.f32 %v7115, %v7191
  %v7213 = vadd.f32 %v7116, %v7191
  %v7214 = vadd.f32 %v7117, %v7191
  %v7215 = vadd.f32 %v7118, %v7191
  %v7216 = vadd.f32 %v7119, %v7191
  %v7217 = vadd.f32 %v7120, %v7191
  %v7218 = vadd.f32 %v7121, %v7191
  %v7219 = vadd.f32 %v7122, %v7191
  %v7220 = vadd.f32 %v7123, %v7191
  %v7221 = vadd.f32 %v7124, %v7191
  %v7222 = vadd.f32 %v7125, %v7191
  %v7223 = vadd.f32 %v7126, %v7191
  %v7224 = vadd.f32 %v7127, %v7191
  %v7225 = vadd.f32 %v7128, %v7191
  %v7226 = vadd.f32 %v7129, %v7191
  %v7227 = vadd.f32 %v7130, %v7191
  %v7228 = vadd.f32 %v7131, %v7191
  %v7229 = vadd.f32 %v7132, %v7191
  %v7230 = vadd.f32 %v7133, %v7195
  %v7231 = vadd.f32 %v7134, %v7195
  %v7232 = vadd.f32 %v7135, %v7195
  %v7233 = vadd.f32 %v7136, %v7195
  %v7234 = vadd.f32 %v7137, %v7195
  %v7235 = vadd.f32 %v7138, %v7195
  %v7236 = vadd.f32 %v7139, %v7195
  %v7237 = vadd.f32 %v7140, %v7195
  %v7238 = vadd.f32 %v7141, %v7195
  %v7239 = vadd.f32 %v7142, %v7195
  %v7240 = vadd.f32 %v7143, %v7195
  %v7241 = vadd.f32 %v7144, %v7195
  %v7242 = vadd.f32 %v7145, %v7195
  %v7243 = vadd.f32 %v7146, %v7195
  %v7244 = vadd.f32 %v7147, %v7195
  %v7245 = vadd.f32 %v7148, %v7195
  %v7246 = vadd.f32 %v7149, %v7195
  %v7247 = vadd.f32 %v7150, %v7195
  %v7248 = vadd.f32 %v7151, %v7195
  %v7249 = vadd.f32 %v7152, %v7195
  %v7250 = vadd.f32 %v7153, %v7195
  %v7251 = vadd.f32 %v7154, %v7195
  %v7252 = vadd.f32 %v7155, %v7195
  %v7253 = vadd.f32 %v7156, %v7195
  %v7254 = vadd.f32 %v7157, %v7195
  %v7255 = vadd.f32 %v7158, %v7195
  %v7256 = vadd.f32 %v7159, %v7195
  %v7257 = vadd.f32 %v7160, %v7195
  %v7258 = vadd.f32 %v7161, %v7195
  %v7259 = vadd.f32 %v7162, %v7195
  %v7260 = vadd.f32 %v7163, %v7195
  %v7261 = vadd.f32 %v7164, %v7195
  %v7262 = vmax.f32 %v7198, 0.0
  %v7263 = vmax.f32 %v7199, 0.0
  %v7264 = vmax.f32 %v7200, 0.0
  %v7265 = vmax.f32 %v7201, 0.0
  %v7266 = vmax.f32 %v7202, 0.0
  %v7267 = vmax.f32 %v7203, 0.0
  %v7268 = vmax.f32 %v7204, 0.0
  %v7269 = vmax.f32 %v7205, 0.0
  %v7270 = vmax.f32 %v7206, 0.0
  %v7271 = vmax.f32 %v7207, 0.0
  %v7272 = vmax.f32 %v7208, 0.0
  %v7273 = vmax.f32 %v7209, 0.0
  %v7274 = vmax.f32 %v7210, 0.0
  %v7275 = vmax.f32 %v7211, 0.0
  %v7276 = vmax.f32 %v7212, 0.0
  %v7277 = vmax.f32 %v7213, 0.0
  %v7278 = vmax.f32 %v7214, 0.0
  %v7279 = vmax.f32 %v7215, 0.0
  %v7280 = vmax.f32 %v7216, 0.0
  %v7281 = vmax.f32 %v7217, 0.0
  %v7282 = vmax.f32 %v7218, 0.0
  %v7283 = vmax.f32 %v7219, 0.0
  %v7284 = vmax.f32 %v7220, 0.0
  %v7285 = vmax.f32 %v7221, 0.0
  %v7286 = vmax.f32 %v7222, 0.0
  %v7287 = vmax.f32 %v7223, 0.0
  %v7288 = vmax.f32 %v7224, 0.0
  %v7289 = vmax.f32 %v7225, 0.0
  %v7290 = vmax.f32 %v7226, 0.0
  %v7291 = vmax.f32 %v7227, 0.0
  %v7292 = vmax.f32 %v7228, 0.0
  %v7293 = vmax.f32 %v7229, 0.0
  %v7294 = vmax.f32 %v7230, 0.0
  %v7295 = vmax.f32 %v7231, 0.0
  %v7296 = vmax.f32 %v7232, 0.0
  %v7297 = vmax.f32 %v7233, 0.0
  %v7298 = vmax.f32 %v7234, 0.0
  %v7299 = vmax.f32 %v7235, 0.0
  %v7300 = vmax.f32 %v7236, 0.0
  %v7301 = vmax.f32 %v7237, 0.0
  %v7302 = vmax.f32 %v7238, 0.0
  %v7303 = vmax.f32 %v7239, 0.0
  %v7304 = vmax.f32 %v7240, 0.0
  %v7305 = vmax.f32 %v7241, 0.0
  %v7306 = vmax.f32 %v7242, 0.0
  %v7307 = vmax.f32 %v7243, 0.0
  %v7308 = vmax.f32 %v7244, 0.0
  %v7309 = vmax.f32 %v7245, 0.0
  %v7310 = vmax.f32 %v7246, 0.0
  %v7311 = vmax.f32 %v7247, 0.0
  %v7312 = vmax.f32 %v7248, 0.0
  %v7313 = vmax.f32 %v7249, 0.0
  %v7314 = vmax.f32 %v7250, 0.0
  %v7315 = vmax.f32 %v7251, 0.0
  %v7316 = vmax.f32 %v7252, 0.0
  %v7317 = vmax.f32 %v7253, 0.0
  %v7318 = vmax.f32 %v7254, 0.0
  %v7319 = vmax.f32 %v7255, 0.0
  %v7320 = vmax.f32 %v7256, 0.0
  %v7321 = vmax.f32 %v7257, 0.0
  %v7322 = vmax.f32 %v7258, 0.0
  %v7323 = vmax.f32 %v7259, 0.0
  %v7324 = vmax.f32 %v7260, 0.0
  %v7325 = vmax.f32 %v7261, 0.0
  %v7326 = vadd.f32 %v7262, %v7263
  %v7327 = vadd.f32 %v7326, %v7264
  %v7328 = vadd.f32 %v7327, %v7265
  %v7329 = vadd.f32 %v7328, %v7266
  %v7330 = vadd.f32 %v7329, %v7267
  %v7331 = vadd.f32 %v7330, %v7268
  %v7332 = vadd.f32 %v7331, %v7269
  %v7333 = vadd.f32 %v7332, %v7270
  %v7334 = vadd.f32 %v7333, %v7271
  %v7335 = vadd.f32 %v7334, %v7272
  %v7336 = vadd.f32 %v7335, %v7273
  %v7337 = vadd.f32 %v7336, %v7274
  %v7338 = vadd.f32 %v7337, %v7275
  %v7339 = vadd.f32 %v7338, %v7276
  %v7340 = vadd.f32 %v7339, %v7277
  %v7341 = vadd.f32 %v7340, %v7278
  %v7342 = vadd.f32 %v7341, %v7279
  %v7343 = vadd.f32 %v7342, %v7280
  %v7344 = vadd.f32 %v7343, %v7281
  %v7345 = vadd.f32 %v7344, %v7282
  %v7346 = vadd.f32 %v7345, %v7283
  %v7347 = vadd.f32 %v7346, %v7284
  %v7348 = vadd.f32 %v7347, %v7285
  %v7349 = vadd.f32 %v7348, %v7286
  %v7350 = vadd.f32 %v7349, %v7287
  %v7351 = vadd.f32 %v7350, %v7288
  %v7352 = vadd.f32 %v7351, %v7289
  %v7353 = vadd.f32 %v7352, %v7290
  %v7354 = vadd.f32 %v7353, %v7291
  %v7355 = vadd.f32 %v7354, %v7292
  %v7356 = vadd.f32 %v7355, %v7293
  %v7357 = vrot.slane %v7356, 4
  %v7358 = vadd.f32 %v7356, %v7357
  %v7359 = vrot.slane %v7358, 2
  %v7360 = vadd.f32 %v7358, %v7359
  %v7361 = vrot.slane %v7360, 1
  %v7362 = vadd.f32 %v7360, %v7361
  %v7363 = vadd.f32 %v7294, %v7295
  %v7364 = vadd.f32 %v7363, %v7296
  %v7365 = vadd.f32 %v7364, %v7297
  %v7366 = vadd.f32 %v7365, %v7298
  %v7367 = vadd.f32 %v7366, %v7299
  %v7368 = vadd.f32 %v7367, %v7300
  %v7369 = vadd.f32 %v7368, %v7301
  %v7370 = vadd.f32 %v7369, %v7302
  %v7371 = vadd.f32 %v7370, %v7303
  %v7372 = vadd.f32 %v7371, %v7304
  %v7373 = vadd.f32 %v7372, %v7305
  %v7374 = vadd.f32 %v7373, %v7306
  %v7375 = vadd.f32 %v7374, %v7307
  %v7376 = vadd.f32 %v7375, %v7308
  %v7377 = vadd.f32 %v7376, %v7309
  %v7378 = vadd.f32 %v7377, %v7310
  %v7379 = vadd.f32 %v7378, %v7311
  %v7380 = vadd.f32 %v7379, %v7312
  %v7381 = vadd.f32 %v7380, %v7313
  %v7382 = vadd.f32 %v7381, %v7314
  %v7383 = vadd.f32 %v7382, %v7315
  %v7384 = vadd.f32 %v7383, %v7316
  %v7385 = vadd.f32 %v7384, %v7317
  %v7386 = vadd.f32 %v7385, %v7318
  %v7387 = vadd.f32 %v7386, %v7319
  %v7388 = vadd.f32 %v7387, %v7320
  %v7389 = vadd.f32 %v7388, %v7321
  %v7390 = vadd.f32 %v7389, %v7322
  %v7391 = vadd.f32 %v7390, %v7323
  %v7392 = vadd.f32 %v7391, %v7324
  %v7393 = vadd.f32 %v7392, %v7325
  %v7394 = vrot.slane %v7393, 4
  %v7395 = vadd.f32 %v7393, %v7394
  %v7396 = vrot.slane %v7395, 2
  %v7397 = vadd.f32 %v7395, %v7396
  %v7398 = vrot.slane %v7397, 1
  %v7399 = vadd.f32 %v7397, %v7398
  %v7400 = vrcp.pop 256.0
  %v7401 = vmul.f32 %v7362, %v7400
  %v7402 = vmul.f32 %v7399, %v7400
  %v7403 = vpack.c.bf16 %v7401, %v7401
  %v7404 = vpack.c.bf16 %v7402, %v7402
  %v7405 = vld [vmem:[%s9] sm:$0xf]
  %v7406 = vld [vmem:[%s9 + $0x4] sm:$0xf]
  %v7407 = vld [vmem:[%s9 + $0x8] sm:$0xf]
  %v7408 = vld [vmem:[%s9 + $0xc] sm:$0xf]
  %v7409 = vld [vmem:[%s9 + $0x10] sm:$0xf]
  %v7410 = vld [vmem:[%s9 + $0x14] sm:$0xf]
  %v7411 = vld [vmem:[%s9 + $0x18] sm:$0xf]
  %v7412 = vld [vmem:[%s9 + $0x1c] sm:$0xf]
  %v7413 = vld [vmem:[%s9 + $0x20] sm:$0xf]
  %v7414 = vld [vmem:[%s9 + $0x24] sm:$0xf]
  %v7415 = vld [vmem:[%s9 + $0x28] sm:$0xf]
  %v7416 = vld [vmem:[%s9 + $0x2c] sm:$0xf]
  %v7417 = vld [vmem:[%s9 + $0x30] sm:$0xf]
  %v7418 = vld [vmem:[%s9 + $0x34] sm:$0xf]
  %v7419 = vld [vmem:[%s9 + $0x38] sm:$0xf]
  %v7420 = vld [vmem:[%s9 + $0x3c] sm:$0xf]
  %v7421 = vld [vmem:[%s10] sm:$0x1]
  %v7423 = vlaneseq
  %v7424 = vshrl.u32 %v7423, 7
  %v7425 = vsub.s32 0, %v7424
  %v7426 = vrot.slane %v7421, %v7425
  %v7430 = vunpack.c.l.b16 %v7403
  %v7431 = vunpack.c.l.b16 %v7404
  %v7432 = vsel %vm3208, %v7431, %v7430
  %v7433 = vpack.c.b16 %v7432, %v7432
  %v7451 = vunpack.c.l.b16 %v7405
  %v7452 = vunpack.c.l.b16 %v7406
  %v7453 = vunpack.c.l.b16 %v7407
  %v7454 = vunpack.c.l.b16 %v7408
  %v7455 = vunpack.c.l.b16 %v7409
  %v7456 = vunpack.c.l.b16 %v7410
  %v7457 = vunpack.c.l.b16 %v7411
  %v7458 = vunpack.c.l.b16 %v7412
  %v7459 = vunpack.c.l.b16 %v7413
  %v7460 = vunpack.c.l.b16 %v7414
  %v7461 = vunpack.c.l.b16 %v7415
  %v7462 = vunpack.c.l.b16 %v7416
  %v7463 = vunpack.c.l.b16 %v7417
  %v7464 = vunpack.c.l.b16 %v7418
  %v7465 = vunpack.c.l.b16 %v7419
  %v7466 = vunpack.c.l.b16 %v7420
  %v7467 = vpack.c.b16 %v7452, %v7451
  %v7468 = vpack.c.b16 %v7454, %v7453
  %v7469 = vpack.c.b16 %v7456, %v7455
  %v7470 = vpack.c.b16 %v7458, %v7457
  %v7471 = vpack.c.b16 %v7460, %v7459
  %v7472 = vpack.c.b16 %v7462, %v7461
  %v7473 = vpack.c.b16 %v7464, %v7463
  %v7474 = vpack.c.b16 %v7466, %v7465
  %7483 = vmatprep.subr.bf16.mxu0 0
  %7484 = vmatpush1.bf16.msra.mxu0 %v7467
  %7485 = vmatprep.subr.bf16.mxu0 0
  %7486 = vmatpush1.bf16.msra.mxu0 %v7468
  %7487 = vmatprep.subr.bf16.mxu0 0
  %7488 = vmatpush1.bf16.msra.mxu0 %v7469
  %7489 = vmatprep.subr.bf16.mxu0 0
  %7490 = vmatpush1.bf16.msra.mxu0 %v7470
  %7491 = vmatprep.subr.bf16.mxu0 0
  %7492 = vmatpush1.bf16.msra.mxu0 %v7471
  %7493 = vmatprep.subr.bf16.mxu0 0
  %7494 = vmatpush1.bf16.msra.mxu0 %v7472
  %7495 = vmatprep.subr.bf16.mxu0 0
  %7496 = vmatpush1.bf16.msra.mxu0 %v7473
  %7497 = vmatprep.subr.bf16.mxu0 0
  %7498 = vmatpush1.bf16.msra.mxu0 %v7474
  %7499 = vmatprep.subr.bf16.mxu0 0
  %7500 = vmatpush1.bf16.msra.mxu0 0
  %7501 = vmatprep.subr.bf16.mxu0 0
  %7502 = vmatpush1.bf16.msra.mxu0 0
  %7503 = vmatprep.subr.bf16.mxu0 0
  %7504 = vmatpush1.bf16.msra.mxu0 0
  %7505 = vmatprep.subr.bf16.mxu0 0
  %7506 = vmatpush1.bf16.msra.mxu0 0
  %7507 = vmatprep.subr.bf16.mxu0 0
  %7508 = vmatpush1.bf16.msra.mxu0 0
  %7509 = vmatprep.subr.bf16.mxu0 0
  %7510 = vmatpush1.bf16.msra.mxu0 0
  %7511 = vmatprep.subr.bf16.mxu0 0
  %7512 = vmatpush1.bf16.msra.mxu0 0
  %7513 = vmatprep.subr.bf16.mxu0 0
  %7514 = vmatpush1.bf16.msra.mxu0 0
  %7515 = vmatprep.mubr.bf16.mxu0 0
  %7516 = vmatmul.mubr.bf16.gmra.mrb[0].mxu0 %v7433
  %v7517 = vpop.f32.mrb[0].mxu0
  %v7518 = vadd.f32 %v7426, %v7517
  %v7519 = vpop.f32.mrb[0].mxu0
  %v7520 = vpop.f32.mrb[0].mxu0
  %v7521 = vpop.f32.mrb[0].mxu0
  %7522 = vdwg.mxu0
  %v7523 = vld [vmem:[%s11] sm:$0x1]
  %v7524 = vld [vmem:[%s1] sm:$0x3]
  %v7526 = vlaneseq
  %v7527 = vshrl.u32 %v7526, 7
  %v7528 = vsub.s32 0, %v7527
  %v7529 = vrot.slane %v7523, %v7528
  %7532 = vset.pattern.permute.xlu0 0
  %7533 = vperm.xlu0 %7532, %v7524
  %v7534 = vpop.permute.xlu0 %7533
  %v7536 = vmul.f32 %v7529, %v7534
  %v7537 = vmul.f32 %v7518, %v7536
  %v7538 = vmul.f32 %v7537, 1.442695
  %v7539 = vpow.pop %v7538
  %v7540 = vmul.f32 %v7529, %v7539
  %v7541 = vsub.f32 1.0, %v7523
  %v7543 = vlaneseq
  %v7544 = vshrl.u32 %v7543, 7
  %v7545 = vsub.s32 0, %v7544
  %v7546 = vrot.slane %v7541, %v7545
  %v7548 = vmul.f32 %v7546, %v7518
  %v7549 = vadd.f32 %v7540, %v7548
  %7550 = vst [vmem:[%s12] sm:$0x3] %v7549
  // Predicated region
  $region50: #{_yooo_head_forward.2} parent=0 // pred_check
    _
  $region51: #{_yooo_head_forward.2} parent=0 // pred_check_branch
    %7552 = sbr.rel (0) target = $region53
  $region52: #{_yooo_head_forward.2} parent=0 // pred_region
    _
  $region53: #{_yooo_head_forward.2} parent=0 // pred_fallthru
    _
  // Predicated region
  $region54: #{_yooo_head_forward.2} parent=0 // pred_check
    _
  $region55: #{_yooo_head_forward.2} parent=0 // pred_check_branch
    %7554 = sbr.rel (0) target = $region57
  $region56: #{_yooo_head_forward.2} parent=0 // pred_region
    _
  $region57: #{_yooo_head_forward.2} parent=0 // pred_fallthru
    _

</llo_original>
